<compile_context>
chip_gen: v6e
topology: v6e:2x2x1
jax: 0.10.0
libtpu: 0.0.40
codegen_flags: <defaults>
</compile_context>

<pallas_src>
import functools

import jax
import jax.numpy as jnp
from jax.experimental import pallas as pl
from jax.experimental.pallas import tpu as pltpu


def _round_up(x, m):
    return ((x + m - 1) // m) * m


# ----------------------------------------------------------------------------
# Pallas kernel 1: fused GEMM + bias (+ optional ReLU) -- conv1 / conv2.
# ----------------------------------------------------------------------------
def _matmul_bias_kernel(a_ref, w_ref, b_ref, o_ref, *, relu):
    acc = jnp.dot(a_ref[...], w_ref[...], preferred_element_type=jnp.float32)
    acc = acc + b_ref[...]
    if relu:
        acc = jnp.maximum(acc, 0.0)
    o_ref[...] = acc.astype(o_ref.dtype)


def matmul_bias(a, w, b, *, relu=False, tm=1024, compute_dtype=jnp.bfloat16):
    """a: (M, K), w: (K, N), b: (N,) -> (M, N) f32.

    K and N are zero-padded to multiples of 128 (lane-dense, unmasked MXU
    tiles).  M is tiled at <= `tm` rows, split into >= 2 tiles whenever
    possible so the "parallel" grid can shard across both TensorCores.
    """
    M, K = a.shape
    Kw, N = w.shape
    assert K == Kw
    Kp = _round_up(K, 128)
    Np = _round_up(N, 128)
    Mp8 = _round_up(M, 8)
    if Mp8 <= 16:                      # too small to split
        tm_eff = Mp8
    elif Mp8 <= tm:                    # fits in one tile -> split into 2
        tm_eff = _round_up((Mp8 + 1) // 2, 8)
    else:
        tm_eff = tm
    Mp = _round_up(Mp8, tm_eff)

    a_p = jnp.pad(a, ((0, Mp - M), (0, Kp - K))).astype(compute_dtype)
    w_p = jnp.pad(w, ((0, Kp - K), (0, Np - N))).astype(compute_dtype)
    b_p = jnp.pad(b, (0, Np - N)).astype(jnp.float32).reshape(1, Np)

    out = pl.pallas_call(
        functools.partial(_matmul_bias_kernel, relu=relu),
        out_shape=jax.ShapeDtypeStruct((Mp, Np), jnp.float32),
        grid_spec=pltpu.PrefetchScalarGridSpec(
            num_scalar_prefetch=0,
            grid=(Mp // tm_eff,),
            in_specs=[
                pl.BlockSpec((tm_eff, Kp), lambda i: (i, 0)),
                pl.BlockSpec((Kp, Np), lambda i: (0, 0)),
                pl.BlockSpec((1, Np), lambda i: (0, 0)),
            ],
            out_specs=pl.BlockSpec((tm_eff, Np), lambda i: (i, 0)),
        ),
        compiler_params=pltpu.CompilerParams(
            dimension_semantics=("parallel",)),
    )(a_p, w_p, b_p)
    return out[:M, :N]


# ----------------------------------------------------------------------------
# Pallas kernel 2: conv3 GEMM + bias + ReLU + spatial mean + W_in projection,
# all fused (eliminates two extra kernel launches and an HBM round trip).
# ----------------------------------------------------------------------------
def _conv3_head_kernel(a_ref, w_ref, b_ref, win_ref, bin_ref, o_ref, *, rows):
    acc = jnp.dot(a_ref[...], w_ref[...], preferred_element_type=jnp.float32)
    acc = jnp.maximum(acc + b_ref[...], 0.0)
    m, n = acc.shape
    feat = jnp.mean(acc.reshape(m // rows, rows, n), axis=1)     # (imgs, C)
    xin = jnp.dot(feat, win_ref[...],
                  preferred_element_type=jnp.float32) + bin_ref[...]
    o_ref[...] = xin.astype(o_ref.dtype)


def conv3_head(cols, w3_mat, b3, w_in, b_in, *, rows, img_tile=8,
               compute_dtype=jnp.bfloat16):
    """cols: (n_img*rows, K) im2col patches of conv3's input.

    Returns xin: (n_img, Hd_padded) = W_in-projected, spatially-averaged
    conv3 features (padded hidden columns are exactly zero).
    """
    M, K = cols.shape
    n_img = M // rows
    C = w3_mat.shape[1]
    Kp = _round_up(K, 128)
    Cp = _round_up(C, 128)
    Hd = w_in.shape[1]
    Hdp = _round_up(Hd, 128)
    n_img_p = _round_up(n_img, img_tile)

    a_p = jnp.pad(cols, ((0, (n_img_p - n_img) * rows),
                         (0, Kp - K))).astype(compute_dtype)
    w3_p = jnp.pad(w3_mat, ((0, Kp - K), (0, Cp - C))).astype(compute_dtype)
    b3_p = jnp.pad(b3, (0, Cp - C)).astype(jnp.float32).reshape(1, Cp)
    win_p = jnp.pad(w_in, ((0, Cp - C), (0, Hdp - Hd))).astype(jnp.float32)
    bin_p = jnp.pad(b_in, (0, Hdp - Hd)).astype(jnp.float32).reshape(1, Hdp)

    out = pl.pallas_call(
        functools.partial(_conv3_head_kernel, rows=rows),
        out_shape=jax.ShapeDtypeStruct((n_img_p, Hdp), jnp.float32),
        grid_spec=pltpu.PrefetchScalarGridSpec(
            num_scalar_prefetch=0,
            grid=(n_img_p // img_tile,),
            in_specs=[
                pl.BlockSpec((img_tile * rows, Kp), lambda i: (i, 0)),
                pl.BlockSpec((Kp, Cp), lambda i: (0, 0)),
                pl.BlockSpec((1, Cp), lambda i: (0, 0)),
                pl.BlockSpec((Cp, Hdp), lambda i: (0, 0)),
                pl.BlockSpec((1, Hdp), lambda i: (0, 0)),
            ],
            out_specs=pl.BlockSpec((img_tile, Hdp), lambda i: (i, 0)),
        ),
        compiler_params=pltpu.CompilerParams(
            dimension_semantics=("parallel",)),
    )(a_p, w3_p, b3_p, win_p, bin_p)
    return out[:n_img]


# ----------------------------------------------------------------------------
# Pallas kernel 3: Wilson-Cowan recurrence (serial part) + fused readout.
# Single grid step; time loop fully unrolled (T is tiny); all tiles are
# (8, 128)-dense because batch/hidden are zero-padded (padding is invariant
# under the dynamics since tanh(0) = 0).
# ----------------------------------------------------------------------------
def _wc_recurrence_kernel(xin_ref, h0_ref, whh_ref, wout_ref, bout_ref,
                          y_ref, hfin_ref, hseq_ref, *, dt, use_rk4, seq_len):
    whh = whh_ref[...]

    def f(xin, hh):
        rec = jnp.dot(hh, whh, preferred_element_type=jnp.float32)
        return -hh + jnp.tanh(xin + rec)

    def step(t, h):
        xin = xin_ref[t]                                   # (Bp, Hdp)
        if use_rk4:
            k1 = f(xin, h)
            k2 = f(xin, h + 0.5 * dt * k1)
            k3 = f(xin, h + 0.5 * dt * k2)
            k4 = f(xin, h + dt * k3)
            h_new = h + (dt / 6.0) * (k1 + 2.0 * k2 + 2.0 * k3 + k4)
        else:
            h_new = h + dt * f(xin, h)
        hseq_ref[t] = h_new
        return h_new

    h_final = jax.lax.fori_loop(0, seq_len, step, h0_ref[...], unroll=True)
    hfin_ref[...] = h_final

    # Fused readout: one batched lane-dense GEMM over all (t, b) states.
    t_, b_, hd_ = hseq_ref.shape
    hs = hseq_ref[...].reshape(t_ * b_, hd_)
    y = jnp.dot(hs, wout_ref[...],
                preferred_element_type=jnp.float32) + bout_ref[...]
    y_ref[...] = y.reshape(t_, b_, -1).astype(y_ref.dtype)


def wc_recurrence(xin_seq, h0, w_hh, w_out, b_out, *, dt, use_rk4):
    """xin_seq: (T, B, Hd) pre-projected inputs; h0: (B, Hd).

    Returns (y_seq (T, B, A), h_final (B, Hd)).
    """
    T, B, Hd = xin_seq.shape
    A = w_out.shape[1]
    Bp = _round_up(B, 8)
    Hdp = _round_up(Hd, 128)
    Ap = _round_up(A, 128)

    xin_p = jnp.pad(xin_seq, ((0, 0), (0, Bp - B), (0, Hdp - Hd)))
    h0_p = jnp.pad(h0, ((0, Bp - B), (0, Hdp - Hd)))
    whh_p = jnp.pad(w_hh, ((0, Hdp - Hd), (0, Hdp - Hd)))
    wout_p = jnp.pad(w_out, ((0, Hdp - Hd), (0, Ap - A)))
    bout_p = jnp.pad(b_out, (0, Ap - A)).astype(jnp.float32).reshape(1, Ap)

    y_p, hfin_p = pl.pallas_call(
        functools.partial(_wc_recurrence_kernel, dt=dt, use_rk4=use_rk4,
                          seq_len=T),
        out_shape=(jax.ShapeDtypeStruct((T, Bp, Ap), jnp.float32),
                   jax.ShapeDtypeStruct((Bp, Hdp), jnp.float32)),
        grid_spec=pltpu.PrefetchScalarGridSpec(
            num_scalar_prefetch=0,
            grid=(1,),
            in_specs=[
                pl.BlockSpec((T, Bp, Hdp), lambda i: (0, 0, 0)),
                pl.BlockSpec((Bp, Hdp), lambda i: (0, 0)),
                pl.BlockSpec((Hdp, Hdp), lambda i: (0, 0)),
                pl.BlockSpec((Hdp, Ap), lambda i: (0, 0)),
                pl.BlockSpec((1, Ap), lambda i: (0, 0)),
            ],
            out_specs=[
                pl.BlockSpec((T, Bp, Ap), lambda i: (0, 0, 0)),
                pl.BlockSpec((Bp, Hdp), lambda i: (0, 0)),
            ],
            scratch_shapes=[pltpu.VMEM((T, Bp, Hdp), jnp.float32)],
        ),
        compiler_params=pltpu.CompilerParams(
            dimension_semantics=("arbitrary",)),
    )(xin_p, h0_p, whh_p, wout_p, bout_p)
    return y_p[:, :B, :A], hfin_p[:B, :Hd]


# ----------------------------------------------------------------------------
# Plain-JAX glue: im2col, conv wrapper, parameter setup, BN folding.
# ----------------------------------------------------------------------------
def im2col(x_nhwc, kh, kw, stride, pad):
    # TODO(synk): patches are materialized in HBM; moving patch extraction
    # into the GEMM kernel (halo'd row blocks via pl.ds) would remove the
    # ~k^2x im2col HBM-traffic tax on these mem-bound convs.
    xp = jnp.pad(x_nhwc, ((0, 0), (pad, pad), (pad, pad), (0, 0)))
    N, H, W, C = xp.shape
    Ho = (H - kh) // stride + 1
    Wo = (W - kw) // stride + 1
    patches = []
    for i in range(kh):
        for j in range(kw):
            patches.append(
                xp[:, i:i + stride * Ho:stride, j:j + stride * Wo:stride, :])
    cols = jnp.stack(patches, axis=3)            # (N, Ho, Wo, kh*kw, C)
    return cols.reshape(N, Ho, Wo, kh * kw * C), Ho, Wo


def conv_w_to_mat(w_oihw):
    out_c, in_c, kh, kw = w_oihw.shape
    return jnp.transpose(w_oihw, (2, 3, 1, 0)).reshape(kh * kw * in_c, out_c)


def conv2d(x_nhwc, w_oihw, bias, *, stride=1, pad=0, relu=False):
    out_c, in_c, kh, kw = w_oihw.shape
    cols, Ho, Wo = im2col(x_nhwc, kh, kw, stride, pad)
    N = x_nhwc.shape[0]
    a = cols.reshape(N * Ho * Wo, kh * kw * in_c)
    o = matmul_bias(a, conv_w_to_mat(w_oihw), bias, relu=relu)
    return o.reshape(N, Ho, Wo, out_c)


def _uniform(key, shape, bound):
    return jax.random.uniform(key, shape, jnp.float32, -bound, bound)


def conv_init(key, out_c, in_c, kh, kw):
    k1, k2 = jax.random.split(key)
    bound = (in_c * kh * kw) ** -0.5
    return {"w": _uniform(k1, (out_c, in_c, kh, kw), bound),
            "b": _uniform(k2, (out_c,), bound)}


def fold_bn(conv, gamma, beta, rmean, rvar, eps=1e-5):
    s = gamma / jnp.sqrt(rvar + eps)
    return {"w": conv["w"] * s[:, None, None, None],
            "b": (conv["b"] - rmean) * s + beta}


def bn_default(c):
    # eval-mode BatchNorm2d with default running stats (identity at init).
    return (jnp.ones((c,), jnp.float32), jnp.zeros((c,), jnp.float32),
            jnp.zeros((c,), jnp.float32), jnp.ones((c,), jnp.float32))


def distance_dependent_mask(key, hd, sparsity):
    # TODO(synk): assumed distance-dependent connectivity (source not given):
    # neurons on a 1-D ring, P(connect) = exp(-d/lambda), Bernoulli-thresholded;
    # self-connections always kept; sparsity shrinks lambda.
    idx = jnp.arange(hd)
    d = jnp.abs(idx[:, None] - idx[None, :])
    d = jnp.minimum(d, hd - d).astype(jnp.float32)
    lam = jnp.maximum(1.0, (1.0 - sparsity) * hd / 4.0)
    prob = jnp.exp(-d / lam)
    keep = (jax.random.uniform(key, (hd, hd)) < prob).astype(jnp.float32)
    return jnp.maximum(keep, jnp.eye(hd, dtype=jnp.float32))


def init_params(key, n_actions=6, hidden_size=64, sparsity=0.5):
    keys = jax.random.split(key, 8)
    p = {}
    p["conv1"] = conv_init(keys[0], 32, 4, 5, 5)
    p["conv2"] = fold_bn(conv_init(keys[1], 64, 32, 5, 5), *bn_default(64))
    p["conv3"] = fold_bn(conv_init(keys[2], 128, 64, 5, 5), *bn_default(128))
    hd = hidden_size
    mask = distance_dependent_mask(keys[5], hd, sparsity)
    p["wc"] = {
        "w_in": _uniform(keys[3], (128, hd), 128.0 ** -0.5),
        "b_in": jnp.zeros((hd,), jnp.float32),
        "w_hh_masked": _uniform(keys[4], (hd, hd), float(hd) ** -0.5) * mask,
        "w_out": _uniform(keys[6], (hd, n_actions), float(hd) ** -0.5),
        "b_out": _uniform(keys[7], (n_actions,), float(hd) ** -0.5),
    }
    return p


# ----------------------------------------------------------------------------
# Model forward (matches Conv3Block + WilsonCowanCell, eval mode).
# ----------------------------------------------------------------------------
def model_forward(p, x, hx=None, *, dt=0.1, use_rk4=True):
    B, T = x.shape[0], x.shape[1]
    wc = p["wc"]
    hd = wc["w_hh_masked"].shape[0]
    if hx is None:
        hx = jnp.zeros((B, hd), jnp.float32)

    # ---- Conv block on B*T frames ----
    x_flat = x.reshape(B * T, *x.shape[2:])                       # (B*T,4,H,W)
    h = jnp.transpose(x_flat, (0, 2, 3, 1))                       # NCHW -> NHWC
    h = conv2d(h, p["conv1"]["w"], p["conv1"]["b"], stride=2, pad=2, relu=True)
    h = conv2d(h, p["conv2"]["w"], p["conv2"]["b"], stride=2, pad=2, relu=True)

    # conv3 + BN3 + ReLU + spatial mean + W_in projection, fused in one kernel.
    cols3, Ho3, Wo3 = im2col(h, 5, 5, 2, 2)
    n_img = B * T
    a3 = cols3.reshape(n_img * Ho3 * Wo3, -1)
    xin = conv3_head(a3, conv_w_to_mat(p["conv3"]["w"]), p["conv3"]["b"],
                     wc["w_in"], wc["b_in"], rows=Ho3 * Wo3)      # (B*T, Hdp)

    hdp = xin.shape[1]
    xin_tbh = jnp.transpose(xin.reshape(B, T, hdp), (1, 0, 2))    # (T, B, Hdp)

    # ---- Serial Wilson-Cowan recurrence + fused readout ----
    hx_p = jnp.pad(hx, ((0, 0), (0, hdp - hd)))
    whh_p = jnp.pad(wc["w_hh_masked"], ((0, hdp - hd), (0, hdp - hd)))
    wout_p = jnp.pad(wc["w_out"], ((0, hdp - hd), (0, 0)))
    y_tba, h_fin = wc_recurrence(xin_tbh, hx_p, whh_p, wout_p, wc["b_out"],
                                 dt=dt, use_rk4=use_rk4)          # (T,B,A)
    y = jnp.transpose(y_tba, (1, 0, 2))                           # (B, T, A)
    return y, h_fin[:, :hd]


if __name__ == "__main__":
    key = jax.random.PRNGKey(0)
    k_param, k_input = jax.random.split(key)

    n_actions, hidden_size = 6, 64
    B, T, C, H, W = 2, 4, 4, 32, 32

    params = init_params(k_param, n_actions=n_actions,
                         hidden_size=hidden_size, sparsity=0.5)
    x = jax.random.normal(k_input, (B, T, C, H, W), jnp.float32)

    fwd = jax.jit(functools.partial(model_forward, dt=0.1, use_rk4=True))
    y, hx = fwd(params, x)
    jax.block_until_ready((y, hx))
    assert y.shape == (B, T, n_actions) and hx.shape == (B, hidden_size)
    assert bool(jnp.all(jnp.isfinite(y))) and bool(jnp.all(jnp.isfinite(hx)))
    print("KERNEL_OK")
</pallas_src>

<mosaic_0001>
module attributes {stable_mosaic.version = 11 : i64} {
  func.func @_matmul_bias_kernel(%arg0: i32, %arg1: memref<1024x128xbf16, #tpu.memory_space<vmem>>, %arg2: memref<128x128xbf16, #tpu.memory_space<vmem>>, %arg3: memref<1x128xf32, #tpu.memory_space<vmem>>, %arg4: memref<1024x128xf32, #tpu.memory_space<vmem>>) attributes {dimension_semantics = [#tpu.dimension_semantics<parallel>], iteration_bounds = array<i64: 2>, scalar_prefetch = 0 : i64, scratch_operands = 0 : i64, tpu.core_type = #tpu.core_type<tc>, window_params = [{transform_indices = @transform_0, window_bounds = array<i64: 1024, 128>}, {pipeline_mode = #tpu.pipeline_mode<synchronous>, transform_indices = @transform_1, window_bounds = array<i64: 128, 128>}, {pipeline_mode = #tpu.pipeline_mode<synchronous>, transform_indices = @transform_2, window_bounds = array<i64: 1, 128>}, {transform_indices = @transform_3, window_bounds = array<i64: 1024, 128>}]} {
    %c0 = arith.constant 0 : index
    %c0_0 = arith.constant 0 : index
    %0 = vector.load %arg1[%c0, %c0_0] : memref<1024x128xbf16, #tpu.memory_space<vmem>>, vector<1024x128xbf16>
    %c0_1 = arith.constant 0 : index
    %c0_2 = arith.constant 0 : index
    %1 = vector.load %arg2[%c0_1, %c0_2] : memref<128x128xbf16, #tpu.memory_space<vmem>>, vector<128x128xbf16>
    %cst = arith.constant dense<0.000000e+00> : vector<1024x128xf32>
    %2 = tpu.matmul %0, %1, %cst {dimension_numbers = #tpu.dot_dimension_numbers<[1], [0], [0], [1], [0, 0, 1, 1], [], []>} : vector<1024x128xbf16>, vector<128x128xbf16>, vector<1024x128xf32> -> vector<1024x128xf32>
    %c0_3 = arith.constant 0 : index
    %c0_4 = arith.constant 0 : index
    %3 = vector.load %arg3[%c0_3, %c0_4] : memref<1x128xf32, #tpu.memory_space<vmem>>, vector<1x128xf32>
    %4 = vector.broadcast %3 : vector<1x128xf32> to vector<1024x128xf32>
    %5 = arith.addf %2, %4 : vector<1024x128xf32>
    %cst_5 = arith.constant 0.000000e+00 : f32
    %6 = vector.broadcast %cst_5 : f32 to vector<1024x128xf32>
    %7 = arith.maximumf %5, %6 : vector<1024x128xf32>
    %c0_6 = arith.constant 0 : index
    %c0_7 = arith.constant 0 : index
    %8 = vector.load %arg4[%c0_6, %c0_7] : memref<1024x128xf32, #tpu.memory_space<vmem>>, vector<1024x128xf32>
    tpu.vector_store %arg4[%c0_6, %c0_7], %7 {strides = array<i32>} : memref<1024x128xf32, #tpu.memory_space<vmem>>, vector<1024x128xf32>,
    return
  }
  func.func @transform_0(%arg0: i32) -> (i32, i32) {
    %c0_i32 = arith.constant 0 : i32
    %c0_i32_0 = arith.constant 0 : i32
    return %arg0, %c0_i32 : i32, i32
  }
  func.func @transform_1(%arg0: i32) -> (i32, i32) {
    %c0_i32 = arith.constant 0 : i32
    %c0_i32_0 = arith.constant 0 : i32
    %c0_i32_1 = arith.constant 0 : i32
    return %c0_i32, %c0_i32_0 : i32, i32
  }
  func.func @transform_2(%arg0: i32) -> (i32, i32) {
    %c0_i32 = arith.constant 0 : i32
    %c0_i32_0 = arith.constant 0 : i32
    %c0_i32_1 = arith.constant 0 : i32
    return %c0_i32, %c0_i32_0 : i32, i32
  }
  func.func @transform_3(%arg0: i32) -> (i32, i32) {
    %c0_i32 = arith.constant 0 : i32
    %c0_i32_0 = arith.constant 0 : i32
    return %arg0, %c0_i32 : i32, i32
  }
}

module attributes {stable_mosaic.version = 11 : i64} {
  func.func @_matmul_bias_kernel(%arg0: i32, %arg1: memref<256x896xbf16, #tpu.memory_space<vmem>>, %arg2: memref<896x128xbf16, #tpu.memory_space<vmem>>, %arg3: memref<1x128xf32, #tpu.memory_space<vmem>>, %arg4: memref<256x128xf32, #tpu.memory_space<vmem>>) attributes {dimension_semantics = [#tpu.dimension_semantics<parallel>], iteration_bounds = array<i64: 2>, scalar_prefetch = 0 : i64, scratch_operands = 0 : i64, tpu.core_type = #tpu.core_type<tc>, window_params = [{transform_indices = @transform_0, window_bounds = array<i64: 256, 896>}, {pipeline_mode = #tpu.pipeline_mode<synchronous>, transform_indices = @transform_1, window_bounds = array<i64: 896, 128>}, {pipeline_mode = #tpu.pipeline_mode<synchronous>, transform_indices = @transform_2, window_bounds = array<i64: 1, 128>}, {transform_indices = @transform_3, window_bounds = array<i64: 256, 128>}]} {
    %c0 = arith.constant 0 : index
    %c0_0 = arith.constant 0 : index
    %0 = vector.load %arg1[%c0, %c0_0] : memref<256x896xbf16, #tpu.memory_space<vmem>>, vector<256x896xbf16>
    %c0_1 = arith.constant 0 : index
    %c0_2 = arith.constant 0 : index
    %1 = vector.load %arg2[%c0_1, %c0_2] : memref<896x128xbf16, #tpu.memory_space<vmem>>, vector<896x128xbf16>
    %cst = arith.constant dense<0.000000e+00> : vector<256x128xf32>
    %2 = tpu.matmul %0, %1, %cst {dimension_numbers = #tpu.dot_dimension_numbers<[1], [0], [0], [1], [0, 0, 1, 1], [], []>} : vector<256x896xbf16>, vector<896x128xbf16>, vector<256x128xf32> -> vector<256x128xf32>
    %c0_3 = arith.constant 0 : index
    %c0_4 = arith.constant 0 : index
    %3 = vector.load %arg3[%c0_3, %c0_4] : memref<1x128xf32, #tpu.memory_space<vmem>>, vector<1x128xf32>
    %4 = vector.broadcast %3 : vector<1x128xf32> to vector<256x128xf32>
    %5 = arith.addf %2, %4 : vector<256x128xf32>
    %cst_5 = arith.constant 0.000000e+00 : f32
    %6 = vector.broadcast %cst_5 : f32 to vector<256x128xf32>
    %7 = arith.maximumf %5, %6 : vector<256x128xf32>
    %c0_6 = arith.constant 0 : index
    %c0_7 = arith.constant 0 : index
    %8 = vector.load %arg4[%c0_6, %c0_7] : memref<256x128xf32, #tpu.memory_space<vmem>>, vector<256x128xf32>
    tpu.vector_store %arg4[%c0_6, %c0_7], %7 {strides = array<i32>} : memref<256x128xf32, #tpu.memory_space<vmem>>, vector<256x128xf32>,
    return
  }
  func.func @transform_0(%arg0: i32) -> (i32, i32) {
    %c0_i32 = arith.constant 0 : i32
    %c0_i32_0 = arith.constant 0 : i32
    return %arg0, %c0_i32 : i32, i32
  }
  func.func @transform_1(%arg0: i32) -> (i32, i32) {
    %c0_i32 = arith.constant 0 : i32
    %c0_i32_0 = arith.constant 0 : i32
    %c0_i32_1 = arith.constant 0 : i32
    return %c0_i32, %c0_i32_0 : i32, i32
  }
  func.func @transform_2(%arg0: i32) -> (i32, i32) {
    %c0_i32 = arith.constant 0 : i32
    %c0_i32_0 = arith.constant 0 : i32
    %c0_i32_1 = arith.constant 0 : i32
    return %c0_i32, %c0_i32_0 : i32, i32
  }
  func.func @transform_3(%arg0: i32) -> (i32, i32) {
    %c0_i32 = arith.constant 0 : i32
    %c0_i32_0 = arith.constant 0 : i32
    return %arg0, %c0_i32 : i32, i32
  }
}

module attributes {stable_mosaic.version = 11 : i64} {
  func.func @_conv3_head_kernel(%arg0: i32, %arg1: memref<128x1664xbf16, #tpu.memory_space<vmem>>, %arg2: memref<1664x128xbf16, #tpu.memory_space<vmem>>, %arg3: memref<1x128xf32, #tpu.memory_space<vmem>>, %arg4: memref<128x128xf32, #tpu.memory_space<vmem>>, %arg5: memref<1x128xf32, #tpu.memory_space<vmem>>, %arg6: memref<8x128xf32, #tpu.memory_space<vmem>>) attributes {dimension_semantics = [#tpu.dimension_semantics<parallel>], iteration_bounds = array<i64: 1>, scalar_prefetch = 0 : i64, scratch_operands = 0 : i64, tpu.core_type = #tpu.core_type<tc>, window_params = [{transform_indices = @transform_0, window_bounds = array<i64: 128, 1664>}, {pipeline_mode = #tpu.pipeline_mode<synchronous>, transform_indices = @transform_1, window_bounds = array<i64: 1664, 128>}, {pipeline_mode = #tpu.pipeline_mode<synchronous>, transform_indices = @transform_2, window_bounds = array<i64: 1, 128>}, {pipeline_mode = #tpu.pipeline_mode<synchronous>, transform_indices = @transform_3, window_bounds = array<i64: 128, 128>}, {pipeline_mode = #tpu.pipeline_mode<synchronous>, transform_indices = @transform_4, window_bounds = array<i64: 1, 128>}, {transform_indices = @transform_5, window_bounds = array<i64: 8, 128>}]} {
    %c0 = arith.constant 0 : index
    %c0_0 = arith.constant 0 : index
    %0 = vector.load %arg1[%c0, %c0_0] : memref<128x1664xbf16, #tpu.memory_space<vmem>>, vector<128x1664xbf16>
    %c0_1 = arith.constant 0 : index
    %c0_2 = arith.constant 0 : index
    %1 = vector.load %arg2[%c0_1, %c0_2] : memref<1664x128xbf16, #tpu.memory_space<vmem>>, vector<1664x128xbf16>
    %cst = arith.constant dense<0.000000e+00> : vector<128x128xf32>
    %2 = tpu.matmul %0, %1, %cst {dimension_numbers = #tpu.dot_dimension_numbers<[1], [0], [0], [1], [0, 0, 1, 1], [], []>} : vector<128x1664xbf16>, vector<1664x128xbf16>, vector<128x128xf32> -> vector<128x128xf32>
    %c0_3 = arith.constant 0 : index
    %c0_4 = arith.constant 0 : index
    %3 = vector.load %arg3[%c0_3, %c0_4] : memref<1x128xf32, #tpu.memory_space<vmem>>, vector<1x128xf32>
    %4 = vector.broadcast %3 : vector<1x128xf32> to vector<128x128xf32>
    %5 = arith.addf %2, %4 : vector<128x128xf32>
    %cst_5 = arith.constant 0.000000e+00 : f32
    %6 = vector.broadcast %cst_5 : f32 to vector<128x128xf32>
    %7 = arith.maximumf %5, %6 : vector<128x128xf32>
    %8 = vector.shape_cast %7 : vector<128x128xf32> to vector<8x16x128xf32>
    %cst_6 = arith.constant dense<0.000000e+00> : vector<8x128xf32>
    %9 = vector.multi_reduction <add>, %8, %cst_6 [1] : vector<8x16x128xf32> to vector<8x128xf32>
    %cst_7 = arith.constant 1.600000e+01 : f32
    %10 = vector.broadcast %cst_7 : f32 to vector<8x128xf32>
    %11 = arith.divf %9, %10 : vector<8x128xf32>
    %c0_8 = arith.constant 0 : index
    %c0_9 = arith.constant 0 : index
    %12 = vector.load %arg4[%c0_8, %c0_9] : memref<128x128xf32, #tpu.memory_space<vmem>>, vector<128x128xf32>
    %cst_10 = arith.constant dense<0.000000e+00> : vector<8x128xf32>
    %13 = tpu.matmul %11, %12, %cst_10 {dimension_numbers = #tpu.dot_dimension_numbers<[1], [0], [0], [1], [0, 0, 1, 1], [], []>} : vector<8x128xf32>, vector<128x128xf32>, vector<8x128xf32> -> vector<8x128xf32>
    %c0_11 = arith.constant 0 : index
    %c0_12 = arith.constant 0 : index
    %14 = vector.load %arg5[%c0_11, %c0_12] : memref<1x128xf32, #tpu.memory_space<vmem>>, vector<1x128xf32>
    %15 = vector.broadcast %14 : vector<1x128xf32> to vector<8x128xf32>
    %16 = arith.addf %13, %15 : vector<8x128xf32>
    %c0_13 = arith.constant 0 : index
    %c0_14 = arith.constant 0 : index
    %17 = vector.load %arg6[%c0_13, %c0_14] : memref<8x128xf32, #tpu.memory_space<vmem>>, vector<8x128xf32>
    tpu.vector_store %arg6[%c0_13, %c0_14], %16 {strides = array<i32>} : memref<8x128xf32, #tpu.memory_space<vmem>>, vector<8x128xf32>,
    return
  }
  func.func @transform_0(%arg0: i32) -> (i32, i32) {
    %c0_i32 = arith.constant 0 : i32
    %c0_i32_0 = arith.constant 0 : i32
    return %arg0, %c0_i32 : i32, i32
  }
  func.func @transform_1(%arg0: i32) -> (i32, i32) {
    %c0_i32 = arith.constant 0 : i32
    %c0_i32_0 = arith.constant 0 : i32
    %c0_i32_1 = arith.constant 0 : i32
    return %c0_i32, %c0_i32_0 : i32, i32
  }
  func.func @transform_2(%arg0: i32) -> (i32, i32) {
    %c0_i32 = arith.constant 0 : i32
    %c0_i32_0 = arith.constant 0 : i32
    %c0_i32_1 = arith.constant 0 : i32
    return %c0_i32, %c0_i32_0 : i32, i32
  }
  func.func @transform_3(%arg0: i32) -> (i32, i32) {
    %c0_i32 = arith.constant 0 : i32
    %c0_i32_0 = arith.constant 0 : i32
    %c0_i32_1 = arith.constant 0 : i32
    return %c0_i32, %c0_i32_0 : i32, i32
  }
  func.func @transform_4(%arg0: i32) -> (i32, i32) {
    %c0_i32 = arith.constant 0 : i32
    %c0_i32_0 = arith.constant 0 : i32
    %c0_i32_1 = arith.constant 0 : i32
    return %c0_i32, %c0_i32_0 : i32, i32
  }
  func.func @transform_5(%arg0: i32) -> (i32, i32) {
    %c0_i32 = arith.constant 0 : i32
    %c0_i32_0 = arith.constant 0 : i32
    return %arg0, %c0_i32 : i32, i32
  }
}

module attributes {stable_mosaic.version = 11 : i64} {
  func.func @_wc_recurrence_kernel(%arg0: i32, %arg1: memref<4x8x128xf32, #tpu.memory_space<vmem>>, %arg2: memref<8x128xf32, #tpu.memory_space<vmem>>, %arg3: memref<128x128xf32, #tpu.memory_space<vmem>>, %arg4: memref<128x128xf32, #tpu.memory_space<vmem>>, %arg5: memref<1x128xf32, #tpu.memory_space<vmem>>, %arg6: memref<4x8x128xf32, #tpu.memory_space<vmem>>, %arg7: memref<8x128xf32, #tpu.memory_space<vmem>>, %arg8: memref<4x8x128xf32, #tpu.memory_space<vmem>>) attributes {dimension_semantics = [#tpu.dimension_semantics<arbitrary>], iteration_bounds = array<i64: 1>, scalar_prefetch = 0 : i64, scratch_operands = 1 : i64, tpu.core_type = #tpu.core_type<tc>, window_params = [{pipeline_mode = #tpu.pipeline_mode<synchronous>, transform_indices = @transform_0, window_bounds = array<i64: 4, 8, 128>}, {pipeline_mode = #tpu.pipeline_mode<synchronous>, transform_indices = @transform_1, window_bounds = array<i64: 8, 128>}, {pipeline_mode = #tpu.pipeline_mode<synchronous>, transform_indices = @transform_2, window_bounds = array<i64: 128, 128>}, {pipeline_mode = #tpu.pipeline_mode<synchronous>, transform_indices = @transform_3, window_bounds = array<i64: 128, 128>}, {pipeline_mode = #tpu.pipeline_mode<synchronous>, transform_indices = @transform_4, window_bounds = array<i64: 1, 128>}, {pipeline_mode = #tpu.pipeline_mode<synchronous>, transform_indices = @transform_5, window_bounds = array<i64: 4, 8, 128>}, {pipeline_mode = #tpu.pipeline_mode<synchronous>, transform_indices = @transform_6, window_bounds = array<i64: 8, 128>}]} {
    %c0 = arith.constant 0 : index
    %c0_0 = arith.constant 0 : index
    %0 = vector.load %arg3[%c0, %c0_0] : memref<128x128xf32, #tpu.memory_space<vmem>>, vector<128x128xf32>
    %c0_1 = arith.constant 0 : index
    %c0_2 = arith.constant 0 : index
    %1 = vector.load %arg2[%c0_1, %c0_2] : memref<8x128xf32, #tpu.memory_space<vmem>>, vector<8x128xf32>
    %c0_i32 = arith.constant 0 : i32
    %2 = arith.index_cast %c0_i32 : i32 to index
    %c0_3 = arith.constant 0 : index
    %c0_4 = arith.constant 0 : index
    %3 = vector.load %arg1[%2, %c0_3, %c0_4] : memref<4x8x128xf32, #tpu.memory_space<vmem>>, vector<1x8x128xf32>
    %4 = vector.shape_cast %3 : vector<1x8x128xf32> to vector<8x128xf32>
    %cst = arith.constant dense<0.000000e+00> : vector<8x128xf32>
    %5 = tpu.matmul %1, %0, %cst {dimension_numbers = #tpu.dot_dimension_numbers<[1], [0], [0], [1], [0, 0, 1, 1], [], []>} : vector<8x128xf32>, vector<128x128xf32>, vector<8x128xf32> -> vector<8x128xf32>
    %cst_5 = arith.constant 0.000000e+00 : f32
    %6 = vector.broadcast %cst_5 : f32 to vector<8x128xf32>
    %7 = arith.subf %6, %1 : vector<8x128xf32>
    %8 = arith.addf %4, %5 : vector<8x128xf32>
    %9 = math.tanh %8 : vector<8x128xf32>
    %10 = arith.addf %7, %9 : vector<8x128xf32>
    %cst_6 = arith.constant 5.000000e-02 : f32
    %11 = vector.broadcast %cst_6 : f32 to vector<8x128xf32>
    %12 = arith.mulf %11, %10 : vector<8x128xf32>
    %13 = arith.addf %1, %12 : vector<8x128xf32>
    %cst_7 = arith.constant dense<0.000000e+00> : vector<8x128xf32>
    %14 = tpu.matmul %13, %0, %cst_7 {dimension_numbers = #tpu.dot_dimension_numbers<[1], [0], [0], [1], [0, 0, 1, 1], [], []>} : vector<8x128xf32>, vector<128x128xf32>, vector<8x128xf32> -> vector<8x128xf32>
    %cst_8 = arith.constant 0.000000e+00 : f32
    %15 = vector.broadcast %cst_8 : f32 to vector<8x128xf32>
    %16 = arith.subf %15, %13 : vector<8x128xf32>
    %17 = arith.addf %4, %14 : vector<8x128xf32>
    %18 = math.tanh %17 : vector<8x128xf32>
    %19 = arith.addf %16, %18 : vector<8x128xf32>
    %cst_9 = arith.constant 5.000000e-02 : f32
    %20 = vector.broadcast %cst_9 : f32 to vector<8x128xf32>
    %21 = arith.mulf %20, %19 : vector<8x128xf32>
    %22 = arith.addf %1, %21 : vector<8x128xf32>
    %cst_10 = arith.constant dense<0.000000e+00> : vector<8x128xf32>
    %23 = tpu.matmul %22, %0, %cst_10 {dimension_numbers = #tpu.dot_dimension_numbers<[1], [0], [0], [1], [0, 0, 1, 1], [], []>} : vector<8x128xf32>, vector<128x128xf32>, vector<8x128xf32> -> vector<8x128xf32>
    %cst_11 = arith.constant 0.000000e+00 : f32
    %24 = vector.broadcast %cst_11 : f32 to vector<8x128xf32>
    %25 = arith.subf %24, %22 : vector<8x128xf32>
    %26 = arith.addf %4, %23 : vector<8x128xf32>
    %27 = math.tanh %26 : vector<8x128xf32>
    %28 = arith.addf %25, %27 : vector<8x128xf32>
    %cst_12 = arith.constant 1.000000e-01 : f32
    %29 = vector.broadcast %cst_12 : f32 to vector<8x128xf32>
    %30 = arith.mulf %29, %28 : vector<8x128xf32>
    %31 = arith.addf %1, %30 : vector<8x128xf32>
    %cst_13 = arith.constant dense<0.000000e+00> : vector<8x128xf32>
    %32 = tpu.matmul %31, %0, %cst_13 {dimension_numbers = #tpu.dot_dimension_numbers<[1], [0], [0], [1], [0, 0, 1, 1], [], []>} : vector<8x128xf32>, vector<128x128xf32>, vector<8x128xf32> -> vector<8x128xf32>
    %cst_14 = arith.constant 0.000000e+00 : f32
    %33 = vector.broadcast %cst_14 : f32 to vector<8x128xf32>
    %34 = arith.subf %33, %31 : vector<8x128xf32>
    %35 = arith.addf %4, %32 : vector<8x128xf32>
    %36 = math.tanh %35 : vector<8x128xf32>
    %37 = arith.addf %34, %36 : vector<8x128xf32>
    %cst_15 = arith.constant 2.000000e+00 : f32
    %38 = vector.broadcast %cst_15 : f32 to vector<8x128xf32>
    %39 = arith.mulf %38, %19 : vector<8x128xf32>
    %40 = arith.addf %10, %39 : vector<8x128xf32>
    %cst_16 = arith.constant 2.000000e+00 : f32
    %41 = vector.broadcast %cst_16 : f32 to vector<8x128xf32>
    %42 = arith.mulf %41, %28 : vector<8x128xf32>
    %43 = arith.addf %40, %42 : vector<8x128xf32>
    %44 = arith.addf %43, %37 : vector<8x128xf32>
    %cst_17 = arith.constant 0.0166666675 : f32
    %45 = vector.broadcast %cst_17 : f32 to vector<8x128xf32>
    %46 = arith.mulf %45, %44 : vector<8x128xf32>
    %47 = arith.addf %1, %46 : vector<8x128xf32>
    %48 = arith.index_cast %c0_i32 : i32 to index
    %c0_18 = arith.constant 0 : index
    %c0_19 = arith.constant 0 : index
    %49 = vector.load %arg8[%48, %c0_18, %c0_19] : memref<4x8x128xf32, #tpu.memory_space<vmem>>, vector<1x8x128xf32>
    %50 = vector.shape_cast %49 : vector<1x8x128xf32> to vector<8x128xf32>
    %51 = vector.shape_cast %47 : vector<8x128xf32> to vector<1x8x128xf32>
    tpu.vector_store %arg8[%48, %c0_18, %c0_19], %51 {strides = array<i32>} : memref<4x8x128xf32, #tpu.memory_space<vmem>>, vector<1x8x128xf32>,
    %c1_i32 = arith.constant 1 : i32
    %52 = arith.index_cast %c1_i32 : i32 to index
    %c0_20 = arith.constant 0 : index
    %c0_21 = arith.constant 0 : index
    %53 = vector.load %arg1[%52, %c0_20, %c0_21] : memref<4x8x128xf32, #tpu.memory_space<vmem>>, vector<1x8x128xf32>
    %54 = vector.shape_cast %53 : vector<1x8x128xf32> to vector<8x128xf32>
    %cst_22 = arith.constant dense<0.000000e+00> : vector<8x128xf32>
    %55 = tpu.matmul %47, %0, %cst_22 {dimension_numbers = #tpu.dot_dimension_numbers<[1], [0], [0], [1], [0, 0, 1, 1], [], []>} : vector<8x128xf32>, vector<128x128xf32>, vector<8x128xf32> -> vector<8x128xf32>
    %cst_23 = arith.constant 0.000000e+00 : f32
    %56 = vector.broadcast %cst_23 : f32 to vector<8x128xf32>
    %57 = arith.subf %56, %47 : vector<8x128xf32>
    %58 = arith.addf %54, %55 : vector<8x128xf32>
    %59 = math.tanh %58 : vector<8x128xf32>
    %60 = arith.addf %57, %59 : vector<8x128xf32>
    %cst_24 = arith.constant 5.000000e-02 : f32
    %61 = vector.broadcast %cst_24 : f32 to vector<8x128xf32>
    %62 = arith.mulf %61, %60 : vector<8x128xf32>
    %63 = arith.addf %47, %62 : vector<8x128xf32>
    %cst_25 = arith.constant dense<0.000000e+00> : vector<8x128xf32>
    %64 = tpu.matmul %63, %0, %cst_25 {dimension_numbers = #tpu.dot_dimension_numbers<[1], [0], [0], [1], [0, 0, 1, 1], [], []>} : vector<8x128xf32>, vector<128x128xf32>, vector<8x128xf32> -> vector<8x128xf32>
    %cst_26 = arith.constant 0.000000e+00 : f32
    %65 = vector.broadcast %cst_26 : f32 to vector<8x128xf32>
    %66 = arith.subf %65, %63 : vector<8x128xf32>
    %67 = arith.addf %54, %64 : vector<8x128xf32>
    %68 = math.tanh %67 : vector<8x128xf32>
    %69 = arith.addf %66, %68 : vector<8x128xf32>
    %cst_27 = arith.constant 5.000000e-02 : f32
    %70 = vector.broadcast %cst_27 : f32 to vector<8x128xf32>
    %71 = arith.mulf %70, %69 : vector<8x128xf32>
    %72 = arith.addf %47, %71 : vector<8x128xf32>
    %cst_28 = arith.constant dense<0.000000e+00> : vector<8x128xf32>
    %73 = tpu.matmul %72, %0, %cst_28 {dimension_numbers = #tpu.dot_dimension_numbers<[1], [0], [0], [1], [0, 0, 1, 1], [], []>} : vector<8x128xf32>, vector<128x128xf32>, vector<8x128xf32> -> vector<8x128xf32>
    %cst_29 = arith.constant 0.000000e+00 : f32
    %74 = vector.broadcast %cst_29 : f32 to vector<8x128xf32>
    %75 = arith.subf %74, %72 : vector<8x128xf32>
    %76 = arith.addf %54, %73 : vector<8x128xf32>
    %77 = math.tanh %76 : vector<8x128xf32>
    %78 = arith.addf %75, %77 : vector<8x128xf32>
    %cst_30 = arith.constant 1.000000e-01 : f32
    %79 = vector.broadcast %cst_30 : f32 to vector<8x128xf32>
    %80 = arith.mulf %79, %78 : vector<8x128xf32>
    %81 = arith.addf %47, %80 : vector<8x128xf32>
    %cst_31 = arith.constant dense<0.000000e+00> : vector<8x128xf32>
    %82 = tpu.matmul %81, %0, %cst_31 {dimension_numbers = #tpu.dot_dimension_numbers<[1], [0], [0], [1], [0, 0, 1, 1], [], []>} : vector<8x128xf32>, vector<128x128xf32>, vector<8x128xf32> -> vector<8x128xf32>
    %cst_32 = arith.constant 0.000000e+00 : f32
    %83 = vector.broadcast %cst_32 : f32 to vector<8x128xf32>
    %84 = arith.subf %83, %81 : vector<8x128xf32>
    %85 = arith.addf %54, %82 : vector<8x128xf32>
    %86 = math.tanh %85 : vector<8x128xf32>
    %87 = arith.addf %84, %86 : vector<8x128xf32>
    %cst_33 = arith.constant 2.000000e+00 : f32
    %88 = vector.broadcast %cst_33 : f32 to vector<8x128xf32>
    %89 = arith.mulf %88, %69 : vector<8x128xf32>
    %90 = arith.addf %60, %89 : vector<8x128xf32>
    %cst_34 = arith.constant 2.000000e+00 : f32
    %91 = vector.broadcast %cst_34 : f32 to vector<8x128xf32>
    %92 = arith.mulf %91, %78 : vector<8x128xf32>
    %93 = arith.addf %90, %92 : vector<8x128xf32>
    %94 = arith.addf %93, %87 : vector<8x128xf32>
    %cst_35 = arith.constant 0.0166666675 : f32
    %95 = vector.broadcast %cst_35 : f32 to vector<8x128xf32>
    %96 = arith.mulf %95, %94 : vector<8x128xf32>
    %97 = arith.addf %47, %96 : vector<8x128xf32>
    %98 = arith.index_cast %c1_i32 : i32 to index
    %c0_36 = arith.constant 0 : index
    %c0_37 = arith.constant 0 : index
    %99 = vector.load %arg8[%98, %c0_36, %c0_37] : memref<4x8x128xf32, #tpu.memory_space<vmem>>, vector<1x8x128xf32>
    %100 = vector.shape_cast %99 : vector<1x8x128xf32> to vector<8x128xf32>
    %101 = vector.shape_cast %97 : vector<8x128xf32> to vector<1x8x128xf32>
    tpu.vector_store %arg8[%98, %c0_36, %c0_37], %101 {strides = array<i32>} : memref<4x8x128xf32, #tpu.memory_space<vmem>>, vector<1x8x128xf32>,
    %c2_i32 = arith.constant 2 : i32
    %102 = arith.index_cast %c2_i32 : i32 to index
    %c0_38 = arith.constant 0 : index
    %c0_39 = arith.constant 0 : index
    %103 = vector.load %arg1[%102, %c0_38, %c0_39] : memref<4x8x128xf32, #tpu.memory_space<vmem>>, vector<1x8x128xf32>
    %104 = vector.shape_cast %103 : vector<1x8x128xf32> to vector<8x128xf32>
    %cst_40 = arith.constant dense<0.000000e+00> : vector<8x128xf32>
    %105 = tpu.matmul %97, %0, %cst_40 {dimension_numbers = #tpu.dot_dimension_numbers<[1], [0], [0], [1], [0, 0, 1, 1], [], []>} : vector<8x128xf32>, vector<128x128xf32>, vector<8x128xf32> -> vector<8x128xf32>
    %cst_41 = arith.constant 0.000000e+00 : f32
    %106 = vector.broadcast %cst_41 : f32 to vector<8x128xf32>
    %107 = arith.subf %106, %97 : vector<8x128xf32>
    %108 = arith.addf %104, %105 : vector<8x128xf32>
    %109 = math.tanh %108 : vector<8x128xf32>
    %110 = arith.addf %107, %109 : vector<8x128xf32>
    %cst_42 = arith.constant 5.000000e-02 : f32
    %111 = vector.broadcast %cst_42 : f32 to vector<8x128xf32>
    %112 = arith.mulf %111, %110 : vector<8x128xf32>
    %113 = arith.addf %97, %112 : vector<8x128xf32>
    %cst_43 = arith.constant dense<0.000000e+00> : vector<8x128xf32>
    %114 = tpu.matmul %113, %0, %cst_43 {dimension_numbers = #tpu.dot_dimension_numbers<[1], [0], [0], [1], [0, 0, 1, 1], [], []>} : vector<8x128xf32>, vector<128x128xf32>, vector<8x128xf32> -> vector<8x128xf32>
    %cst_44 = arith.constant 0.000000e+00 : f32
    %115 = vector.broadcast %cst_44 : f32 to vector<8x128xf32>
    %116 = arith.subf %115, %113 : vector<8x128xf32>
    %117 = arith.addf %104, %114 : vector<8x128xf32>
    %118 = math.tanh %117 : vector<8x128xf32>
    %119 = arith.addf %116, %118 : vector<8x128xf32>
    %cst_45 = arith.constant 5.000000e-02 : f32
    %120 = vector.broadcast %cst_45 : f32 to vector<8x128xf32>
    %121 = arith.mulf %120, %119 : vector<8x128xf32>
    %122 = arith.addf %97, %121 : vector<8x128xf32>
    %cst_46 = arith.constant dense<0.000000e+00> : vector<8x128xf32>
    %123 = tpu.matmul %122, %0, %cst_46 {dimension_numbers = #tpu.dot_dimension_numbers<[1], [0], [0], [1], [0, 0, 1, 1], [], []>} : vector<8x128xf32>, vector<128x128xf32>, vector<8x128xf32> -> vector<8x128xf32>
    %cst_47 = arith.constant 0.000000e+00 : f32
    %124 = vector.broadcast %cst_47 : f32 to vector<8x128xf32>
    %125 = arith.subf %124, %122 : vector<8x128xf32>
    %126 = arith.addf %104, %123 : vector<8x128xf32>
    %127 = math.tanh %126 : vector<8x128xf32>
    %128 = arith.addf %125, %127 : vector<8x128xf32>
    %cst_48 = arith.constant 1.000000e-01 : f32
    %129 = vector.broadcast %cst_48 : f32 to vector<8x128xf32>
    %130 = arith.mulf %129, %128 : vector<8x128xf32>
    %131 = arith.addf %97, %130 : vector<8x128xf32>
    %cst_49 = arith.constant dense<0.000000e+00> : vector<8x128xf32>
    %132 = tpu.matmul %131, %0, %cst_49 {dimension_numbers = #tpu.dot_dimension_numbers<[1], [0], [0], [1], [0, 0, 1, 1], [], []>} : vector<8x128xf32>, vector<128x128xf32>, vector<8x128xf32> -> vector<8x128xf32>
    %cst_50 = arith.constant 0.000000e+00 : f32
    %133 = vector.broadcast %cst_50 : f32 to vector<8x128xf32>
    %134 = arith.subf %133, %131 : vector<8x128xf32>
    %135 = arith.addf %104, %132 : vector<8x128xf32>
    %136 = math.tanh %135 : vector<8x128xf32>
    %137 = arith.addf %134, %136 : vector<8x128xf32>
    %cst_51 = arith.constant 2.000000e+00 : f32
    %138 = vector.broadcast %cst_51 : f32 to vector<8x128xf32>
    %139 = arith.mulf %138, %119 : vector<8x128xf32>
    %140 = arith.addf %110, %139 : vector<8x128xf32>
    %cst_52 = arith.constant 2.000000e+00 : f32
    %141 = vector.broadcast %cst_52 : f32 to vector<8x128xf32>
    %142 = arith.mulf %141, %128 : vector<8x128xf32>
    %143 = arith.addf %140, %142 : vector<8x128xf32>
    %144 = arith.addf %143, %137 : vector<8x128xf32>
    %cst_53 = arith.constant 0.0166666675 : f32
    %145 = vector.broadcast %cst_53 : f32 to vector<8x128xf32>
    %146 = arith.mulf %145, %144 : vector<8x128xf32>
    %147 = arith.addf %97, %146 : vector<8x128xf32>
    %148 = arith.index_cast %c2_i32 : i32 to index
    %c0_54 = arith.constant 0 : index
    %c0_55 = arith.constant 0 : index
    %149 = vector.load %arg8[%148, %c0_54, %c0_55] : memref<4x8x128xf32, #tpu.memory_space<vmem>>, vector<1x8x128xf32>
    %150 = vector.shape_cast %149 : vector<1x8x128xf32> to vector<8x128xf32>
    %151 = vector.shape_cast %147 : vector<8x128xf32> to vector<1x8x128xf32>
    tpu.vector_store %arg8[%148, %c0_54, %c0_55], %151 {strides = array<i32>} : memref<4x8x128xf32, #tpu.memory_space<vmem>>, vector<1x8x128xf32>,
    %c3_i32 = arith.constant 3 : i32
    %152 = arith.index_cast %c3_i32 : i32 to index
    %c0_56 = arith.constant 0 : index
    %c0_57 = arith.constant 0 : index
    %153 = vector.load %arg1[%152, %c0_56, %c0_57] : memref<4x8x128xf32, #tpu.memory_space<vmem>>, vector<1x8x128xf32>
    %154 = vector.shape_cast %153 : vector<1x8x128xf32> to vector<8x128xf32>
    %cst_58 = arith.constant dense<0.000000e+00> : vector<8x128xf32>
    %155 = tpu.matmul %147, %0, %cst_58 {dimension_numbers = #tpu.dot_dimension_numbers<[1], [0], [0], [1], [0, 0, 1, 1], [], []>} : vector<8x128xf32>, vector<128x128xf32>, vector<8x128xf32> -> vector<8x128xf32>
    %cst_59 = arith.constant 0.000000e+00 : f32
    %156 = vector.broadcast %cst_59 : f32 to vector<8x128xf32>
    %157 = arith.subf %156, %147 : vector<8x128xf32>
    %158 = arith.addf %154, %155 : vector<8x128xf32>
    %159 = math.tanh %158 : vector<8x128xf32>
    %160 = arith.addf %157, %159 : vector<8x128xf32>
    %cst_60 = arith.constant 5.000000e-02 : f32
    %161 = vector.broadcast %cst_60 : f32 to vector<8x128xf32>
    %162 = arith.mulf %161, %160 : vector<8x128xf32>
    %163 = arith.addf %147, %162 : vector<8x128xf32>
    %cst_61 = arith.constant dense<0.000000e+00> : vector<8x128xf32>
    %164 = tpu.matmul %163, %0, %cst_61 {dimension_numbers = #tpu.dot_dimension_numbers<[1], [0], [0], [1], [0, 0, 1, 1], [], []>} : vector<8x128xf32>, vector<128x128xf32>, vector<8x128xf32> -> vector<8x128xf32>
    %cst_62 = arith.constant 0.000000e+00 : f32
    %165 = vector.broadcast %cst_62 : f32 to vector<8x128xf32>
    %166 = arith.subf %165, %163 : vector<8x128xf32>
    %167 = arith.addf %154, %164 : vector<8x128xf32>
    %168 = math.tanh %167 : vector<8x128xf32>
    %169 = arith.addf %166, %168 : vector<8x128xf32>
    %cst_63 = arith.constant 5.000000e-02 : f32
    %170 = vector.broadcast %cst_63 : f32 to vector<8x128xf32>
    %171 = arith.mulf %170, %169 : vector<8x128xf32>
    %172 = arith.addf %147, %171 : vector<8x128xf32>
    %cst_64 = arith.constant dense<0.000000e+00> : vector<8x128xf32>
    %173 = tpu.matmul %172, %0, %cst_64 {dimension_numbers = #tpu.dot_dimension_numbers<[1], [0], [0], [1], [0, 0, 1, 1], [], []>} : vector<8x128xf32>, vector<128x128xf32>, vector<8x128xf32> -> vector<8x128xf32>
    %cst_65 = arith.constant 0.000000e+00 : f32
    %174 = vector.broadcast %cst_65 : f32 to vector<8x128xf32>
    %175 = arith.subf %174, %172 : vector<8x128xf32>
    %176 = arith.addf %154, %173 : vector<8x128xf32>
    %177 = math.tanh %176 : vector<8x128xf32>
    %178 = arith.addf %175, %177 : vector<8x128xf32>
    %cst_66 = arith.constant 1.000000e-01 : f32
    %179 = vector.broadcast %cst_66 : f32 to vector<8x128xf32>
    %180 = arith.mulf %179, %178 : vector<8x128xf32>
    %181 = arith.addf %147, %180 : vector<8x128xf32>
    %cst_67 = arith.constant dense<0.000000e+00> : vector<8x128xf32>
    %182 = tpu.matmul %181, %0, %cst_67 {dimension_numbers = #tpu.dot_dimension_numbers<[1], [0], [0], [1], [0, 0, 1, 1], [], []>} : vector<8x128xf32>, vector<128x128xf32>, vector<8x128xf32> -> vector<8x128xf32>
    %cst_68 = arith.constant 0.000000e+00 : f32
    %183 = vector.broadcast %cst_68 : f32 to vector<8x128xf32>
    %184 = arith.subf %183, %181 : vector<8x128xf32>
    %185 = arith.addf %154, %182 : vector<8x128xf32>
    %186 = math.tanh %185 : vector<8x128xf32>
    %187 = arith.addf %184, %186 : vector<8x128xf32>
    %cst_69 = arith.constant 2.000000e+00 : f32
    %188 = vector.broadcast %cst_69 : f32 to vector<8x128xf32>
    %189 = arith.mulf %188, %169 : vector<8x128xf32>
    %190 = arith.addf %160, %189 : vector<8x128xf32>
    %cst_70 = arith.constant 2.000000e+00 : f32
    %191 = vector.broadcast %cst_70 : f32 to vector<8x128xf32>
    %192 = arith.mulf %191, %178 : vector<8x128xf32>
    %193 = arith.addf %190, %192 : vector<8x128xf32>
    %194 = arith.addf %193, %187 : vector<8x128xf32>
    %cst_71 = arith.constant 0.0166666675 : f32
    %195 = vector.broadcast %cst_71 : f32 to vector<8x128xf32>
    %196 = arith.mulf %195, %194 : vector<8x128xf32>
    %197 = arith.addf %147, %196 : vector<8x128xf32>
    %198 = arith.index_cast %c3_i32 : i32 to index
    %c0_72 = arith.constant 0 : index
    %c0_73 = arith.constant 0 : index
    %199 = vector.load %arg8[%198, %c0_72, %c0_73] : memref<4x8x128xf32, #tpu.memory_space<vmem>>, vector<1x8x128xf32>
    %200 = vector.shape_cast %199 : vector<1x8x128xf32> to vector<8x128xf32>
    %201 = vector.shape_cast %197 : vector<8x128xf32> to vector<1x8x128xf32>
    tpu.vector_store %arg8[%198, %c0_72, %c0_73], %201 {strides = array<i32>} : memref<4x8x128xf32, #tpu.memory_space<vmem>>, vector<1x8x128xf32>,
    %c4_i32 = arith.constant 4 : i32
    %c0_74 = arith.constant 0 : index
    %c0_75 = arith.constant 0 : index
    %202 = vector.load %arg7[%c0_74, %c0_75] : memref<8x128xf32, #tpu.memory_space<vmem>>, vector<8x128xf32>
    tpu.vector_store %arg7[%c0_74, %c0_75], %197 {strides = array<i32>} : memref<8x128xf32, #tpu.memory_space<vmem>>, vector<8x128xf32>,
    %c0_76 = arith.constant 0 : index
    %c0_77 = arith.constant 0 : index
    %c0_78 = arith.constant 0 : index
    %203 = vector.load %arg8[%c0_76, %c0_77, %c0_78] : memref<4x8x128xf32, #tpu.memory_space<vmem>>, vector<4x8x128xf32>
    %204 = vector.shape_cast %203 : vector<4x8x128xf32> to vector<32x128xf32>
    %c0_79 = arith.constant 0 : index
    %c0_80 = arith.constant 0 : index
    %205 = vector.load %arg4[%c0_79, %c0_80] : memref<128x128xf32, #tpu.memory_space<vmem>>, vector<128x128xf32>
    %cst_81 = arith.constant dense<0.000000e+00> : vector<32x128xf32>
    %206 = tpu.matmul %204, %205, %cst_81 {dimension_numbers = #tpu.dot_dimension_numbers<[1], [0], [0], [1], [0, 0, 1, 1], [], []>} : vector<32x128xf32>, vector<128x128xf32>, vector<32x128xf32> -> vector<32x128xf32>
    %c0_82 = arith.constant 0 : index
    %c0_83 = arith.constant 0 : index
    %207 = vector.load %arg5[%c0_82, %c0_83] : memref<1x128xf32, #tpu.memory_space<vmem>>, vector<1x128xf32>
    %208 = vector.broadcast %207 : vector<1x128xf32> to vector<32x128xf32>
    %209 = arith.addf %206, %208 : vector<32x128xf32>
    %210 = vector.shape_cast %209 : vector<32x128xf32> to vector<4x8x128xf32>
    %c0_84 = arith.constant 0 : index
    %c0_85 = arith.constant 0 : index
    %c0_86 = arith.constant 0 : index
    %211 = vector.load %arg6[%c0_84, %c0_85, %c0_86] : memref<4x8x128xf32, #tpu.memory_space<vmem>>, vector<4x8x128xf32>
    tpu.vector_store %arg6[%c0_84, %c0_85, %c0_86], %210 {strides = array<i32>} : memref<4x8x128xf32, #tpu.memory_space<vmem>>, vector<4x8x128xf32>,
    return
  }
  func.func @transform_0(%arg0: i32) -> (i32, i32, i32) {
    %c0_i32 = arith.constant 0 : i32
    %c0_i32_0 = arith.constant 0 : i32
    %c0_i32_1 = arith.constant 0 : i32
    %c0_i32_2 = arith.constant 0 : i32
    return %c0_i32, %c0_i32_0, %c0_i32_1 : i32, i32, i32
  }
  func.func @transform_1(%arg0: i32) -> (i32, i32) {
    %c0_i32 = arith.constant 0 : i32
    %c0_i32_0 = arith.constant 0 : i32
    %c0_i32_1 = arith.constant 0 : i32
    return %c0_i32, %c0_i32_0 : i32, i32
  }
  func.func @transform_2(%arg0: i32) -> (i32, i32) {
    %c0_i32 = arith.constant 0 : i32
    %c0_i32_0 = arith.constant 0 : i32
    %c0_i32_1 = arith.constant 0 : i32
    return %c0_i32, %c0_i32_0 : i32, i32
  }
  func.func @transform_3(%arg0: i32) -> (i32, i32) {
    %c0_i32 = arith.constant 0 : i32
    %c0_i32_0 = arith.constant 0 : i32
    %c0_i32_1 = arith.constant 0 : i32
    return %c0_i32, %c0_i32_0 : i32, i32
  }
  func.func @transform_4(%arg0: i32) -> (i32, i32) {
    %c0_i32 = arith.constant 0 : i32
    %c0_i32_0 = arith.constant 0 : i32
    %c0_i32_1 = arith.constant 0 : i32
    return %c0_i32, %c0_i32_0 : i32, i32
  }
  func.func @transform_5(%arg0: i32) -> (i32, i32, i32) {
    %c0_i32 = arith.constant 0 : i32
    %c0_i32_0 = arith.constant 0 : i32
    %c0_i32_1 = arith.constant 0 : i32
    %c0_i32_2 = arith.constant 0 : i32
    return %c0_i32, %c0_i32_0, %c0_i32_1 : i32, i32, i32
  }
  func.func @transform_6(%arg0: i32) -> (i32, i32) {
    %c0_i32 = arith.constant 0 : i32
    %c0_i32_0 = arith.constant 0 : i32
    %c0_i32_1 = arith.constant 0 : i32
    return %c0_i32, %c0_i32_0 : i32, i32
  }
}

</mosaic_0001>

<llo_original>
// kernel: model_forward.4
$region0: #{model_forward.4}
  #allocation0 [shape = 'u32[]', space=smem, size = 0x4, offset = 0x4, fixed_abs, tag = 'smem constant byte address 0x4 - core index']
  #allocation1 [shape = 'u32[144,128]{1,0:T(1,128)}', space=vmem, size = 0x12000, scoped, tag = 'internal scratch']
  %s0 = inlined_call_operand.vmem [shape: bf16[2048,128], index: 0, kind: input, shape index: {}]
  %s1 = inlined_call_operand.vmem [shape: bf16[128,128], index: 1, kind: input, shape index: {}]
  %s2 = inlined_call_operand.vmem [shape: f32[1,128], index: 2, kind: input, shape index: {}]
  %s3 = inlined_call_operand.vmem [shape: f32[2048,128], index: 3, kind: output, shape index: {}]
  %s4 = sld [smem:[#allocation0]]
  $region45: #{model_forward.4} parent=0
    _
  %s6 = ssub.s32 1, %s4
  %s7 = scalar_select 0, %s6, %s4
  loop: start=0, step=1, limit=4
  $region2: #{model_forward.4} parent=0 // loop_pre_header
    _
  $region3: #{model_forward.4} parent=0 // loop_header
    %s9 = sphi 0, %s13
    %p10 = scmp.ge.s32.totalorder %s9, 4
    %s19 = sphi 0, %s21
    %s22 = sphi 0, %s19
    %s23 = sphi 0, %s22
    %s39 = sphi 0, %s23
    %s43 = sphi 0, %s43
    %s45 = sphi 0, %s43
    %s46 = sphi 0, %s45
    %s60 = sphi 0, %s46
    %s64 = sphi 0, %s64
    %s66 = sphi 0, %s64
    %s67 = sphi 0, %s66
    %s81 = sphi 0, %s67
    %s87 = sphi 0, %s89
    %s90 = sphi 0, %s87
    %s91 = sphi 0, %s90
    %s107 = sphi 0, %s91
  $region4: #{model_forward.4} parent=0 // loop_header_branch
    %12 = sbr.rel (%p10) target = $region8
  $region5: #{model_forward.4} parent=0 // loop_body
    %s14 = ssub.s32 %s9, 1
    %s15 = ssub.s32 %s9, 2
    %s16 = sadd.s32 %s9, 1
    %s17 = ssub.s32 %s9, %s16
    %p18 = scmp.eq.s32.totalorder %s17, 0
    %s20 = sadd.s32 %s19, 1
    %s21 = scalar_select %p18, %s19, %s20
    %p24 = pneg %p18
    %p25 = scmp.eq.s32.totalorder %s9, 1
    %p26 = por %p24, %p25
    %p27 = scmp.ne.s32.totalorder %s19, %s22
    %p28 = scmp.eq.s32.totalorder %s9, 0
    %p29 = por %p27, %p28
    %p30 = scmp.ne.s32.totalorder %s19, %s22
    %p31 = scmp.eq.s32.totalorder %s14, 1
    %p32 = por %p30, %p31
    %p33 = scmp.ne.s32.totalorder %s22, %s23
    %p34 = scmp.eq.s32.totalorder %s14, 0
    %p35 = por %p33, %p34
    %p36 = scmp.ne.s32.totalorder %s22, %s23
    %p37 = scmp.eq.s32.totalorder %s15, 1
    %p38 = por %p36, %p37
    %p40 = scmp.ne.s32.totalorder %s23, %s39
    %p41 = scmp.eq.s32.totalorder %s15, 0
    %p42 = por %p40, %p41
    %s44 = sadd.s32 %s43, 1
    %p47 = scmp.eq.s32.totalorder %s9, 1
    %p48 = scmp.ne.s32.totalorder %s43, %s45
    %p49 = scmp.eq.s32.totalorder %s9, 0
    %p50 = por %p48, %p49
    %p51 = scmp.ne.s32.totalorder %s43, %s45
    %p52 = scmp.eq.s32.totalorder %s14, 1
    %p53 = por %p51, %p52
    %p54 = scmp.ne.s32.totalorder %s45, %s46
    %p55 = scmp.eq.s32.totalorder %s14, 0
    %p56 = por %p54, %p55
    %p57 = scmp.ne.s32.totalorder %s45, %s46
    %p58 = scmp.eq.s32.totalorder %s15, 1
    %p59 = por %p57, %p58
    %p61 = scmp.ne.s32.totalorder %s46, %s60
    %p62 = scmp.eq.s32.totalorder %s15, 0
    %p63 = por %p61, %p62
    %s65 = sadd.s32 %s64, 1
    %p68 = scmp.eq.s32.totalorder %s9, 1
    %p69 = scmp.ne.s32.totalorder %s64, %s66
    %p70 = scmp.eq.s32.totalorder %s9, 0
    %p71 = por %p69, %p70
    %p72 = scmp.ne.s32.totalorder %s64, %s66
    %p73 = scmp.eq.s32.totalorder %s14, 1
    %p74 = por %p72, %p73
    %p75 = scmp.ne.s32.totalorder %s66, %s67
    %p76 = scmp.eq.s32.totalorder %s14, 0
    %p77 = por %p75, %p76
    %p78 = scmp.ne.s32.totalorder %s66, %s67
    %p79 = scmp.eq.s32.totalorder %s15, 1
    %p80 = por %p78, %p79
    %p82 = scmp.ne.s32.totalorder %s67, %s81
    %p83 = scmp.eq.s32.totalorder %s15, 0
    %p84 = por %p82, %p83
    %s85 = ssub.s32 %s9, %s16
    %p86 = scmp.eq.s32.totalorder %s85, 0
    %s88 = sadd.s32 %s87, 1
    %s89 = scalar_select %p86, %s87, %s88
    %p92 = pneg %p86
    %p93 = scmp.eq.s32.totalorder %s9, 1
    %p94 = por %p92, %p93
    %p95 = scmp.ne.s32.totalorder %s87, %s90
    %p96 = scmp.eq.s32.totalorder %s9, 0
    %p97 = por %p95, %p96
    %p98 = scmp.ne.s32.totalorder %s87, %s90
    %p99 = scmp.eq.s32.totalorder %s14, 1
    %p100 = por %p98, %p99
    %p101 = scmp.ne.s32.totalorder %s90, %s91
    %p102 = scmp.eq.s32.totalorder %s14, 0
    %p103 = por %p101, %p102
    %p104 = scmp.ne.s32.totalorder %s90, %s91
    %p105 = scmp.eq.s32.totalorder %s15, 1
    %p106 = por %p104, %p105
    %p108 = scmp.ne.s32.totalorder %s91, %s107
    %p109 = scmp.eq.s32.totalorder %s15, 0
    %p110 = por %p108, %p109
    %p111 = scmp.le.s32.totalorder 1, %s9
    %p112 = scmp.lt.s32.totalorder %s9, 3
    %p113 = pnand %p111, %p112
    %p114 = pneg %p113
    // Predicated region
    $region9: #{model_forward.4} parent=5 // pred_check
      _
    $region10: #{model_forward.4} parent=5 // pred_check_branch
      %116 = sbr.rel (%p113) target = $region12
    $region11: #{model_forward.4} parent=5 // pred_region
      %s117 = ssub.s32 %s9, 1
      // Predicated region
      $region13: #{model_forward.4} parent=11 // pred_check
        %p118 = pneg %p56
      $region14: #{model_forward.4} parent=11 // pred_check_branch
        %120 = sbr.rel (%p118) target = $region16
      $region15: #{model_forward.4} parent=11 // pred_region
        _
      $region16: #{model_forward.4} parent=11 // pred_fallthru
        _
      // Predicated region
      $region17: #{model_forward.4} parent=11 // pred_check
        %p121 = pneg %p77
      $region18: #{model_forward.4} parent=11 // pred_check_branch
        %123 = sbr.rel (%p121) target = $region20
      $region19: #{model_forward.4} parent=11 // pred_region
        _
      $region20: #{model_forward.4} parent=11 // pred_fallthru
        _
    $region12: #{model_forward.4} parent=5 // pred_fallthru
      _
    %p124 = scmp.lt.s32.totalorder %s9, 2
    // Predicated region
    $region21: #{model_forward.4} parent=5 // pred_check
      %p125 = pneg %p124
    $region22: #{model_forward.4} parent=5 // pred_check_branch
      %127 = sbr.rel (%p125) target = $region24
    $region23: #{model_forward.4} parent=5 // pred_region
      // Predicated region
      $region25: #{model_forward.4} parent=23 // pred_check
        %p128 = pneg %p29
      $region26: #{model_forward.4} parent=23 // pred_check_branch
        %130 = sbr.rel (%p128) target = $region28
      $region27: #{model_forward.4} parent=23 // pred_region
        %s131 = smul.u32 128, %s9
        %p132 = scmp.lt.s32.totalorder %s131, 255
        %s133 = scalar_select %p132, %s131, 255
        %s134 = smul.addr %s133, 4
        %s135 = scalar_lea.vmem %s0, %s134
        %s136 = smul.u32 128, %s9
      $region28: #{model_forward.4} parent=23 // pred_fallthru
        _
    $region24: #{model_forward.4} parent=5 // pred_fallthru
      _
    %p137 = scmp.le.s32.totalorder 1, %s9
    %p138 = scmp.lt.s32.totalorder %s9, 3
    %p139 = pnand %p137, %p138
    %p140 = pneg %p139
    // Predicated region
    $region29: #{model_forward.4} parent=5 // pred_check
      _
    $region30: #{model_forward.4} parent=5 // pred_check_branch
      %142 = sbr.rel (%p139) target = $region32
    $region31: #{model_forward.4} parent=5 // pred_region
      %s143 = ssub.s32 %s9, 1
      %s144 = smul.u32 128, %s14
      %p145 = scmp.lt.s32.totalorder %s144, 255
      %s146 = scalar_select %p145, %s144, 255
      %s147 = smul.addr %s146, 4
      %s148 = scalar_lea.vmem %s0, %s147
      %p149 = pneg %p35
      %p150 = pneg %p32
      %p151 = pneg %p56
      %p152 = pneg %p53
      %p153 = pneg %p77
      %p154 = pneg %p74
      %p155 = pneg %p103
      %p156 = pneg %p100
      %s157 = smul.u32 128, %s14
      %p158 = scmp.lt.s32.totalorder %s157, 255
      %s159 = scalar_select %p158, %s157, 255
      %s160 = smul.addr %s159, 8
      %s161 = scalar_lea.vmem %s3, %s160
      %s162 = smul.u32 128, %s14
      %p163 = scmp.lt.s32.totalorder %s162, 255
      %s164 = scalar_select %p163, %s162, 255
      %s165 = smul.addr %s164, 4
      %s166 = scalar_lea.vmem %s0, %s165
      %s167 = smul.u32 128, %s14
      %s168 = smul.u32 128, %s14
      %p169 = scmp.lt.s32.totalorder %s168, 255
      %s170 = scalar_select %p169, %s168, 255
      %s171 = smul.addr %s170, 8
      %s172 = scalar_lea.vmem %s3, %s171
      %s173 = smul.u32 128, %s14
      %v175 = vld [vmem:[%s166] sm:$0xf]
      %v176 = vld [vmem:[%s166 + $0x4] sm:$0xf]
      %v177 = vld [vmem:[%s166 + $0x8] sm:$0xf]
      %v178 = vld [vmem:[%s166 + $0xc] sm:$0xf]
      %v179 = vld [vmem:[%s166 + $0x10] sm:$0xf]
      %v180 = vld [vmem:[%s166 + $0x14] sm:$0xf]
      %v181 = vld [vmem:[%s166 + $0x18] sm:$0xf]
      %v182 = vld [vmem:[%s166 + $0x1c] sm:$0xf]
      %v183 = vld [vmem:[%s166 + $0x20] sm:$0xf]
      %v184 = vld [vmem:[%s166 + $0x24] sm:$0xf]
      %v185 = vld [vmem:[%s166 + $0x28] sm:$0xf]
      %v186 = vld [vmem:[%s166 + $0x2c] sm:$0xf]
      %v187 = vld [vmem:[%s166 + $0x30] sm:$0xf]
      %v188 = vld [vmem:[%s166 + $0x34] sm:$0xf]
      %v189 = vld [vmem:[%s166 + $0x38] sm:$0xf]
      %v190 = vld [vmem:[%s166 + $0x3c] sm:$0xf]
      %v191 = vld [vmem:[%s166 + $0x40] sm:$0xf]
      %v192 = vld [vmem:[%s166 + $0x44] sm:$0xf]
      %v193 = vld [vmem:[%s166 + $0x48] sm:$0xf]
      %v194 = vld [vmem:[%s166 + $0x4c] sm:$0xf]
      %v195 = vld [vmem:[%s166 + $0x50] sm:$0xf]
      %v196 = vld [vmem:[%s166 + $0x54] sm:$0xf]
      %v197 = vld [vmem:[%s166 + $0x58] sm:$0xf]
      %v198 = vld [vmem:[%s166 + $0x5c] sm:$0xf]
      %v199 = vld [vmem:[%s166 + $0x60] sm:$0xf]
      %v200 = vld [vmem:[%s166 + $0x64] sm:$0xf]
      %v201 = vld [vmem:[%s166 + $0x68] sm:$0xf]
      %v202 = vld [vmem:[%s166 + $0x6c] sm:$0xf]
      %v203 = vld [vmem:[%s166 + $0x70] sm:$0xf]
      %v204 = vld [vmem:[%s166 + $0x74] sm:$0xf]
      %v205 = vld [vmem:[%s166 + $0x78] sm:$0xf]
      %v206 = vld [vmem:[%s166 + $0x7c] sm:$0xf]
      %v207 = vld [vmem:[%s166 + $0x80] sm:$0xf]
      %v208 = vld [vmem:[%s166 + $0x84] sm:$0xf]
      %v209 = vld [vmem:[%s166 + $0x88] sm:$0xf]
      %v210 = vld [vmem:[%s166 + $0x8c] sm:$0xf]
      %v211 = vld [vmem:[%s166 + $0x90] sm:$0xf]
      %v212 = vld [vmem:[%s166 + $0x94] sm:$0xf]
      %v213 = vld [vmem:[%s166 + $0x98] sm:$0xf]
      %v214 = vld [vmem:[%s166 + $0x9c] sm:$0xf]
      %v215 = vld [vmem:[%s166 + $0xa0] sm:$0xf]
      %v216 = vld [vmem:[%s166 + $0xa4] sm:$0xf]
      %v217 = vld [vmem:[%s166 + $0xa8] sm:$0xf]
      %v218 = vld [vmem:[%s166 + $0xac] sm:$0xf]
      %v219 = vld [vmem:[%s166 + $0xb0] sm:$0xf]
      %v220 = vld [vmem:[%s166 + $0xb4] sm:$0xf]
      %v221 = vld [vmem:[%s166 + $0xb8] sm:$0xf]
      %v222 = vld [vmem:[%s166 + $0xbc] sm:$0xf]
      %v223 = vld [vmem:[%s166 + $0xc0] sm:$0xf]
      %v224 = vld [vmem:[%s166 + $0xc4] sm:$0xf]
      %v225 = vld [vmem:[%s166 + $0xc8] sm:$0xf]
      %v226 = vld [vmem:[%s166 + $0xcc] sm:$0xf]
      %v227 = vld [vmem:[%s166 + $0xd0] sm:$0xf]
      %v228 = vld [vmem:[%s166 + $0xd4] sm:$0xf]
      %v229 = vld [vmem:[%s166 + $0xd8] sm:$0xf]
      %v230 = vld [vmem:[%s166 + $0xdc] sm:$0xf]
      %v231 = vld [vmem:[%s166 + $0xe0] sm:$0xf]
      %v232 = vld [vmem:[%s166 + $0xe4] sm:$0xf]
      %v233 = vld [vmem:[%s166 + $0xe8] sm:$0xf]
      %v234 = vld [vmem:[%s166 + $0xec] sm:$0xf]
      %v235 = vld [vmem:[%s166 + $0xf0] sm:$0xf]
      %v236 = vld [vmem:[%s166 + $0xf4] sm:$0xf]
      %v237 = vld [vmem:[%s166 + $0xf8] sm:$0xf]
      %v238 = vld [vmem:[%s166 + $0xfc] sm:$0xf]
      %v239 = vld [vmem:[%s166 + $0x100] sm:$0xf]
      %v240 = vld [vmem:[%s166 + $0x104] sm:$0xf]
      %v241 = vld [vmem:[%s166 + $0x108] sm:$0xf]
      %v242 = vld [vmem:[%s166 + $0x10c] sm:$0xf]
      %v243 = vld [vmem:[%s166 + $0x110] sm:$0xf]
      %v244 = vld [vmem:[%s166 + $0x114] sm:$0xf]
      %v245 = vld [vmem:[%s166 + $0x118] sm:$0xf]
      %v246 = vld [vmem:[%s166 + $0x11c] sm:$0xf]
      %v247 = vld [vmem:[%s166 + $0x120] sm:$0xf]
      %v248 = vld [vmem:[%s166 + $0x124] sm:$0xf]
      %v249 = vld [vmem:[%s166 + $0x128] sm:$0xf]
      %v250 = vld [vmem:[%s166 + $0x12c] sm:$0xf]
      %v251 = vld [vmem:[%s166 + $0x130] sm:$0xf]
      %v252 = vld [vmem:[%s166 + $0x134] sm:$0xf]
      %v253 = vld [vmem:[%s166 + $0x138] sm:$0xf]
      %v254 = vld [vmem:[%s166 + $0x13c] sm:$0xf]
      %v255 = vld [vmem:[%s166 + $0x140] sm:$0xf]
      %v256 = vld [vmem:[%s166 + $0x144] sm:$0xf]
      %v257 = vld [vmem:[%s166 + $0x148] sm:$0xf]
      %v258 = vld [vmem:[%s166 + $0x14c] sm:$0xf]
      %v259 = vld [vmem:[%s166 + $0x150] sm:$0xf]
      %v260 = vld [vmem:[%s166 + $0x154] sm:$0xf]
      %v261 = vld [vmem:[%s166 + $0x158] sm:$0xf]
      %v262 = vld [vmem:[%s166 + $0x15c] sm:$0xf]
      %v263 = vld [vmem:[%s166 + $0x160] sm:$0xf]
      %v264 = vld [vmem:[%s166 + $0x164] sm:$0xf]
      %v265 = vld [vmem:[%s166 + $0x168] sm:$0xf]
      %v266 = vld [vmem:[%s166 + $0x16c] sm:$0xf]
      %v267 = vld [vmem:[%s166 + $0x170] sm:$0xf]
      %v268 = vld [vmem:[%s166 + $0x174] sm:$0xf]
      %v269 = vld [vmem:[%s166 + $0x178] sm:$0xf]
      %v270 = vld [vmem:[%s166 + $0x17c] sm:$0xf]
      %v271 = vld [vmem:[%s166 + $0x180] sm:$0xf]
      %v272 = vld [vmem:[%s166 + $0x184] sm:$0xf]
      %v273 = vld [vmem:[%s166 + $0x188] sm:$0xf]
      %v274 = vld [vmem:[%s166 + $0x18c] sm:$0xf]
      %v275 = vld [vmem:[%s166 + $0x190] sm:$0xf]
      %v276 = vld [vmem:[%s166 + $0x194] sm:$0xf]
      %v277 = vld [vmem:[%s166 + $0x198] sm:$0xf]
      %v278 = vld [vmem:[%s166 + $0x19c] sm:$0xf]
      %v279 = vld [vmem:[%s166 + $0x1a0] sm:$0xf]
      %v280 = vld [vmem:[%s166 + $0x1a4] sm:$0xf]
      %v281 = vld [vmem:[%s166 + $0x1a8] sm:$0xf]
      %v282 = vld [vmem:[%s166 + $0x1ac] sm:$0xf]
      %v283 = vld [vmem:[%s166 + $0x1b0] sm:$0xf]
      %v284 = vld [vmem:[%s166 + $0x1b4] sm:$0xf]
      %v285 = vld [vmem:[%s166 + $0x1b8] sm:$0xf]
      %v286 = vld [vmem:[%s166 + $0x1bc] sm:$0xf]
      %v287 = vld [vmem:[%s166 + $0x1c0] sm:$0xf]
      %v288 = vld [vmem:[%s166 + $0x1c4] sm:$0xf]
      %v289 = vld [vmem:[%s166 + $0x1c8] sm:$0xf]
      %v290 = vld [vmem:[%s166 + $0x1cc] sm:$0xf]
      %v291 = vld [vmem:[%s166 + $0x1d0] sm:$0xf]
      %v292 = vld [vmem:[%s166 + $0x1d4] sm:$0xf]
      %v293 = vld [vmem:[%s166 + $0x1d8] sm:$0xf]
      %v294 = vld [vmem:[%s166 + $0x1dc] sm:$0xf]
      %v295 = vld [vmem:[%s166 + $0x1e0] sm:$0xf]
      %v296 = vld [vmem:[%s166 + $0x1e4] sm:$0xf]
      %v297 = vld [vmem:[%s166 + $0x1e8] sm:$0xf]
      %v298 = vld [vmem:[%s166 + $0x1ec] sm:$0xf]
      %v299 = vld [vmem:[%s166 + $0x1f0] sm:$0xf]
      %v300 = vld [vmem:[%s166 + $0x1f4] sm:$0xf]
      %v301 = vld [vmem:[%s166 + $0x1f8] sm:$0xf]
      %v302 = vld [vmem:[%s166 + $0x1fc] sm:$0xf]
      %v303 = vld [vmem:[%s1] sm:$0xf]
      %v304 = vld [vmem:[%s1 + $0x4] sm:$0xf]
      %v305 = vld [vmem:[%s1 + $0x8] sm:$0xf]
      %v306 = vld [vmem:[%s1 + $0xc] sm:$0xf]
      %v307 = vld [vmem:[%s1 + $0x10] sm:$0xf]
      %v308 = vld [vmem:[%s1 + $0x14] sm:$0xf]
      %v309 = vld [vmem:[%s1 + $0x18] sm:$0xf]
      %v310 = vld [vmem:[%s1 + $0x1c] sm:$0xf]
      %v311 = vld [vmem:[%s1 + $0x20] sm:$0xf]
      %v312 = vld [vmem:[%s1 + $0x24] sm:$0xf]
      %v313 = vld [vmem:[%s1 + $0x28] sm:$0xf]
      %v314 = vld [vmem:[%s1 + $0x2c] sm:$0xf]
      %v315 = vld [vmem:[%s1 + $0x30] sm:$0xf]
      %v316 = vld [vmem:[%s1 + $0x34] sm:$0xf]
      %v317 = vld [vmem:[%s1 + $0x38] sm:$0xf]
      %v318 = vld [vmem:[%s1 + $0x3c] sm:$0xf]
      %v319 = vld [vmem:[%s2] sm:$0x1]
      %v321 = vlaneseq
      %v322 = vshrl.u32 %v321, 7
      %v323 = vsub.s32 0, %v322
      %v324 = vrot.slane %v319, %v323
      %v454 = vunpack.c.l.b16 %v175
      %v455 = vunpack.c.l.b16 %v176
      %v456 = vunpack.c.l.b16 %v177
      %v457 = vunpack.c.l.b16 %v178
      %v458 = vunpack.c.l.b16 %v179
      %v459 = vunpack.c.l.b16 %v180
      %v460 = vunpack.c.l.b16 %v181
      %v461 = vunpack.c.l.b16 %v182
      %v462 = vunpack.c.l.b16 %v183
      %v463 = vunpack.c.l.b16 %v184
      %v464 = vunpack.c.l.b16 %v185
      %v465 = vunpack.c.l.b16 %v186
      %v466 = vunpack.c.l.b16 %v187
      %v467 = vunpack.c.l.b16 %v188
      %v468 = vunpack.c.l.b16 %v189
      %v469 = vunpack.c.l.b16 %v190
      %v470 = vunpack.c.l.b16 %v191
      %v471 = vunpack.c.l.b16 %v192
      %v472 = vunpack.c.l.b16 %v193
      %v473 = vunpack.c.l.b16 %v194
      %v474 = vunpack.c.l.b16 %v195
      %v475 = vunpack.c.l.b16 %v196
      %v476 = vunpack.c.l.b16 %v197
      %v477 = vunpack.c.l.b16 %v198
      %v478 = vunpack.c.l.b16 %v199
      %v479 = vunpack.c.l.b16 %v200
      %v480 = vunpack.c.l.b16 %v201
      %v481 = vunpack.c.l.b16 %v202
      %v482 = vunpack.c.l.b16 %v203
      %v483 = vunpack.c.l.b16 %v204
      %v484 = vunpack.c.l.b16 %v205
      %v485 = vunpack.c.l.b16 %v206
      %v486 = vunpack.c.l.b16 %v207
      %v487 = vunpack.c.l.b16 %v208
      %v488 = vunpack.c.l.b16 %v209
      %v489 = vunpack.c.l.b16 %v210
      %v490 = vunpack.c.l.b16 %v211
      %v491 = vunpack.c.l.b16 %v212
      %v492 = vunpack.c.l.b16 %v213
      %v493 = vunpack.c.l.b16 %v214
      %v494 = vunpack.c.l.b16 %v215
      %v495 = vunpack.c.l.b16 %v216
      %v496 = vunpack.c.l.b16 %v217
      %v497 = vunpack.c.l.b16 %v218
      %v498 = vunpack.c.l.b16 %v219
      %v499 = vunpack.c.l.b16 %v220
      %v500 = vunpack.c.l.b16 %v221
      %v501 = vunpack.c.l.b16 %v222
      %v502 = vunpack.c.l.b16 %v223
      %v503 = vunpack.c.l.b16 %v224
      %v504 = vunpack.c.l.b16 %v225
      %v505 = vunpack.c.l.b16 %v226
      %v506 = vunpack.c.l.b16 %v227
      %v507 = vunpack.c.l.b16 %v228
      %v508 = vunpack.c.l.b16 %v229
      %v509 = vunpack.c.l.b16 %v230
      %v510 = vunpack.c.l.b16 %v231
      %v511 = vunpack.c.l.b16 %v232
      %v512 = vunpack.c.l.b16 %v233
      %v513 = vunpack.c.l.b16 %v234
      %v514 = vunpack.c.l.b16 %v235
      %v515 = vunpack.c.l.b16 %v236
      %v516 = vunpack.c.l.b16 %v237
      %v517 = vunpack.c.l.b16 %v238
      %v518 = vunpack.c.l.b16 %v239
      %v519 = vunpack.c.l.b16 %v240
      %v520 = vunpack.c.l.b16 %v241
      %v521 = vunpack.c.l.b16 %v242
      %v522 = vunpack.c.l.b16 %v243
      %v523 = vunpack.c.l.b16 %v244
      %v524 = vunpack.c.l.b16 %v245
      %v525 = vunpack.c.l.b16 %v246
      %v526 = vunpack.c.l.b16 %v247
      %v527 = vunpack.c.l.b16 %v248
      %v528 = vunpack.c.l.b16 %v249
      %v529 = vunpack.c.l.b16 %v250
      %v530 = vunpack.c.l.b16 %v251
      %v531 = vunpack.c.l.b16 %v252
      %v532 = vunpack.c.l.b16 %v253
      %v533 = vunpack.c.l.b16 %v254
      %v534 = vunpack.c.l.b16 %v255
      %v535 = vunpack.c.l.b16 %v256
      %v536 = vunpack.c.l.b16 %v257
      %v537 = vunpack.c.l.b16 %v258
      %v538 = vunpack.c.l.b16 %v259
      %v539 = vunpack.c.l.b16 %v260
      %v540 = vunpack.c.l.b16 %v261
      %v541 = vunpack.c.l.b16 %v262
      %v542 = vunpack.c.l.b16 %v263
      %v543 = vunpack.c.l.b16 %v264
      %v544 = vunpack.c.l.b16 %v265
      %v545 = vunpack.c.l.b16 %v266
      %v546 = vunpack.c.l.b16 %v267
      %v547 = vunpack.c.l.b16 %v268
      %v548 = vunpack.c.l.b16 %v269
      %v549 = vunpack.c.l.b16 %v270
      %v550 = vunpack.c.l.b16 %v271
      %v551 = vunpack.c.l.b16 %v272
      %v552 = vunpack.c.l.b16 %v273
      %v553 = vunpack.c.l.b16 %v274
      %v554 = vunpack.c.l.b16 %v275
      %v555 = vunpack.c.l.b16 %v276
      %v556 = vunpack.c.l.b16 %v277
      %v557 = vunpack.c.l.b16 %v278
      %v558 = vunpack.c.l.b16 %v279
      %v559 = vunpack.c.l.b16 %v280
      %v560 = vunpack.c.l.b16 %v281
      %v561 = vunpack.c.l.b16 %v282
      %v562 = vunpack.c.l.b16 %v283
      %v563 = vunpack.c.l.b16 %v284
      %v564 = vunpack.c.l.b16 %v285
      %v565 = vunpack.c.l.b16 %v286
      %v566 = vunpack.c.l.b16 %v287
      %v567 = vunpack.c.l.b16 %v288
      %v568 = vunpack.c.l.b16 %v289
      %v569 = vunpack.c.l.b16 %v290
      %v570 = vunpack.c.l.b16 %v291
      %v571 = vunpack.c.l.b16 %v292
      %v572 = vunpack.c.l.b16 %v293
      %v573 = vunpack.c.l.b16 %v294
      %v574 = vunpack.c.l.b16 %v295
      %v575 = vunpack.c.l.b16 %v296
      %v576 = vunpack.c.l.b16 %v297
      %v577 = vunpack.c.l.b16 %v298
      %v578 = vunpack.c.l.b16 %v299
      %v579 = vunpack.c.l.b16 %v300
      %v580 = vunpack.c.l.b16 %v301
      %v581 = vunpack.c.l.b16 %v302
      %v582 = vpack.c.b16 %v455, %v454
      %v583 = vpack.c.b16 %v457, %v456
      %v584 = vpack.c.b16 %v459, %v458
      %v585 = vpack.c.b16 %v461, %v460
      %v586 = vpack.c.b16 %v463, %v462
      %v587 = vpack.c.b16 %v465, %v464
      %v588 = vpack.c.b16 %v467, %v466
      %v589 = vpack.c.b16 %v469, %v468
      %v590 = vpack.c.b16 %v471, %v470
      %v591 = vpack.c.b16 %v473, %v472
      %v592 = vpack.c.b16 %v475, %v474
      %v593 = vpack.c.b16 %v477, %v476
      %v594 = vpack.c.b16 %v479, %v478
      %v595 = vpack.c.b16 %v481, %v480
      %v596 = vpack.c.b16 %v483, %v482
      %v597 = vpack.c.b16 %v485, %v484
      %v598 = vpack.c.b16 %v487, %v486
      %v599 = vpack.c.b16 %v489, %v488
      %v600 = vpack.c.b16 %v491, %v490
      %v601 = vpack.c.b16 %v493, %v492
      %v602 = vpack.c.b16 %v495, %v494
      %v603 = vpack.c.b16 %v497, %v496
      %v604 = vpack.c.b16 %v499, %v498
      %v605 = vpack.c.b16 %v501, %v500
      %v606 = vpack.c.b16 %v503, %v502
      %v607 = vpack.c.b16 %v505, %v504
      %v608 = vpack.c.b16 %v507, %v506
      %v609 = vpack.c.b16 %v509, %v508
      %v610 = vpack.c.b16 %v511, %v510
      %v611 = vpack.c.b16 %v513, %v512
      %v612 = vpack.c.b16 %v515, %v514
      %v613 = vpack.c.b16 %v517, %v516
      %v614 = vpack.c.b16 %v519, %v518
      %v615 = vpack.c.b16 %v521, %v520
      %v616 = vpack.c.b16 %v523, %v522
      %v617 = vpack.c.b16 %v525, %v524
      %v618 = vpack.c.b16 %v527, %v526
      %v619 = vpack.c.b16 %v529, %v528
      %v620 = vpack.c.b16 %v531, %v530
      %v621 = vpack.c.b16 %v533, %v532
      %v622 = vpack.c.b16 %v535, %v534
      %v623 = vpack.c.b16 %v537, %v536
      %v624 = vpack.c.b16 %v539, %v538
      %v625 = vpack.c.b16 %v541, %v540
      %v626 = vpack.c.b16 %v543, %v542
      %v627 = vpack.c.b16 %v545, %v544
      %v628 = vpack.c.b16 %v547, %v546
      %v629 = vpack.c.b16 %v549, %v548
      %v630 = vpack.c.b16 %v551, %v550
      %v631 = vpack.c.b16 %v553, %v552
      %v632 = vpack.c.b16 %v555, %v554
      %v633 = vpack.c.b16 %v557, %v556
      %v634 = vpack.c.b16 %v559, %v558
      %v635 = vpack.c.b16 %v561, %v560
      %v636 = vpack.c.b16 %v563, %v562
      %v637 = vpack.c.b16 %v565, %v564
      %v638 = vpack.c.b16 %v567, %v566
      %v639 = vpack.c.b16 %v569, %v568
      %v640 = vpack.c.b16 %v571, %v570
      %v641 = vpack.c.b16 %v573, %v572
      %v642 = vpack.c.b16 %v575, %v574
      %v643 = vpack.c.b16 %v577, %v576
      %v644 = vpack.c.b16 %v579, %v578
      %v645 = vpack.c.b16 %v581, %v580
      %v726 = vunpack.c.l.b16 %v303
      %v727 = vunpack.c.l.b16 %v304
      %v728 = vunpack.c.l.b16 %v305
      %v729 = vunpack.c.l.b16 %v306
      %v730 = vunpack.c.l.b16 %v307
      %v731 = vunpack.c.l.b16 %v308
      %v732 = vunpack.c.l.b16 %v309
      %v733 = vunpack.c.l.b16 %v310
      %v734 = vunpack.c.l.b16 %v311
      %v735 = vunpack.c.l.b16 %v312
      %v736 = vunpack.c.l.b16 %v313
      %v737 = vunpack.c.l.b16 %v314
      %v738 = vunpack.c.l.b16 %v315
      %v739 = vunpack.c.l.b16 %v316
      %v740 = vunpack.c.l.b16 %v317
      %v741 = vunpack.c.l.b16 %v318
      %v742 = vpack.c.b16 %v727, %v726
      %v743 = vpack.c.b16 %v729, %v728
      %v744 = vpack.c.b16 %v731, %v730
      %v745 = vpack.c.b16 %v733, %v732
      %v746 = vpack.c.b16 %v735, %v734
      %v747 = vpack.c.b16 %v737, %v736
      %v748 = vpack.c.b16 %v739, %v738
      %v749 = vpack.c.b16 %v741, %v740
      %758 = vmatprep.subr.bf16.mxu0 0
      %759 = vmatpush1.bf16.msra.mxu0 %v749
      %760 = vmatprep.subr.bf16.mxu0 0
      %761 = vmatpush1.bf16.msra.mxu0 %v748
      %762 = vmatprep.subr.bf16.mxu0 0
      %763 = vmatpush1.bf16.msra.mxu0 %v747
      %764 = vmatprep.subr.bf16.mxu0 0
      %765 = vmatpush1.bf16.msra.mxu0 %v746
      %766 = vmatprep.subr.bf16.mxu0 0
      %767 = vmatpush1.bf16.msra.mxu0 %v745
      %768 = vmatprep.subr.bf16.mxu0 0
      %769 = vmatpush1.bf16.msra.mxu0 %v744
      %770 = vmatprep.subr.bf16.mxu0 0
      %771 = vmatpush1.bf16.msra.mxu0 %v743
      %772 = vmatprep.subr.bf16.mxu0 0
      %773 = vmatpush1.bf16.msra.mxu0 %v742
      %774 = vmatprep.subr.bf16.mxu0 0
      %775 = vmatpush2.bf16.msra.mxu0 0
      %776 = vmatprep.subr.bf16.mxu0 0
      %777 = vmatpush2.bf16.msra.mxu0 0
      %778 = vmatprep.subr.bf16.mxu0 0
      %779 = vmatpush2.bf16.msra.mxu0 0
      %780 = vmatprep.subr.bf16.mxu0 0
      %781 = vmatpush2.bf16.msra.mxu0 0
      %782 = vmatprep.subr.bf16.mxu0 0
      %783 = vmatpush2.bf16.msra.mxu0 0
      %784 = vmatprep.subr.bf16.mxu0 0
      %785 = vmatpush2.bf16.msra.mxu0 0
      %786 = vmatprep.subr.bf16.mxu0 0
      %787 = vmatpush2.bf16.msra.mxu0 0
      %788 = vmatprep.subr.bf16.mxu0 0
      %789 = vmatpush2.bf16.msra.mxu0 0
      %790 = vmatprep.mubr.bf16.mxu0 0
      %791 = vmatmul.mubr.bf16.gmra.mxu0 %v582
      %v792 = vpop.f32.mrf.mxu0
      %v793 = vadd.f32 %v324, %v792
      %v794 = vpop.f32.mrf.mxu0
      %v795 = vpop.f32.mrf.mxu0
      %v796 = vadd.f32 %v324, %v795
      %v797 = vpop.f32.mrf.mxu0
      %798 = vmatprep.mubr.bf16.mxu0 0
      %799 = vmatmul.mubr.bf16.gmra.mxu0 %v583
      %v800 = vpop.f32.mrf.mxu0
      %v801 = vadd.f32 %v324, %v800
      %v802 = vpop.f32.mrf.mxu0
      %v803 = vpop.f32.mrf.mxu0
      %v804 = vadd.f32 %v324, %v803
      %v805 = vpop.f32.mrf.mxu0
      %806 = vmatprep.mubr.bf16.mxu0 0
      %807 = vmatmul.mubr.bf16.gmra.mxu0 %v584
      %v808 = vpop.f32.mrf.mxu0
      %v809 = vadd.f32 %v324, %v808
      %v810 = vpop.f32.mrf.mxu0
      %v811 = vpop.f32.mrf.mxu0
      %v812 = vadd.f32 %v324, %v811
      %v813 = vpop.f32.mrf.mxu0
      %814 = vmatprep.mubr.bf16.mxu0 0
      %815 = vmatmul.mubr.bf16.gmra.mxu0 %v585
      %v816 = vpop.f32.mrf.mxu0
      %v817 = vadd.f32 %v324, %v816
      %v818 = vpop.f32.mrf.mxu0
      %v819 = vpop.f32.mrf.mxu0
      %v820 = vadd.f32 %v324, %v819
      %v821 = vpop.f32.mrf.mxu0
      %822 = vmatprep.mubr.bf16.mxu0 0
      %823 = vmatmul.mubr.bf16.gmra.mxu0 %v586
      %v824 = vpop.f32.mrf.mxu0
      %v825 = vadd.f32 %v324, %v824
      %v826 = vpop.f32.mrf.mxu0
      %v827 = vpop.f32.mrf.mxu0
      %v828 = vadd.f32 %v324, %v827
      %v829 = vpop.f32.mrf.mxu0
      %830 = vmatprep.mubr.bf16.mxu0 0
      %831 = vmatmul.mubr.bf16.gmra.mxu0 %v587
      %v832 = vpop.f32.mrf.mxu0
      %v833 = vadd.f32 %v324, %v832
      %v834 = vpop.f32.mrf.mxu0
      %v835 = vpop.f32.mrf.mxu0
      %v836 = vadd.f32 %v324, %v835
      %v837 = vpop.f32.mrf.mxu0
      %838 = vmatprep.mubr.bf16.mxu0 0
      %839 = vmatmul.mubr.bf16.gmra.mxu0 %v588
      %v840 = vpop.f32.mrf.mxu0
      %v841 = vadd.f32 %v324, %v840
      %v842 = vpop.f32.mrf.mxu0
      %v843 = vpop.f32.mrf.mxu0
      %v844 = vadd.f32 %v324, %v843
      %v845 = vpop.f32.mrf.mxu0
      %846 = vmatprep.mubr.bf16.mxu0 0
      %847 = vmatmul.mubr.bf16.gmra.mxu0 %v589
      %v848 = vpop.f32.mrf.mxu0
      %v849 = vadd.f32 %v324, %v848
      %v850 = vpop.f32.mrf.mxu0
      %v851 = vpop.f32.mrf.mxu0
      %v852 = vadd.f32 %v324, %v851
      %v853 = vpop.f32.mrf.mxu0
      %854 = vmatprep.mubr.bf16.mxu0 0
      %855 = vmatmul.mubr.bf16.gmra.mxu0 %v590
      %v856 = vpop.f32.mrf.mxu0
      %v857 = vadd.f32 %v324, %v856
      %v858 = vpop.f32.mrf.mxu0
      %v859 = vpop.f32.mrf.mxu0
      %v860 = vadd.f32 %v324, %v859
      %v861 = vpop.f32.mrf.mxu0
      %862 = vmatprep.mubr.bf16.mxu0 0
      %863 = vmatmul.mubr.bf16.gmra.mxu0 %v591
      %v864 = vpop.f32.mrf.mxu0
      %v865 = vadd.f32 %v324, %v864
      %v866 = vpop.f32.mrf.mxu0
      %v867 = vpop.f32.mrf.mxu0
      %v868 = vadd.f32 %v324, %v867
      %v869 = vpop.f32.mrf.mxu0
      %870 = vmatprep.mubr.bf16.mxu0 0
      %871 = vmatmul.mubr.bf16.gmra.mxu0 %v592
      %v872 = vpop.f32.mrf.mxu0
      %v873 = vadd.f32 %v324, %v872
      %v874 = vpop.f32.mrf.mxu0
      %v875 = vpop.f32.mrf.mxu0
      %v876 = vadd.f32 %v324, %v875
      %v877 = vpop.f32.mrf.mxu0
      %878 = vmatprep.mubr.bf16.mxu0 0
      %879 = vmatmul.mubr.bf16.gmra.mxu0 %v593
      %v880 = vpop.f32.mrf.mxu0
      %v881 = vadd.f32 %v324, %v880
      %v882 = vpop.f32.mrf.mxu0
      %v883 = vpop.f32.mrf.mxu0
      %v884 = vadd.f32 %v324, %v883
      %v885 = vpop.f32.mrf.mxu0
      %886 = vmatprep.mubr.bf16.mxu0 0
      %887 = vmatmul.mubr.bf16.gmra.mxu0 %v594
      %v888 = vpop.f32.mrf.mxu0
      %v889 = vadd.f32 %v324, %v888
      %v890 = vpop.f32.mrf.mxu0
      %v891 = vpop.f32.mrf.mxu0
      %v892 = vadd.f32 %v324, %v891
      %v893 = vpop.f32.mrf.mxu0
      %894 = vmatprep.mubr.bf16.mxu0 0
      %895 = vmatmul.mubr.bf16.gmra.mxu0 %v595
      %v896 = vpop.f32.mrf.mxu0
      %v897 = vadd.f32 %v324, %v896
      %v898 = vpop.f32.mrf.mxu0
      %v899 = vpop.f32.mrf.mxu0
      %v900 = vadd.f32 %v324, %v899
      %v901 = vpop.f32.mrf.mxu0
      %902 = vmatprep.mubr.bf16.mxu0 0
      %903 = vmatmul.mubr.bf16.gmra.mxu0 %v596
      %v904 = vpop.f32.mrf.mxu0
      %v905 = vadd.f32 %v324, %v904
      %v906 = vpop.f32.mrf.mxu0
      %v907 = vpop.f32.mrf.mxu0
      %v908 = vadd.f32 %v324, %v907
      %v909 = vpop.f32.mrf.mxu0
      %910 = vmatprep.mubr.bf16.mxu0 0
      %911 = vmatmul.mubr.bf16.gmra.mxu0 %v597
      %v912 = vpop.f32.mrf.mxu0
      %v913 = vadd.f32 %v324, %v912
      %v914 = vpop.f32.mrf.mxu0
      %v915 = vpop.f32.mrf.mxu0
      %v916 = vadd.f32 %v324, %v915
      %v917 = vpop.f32.mrf.mxu0
      %918 = vmatprep.mubr.bf16.mxu0 0
      %919 = vmatmul.mubr.bf16.gmra.mxu0 %v598
      %v920 = vpop.f32.mrf.mxu0
      %v921 = vadd.f32 %v324, %v920
      %v922 = vpop.f32.mrf.mxu0
      %v923 = vpop.f32.mrf.mxu0
      %v924 = vadd.f32 %v324, %v923
      %v925 = vpop.f32.mrf.mxu0
      %926 = vmatprep.mubr.bf16.mxu0 0
      %927 = vmatmul.mubr.bf16.gmra.mxu0 %v599
      %v928 = vpop.f32.mrf.mxu0
      %v929 = vadd.f32 %v324, %v928
      %v930 = vpop.f32.mrf.mxu0
      %v931 = vpop.f32.mrf.mxu0
      %v932 = vadd.f32 %v324, %v931
      %v933 = vpop.f32.mrf.mxu0
      %934 = vmatprep.mubr.bf16.mxu0 0
      %935 = vmatmul.mubr.bf16.gmra.mxu0 %v600
      %v936 = vpop.f32.mrf.mxu0
      %v937 = vadd.f32 %v324, %v936
      %v938 = vpop.f32.mrf.mxu0
      %v939 = vpop.f32.mrf.mxu0
      %v940 = vadd.f32 %v324, %v939
      %v941 = vpop.f32.mrf.mxu0
      %942 = vmatprep.mubr.bf16.mxu0 0
      %943 = vmatmul.mubr.bf16.gmra.mxu0 %v601
      %v944 = vpop.f32.mrf.mxu0
      %v945 = vadd.f32 %v324, %v944
      %v946 = vpop.f32.mrf.mxu0
      %v947 = vpop.f32.mrf.mxu0
      %v948 = vadd.f32 %v324, %v947
      %v949 = vpop.f32.mrf.mxu0
      %950 = vmatprep.mubr.bf16.mxu0 0
      %951 = vmatmul.mubr.bf16.gmra.mxu0 %v602
      %v952 = vpop.f32.mrf.mxu0
      %v953 = vadd.f32 %v324, %v952
      %v954 = vpop.f32.mrf.mxu0
      %v955 = vpop.f32.mrf.mxu0
      %v956 = vadd.f32 %v324, %v955
      %v957 = vpop.f32.mrf.mxu0
      %958 = vmatprep.mubr.bf16.mxu0 0
      %959 = vmatmul.mubr.bf16.gmra.mxu0 %v603
      %v960 = vpop.f32.mrf.mxu0
      %v961 = vadd.f32 %v324, %v960
      %v962 = vpop.f32.mrf.mxu0
      %v963 = vpop.f32.mrf.mxu0
      %v964 = vadd.f32 %v324, %v963
      %v965 = vpop.f32.mrf.mxu0
      %966 = vmatprep.mubr.bf16.mxu0 0
      %967 = vmatmul.mubr.bf16.gmra.mxu0 %v604
      %v968 = vpop.f32.mrf.mxu0
      %v969 = vadd.f32 %v324, %v968
      %v970 = vpop.f32.mrf.mxu0
      %v971 = vpop.f32.mrf.mxu0
      %v972 = vadd.f32 %v324, %v971
      %v973 = vpop.f32.mrf.mxu0
      %974 = vmatprep.mubr.bf16.mxu0 0
      %975 = vmatmul.mubr.bf16.gmra.mxu0 %v605
      %v976 = vpop.f32.mrf.mxu0
      %v977 = vadd.f32 %v324, %v976
      %v978 = vpop.f32.mrf.mxu0
      %v979 = vpop.f32.mrf.mxu0
      %v980 = vadd.f32 %v324, %v979
      %v981 = vpop.f32.mrf.mxu0
      %982 = vmatprep.mubr.bf16.mxu0 0
      %983 = vmatmul.mubr.bf16.gmra.mxu0 %v606
      %v984 = vpop.f32.mrf.mxu0
      %v985 = vadd.f32 %v324, %v984
      %v986 = vpop.f32.mrf.mxu0
      %v987 = vpop.f32.mrf.mxu0
      %v988 = vadd.f32 %v324, %v987
      %v989 = vpop.f32.mrf.mxu0
      %990 = vmatprep.mubr.bf16.mxu0 0
      %991 = vmatmul.mubr.bf16.gmra.mxu0 %v607
      %v992 = vpop.f32.mrf.mxu0
      %v993 = vadd.f32 %v324, %v992
      %v994 = vpop.f32.mrf.mxu0
      %v995 = vpop.f32.mrf.mxu0
      %v996 = vadd.f32 %v324, %v995
      %v997 = vpop.f32.mrf.mxu0
      %998 = vmatprep.mubr.bf16.mxu0 0
      %999 = vmatmul.mubr.bf16.gmra.mxu0 %v608
      %v1000 = vpop.f32.mrf.mxu0
      %v1001 = vadd.f32 %v324, %v1000
      %v1002 = vpop.f32.mrf.mxu0
      %v1003 = vpop.f32.mrf.mxu0
      %v1004 = vadd.f32 %v324, %v1003
      %v1005 = vpop.f32.mrf.mxu0
      %1006 = vmatprep.mubr.bf16.mxu0 0
      %1007 = vmatmul.mubr.bf16.gmra.mxu0 %v609
      %v1008 = vpop.f32.mrf.mxu0
      %v1009 = vadd.f32 %v324, %v1008
      %v1010 = vpop.f32.mrf.mxu0
      %v1011 = vpop.f32.mrf.mxu0
      %v1012 = vadd.f32 %v324, %v1011
      %v1013 = vpop.f32.mrf.mxu0
      %1014 = vmatprep.mubr.bf16.mxu0 0
      %1015 = vmatmul.mubr.bf16.gmra.mxu0 %v610
      %v1016 = vpop.f32.mrf.mxu0
      %v1017 = vadd.f32 %v324, %v1016
      %v1018 = vpop.f32.mrf.mxu0
      %v1019 = vpop.f32.mrf.mxu0
      %v1020 = vadd.f32 %v324, %v1019
      %v1021 = vpop.f32.mrf.mxu0
      %1022 = vmatprep.mubr.bf16.mxu0 0
      %1023 = vmatmul.mubr.bf16.gmra.mxu0 %v611
      %v1024 = vpop.f32.mrf.mxu0
      %v1025 = vadd.f32 %v324, %v1024
      %v1026 = vpop.f32.mrf.mxu0
      %v1027 = vpop.f32.mrf.mxu0
      %v1028 = vadd.f32 %v324, %v1027
      %v1029 = vpop.f32.mrf.mxu0
      %1030 = vmatprep.mubr.bf16.mxu0 0
      %1031 = vmatmul.mubr.bf16.gmra.mxu0 %v612
      %v1032 = vpop.f32.mrf.mxu0
      %v1033 = vadd.f32 %v324, %v1032
      %v1034 = vpop.f32.mrf.mxu0
      %v1035 = vpop.f32.mrf.mxu0
      %v1036 = vadd.f32 %v324, %v1035
      %v1037 = vpop.f32.mrf.mxu0
      %1038 = vmatprep.mubr.bf16.mxu0 0
      %1039 = vmatmul.mubr.bf16.gmra.mxu0 %v613
      %v1040 = vpop.f32.mrf.mxu0
      %v1041 = vadd.f32 %v324, %v1040
      %v1042 = vpop.f32.mrf.mxu0
      %v1043 = vpop.f32.mrf.mxu0
      %v1044 = vadd.f32 %v324, %v1043
      %v1045 = vpop.f32.mrf.mxu0
      %1046 = vmatprep.mubr.bf16.mxu0 0
      %1047 = vmatmul.mubr.bf16.gmra.mxu0 %v614
      %v1048 = vpop.f32.mrf.mxu0
      %v1049 = vadd.f32 %v324, %v1048
      %v1050 = vpop.f32.mrf.mxu0
      %v1051 = vpop.f32.mrf.mxu0
      %v1052 = vadd.f32 %v324, %v1051
      %v1053 = vpop.f32.mrf.mxu0
      %1054 = vmatprep.mubr.bf16.mxu0 0
      %1055 = vmatmul.mubr.bf16.gmra.mxu0 %v615
      %v1056 = vpop.f32.mrf.mxu0
      %v1057 = vadd.f32 %v324, %v1056
      %v1058 = vpop.f32.mrf.mxu0
      %v1059 = vpop.f32.mrf.mxu0
      %v1060 = vadd.f32 %v324, %v1059
      %v1061 = vpop.f32.mrf.mxu0
      %1062 = vmatprep.mubr.bf16.mxu0 0
      %1063 = vmatmul.mubr.bf16.gmra.mxu0 %v616
      %v1064 = vpop.f32.mrf.mxu0
      %v1065 = vadd.f32 %v324, %v1064
      %v1066 = vpop.f32.mrf.mxu0
      %v1067 = vpop.f32.mrf.mxu0
      %v1068 = vadd.f32 %v324, %v1067
      %v1069 = vpop.f32.mrf.mxu0
      %1070 = vmatprep.mubr.bf16.mxu0 0
      %1071 = vmatmul.mubr.bf16.gmra.mxu0 %v617
      %v1072 = vpop.f32.mrf.mxu0
      %v1073 = vadd.f32 %v324, %v1072
      %v1074 = vpop.f32.mrf.mxu0
      %v1075 = vpop.f32.mrf.mxu0
      %v1076 = vadd.f32 %v324, %v1075
      %v1077 = vpop.f32.mrf.mxu0
      %1078 = vmatprep.mubr.bf16.mxu0 0
      %1079 = vmatmul.mubr.bf16.gmra.mxu0 %v618
      %v1080 = vpop.f32.mrf.mxu0
      %v1081 = vadd.f32 %v324, %v1080
      %v1082 = vpop.f32.mrf.mxu0
      %v1083 = vpop.f32.mrf.mxu0
      %v1084 = vadd.f32 %v324, %v1083
      %v1085 = vpop.f32.mrf.mxu0
      %1086 = vmatprep.mubr.bf16.mxu0 0
      %1087 = vmatmul.mubr.bf16.gmra.mxu0 %v619
      %v1088 = vpop.f32.mrf.mxu0
      %v1089 = vadd.f32 %v324, %v1088
      %v1090 = vpop.f32.mrf.mxu0
      %v1091 = vpop.f32.mrf.mxu0
      %v1092 = vadd.f32 %v324, %v1091
      %v1093 = vpop.f32.mrf.mxu0
      %1094 = vmatprep.mubr.bf16.mxu0 0
      %1095 = vmatmul.mubr.bf16.gmra.mxu0 %v620
      %v1096 = vpop.f32.mrf.mxu0
      %v1097 = vadd.f32 %v324, %v1096
      %v1098 = vpop.f32.mrf.mxu0
      %v1099 = vpop.f32.mrf.mxu0
      %v1100 = vadd.f32 %v324, %v1099
      %v1101 = vpop.f32.mrf.mxu0
      %1102 = vmatprep.mubr.bf16.mxu0 0
      %1103 = vmatmul.mubr.bf16.gmra.mxu0 %v621
      %v1104 = vpop.f32.mrf.mxu0
      %v1105 = vadd.f32 %v324, %v1104
      %v1106 = vpop.f32.mrf.mxu0
      %v1107 = vpop.f32.mrf.mxu0
      %v1108 = vadd.f32 %v324, %v1107
      %v1109 = vpop.f32.mrf.mxu0
      %1110 = vmatprep.mubr.bf16.mxu0 0
      %1111 = vmatmul.mubr.bf16.gmra.mxu0 %v622
      %v1112 = vpop.f32.mrf.mxu0
      %v1113 = vadd.f32 %v324, %v1112
      %v1114 = vpop.f32.mrf.mxu0
      %v1115 = vpop.f32.mrf.mxu0
      %v1116 = vadd.f32 %v324, %v1115
      %v1117 = vpop.f32.mrf.mxu0
      %1118 = vmatprep.mubr.bf16.mxu0 0
      %1119 = vmatmul.mubr.bf16.gmra.mxu0 %v623
      %v1120 = vpop.f32.mrf.mxu0
      %v1121 = vadd.f32 %v324, %v1120
      %v1122 = vpop.f32.mrf.mxu0
      %v1123 = vpop.f32.mrf.mxu0
      %v1124 = vadd.f32 %v324, %v1123
      %v1125 = vpop.f32.mrf.mxu0
      %1126 = vmatprep.mubr.bf16.mxu0 0
      %1127 = vmatmul.mubr.bf16.gmra.mxu0 %v624
      %v1128 = vpop.f32.mrf.mxu0
      %v1129 = vadd.f32 %v324, %v1128
      %v1130 = vpop.f32.mrf.mxu0
      %v1131 = vpop.f32.mrf.mxu0
      %v1132 = vadd.f32 %v324, %v1131
      %v1133 = vpop.f32.mrf.mxu0
      %1134 = vmatprep.mubr.bf16.mxu0 0
      %1135 = vmatmul.mubr.bf16.gmra.mxu0 %v625
      %v1136 = vpop.f32.mrf.mxu0
      %v1137 = vadd.f32 %v324, %v1136
      %v1138 = vpop.f32.mrf.mxu0
      %v1139 = vpop.f32.mrf.mxu0
      %v1140 = vadd.f32 %v324, %v1139
      %v1141 = vpop.f32.mrf.mxu0
      %1142 = vmatprep.mubr.bf16.mxu0 0
      %1143 = vmatmul.mubr.bf16.gmra.mxu0 %v626
      %v1144 = vpop.f32.mrf.mxu0
      %v1145 = vadd.f32 %v324, %v1144
      %v1146 = vpop.f32.mrf.mxu0
      %v1147 = vpop.f32.mrf.mxu0
      %v1148 = vadd.f32 %v324, %v1147
      %v1149 = vpop.f32.mrf.mxu0
      %1150 = vmatprep.mubr.bf16.mxu0 0
      %1151 = vmatmul.mubr.bf16.gmra.mxu0 %v627
      %v1152 = vpop.f32.mrf.mxu0
      %v1153 = vadd.f32 %v324, %v1152
      %v1154 = vpop.f32.mrf.mxu0
      %v1155 = vpop.f32.mrf.mxu0
      %v1156 = vadd.f32 %v324, %v1155
      %v1157 = vpop.f32.mrf.mxu0
      %1158 = vmatprep.mubr.bf16.mxu0 0
      %1159 = vmatmul.mubr.bf16.gmra.mxu0 %v628
      %v1160 = vpop.f32.mrf.mxu0
      %v1161 = vadd.f32 %v324, %v1160
      %v1162 = vpop.f32.mrf.mxu0
      %v1163 = vpop.f32.mrf.mxu0
      %v1164 = vadd.f32 %v324, %v1163
      %v1165 = vpop.f32.mrf.mxu0
      %1166 = vmatprep.mubr.bf16.mxu0 0
      %1167 = vmatmul.mubr.bf16.gmra.mxu0 %v629
      %v1168 = vpop.f32.mrf.mxu0
      %v1169 = vadd.f32 %v324, %v1168
      %v1170 = vpop.f32.mrf.mxu0
      %v1171 = vpop.f32.mrf.mxu0
      %v1172 = vadd.f32 %v324, %v1171
      %v1173 = vpop.f32.mrf.mxu0
      %1174 = vmatprep.mubr.bf16.mxu0 0
      %1175 = vmatmul.mubr.bf16.gmra.mxu0 %v630
      %v1176 = vpop.f32.mrf.mxu0
      %v1177 = vadd.f32 %v324, %v1176
      %v1178 = vpop.f32.mrf.mxu0
      %v1179 = vpop.f32.mrf.mxu0
      %v1180 = vadd.f32 %v324, %v1179
      %v1181 = vpop.f32.mrf.mxu0
      %1182 = vmatprep.mubr.bf16.mxu0 0
      %1183 = vmatmul.mubr.bf16.gmra.mxu0 %v631
      %v1184 = vpop.f32.mrf.mxu0
      %v1185 = vadd.f32 %v324, %v1184
      %v1186 = vpop.f32.mrf.mxu0
      %v1187 = vpop.f32.mrf.mxu0
      %v1188 = vadd.f32 %v324, %v1187
      %v1189 = vpop.f32.mrf.mxu0
      %1190 = vmatprep.mubr.bf16.mxu0 0
      %1191 = vmatmul.mubr.bf16.gmra.mxu0 %v632
      %v1192 = vpop.f32.mrf.mxu0
      %v1193 = vadd.f32 %v324, %v1192
      %v1194 = vpop.f32.mrf.mxu0
      %v1195 = vpop.f32.mrf.mxu0
      %v1196 = vadd.f32 %v324, %v1195
      %v1197 = vpop.f32.mrf.mxu0
      %1198 = vmatprep.mubr.bf16.mxu0 0
      %1199 = vmatmul.mubr.bf16.gmra.mxu0 %v633
      %v1200 = vpop.f32.mrf.mxu0
      %v1201 = vadd.f32 %v324, %v1200
      %v1202 = vpop.f32.mrf.mxu0
      %v1203 = vpop.f32.mrf.mxu0
      %v1204 = vadd.f32 %v324, %v1203
      %v1205 = vpop.f32.mrf.mxu0
      %1206 = vmatprep.mubr.bf16.mxu0 0
      %1207 = vmatmul.mubr.bf16.gmra.mxu0 %v634
      %v1208 = vpop.f32.mrf.mxu0
      %v1209 = vadd.f32 %v324, %v1208
      %v1210 = vpop.f32.mrf.mxu0
      %v1211 = vpop.f32.mrf.mxu0
      %v1212 = vadd.f32 %v324, %v1211
      %v1213 = vpop.f32.mrf.mxu0
      %1214 = vmatprep.mubr.bf16.mxu0 0
      %1215 = vmatmul.mubr.bf16.gmra.mxu0 %v635
      %v1216 = vpop.f32.mrf.mxu0
      %v1217 = vadd.f32 %v324, %v1216
      %v1218 = vpop.f32.mrf.mxu0
      %v1219 = vpop.f32.mrf.mxu0
      %v1220 = vadd.f32 %v324, %v1219
      %v1221 = vpop.f32.mrf.mxu0
      %1222 = vmatprep.mubr.bf16.mxu0 0
      %1223 = vmatmul.mubr.bf16.gmra.mxu0 %v636
      %v1224 = vpop.f32.mrf.mxu0
      %v1225 = vadd.f32 %v324, %v1224
      %v1226 = vpop.f32.mrf.mxu0
      %v1227 = vpop.f32.mrf.mxu0
      %v1228 = vadd.f32 %v324, %v1227
      %v1229 = vpop.f32.mrf.mxu0
      %1230 = vmatprep.mubr.bf16.mxu0 0
      %1231 = vmatmul.mubr.bf16.gmra.mxu0 %v637
      %v1232 = vpop.f32.mrf.mxu0
      %v1233 = vadd.f32 %v324, %v1232
      %v1234 = vpop.f32.mrf.mxu0
      %v1235 = vpop.f32.mrf.mxu0
      %v1236 = vadd.f32 %v324, %v1235
      %v1237 = vpop.f32.mrf.mxu0
      %1238 = vmatprep.mubr.bf16.mxu0 0
      %1239 = vmatmul.mubr.bf16.gmra.mxu0 %v638
      %v1240 = vpop.f32.mrf.mxu0
      %v1241 = vadd.f32 %v324, %v1240
      %v1242 = vpop.f32.mrf.mxu0
      %v1243 = vpop.f32.mrf.mxu0
      %v1244 = vadd.f32 %v324, %v1243
      %v1245 = vpop.f32.mrf.mxu0
      %1246 = vmatprep.mubr.bf16.mxu0 0
      %1247 = vmatmul.mubr.bf16.gmra.mxu0 %v639
      %v1248 = vpop.f32.mrf.mxu0
      %v1249 = vadd.f32 %v324, %v1248
      %v1250 = vpop.f32.mrf.mxu0
      %v1251 = vpop.f32.mrf.mxu0
      %v1252 = vadd.f32 %v324, %v1251
      %v1253 = vpop.f32.mrf.mxu0
      %1254 = vmatprep.mubr.bf16.mxu0 0
      %1255 = vmatmul.mubr.bf16.gmra.mxu0 %v640
      %v1256 = vpop.f32.mrf.mxu0
      %v1257 = vadd.f32 %v324, %v1256
      %v1258 = vpop.f32.mrf.mxu0
      %v1259 = vpop.f32.mrf.mxu0
      %v1260 = vadd.f32 %v324, %v1259
      %v1261 = vpop.f32.mrf.mxu0
      %1262 = vmatprep.mubr.bf16.mxu0 0
      %1263 = vmatmul.mubr.bf16.gmra.mxu0 %v641
      %v1264 = vpop.f32.mrf.mxu0
      %v1265 = vadd.f32 %v324, %v1264
      %v1266 = vpop.f32.mrf.mxu0
      %v1267 = vpop.f32.mrf.mxu0
      %v1268 = vadd.f32 %v324, %v1267
      %v1269 = vpop.f32.mrf.mxu0
      %1270 = vmatprep.mubr.bf16.mxu0 0
      %1271 = vmatmul.mubr.bf16.gmra.mxu0 %v642
      %v1272 = vpop.f32.mrf.mxu0
      %v1273 = vadd.f32 %v324, %v1272
      %v1274 = vpop.f32.mrf.mxu0
      %v1275 = vpop.f32.mrf.mxu0
      %v1276 = vadd.f32 %v324, %v1275
      %v1277 = vpop.f32.mrf.mxu0
      %1278 = vmatprep.mubr.bf16.mxu0 0
      %1279 = vmatmul.mubr.bf16.gmra.mxu0 %v643
      %v1280 = vpop.f32.mrf.mxu0
      %v1281 = vadd.f32 %v324, %v1280
      %v1282 = vpop.f32.mrf.mxu0
      %v1283 = vpop.f32.mrf.mxu0
      %v1284 = vadd.f32 %v324, %v1283
      %v1285 = vpop.f32.mrf.mxu0
      %1286 = vmatprep.mubr.bf16.mxu0 0
      %1287 = vmatmul.mubr.bf16.gmra.mxu0 %v644
      %v1288 = vpop.f32.mrf.mxu0
      %v1289 = vadd.f32 %v324, %v1288
      %v1290 = vpop.f32.mrf.mxu0
      %v1291 = vpop.f32.mrf.mxu0
      %v1292 = vadd.f32 %v324, %v1291
      %v1293 = vpop.f32.mrf.mxu0
      %1294 = vmatprep.mubr.bf16.mxu0 0
      %1295 = vmatmul.mubr.bf16.gmra.mxu0 %v645
      %v1296 = vpop.f32.mrf.mxu0
      %v1297 = vadd.f32 %v324, %v1296
      %v1298 = vpop.f32.mrf.mxu0
      %v1299 = vpop.f32.mrf.mxu0
      %v1300 = vadd.f32 %v324, %v1299
      %v1301 = vpop.f32.mrf.mxu0
      %1302 = vdwg.mxu0
      %v1303 = vmax.f32 %v793, 0.0
      %v1304 = vmax.f32 %v796, 0.0
      %v1305 = vmax.f32 %v801, 0.0
      %v1306 = vmax.f32 %v804, 0.0
      %v1307 = vmax.f32 %v809, 0.0
      %v1308 = vmax.f32 %v812, 0.0
      %v1309 = vmax.f32 %v817, 0.0
      %v1310 = vmax.f32 %v820, 0.0
      %v1311 = vmax.f32 %v825, 0.0
      %v1312 = vmax.f32 %v828, 0.0
      %v1313 = vmax.f32 %v833, 0.0
      %v1314 = vmax.f32 %v836, 0.0
      %v1315 = vmax.f32 %v841, 0.0
      %v1316 = vmax.f32 %v844, 0.0
      %v1317 = vmax.f32 %v849, 0.0
      %v1318 = vmax.f32 %v852, 0.0
      %v1319 = vmax.f32 %v857, 0.0
      %v1320 = vmax.f32 %v860, 0.0
      %v1321 = vmax.f32 %v865, 0.0
      %v1322 = vmax.f32 %v868, 0.0
      %v1323 = vmax.f32 %v873, 0.0
      %v1324 = vmax.f32 %v876, 0.0
      %v1325 = vmax.f32 %v881, 0.0
      %v1326 = vmax.f32 %v884, 0.0
      %v1327 = vmax.f32 %v889, 0.0
      %v1328 = vmax.f32 %v892, 0.0
      %v1329 = vmax.f32 %v897, 0.0
      %v1330 = vmax.f32 %v900, 0.0
      %v1331 = vmax.f32 %v905, 0.0
      %v1332 = vmax.f32 %v908, 0.0
      %v1333 = vmax.f32 %v913, 0.0
      %v1334 = vmax.f32 %v916, 0.0
      %v1335 = vmax.f32 %v921, 0.0
      %v1336 = vmax.f32 %v924, 0.0
      %v1337 = vmax.f32 %v929, 0.0
      %v1338 = vmax.f32 %v932, 0.0
      %v1339 = vmax.f32 %v937, 0.0
      %v1340 = vmax.f32 %v940, 0.0
      %v1341 = vmax.f32 %v945, 0.0
      %v1342 = vmax.f32 %v948, 0.0
      %v1343 = vmax.f32 %v953, 0.0
      %v1344 = vmax.f32 %v956, 0.0
      %v1345 = vmax.f32 %v961, 0.0
      %v1346 = vmax.f32 %v964, 0.0
      %v1347 = vmax.f32 %v969, 0.0
      %v1348 = vmax.f32 %v972, 0.0
      %v1349 = vmax.f32 %v977, 0.0
      %v1350 = vmax.f32 %v980, 0.0
      %v1351 = vmax.f32 %v985, 0.0
      %v1352 = vmax.f32 %v988, 0.0
      %v1353 = vmax.f32 %v993, 0.0
      %v1354 = vmax.f32 %v996, 0.0
      %v1355 = vmax.f32 %v1001, 0.0
      %v1356 = vmax.f32 %v1004, 0.0
      %v1357 = vmax.f32 %v1009, 0.0
      %v1358 = vmax.f32 %v1012, 0.0
      %v1359 = vmax.f32 %v1017, 0.0
      %v1360 = vmax.f32 %v1020, 0.0
      %v1361 = vmax.f32 %v1025, 0.0
      %v1362 = vmax.f32 %v1028, 0.0
      %v1363 = vmax.f32 %v1033, 0.0
      %v1364 = vmax.f32 %v1036, 0.0
      %v1365 = vmax.f32 %v1041, 0.0
      %v1366 = vmax.f32 %v1044, 0.0
      %v1367 = vmax.f32 %v1049, 0.0
      %v1368 = vmax.f32 %v1052, 0.0
      %v1369 = vmax.f32 %v1057, 0.0
      %v1370 = vmax.f32 %v1060, 0.0
      %v1371 = vmax.f32 %v1065, 0.0
      %v1372 = vmax.f32 %v1068, 0.0
      %v1373 = vmax.f32 %v1073, 0.0
      %v1374 = vmax.f32 %v1076, 0.0
      %v1375 = vmax.f32 %v1081, 0.0
      %v1376 = vmax.f32 %v1084, 0.0
      %v1377 = vmax.f32 %v1089, 0.0
      %v1378 = vmax.f32 %v1092, 0.0
      %v1379 = vmax.f32 %v1097, 0.0
      %v1380 = vmax.f32 %v1100, 0.0
      %v1381 = vmax.f32 %v1105, 0.0
      %v1382 = vmax.f32 %v1108, 0.0
      %v1383 = vmax.f32 %v1113, 0.0
      %v1384 = vmax.f32 %v1116, 0.0
      %v1385 = vmax.f32 %v1121, 0.0
      %v1386 = vmax.f32 %v1124, 0.0
      %v1387 = vmax.f32 %v1129, 0.0
      %v1388 = vmax.f32 %v1132, 0.0
      %v1389 = vmax.f32 %v1137, 0.0
      %v1390 = vmax.f32 %v1140, 0.0
      %v1391 = vmax.f32 %v1145, 0.0
      %v1392 = vmax.f32 %v1148, 0.0
      %v1393 = vmax.f32 %v1153, 0.0
      %v1394 = vmax.f32 %v1156, 0.0
      %v1395 = vmax.f32 %v1161, 0.0
      %v1396 = vmax.f32 %v1164, 0.0
      %v1397 = vmax.f32 %v1169, 0.0
      %v1398 = vmax.f32 %v1172, 0.0
      %v1399 = vmax.f32 %v1177, 0.0
      %v1400 = vmax.f32 %v1180, 0.0
      %v1401 = vmax.f32 %v1185, 0.0
      %v1402 = vmax.f32 %v1188, 0.0
      %v1403 = vmax.f32 %v1193, 0.0
      %v1404 = vmax.f32 %v1196, 0.0
      %v1405 = vmax.f32 %v1201, 0.0
      %v1406 = vmax.f32 %v1204, 0.0
      %v1407 = vmax.f32 %v1209, 0.0
      %v1408 = vmax.f32 %v1212, 0.0
      %v1409 = vmax.f32 %v1217, 0.0
      %v1410 = vmax.f32 %v1220, 0.0
      %v1411 = vmax.f32 %v1225, 0.0
      %v1412 = vmax.f32 %v1228, 0.0
      %v1413 = vmax.f32 %v1233, 0.0
      %v1414 = vmax.f32 %v1236, 0.0
      %v1415 = vmax.f32 %v1241, 0.0
      %v1416 = vmax.f32 %v1244, 0.0
      %v1417 = vmax.f32 %v1249, 0.0
      %v1418 = vmax.f32 %v1252, 0.0
      %v1419 = vmax.f32 %v1257, 0.0
      %v1420 = vmax.f32 %v1260, 0.0
      %v1421 = vmax.f32 %v1265, 0.0
      %v1422 = vmax.f32 %v1268, 0.0
      %v1423 = vmax.f32 %v1273, 0.0
      %v1424 = vmax.f32 %v1276, 0.0
      %v1425 = vmax.f32 %v1281, 0.0
      %v1426 = vmax.f32 %v1284, 0.0
      %v1427 = vmax.f32 %v1289, 0.0
      %v1428 = vmax.f32 %v1292, 0.0
      %v1429 = vmax.f32 %v1297, 0.0
      %v1430 = vmax.f32 %v1300, 0.0
      %1431 = vst [vmem:[%s172] sm:$0xff] %v1303
      %1432 = vst [vmem:[%s172 + $0x8] sm:$0xff] %v1304
      %1433 = vst [vmem:[%s172 + $0x10] sm:$0xff] %v1305
      %1434 = vst [vmem:[%s172 + $0x18] sm:$0xff] %v1306
      %1435 = vst [vmem:[%s172 + $0x20] sm:$0xff] %v1307
      %1436 = vst [vmem:[%s172 + $0x28] sm:$0xff] %v1308
      %1437 = vst [vmem:[%s172 + $0x30] sm:$0xff] %v1309
      %1438 = vst [vmem:[%s172 + $0x38] sm:$0xff] %v1310
      %1439 = vst [vmem:[%s172 + $0x40] sm:$0xff] %v1311
      %1440 = vst [vmem:[%s172 + $0x48] sm:$0xff] %v1312
      %1441 = vst [vmem:[%s172 + $0x50] sm:$0xff] %v1313
      %1442 = vst [vmem:[%s172 + $0x58] sm:$0xff] %v1314
      %1443 = vst [vmem:[%s172 + $0x60] sm:$0xff] %v1315
      %1444 = vst [vmem:[%s172 + $0x68] sm:$0xff] %v1316
      %1445 = vst [vmem:[%s172 + $0x70] sm:$0xff] %v1317
      %1446 = vst [vmem:[%s172 + $0x78] sm:$0xff] %v1318
      %1447 = vst [vmem:[%s172 + $0x80] sm:$0xff] %v1319
      %1448 = vst [vmem:[%s172 + $0x88] sm:$0xff] %v1320
      %1449 = vst [vmem:[%s172 + $0x90] sm:$0xff] %v1321
      %1450 = vst [vmem:[%s172 + $0x98] sm:$0xff] %v1322
      %1451 = vst [vmem:[%s172 + $0xa0] sm:$0xff] %v1323
      %1452 = vst [vmem:[%s172 + $0xa8] sm:$0xff] %v1324
      %1453 = vst [vmem:[%s172 + $0xb0] sm:$0xff] %v1325
      %1454 = vst [vmem:[%s172 + $0xb8] sm:$0xff] %v1326
      %1455 = vst [vmem:[%s172 + $0xc0] sm:$0xff] %v1327
      %1456 = vst [vmem:[%s172 + $0xc8] sm:$0xff] %v1328
      %1457 = vst [vmem:[%s172 + $0xd0] sm:$0xff] %v1329
      %1458 = vst [vmem:[%s172 + $0xd8] sm:$0xff] %v1330
      %1459 = vst [vmem:[%s172 + $0xe0] sm:$0xff] %v1331
      %1460 = vst [vmem:[%s172 + $0xe8] sm:$0xff] %v1332
      %1461 = vst [vmem:[%s172 + $0xf0] sm:$0xff] %v1333
      %1462 = vst [vmem:[%s172 + $0xf8] sm:$0xff] %v1334
      %1463 = vst [vmem:[%s172 + $0x100] sm:$0xff] %v1335
      %1464 = vst [vmem:[%s172 + $0x108] sm:$0xff] %v1336
      %1465 = vst [vmem:[%s172 + $0x110] sm:$0xff] %v1337
      %1466 = vst [vmem:[%s172 + $0x118] sm:$0xff] %v1338
      %1467 = vst [vmem:[%s172 + $0x120] sm:$0xff] %v1339
      %1468 = vst [vmem:[%s172 + $0x128] sm:$0xff] %v1340
      %1469 = vst [vmem:[%s172 + $0x130] sm:$0xff] %v1341
      %1470 = vst [vmem:[%s172 + $0x138] sm:$0xff] %v1342
      %1471 = vst [vmem:[%s172 + $0x140] sm:$0xff] %v1343
      %1472 = vst [vmem:[%s172 + $0x148] sm:$0xff] %v1344
      %1473 = vst [vmem:[%s172 + $0x150] sm:$0xff] %v1345
      %1474 = vst [vmem:[%s172 + $0x158] sm:$0xff] %v1346
      %1475 = vst [vmem:[%s172 + $0x160] sm:$0xff] %v1347
      %1476 = vst [vmem:[%s172 + $0x168] sm:$0xff] %v1348
      %1477 = vst [vmem:[%s172 + $0x170] sm:$0xff] %v1349
      %1478 = vst [vmem:[%s172 + $0x178] sm:$0xff] %v1350
      %1479 = vst [vmem:[%s172 + $0x180] sm:$0xff] %v1351
      %1480 = vst [vmem:[%s172 + $0x188] sm:$0xff] %v1352
      %1481 = vst [vmem:[%s172 + $0x190] sm:$0xff] %v1353
      %1482 = vst [vmem:[%s172 + $0x198] sm:$0xff] %v1354
      %1483 = vst [vmem:[%s172 + $0x1a0] sm:$0xff] %v1355
      %1484 = vst [vmem:[%s172 + $0x1a8] sm:$0xff] %v1356
      %1485 = vst [vmem:[%s172 + $0x1b0] sm:$0xff] %v1357
      %1486 = vst [vmem:[%s172 + $0x1b8] sm:$0xff] %v1358
      %1487 = vst [vmem:[%s172 + $0x1c0] sm:$0xff] %v1359
      %1488 = vst [vmem:[%s172 + $0x1c8] sm:$0xff] %v1360
      %1489 = vst [vmem:[%s172 + $0x1d0] sm:$0xff] %v1361
      %1490 = vst [vmem:[%s172 + $0x1d8] sm:$0xff] %v1362
      %1491 = vst [vmem:[%s172 + $0x1e0] sm:$0xff] %v1363
      %1492 = vst [vmem:[%s172 + $0x1e8] sm:$0xff] %v1364
      %1493 = vst [vmem:[%s172 + $0x1f0] sm:$0xff] %v1365
      %1494 = vst [vmem:[%s172 + $0x1f8] sm:$0xff] %v1366
      %1495 = vst [vmem:[%s172 + $0x200] sm:$0xff] %v1367
      %1496 = vst [vmem:[%s172 + $0x208] sm:$0xff] %v1368
      %1497 = vst [vmem:[%s172 + $0x210] sm:$0xff] %v1369
      %1498 = vst [vmem:[%s172 + $0x218] sm:$0xff] %v1370
      %1499 = vst [vmem:[%s172 + $0x220] sm:$0xff] %v1371
      %1500 = vst [vmem:[%s172 + $0x228] sm:$0xff] %v1372
      %1501 = vst [vmem:[%s172 + $0x230] sm:$0xff] %v1373
      %1502 = vst [vmem:[%s172 + $0x238] sm:$0xff] %v1374
      %1503 = vst [vmem:[%s172 + $0x240] sm:$0xff] %v1375
      %1504 = vst [vmem:[%s172 + $0x248] sm:$0xff] %v1376
      %1505 = vst [vmem:[%s172 + $0x250] sm:$0xff] %v1377
      %1506 = vst [vmem:[%s172 + $0x258] sm:$0xff] %v1378
      %1507 = vst [vmem:[%s172 + $0x260] sm:$0xff] %v1379
      %1508 = vst [vmem:[%s172 + $0x268] sm:$0xff] %v1380
      %1509 = vst [vmem:[%s172 + $0x270] sm:$0xff] %v1381
      %1510 = vst [vmem:[%s172 + $0x278] sm:$0xff] %v1382
      %1511 = vst [vmem:[%s172 + $0x280] sm:$0xff] %v1383
      %1512 = vst [vmem:[%s172 + $0x288] sm:$0xff] %v1384
      %1513 = vst [vmem:[%s172 + $0x290] sm:$0xff] %v1385
      %1514 = vst [vmem:[%s172 + $0x298] sm:$0xff] %v1386
      %1515 = vst [vmem:[%s172 + $0x2a0] sm:$0xff] %v1387
      %1516 = vst [vmem:[%s172 + $0x2a8] sm:$0xff] %v1388
      %1517 = vst [vmem:[%s172 + $0x2b0] sm:$0xff] %v1389
      %1518 = vst [vmem:[%s172 + $0x2b8] sm:$0xff] %v1390
      %1519 = vst [vmem:[%s172 + $0x2c0] sm:$0xff] %v1391
      %1520 = vst [vmem:[%s172 + $0x2c8] sm:$0xff] %v1392
      %1521 = vst [vmem:[%s172 + $0x2d0] sm:$0xff] %v1393
      %1522 = vst [vmem:[%s172 + $0x2d8] sm:$0xff] %v1394
      %1523 = vst [vmem:[%s172 + $0x2e0] sm:$0xff] %v1395
      %1524 = vst [vmem:[%s172 + $0x2e8] sm:$0xff] %v1396
      %1525 = vst [vmem:[%s172 + $0x2f0] sm:$0xff] %v1397
      %1526 = vst [vmem:[%s172 + $0x2f8] sm:$0xff] %v1398
      %1527 = vst [vmem:[%s172 + $0x300] sm:$0xff] %v1399
      %1528 = vst [vmem:[%s172 + $0x308] sm:$0xff] %v1400
      %1529 = vst [vmem:[%s172 + $0x310] sm:$0xff] %v1401
      %1530 = vst [vmem:[%s172 + $0x318] sm:$0xff] %v1402
      %1531 = vst [vmem:[%s172 + $0x320] sm:$0xff] %v1403
      %1532 = vst [vmem:[%s172 + $0x328] sm:$0xff] %v1404
      %1533 = vst [vmem:[%s172 + $0x330] sm:$0xff] %v1405
      %1534 = vst [vmem:[%s172 + $0x338] sm:$0xff] %v1406
      %1535 = vst [vmem:[%s172 + $0x340] sm:$0xff] %v1407
      %1536 = vst [vmem:[%s172 + $0x348] sm:$0xff] %v1408
      %1537 = vst [vmem:[%s172 + $0x350] sm:$0xff] %v1409
      %1538 = vst [vmem:[%s172 + $0x358] sm:$0xff] %v1410
      %1539 = vst [vmem:[%s172 + $0x360] sm:$0xff] %v1411
      %1540 = vst [vmem:[%s172 + $0x368] sm:$0xff] %v1412
      %1541 = vst [vmem:[%s172 + $0x370] sm:$0xff] %v1413
      %1542 = vst [vmem:[%s172 + $0x378] sm:$0xff] %v1414
      %1543 = vst [vmem:[%s172 + $0x380] sm:$0xff] %v1415
      %1544 = vst [vmem:[%s172 + $0x388] sm:$0xff] %v1416
      %1545 = vst [vmem:[%s172 + $0x390] sm:$0xff] %v1417
      %1546 = vst [vmem:[%s172 + $0x398] sm:$0xff] %v1418
      %1547 = vst [vmem:[%s172 + $0x3a0] sm:$0xff] %v1419
      %1548 = vst [vmem:[%s172 + $0x3a8] sm:$0xff] %v1420
      %1549 = vst [vmem:[%s172 + $0x3b0] sm:$0xff] %v1421
      %1550 = vst [vmem:[%s172 + $0x3b8] sm:$0xff] %v1422
      %1551 = vst [vmem:[%s172 + $0x3c0] sm:$0xff] %v1423
      %1552 = vst [vmem:[%s172 + $0x3c8] sm:$0xff] %v1424
      %1553 = vst [vmem:[%s172 + $0x3d0] sm:$0xff] %v1425
      %1554 = vst [vmem:[%s172 + $0x3d8] sm:$0xff] %v1426
      %1555 = vst [vmem:[%s172 + $0x3e0] sm:$0xff] %v1427
      %1556 = vst [vmem:[%s172 + $0x3e8] sm:$0xff] %v1428
      %1557 = vst [vmem:[%s172 + $0x3f0] sm:$0xff] %v1429
      %1558 = vst [vmem:[%s172 + $0x3f8] sm:$0xff] %v1430
      %s1559 = smul.u32 128, %s14
      %p1560 = scmp.lt.s32.totalorder %s1559, 255
      %s1561 = scalar_select %p1560, %s1559, 255
      %s1562 = smul.addr %s1561, 8
      %s1563 = scalar_lea.vmem %s3, %s1562
      // Predicated region
      $region33: #{model_forward.4} parent=31 // pred_check
        %p1564 = pneg %p100
      $region34: #{model_forward.4} parent=31 // pred_check_branch
        %1566 = sbr.rel (%p1564) target = $region36
      $region35: #{model_forward.4} parent=31 // pred_region
        %s1567 = smul.u32 128, %s14
      $region36: #{model_forward.4} parent=31 // pred_fallthru
        _
    $region32: #{model_forward.4} parent=5 // pred_fallthru
      _
    %p1568 = scmp.le.s32.totalorder 2, %s9
    // Predicated region
    $region37: #{model_forward.4} parent=5 // pred_check
      %p1569 = pneg %p1568
    $region38: #{model_forward.4} parent=5 // pred_check_branch
      %1571 = sbr.rel (%p1569) target = $region40
    $region39: #{model_forward.4} parent=5 // pred_region
      %s1572 = ssub.s32 %s9, 2
      // Predicated region
      $region41: #{model_forward.4} parent=39 // pred_check
        %p1573 = pneg %p106
      $region42: #{model_forward.4} parent=39 // pred_check_branch
        %1575 = sbr.rel (%p1573) target = $region44
      $region43: #{model_forward.4} parent=39 // pred_region
        %s1576 = smul.u32 128, %s15
        %p1577 = scmp.lt.s32.totalorder %s1576, 255
        %s1578 = scalar_select %p1577, %s1576, 255
        %s1579 = smul.addr %s1578, 8
        %s1580 = scalar_lea.vmem %s3, %s1579
      $region44: #{model_forward.4} parent=39 // pred_fallthru
        _
    $region40: #{model_forward.4} parent=5 // pred_fallthru
      _
  $region6: #{model_forward.4} parent=0 // loop_footer
    %s13 = sadd.s32 1, %s9
  $region7: #{model_forward.4} parent=0 // loop_footer_branch
    %8 = sbr.rel target = $region3
  $region8: #{model_forward.4} parent=0 // loop_exit
    _

// kernel: model_forward.5
$region0: #{model_forward.5}
  #allocation0 [shape = 'u32[]', space=smem, size = 0x4, offset = 0x4, fixed_abs, tag = 'smem constant byte address 0x4 - core index']
  #allocation1 [shape = 'u32[144,128]{1,0:T(1,128)}', space=vmem, size = 0x12000, scoped, tag = 'internal scratch']
  %s0 = inlined_call_operand.vmem [shape: bf16[512,896], index: 0, kind: input, shape index: {}]
  %s1 = inlined_call_operand.vmem [shape: bf16[896,128], index: 1, kind: input, shape index: {}]
  %s2 = inlined_call_operand.vmem [shape: f32[1,128], index: 2, kind: input, shape index: {}]
  %s3 = inlined_call_operand.vmem [shape: f32[512,128], index: 3, kind: output, shape index: {}]
  %s4 = sld [smem:[#allocation0]]
  $region45: #{model_forward.5} parent=0
    _
  %s6 = ssub.s32 1, %s4
  %s7 = scalar_select 0, %s6, %s4
  loop: start=0, step=1, limit=4
  $region2: #{model_forward.5} parent=0 // loop_pre_header
    _
  $region3: #{model_forward.5} parent=0 // loop_header
    %s9 = sphi 0, %s13
    %p10 = scmp.ge.s32.totalorder %s9, 4
    %s19 = sphi 0, %s21
    %s22 = sphi 0, %s19
    %s23 = sphi 0, %s22
    %s39 = sphi 0, %s23
    %s43 = sphi 0, %s43
    %s45 = sphi 0, %s43
    %s46 = sphi 0, %s45
    %s60 = sphi 0, %s46
    %s64 = sphi 0, %s64
    %s66 = sphi 0, %s64
    %s67 = sphi 0, %s66
    %s81 = sphi 0, %s67
    %s87 = sphi 0, %s89
    %s90 = sphi 0, %s87
    %s91 = sphi 0, %s90
    %s107 = sphi 0, %s91
  $region4: #{model_forward.5} parent=0 // loop_header_branch
    %12 = sbr.rel (%p10) target = $region8
  $region5: #{model_forward.5} parent=0 // loop_body
    %s14 = ssub.s32 %s9, 1
    %s15 = ssub.s32 %s9, 2
    %s16 = sadd.s32 %s9, 1
    %s17 = ssub.s32 %s9, %s16
    %p18 = scmp.eq.s32.totalorder %s17, 0
    %s20 = sadd.s32 %s19, 1
    %s21 = scalar_select %p18, %s19, %s20
    %p24 = pneg %p18
    %p25 = scmp.eq.s32.totalorder %s9, 1
    %p26 = por %p24, %p25
    %p27 = scmp.ne.s32.totalorder %s19, %s22
    %p28 = scmp.eq.s32.totalorder %s9, 0
    %p29 = por %p27, %p28
    %p30 = scmp.ne.s32.totalorder %s19, %s22
    %p31 = scmp.eq.s32.totalorder %s14, 1
    %p32 = por %p30, %p31
    %p33 = scmp.ne.s32.totalorder %s22, %s23
    %p34 = scmp.eq.s32.totalorder %s14, 0
    %p35 = por %p33, %p34
    %p36 = scmp.ne.s32.totalorder %s22, %s23
    %p37 = scmp.eq.s32.totalorder %s15, 1
    %p38 = por %p36, %p37
    %p40 = scmp.ne.s32.totalorder %s23, %s39
    %p41 = scmp.eq.s32.totalorder %s15, 0
    %p42 = por %p40, %p41
    %s44 = sadd.s32 %s43, 1
    %p47 = scmp.eq.s32.totalorder %s9, 1
    %p48 = scmp.ne.s32.totalorder %s43, %s45
    %p49 = scmp.eq.s32.totalorder %s9, 0
    %p50 = por %p48, %p49
    %p51 = scmp.ne.s32.totalorder %s43, %s45
    %p52 = scmp.eq.s32.totalorder %s14, 1
    %p53 = por %p51, %p52
    %p54 = scmp.ne.s32.totalorder %s45, %s46
    %p55 = scmp.eq.s32.totalorder %s14, 0
    %p56 = por %p54, %p55
    %p57 = scmp.ne.s32.totalorder %s45, %s46
    %p58 = scmp.eq.s32.totalorder %s15, 1
    %p59 = por %p57, %p58
    %p61 = scmp.ne.s32.totalorder %s46, %s60
    %p62 = scmp.eq.s32.totalorder %s15, 0
    %p63 = por %p61, %p62
    %s65 = sadd.s32 %s64, 1
    %p68 = scmp.eq.s32.totalorder %s9, 1
    %p69 = scmp.ne.s32.totalorder %s64, %s66
    %p70 = scmp.eq.s32.totalorder %s9, 0
    %p71 = por %p69, %p70
    %p72 = scmp.ne.s32.totalorder %s64, %s66
    %p73 = scmp.eq.s32.totalorder %s14, 1
    %p74 = por %p72, %p73
    %p75 = scmp.ne.s32.totalorder %s66, %s67
    %p76 = scmp.eq.s32.totalorder %s14, 0
    %p77 = por %p75, %p76
    %p78 = scmp.ne.s32.totalorder %s66, %s67
    %p79 = scmp.eq.s32.totalorder %s15, 1
    %p80 = por %p78, %p79
    %p82 = scmp.ne.s32.totalorder %s67, %s81
    %p83 = scmp.eq.s32.totalorder %s15, 0
    %p84 = por %p82, %p83
    %s85 = ssub.s32 %s9, %s16
    %p86 = scmp.eq.s32.totalorder %s85, 0
    %s88 = sadd.s32 %s87, 1
    %s89 = scalar_select %p86, %s87, %s88
    %p92 = pneg %p86
    %p93 = scmp.eq.s32.totalorder %s9, 1
    %p94 = por %p92, %p93
    %p95 = scmp.ne.s32.totalorder %s87, %s90
    %p96 = scmp.eq.s32.totalorder %s9, 0
    %p97 = por %p95, %p96
    %p98 = scmp.ne.s32.totalorder %s87, %s90
    %p99 = scmp.eq.s32.totalorder %s14, 1
    %p100 = por %p98, %p99
    %p101 = scmp.ne.s32.totalorder %s90, %s91
    %p102 = scmp.eq.s32.totalorder %s14, 0
    %p103 = por %p101, %p102
    %p104 = scmp.ne.s32.totalorder %s90, %s91
    %p105 = scmp.eq.s32.totalorder %s15, 1
    %p106 = por %p104, %p105
    %p108 = scmp.ne.s32.totalorder %s91, %s107
    %p109 = scmp.eq.s32.totalorder %s15, 0
    %p110 = por %p108, %p109
    %p111 = scmp.le.s32.totalorder 1, %s9
    %p112 = scmp.lt.s32.totalorder %s9, 3
    %p113 = pnand %p111, %p112
    %p114 = pneg %p113
    // Predicated region
    $region9: #{model_forward.5} parent=5 // pred_check
      _
    $region10: #{model_forward.5} parent=5 // pred_check_branch
      %116 = sbr.rel (%p113) target = $region12
    $region11: #{model_forward.5} parent=5 // pred_region
      %s117 = ssub.s32 %s9, 1
      // Predicated region
      $region13: #{model_forward.5} parent=11 // pred_check
        %p118 = pneg %p56
      $region14: #{model_forward.5} parent=11 // pred_check_branch
        %120 = sbr.rel (%p118) target = $region16
      $region15: #{model_forward.5} parent=11 // pred_region
        _
      $region16: #{model_forward.5} parent=11 // pred_fallthru
        _
      // Predicated region
      $region17: #{model_forward.5} parent=11 // pred_check
        %p121 = pneg %p77
      $region18: #{model_forward.5} parent=11 // pred_check_branch
        %123 = sbr.rel (%p121) target = $region20
      $region19: #{model_forward.5} parent=11 // pred_region
        _
      $region20: #{model_forward.5} parent=11 // pred_fallthru
        _
    $region12: #{model_forward.5} parent=5 // pred_fallthru
      _
    %p124 = scmp.lt.s32.totalorder %s9, 2
    // Predicated region
    $region21: #{model_forward.5} parent=5 // pred_check
      %p125 = pneg %p124
    $region22: #{model_forward.5} parent=5 // pred_check_branch
      %127 = sbr.rel (%p125) target = $region24
    $region23: #{model_forward.5} parent=5 // pred_region
      // Predicated region
      $region25: #{model_forward.5} parent=23 // pred_check
        %p128 = pneg %p29
      $region26: #{model_forward.5} parent=23 // pred_check_branch
        %130 = sbr.rel (%p128) target = $region28
      $region27: #{model_forward.5} parent=23 // pred_region
        %s131 = smul.u32 32, %s9
        %p132 = scmp.lt.s32.totalorder %s131, 63
        %s133 = scalar_select %p132, %s131, 63
        %s134 = smul.addr %s133, 7
        %s135 = smul.addr %s134, 4
        %s136 = scalar_lea.vmem %s0, %s135
        %s137 = smul.u32 32, %s9
      $region28: #{model_forward.5} parent=23 // pred_fallthru
        _
    $region24: #{model_forward.5} parent=5 // pred_fallthru
      _
    %p138 = scmp.le.s32.totalorder 1, %s9
    %p139 = scmp.lt.s32.totalorder %s9, 3
    %p140 = pnand %p138, %p139
    %p141 = pneg %p140
    // Predicated region
    $region29: #{model_forward.5} parent=5 // pred_check
      _
    $region30: #{model_forward.5} parent=5 // pred_check_branch
      %143 = sbr.rel (%p140) target = $region32
    $region31: #{model_forward.5} parent=5 // pred_region
      %s144 = ssub.s32 %s9, 1
      %s145 = smul.u32 32, %s14
      %p146 = scmp.lt.s32.totalorder %s145, 63
      %s147 = scalar_select %p146, %s145, 63
      %s148 = smul.addr %s147, 7
      %s149 = smul.addr %s148, 4
      %s150 = scalar_lea.vmem %s0, %s149
      %p151 = pneg %p35
      %p152 = pneg %p32
      %p153 = pneg %p56
      %p154 = pneg %p53
      %p155 = pneg %p77
      %p156 = pneg %p74
      %p157 = pneg %p103
      %p158 = pneg %p100
      %s159 = smul.u32 32, %s14
      %p160 = scmp.lt.s32.totalorder %s159, 63
      %s161 = scalar_select %p160, %s159, 63
      %s162 = smul.addr %s161, 8
      %s163 = scalar_lea.vmem %s3, %s162
      %s164 = smul.u32 32, %s14
      %p165 = scmp.lt.s32.totalorder %s164, 63
      %s166 = scalar_select %p165, %s164, 63
      %s167 = smul.addr %s166, 7
      %s168 = smul.addr %s167, 4
      %s169 = scalar_lea.vmem %s0, %s168
      %s170 = smul.u32 32, %s14
      %s171 = smul.u32 32, %s14
      %p172 = scmp.lt.s32.totalorder %s171, 63
      %s173 = scalar_select %p172, %s171, 63
      %s174 = smul.addr %s173, 8
      %s175 = scalar_lea.vmem %s3, %s174
      %s176 = smul.u32 32, %s14
      %v178 = vld [vmem:[%s169] sm:$0xff]
      %v179 = vld [vmem:[%s169 + $0x8] sm:$0xff]
      %v180 = vld [vmem:[%s169 + $0x10] sm:$0xff]
      %v181 = vld [vmem:[%s169 + $0x18] sm:$0xf]
      %v182 = vld [vmem:[%s169 + $0x1c] sm:$0xff]
      %v183 = vld [vmem:[%s169 + $0x24] sm:$0xff]
      %v184 = vld [vmem:[%s169 + $0x2c] sm:$0xff]
      %v185 = vld [vmem:[%s169 + $0x34] sm:$0xf]
      %v186 = vld [vmem:[%s169 + $0x38] sm:$0xff]
      %v187 = vld [vmem:[%s169 + $0x40] sm:$0xff]
      %v188 = vld [vmem:[%s169 + $0x48] sm:$0xff]
      %v189 = vld [vmem:[%s169 + $0x50] sm:$0xf]
      %v190 = vld [vmem:[%s169 + $0x54] sm:$0xff]
      %v191 = vld [vmem:[%s169 + $0x5c] sm:$0xff]
      %v192 = vld [vmem:[%s169 + $0x64] sm:$0xff]
      %v193 = vld [vmem:[%s169 + $0x6c] sm:$0xf]
      %v194 = vld [vmem:[%s169 + $0x70] sm:$0xff]
      %v195 = vld [vmem:[%s169 + $0x78] sm:$0xff]
      %v196 = vld [vmem:[%s169 + $0x80] sm:$0xff]
      %v197 = vld [vmem:[%s169 + $0x88] sm:$0xf]
      %v198 = vld [vmem:[%s169 + $0x8c] sm:$0xff]
      %v199 = vld [vmem:[%s169 + $0x94] sm:$0xff]
      %v200 = vld [vmem:[%s169 + $0x9c] sm:$0xff]
      %v201 = vld [vmem:[%s169 + $0xa4] sm:$0xf]
      %v202 = vld [vmem:[%s169 + $0xa8] sm:$0xff]
      %v203 = vld [vmem:[%s169 + $0xb0] sm:$0xff]
      %v204 = vld [vmem:[%s169 + $0xb8] sm:$0xff]
      %v205 = vld [vmem:[%s169 + $0xc0] sm:$0xf]
      %v206 = vld [vmem:[%s169 + $0xc4] sm:$0xff]
      %v207 = vld [vmem:[%s169 + $0xcc] sm:$0xff]
      %v208 = vld [vmem:[%s169 + $0xd4] sm:$0xff]
      %v209 = vld [vmem:[%s169 + $0xdc] sm:$0xf]
      %v210 = vld [vmem:[%s169 + $0xe0] sm:$0xff]
      %v211 = vld [vmem:[%s169 + $0xe8] sm:$0xff]
      %v212 = vld [vmem:[%s169 + $0xf0] sm:$0xff]
      %v213 = vld [vmem:[%s169 + $0xf8] sm:$0xf]
      %v214 = vld [vmem:[%s169 + $0xfc] sm:$0xff]
      %v215 = vld [vmem:[%s169 + $0x104] sm:$0xff]
      %v216 = vld [vmem:[%s169 + $0x10c] sm:$0xff]
      %v217 = vld [vmem:[%s169 + $0x114] sm:$0xf]
      %v218 = vld [vmem:[%s169 + $0x118] sm:$0xff]
      %v219 = vld [vmem:[%s169 + $0x120] sm:$0xff]
      %v220 = vld [vmem:[%s169 + $0x128] sm:$0xff]
      %v221 = vld [vmem:[%s169 + $0x130] sm:$0xf]
      %v222 = vld [vmem:[%s169 + $0x134] sm:$0xff]
      %v223 = vld [vmem:[%s169 + $0x13c] sm:$0xff]
      %v224 = vld [vmem:[%s169 + $0x144] sm:$0xff]
      %v225 = vld [vmem:[%s169 + $0x14c] sm:$0xf]
      %v226 = vld [vmem:[%s169 + $0x150] sm:$0xff]
      %v227 = vld [vmem:[%s169 + $0x158] sm:$0xff]
      %v228 = vld [vmem:[%s169 + $0x160] sm:$0xff]
      %v229 = vld [vmem:[%s169 + $0x168] sm:$0xf]
      %v230 = vld [vmem:[%s169 + $0x16c] sm:$0xff]
      %v231 = vld [vmem:[%s169 + $0x174] sm:$0xff]
      %v232 = vld [vmem:[%s169 + $0x17c] sm:$0xff]
      %v233 = vld [vmem:[%s169 + $0x184] sm:$0xf]
      %v234 = vld [vmem:[%s169 + $0x188] sm:$0xff]
      %v235 = vld [vmem:[%s169 + $0x190] sm:$0xff]
      %v236 = vld [vmem:[%s169 + $0x198] sm:$0xff]
      %v237 = vld [vmem:[%s169 + $0x1a0] sm:$0xf]
      %v238 = vld [vmem:[%s169 + $0x1a4] sm:$0xff]
      %v239 = vld [vmem:[%s169 + $0x1ac] sm:$0xff]
      %v240 = vld [vmem:[%s169 + $0x1b4] sm:$0xff]
      %v241 = vld [vmem:[%s169 + $0x1bc] sm:$0xf]
      %v242 = vld [vmem:[%s169 + $0x1c0] sm:$0xff]
      %v243 = vld [vmem:[%s169 + $0x1c8] sm:$0xff]
      %v244 = vld [vmem:[%s169 + $0x1d0] sm:$0xff]
      %v245 = vld [vmem:[%s169 + $0x1d8] sm:$0xf]
      %v246 = vld [vmem:[%s169 + $0x1dc] sm:$0xff]
      %v247 = vld [vmem:[%s169 + $0x1e4] sm:$0xff]
      %v248 = vld [vmem:[%s169 + $0x1ec] sm:$0xff]
      %v249 = vld [vmem:[%s169 + $0x1f4] sm:$0xf]
      %v250 = vld [vmem:[%s169 + $0x1f8] sm:$0xff]
      %v251 = vld [vmem:[%s169 + $0x200] sm:$0xff]
      %v252 = vld [vmem:[%s169 + $0x208] sm:$0xff]
      %v253 = vld [vmem:[%s169 + $0x210] sm:$0xf]
      %v254 = vld [vmem:[%s169 + $0x214] sm:$0xff]
      %v255 = vld [vmem:[%s169 + $0x21c] sm:$0xff]
      %v256 = vld [vmem:[%s169 + $0x224] sm:$0xff]
      %v257 = vld [vmem:[%s169 + $0x22c] sm:$0xf]
      %v258 = vld [vmem:[%s169 + $0x230] sm:$0xff]
      %v259 = vld [vmem:[%s169 + $0x238] sm:$0xff]
      %v260 = vld [vmem:[%s169 + $0x240] sm:$0xff]
      %v261 = vld [vmem:[%s169 + $0x248] sm:$0xf]
      %v262 = vld [vmem:[%s169 + $0x24c] sm:$0xff]
      %v263 = vld [vmem:[%s169 + $0x254] sm:$0xff]
      %v264 = vld [vmem:[%s169 + $0x25c] sm:$0xff]
      %v265 = vld [vmem:[%s169 + $0x264] sm:$0xf]
      %v266 = vld [vmem:[%s169 + $0x268] sm:$0xff]
      %v267 = vld [vmem:[%s169 + $0x270] sm:$0xff]
      %v268 = vld [vmem:[%s169 + $0x278] sm:$0xff]
      %v269 = vld [vmem:[%s169 + $0x280] sm:$0xf]
      %v270 = vld [vmem:[%s169 + $0x284] sm:$0xff]
      %v271 = vld [vmem:[%s169 + $0x28c] sm:$0xff]
      %v272 = vld [vmem:[%s169 + $0x294] sm:$0xff]
      %v273 = vld [vmem:[%s169 + $0x29c] sm:$0xf]
      %v274 = vld [vmem:[%s169 + $0x2a0] sm:$0xff]
      %v275 = vld [vmem:[%s169 + $0x2a8] sm:$0xff]
      %v276 = vld [vmem:[%s169 + $0x2b0] sm:$0xff]
      %v277 = vld [vmem:[%s169 + $0x2b8] sm:$0xf]
      %v278 = vld [vmem:[%s169 + $0x2bc] sm:$0xff]
      %v279 = vld [vmem:[%s169 + $0x2c4] sm:$0xff]
      %v280 = vld [vmem:[%s169 + $0x2cc] sm:$0xff]
      %v281 = vld [vmem:[%s169 + $0x2d4] sm:$0xf]
      %v282 = vld [vmem:[%s169 + $0x2d8] sm:$0xff]
      %v283 = vld [vmem:[%s169 + $0x2e0] sm:$0xff]
      %v284 = vld [vmem:[%s169 + $0x2e8] sm:$0xff]
      %v285 = vld [vmem:[%s169 + $0x2f0] sm:$0xf]
      %v286 = vld [vmem:[%s169 + $0x2f4] sm:$0xff]
      %v287 = vld [vmem:[%s169 + $0x2fc] sm:$0xff]
      %v288 = vld [vmem:[%s169 + $0x304] sm:$0xff]
      %v289 = vld [vmem:[%s169 + $0x30c] sm:$0xf]
      %v290 = vld [vmem:[%s169 + $0x310] sm:$0xff]
      %v291 = vld [vmem:[%s169 + $0x318] sm:$0xff]
      %v292 = vld [vmem:[%s169 + $0x320] sm:$0xff]
      %v293 = vld [vmem:[%s169 + $0x328] sm:$0xf]
      %v294 = vld [vmem:[%s169 + $0x32c] sm:$0xff]
      %v295 = vld [vmem:[%s169 + $0x334] sm:$0xff]
      %v296 = vld [vmem:[%s169 + $0x33c] sm:$0xff]
      %v297 = vld [vmem:[%s169 + $0x344] sm:$0xf]
      %v298 = vld [vmem:[%s169 + $0x348] sm:$0xff]
      %v299 = vld [vmem:[%s169 + $0x350] sm:$0xff]
      %v300 = vld [vmem:[%s169 + $0x358] sm:$0xff]
      %v301 = vld [vmem:[%s169 + $0x360] sm:$0xf]
      %v302 = vld [vmem:[%s169 + $0x364] sm:$0xff]
      %v303 = vld [vmem:[%s169 + $0x36c] sm:$0xff]
      %v304 = vld [vmem:[%s169 + $0x374] sm:$0xff]
      %v305 = vld [vmem:[%s169 + $0x37c] sm:$0xf]
      %v306 = vld [vmem:[%s1] sm:$0xf]
      %v307 = vld [vmem:[%s1 + $0x4] sm:$0xf]
      %v308 = vld [vmem:[%s1 + $0x8] sm:$0xf]
      %v309 = vld [vmem:[%s1 + $0xc] sm:$0xf]
      %v310 = vld [vmem:[%s1 + $0x10] sm:$0xf]
      %v311 = vld [vmem:[%s1 + $0x14] sm:$0xf]
      %v312 = vld [vmem:[%s1 + $0x18] sm:$0xf]
      %v313 = vld [vmem:[%s1 + $0x1c] sm:$0xf]
      %v314 = vld [vmem:[%s1 + $0x20] sm:$0xf]
      %v315 = vld [vmem:[%s1 + $0x24] sm:$0xf]
      %v316 = vld [vmem:[%s1 + $0x28] sm:$0xf]
      %v317 = vld [vmem:[%s1 + $0x2c] sm:$0xf]
      %v318 = vld [vmem:[%s1 + $0x30] sm:$0xf]
      %v319 = vld [vmem:[%s1 + $0x34] sm:$0xf]
      %v320 = vld [vmem:[%s1 + $0x38] sm:$0xf]
      %v321 = vld [vmem:[%s1 + $0x3c] sm:$0xf]
      %v322 = vld [vmem:[%s1 + $0x40] sm:$0xf]
      %v323 = vld [vmem:[%s1 + $0x44] sm:$0xf]
      %v324 = vld [vmem:[%s1 + $0x48] sm:$0xf]
      %v325 = vld [vmem:[%s1 + $0x4c] sm:$0xf]
      %v326 = vld [vmem:[%s1 + $0x50] sm:$0xf]
      %v327 = vld [vmem:[%s1 + $0x54] sm:$0xf]
      %v328 = vld [vmem:[%s1 + $0x58] sm:$0xf]
      %v329 = vld [vmem:[%s1 + $0x5c] sm:$0xf]
      %v330 = vld [vmem:[%s1 + $0x60] sm:$0xf]
      %v331 = vld [vmem:[%s1 + $0x64] sm:$0xf]
      %v332 = vld [vmem:[%s1 + $0x68] sm:$0xf]
      %v333 = vld [vmem:[%s1 + $0x6c] sm:$0xf]
      %v334 = vld [vmem:[%s1 + $0x70] sm:$0xf]
      %v335 = vld [vmem:[%s1 + $0x74] sm:$0xf]
      %v336 = vld [vmem:[%s1 + $0x78] sm:$0xf]
      %v337 = vld [vmem:[%s1 + $0x7c] sm:$0xf]
      %v338 = vld [vmem:[%s1 + $0x80] sm:$0xf]
      %v339 = vld [vmem:[%s1 + $0x84] sm:$0xf]
      %v340 = vld [vmem:[%s1 + $0x88] sm:$0xf]
      %v341 = vld [vmem:[%s1 + $0x8c] sm:$0xf]
      %v342 = vld [vmem:[%s1 + $0x90] sm:$0xf]
      %v343 = vld [vmem:[%s1 + $0x94] sm:$0xf]
      %v344 = vld [vmem:[%s1 + $0x98] sm:$0xf]
      %v345 = vld [vmem:[%s1 + $0x9c] sm:$0xf]
      %v346 = vld [vmem:[%s1 + $0xa0] sm:$0xf]
      %v347 = vld [vmem:[%s1 + $0xa4] sm:$0xf]
      %v348 = vld [vmem:[%s1 + $0xa8] sm:$0xf]
      %v349 = vld [vmem:[%s1 + $0xac] sm:$0xf]
      %v350 = vld [vmem:[%s1 + $0xb0] sm:$0xf]
      %v351 = vld [vmem:[%s1 + $0xb4] sm:$0xf]
      %v352 = vld [vmem:[%s1 + $0xb8] sm:$0xf]
      %v353 = vld [vmem:[%s1 + $0xbc] sm:$0xf]
      %v354 = vld [vmem:[%s1 + $0xc0] sm:$0xf]
      %v355 = vld [vmem:[%s1 + $0xc4] sm:$0xf]
      %v356 = vld [vmem:[%s1 + $0xc8] sm:$0xf]
      %v357 = vld [vmem:[%s1 + $0xcc] sm:$0xf]
      %v358 = vld [vmem:[%s1 + $0xd0] sm:$0xf]
      %v359 = vld [vmem:[%s1 + $0xd4] sm:$0xf]
      %v360 = vld [vmem:[%s1 + $0xd8] sm:$0xf]
      %v361 = vld [vmem:[%s1 + $0xdc] sm:$0xf]
      %v362 = vld [vmem:[%s1 + $0xe0] sm:$0xf]
      %v363 = vld [vmem:[%s1 + $0xe4] sm:$0xf]
      %v364 = vld [vmem:[%s1 + $0xe8] sm:$0xf]
      %v365 = vld [vmem:[%s1 + $0xec] sm:$0xf]
      %v366 = vld [vmem:[%s1 + $0xf0] sm:$0xf]
      %v367 = vld [vmem:[%s1 + $0xf4] sm:$0xf]
      %v368 = vld [vmem:[%s1 + $0xf8] sm:$0xf]
      %v369 = vld [vmem:[%s1 + $0xfc] sm:$0xf]
      %v370 = vld [vmem:[%s1 + $0x100] sm:$0xf]
      %v371 = vld [vmem:[%s1 + $0x104] sm:$0xf]
      %v372 = vld [vmem:[%s1 + $0x108] sm:$0xf]
      %v373 = vld [vmem:[%s1 + $0x10c] sm:$0xf]
      %v374 = vld [vmem:[%s1 + $0x110] sm:$0xf]
      %v375 = vld [vmem:[%s1 + $0x114] sm:$0xf]
      %v376 = vld [vmem:[%s1 + $0x118] sm:$0xf]
      %v377 = vld [vmem:[%s1 + $0x11c] sm:$0xf]
      %v378 = vld [vmem:[%s1 + $0x120] sm:$0xf]
      %v379 = vld [vmem:[%s1 + $0x124] sm:$0xf]
      %v380 = vld [vmem:[%s1 + $0x128] sm:$0xf]
      %v381 = vld [vmem:[%s1 + $0x12c] sm:$0xf]
      %v382 = vld [vmem:[%s1 + $0x130] sm:$0xf]
      %v383 = vld [vmem:[%s1 + $0x134] sm:$0xf]
      %v384 = vld [vmem:[%s1 + $0x138] sm:$0xf]
      %v385 = vld [vmem:[%s1 + $0x13c] sm:$0xf]
      %v386 = vld [vmem:[%s1 + $0x140] sm:$0xf]
      %v387 = vld [vmem:[%s1 + $0x144] sm:$0xf]
      %v388 = vld [vmem:[%s1 + $0x148] sm:$0xf]
      %v389 = vld [vmem:[%s1 + $0x14c] sm:$0xf]
      %v390 = vld [vmem:[%s1 + $0x150] sm:$0xf]
      %v391 = vld [vmem:[%s1 + $0x154] sm:$0xf]
      %v392 = vld [vmem:[%s1 + $0x158] sm:$0xf]
      %v393 = vld [vmem:[%s1 + $0x15c] sm:$0xf]
      %v394 = vld [vmem:[%s1 + $0x160] sm:$0xf]
      %v395 = vld [vmem:[%s1 + $0x164] sm:$0xf]
      %v396 = vld [vmem:[%s1 + $0x168] sm:$0xf]
      %v397 = vld [vmem:[%s1 + $0x16c] sm:$0xf]
      %v398 = vld [vmem:[%s1 + $0x170] sm:$0xf]
      %v399 = vld [vmem:[%s1 + $0x174] sm:$0xf]
      %v400 = vld [vmem:[%s1 + $0x178] sm:$0xf]
      %v401 = vld [vmem:[%s1 + $0x17c] sm:$0xf]
      %v402 = vld [vmem:[%s1 + $0x180] sm:$0xf]
      %v403 = vld [vmem:[%s1 + $0x184] sm:$0xf]
      %v404 = vld [vmem:[%s1 + $0x188] sm:$0xf]
      %v405 = vld [vmem:[%s1 + $0x18c] sm:$0xf]
      %v406 = vld [vmem:[%s1 + $0x190] sm:$0xf]
      %v407 = vld [vmem:[%s1 + $0x194] sm:$0xf]
      %v408 = vld [vmem:[%s1 + $0x198] sm:$0xf]
      %v409 = vld [vmem:[%s1 + $0x19c] sm:$0xf]
      %v410 = vld [vmem:[%s1 + $0x1a0] sm:$0xf]
      %v411 = vld [vmem:[%s1 + $0x1a4] sm:$0xf]
      %v412 = vld [vmem:[%s1 + $0x1a8] sm:$0xf]
      %v413 = vld [vmem:[%s1 + $0x1ac] sm:$0xf]
      %v414 = vld [vmem:[%s1 + $0x1b0] sm:$0xf]
      %v415 = vld [vmem:[%s1 + $0x1b4] sm:$0xf]
      %v416 = vld [vmem:[%s1 + $0x1b8] sm:$0xf]
      %v417 = vld [vmem:[%s1 + $0x1bc] sm:$0xf]
      %v418 = vld [vmem:[%s2] sm:$0x1]
      %v420 = vlaneseq
      %v421 = vshrl.u32 %v420, 7
      %v422 = vsub.s32 0, %v421
      %v423 = vrot.slane %v418, %v422
      %v553 = vunpack.c.l.b16 %v178
      %v554 = vunpack.c.h.b16 %v178
      %v555 = vunpack.c.l.b16 %v179
      %v556 = vunpack.c.h.b16 %v179
      %v557 = vunpack.c.l.b16 %v180
      %v558 = vunpack.c.h.b16 %v180
      %v559 = vunpack.c.l.b16 %v181
      %v560 = vunpack.c.l.b16 %v182
      %v561 = vunpack.c.h.b16 %v182
      %v562 = vunpack.c.l.b16 %v183
      %v563 = vunpack.c.h.b16 %v183
      %v564 = vunpack.c.l.b16 %v184
      %v565 = vunpack.c.h.b16 %v184
      %v566 = vunpack.c.l.b16 %v185
      %v567 = vunpack.c.l.b16 %v186
      %v568 = vunpack.c.h.b16 %v186
      %v569 = vunpack.c.l.b16 %v187
      %v570 = vunpack.c.h.b16 %v187
      %v571 = vunpack.c.l.b16 %v188
      %v572 = vunpack.c.h.b16 %v188
      %v573 = vunpack.c.l.b16 %v189
      %v574 = vunpack.c.l.b16 %v190
      %v575 = vunpack.c.h.b16 %v190
      %v576 = vunpack.c.l.b16 %v191
      %v577 = vunpack.c.h.b16 %v191
      %v578 = vunpack.c.l.b16 %v192
      %v579 = vunpack.c.h.b16 %v192
      %v580 = vunpack.c.l.b16 %v193
      %v581 = vunpack.c.l.b16 %v194
      %v582 = vunpack.c.h.b16 %v194
      %v583 = vunpack.c.l.b16 %v195
      %v584 = vunpack.c.h.b16 %v195
      %v585 = vunpack.c.l.b16 %v196
      %v586 = vunpack.c.h.b16 %v196
      %v587 = vunpack.c.l.b16 %v197
      %v588 = vunpack.c.l.b16 %v198
      %v589 = vunpack.c.h.b16 %v198
      %v590 = vunpack.c.l.b16 %v199
      %v591 = vunpack.c.h.b16 %v199
      %v592 = vunpack.c.l.b16 %v200
      %v593 = vunpack.c.h.b16 %v200
      %v594 = vunpack.c.l.b16 %v201
      %v595 = vunpack.c.l.b16 %v202
      %v596 = vunpack.c.h.b16 %v202
      %v597 = vunpack.c.l.b16 %v203
      %v598 = vunpack.c.h.b16 %v203
      %v599 = vunpack.c.l.b16 %v204
      %v600 = vunpack.c.h.b16 %v204
      %v601 = vunpack.c.l.b16 %v205
      %v602 = vunpack.c.l.b16 %v206
      %v603 = vunpack.c.h.b16 %v206
      %v604 = vunpack.c.l.b16 %v207
      %v605 = vunpack.c.h.b16 %v207
      %v606 = vunpack.c.l.b16 %v208
      %v607 = vunpack.c.h.b16 %v208
      %v608 = vunpack.c.l.b16 %v209
      %v609 = vunpack.c.l.b16 %v210
      %v610 = vunpack.c.h.b16 %v210
      %v611 = vunpack.c.l.b16 %v211
      %v612 = vunpack.c.h.b16 %v211
      %v613 = vunpack.c.l.b16 %v212
      %v614 = vunpack.c.h.b16 %v212
      %v615 = vunpack.c.l.b16 %v213
      %v616 = vunpack.c.l.b16 %v214
      %v617 = vunpack.c.h.b16 %v214
      %v618 = vunpack.c.l.b16 %v215
      %v619 = vunpack.c.h.b16 %v215
      %v620 = vunpack.c.l.b16 %v216
      %v621 = vunpack.c.h.b16 %v216
      %v622 = vunpack.c.l.b16 %v217
      %v623 = vunpack.c.l.b16 %v218
      %v624 = vunpack.c.h.b16 %v218
      %v625 = vunpack.c.l.b16 %v219
      %v626 = vunpack.c.h.b16 %v219
      %v627 = vunpack.c.l.b16 %v220
      %v628 = vunpack.c.h.b16 %v220
      %v629 = vunpack.c.l.b16 %v221
      %v630 = vunpack.c.l.b16 %v222
      %v631 = vunpack.c.h.b16 %v222
      %v632 = vunpack.c.l.b16 %v223
      %v633 = vunpack.c.h.b16 %v223
      %v634 = vunpack.c.l.b16 %v224
      %v635 = vunpack.c.h.b16 %v224
      %v636 = vunpack.c.l.b16 %v225
      %v637 = vunpack.c.l.b16 %v226
      %v638 = vunpack.c.h.b16 %v226
      %v639 = vunpack.c.l.b16 %v227
      %v640 = vunpack.c.h.b16 %v227
      %v641 = vunpack.c.l.b16 %v228
      %v642 = vunpack.c.h.b16 %v228
      %v643 = vunpack.c.l.b16 %v229
      %v644 = vunpack.c.l.b16 %v230
      %v645 = vunpack.c.h.b16 %v230
      %v646 = vunpack.c.l.b16 %v231
      %v647 = vunpack.c.h.b16 %v231
      %v648 = vunpack.c.l.b16 %v232
      %v649 = vunpack.c.h.b16 %v232
      %v650 = vunpack.c.l.b16 %v233
      %v651 = vunpack.c.l.b16 %v234
      %v652 = vunpack.c.h.b16 %v234
      %v653 = vunpack.c.l.b16 %v235
      %v654 = vunpack.c.h.b16 %v235
      %v655 = vunpack.c.l.b16 %v236
      %v656 = vunpack.c.h.b16 %v236
      %v657 = vunpack.c.l.b16 %v237
      %v658 = vunpack.c.l.b16 %v238
      %v659 = vunpack.c.h.b16 %v238
      %v660 = vunpack.c.l.b16 %v239
      %v661 = vunpack.c.h.b16 %v239
      %v662 = vunpack.c.l.b16 %v240
      %v663 = vunpack.c.h.b16 %v240
      %v664 = vunpack.c.l.b16 %v241
      %v665 = vunpack.c.l.b16 %v242
      %v666 = vunpack.c.h.b16 %v242
      %v667 = vunpack.c.l.b16 %v243
      %v668 = vunpack.c.h.b16 %v243
      %v669 = vunpack.c.l.b16 %v244
      %v670 = vunpack.c.h.b16 %v244
      %v671 = vunpack.c.l.b16 %v245
      %v672 = vunpack.c.l.b16 %v246
      %v673 = vunpack.c.h.b16 %v246
      %v674 = vunpack.c.l.b16 %v247
      %v675 = vunpack.c.h.b16 %v247
      %v676 = vunpack.c.l.b16 %v248
      %v677 = vunpack.c.h.b16 %v248
      %v678 = vunpack.c.l.b16 %v249
      %v679 = vunpack.c.l.b16 %v250
      %v680 = vunpack.c.h.b16 %v250
      %v681 = vunpack.c.l.b16 %v251
      %v682 = vunpack.c.h.b16 %v251
      %v683 = vunpack.c.l.b16 %v252
      %v684 = vunpack.c.h.b16 %v252
      %v685 = vunpack.c.l.b16 %v253
      %v686 = vunpack.c.l.b16 %v254
      %v687 = vunpack.c.h.b16 %v254
      %v688 = vunpack.c.l.b16 %v255
      %v689 = vunpack.c.h.b16 %v255
      %v690 = vunpack.c.l.b16 %v256
      %v691 = vunpack.c.h.b16 %v256
      %v692 = vunpack.c.l.b16 %v257
      %v693 = vunpack.c.l.b16 %v258
      %v694 = vunpack.c.h.b16 %v258
      %v695 = vunpack.c.l.b16 %v259
      %v696 = vunpack.c.h.b16 %v259
      %v697 = vunpack.c.l.b16 %v260
      %v698 = vunpack.c.h.b16 %v260
      %v699 = vunpack.c.l.b16 %v261
      %v700 = vunpack.c.l.b16 %v262
      %v701 = vunpack.c.h.b16 %v262
      %v702 = vunpack.c.l.b16 %v263
      %v703 = vunpack.c.h.b16 %v263
      %v704 = vunpack.c.l.b16 %v264
      %v705 = vunpack.c.h.b16 %v264
      %v706 = vunpack.c.l.b16 %v265
      %v707 = vunpack.c.l.b16 %v266
      %v708 = vunpack.c.h.b16 %v266
      %v709 = vunpack.c.l.b16 %v267
      %v710 = vunpack.c.h.b16 %v267
      %v711 = vunpack.c.l.b16 %v268
      %v712 = vunpack.c.h.b16 %v268
      %v713 = vunpack.c.l.b16 %v269
      %v714 = vunpack.c.l.b16 %v270
      %v715 = vunpack.c.h.b16 %v270
      %v716 = vunpack.c.l.b16 %v271
      %v717 = vunpack.c.h.b16 %v271
      %v718 = vunpack.c.l.b16 %v272
      %v719 = vunpack.c.h.b16 %v272
      %v720 = vunpack.c.l.b16 %v273
      %v721 = vunpack.c.l.b16 %v274
      %v722 = vunpack.c.h.b16 %v274
      %v723 = vunpack.c.l.b16 %v275
      %v724 = vunpack.c.h.b16 %v275
      %v725 = vunpack.c.l.b16 %v276
      %v726 = vunpack.c.h.b16 %v276
      %v727 = vunpack.c.l.b16 %v277
      %v728 = vunpack.c.l.b16 %v278
      %v729 = vunpack.c.h.b16 %v278
      %v730 = vunpack.c.l.b16 %v279
      %v731 = vunpack.c.h.b16 %v279
      %v732 = vunpack.c.l.b16 %v280
      %v733 = vunpack.c.h.b16 %v280
      %v734 = vunpack.c.l.b16 %v281
      %v735 = vunpack.c.l.b16 %v282
      %v736 = vunpack.c.h.b16 %v282
      %v737 = vunpack.c.l.b16 %v283
      %v738 = vunpack.c.h.b16 %v283
      %v739 = vunpack.c.l.b16 %v284
      %v740 = vunpack.c.h.b16 %v284
      %v741 = vunpack.c.l.b16 %v285
      %v742 = vunpack.c.l.b16 %v286
      %v743 = vunpack.c.h.b16 %v286
      %v744 = vunpack.c.l.b16 %v287
      %v745 = vunpack.c.h.b16 %v287
      %v746 = vunpack.c.l.b16 %v288
      %v747 = vunpack.c.h.b16 %v288
      %v748 = vunpack.c.l.b16 %v289
      %v749 = vunpack.c.l.b16 %v290
      %v750 = vunpack.c.h.b16 %v290
      %v751 = vunpack.c.l.b16 %v291
      %v752 = vunpack.c.h.b16 %v291
      %v753 = vunpack.c.l.b16 %v292
      %v754 = vunpack.c.h.b16 %v292
      %v755 = vunpack.c.l.b16 %v293
      %v756 = vunpack.c.l.b16 %v294
      %v757 = vunpack.c.h.b16 %v294
      %v758 = vunpack.c.l.b16 %v295
      %v759 = vunpack.c.h.b16 %v295
      %v760 = vunpack.c.l.b16 %v296
      %v761 = vunpack.c.h.b16 %v296
      %v762 = vunpack.c.l.b16 %v297
      %v763 = vunpack.c.l.b16 %v298
      %v764 = vunpack.c.h.b16 %v298
      %v765 = vunpack.c.l.b16 %v299
      %v766 = vunpack.c.h.b16 %v299
      %v767 = vunpack.c.l.b16 %v300
      %v768 = vunpack.c.h.b16 %v300
      %v769 = vunpack.c.l.b16 %v301
      %v770 = vunpack.c.l.b16 %v302
      %v771 = vunpack.c.h.b16 %v302
      %v772 = vunpack.c.l.b16 %v303
      %v773 = vunpack.c.h.b16 %v303
      %v774 = vunpack.c.l.b16 %v304
      %v775 = vunpack.c.h.b16 %v304
      %v776 = vunpack.c.l.b16 %v305
      %v777 = vpack.c.b16 %v560, %v553
      %v778 = vpack.c.b16 %v561, %v554
      %v779 = vpack.c.b16 %v562, %v555
      %v780 = vpack.c.b16 %v563, %v556
      %v781 = vpack.c.b16 %v564, %v557
      %v782 = vpack.c.b16 %v565, %v558
      %v783 = vpack.c.b16 %v566, %v559
      %v784 = vpack.c.b16 %v574, %v567
      %v785 = vpack.c.b16 %v575, %v568
      %v786 = vpack.c.b16 %v576, %v569
      %v787 = vpack.c.b16 %v577, %v570
      %v788 = vpack.c.b16 %v578, %v571
      %v789 = vpack.c.b16 %v579, %v572
      %v790 = vpack.c.b16 %v580, %v573
      %v791 = vpack.c.b16 %v588, %v581
      %v792 = vpack.c.b16 %v589, %v582
      %v793 = vpack.c.b16 %v590, %v583
      %v794 = vpack.c.b16 %v591, %v584
      %v795 = vpack.c.b16 %v592, %v585
      %v796 = vpack.c.b16 %v593, %v586
      %v797 = vpack.c.b16 %v594, %v587
      %v798 = vpack.c.b16 %v602, %v595
      %v799 = vpack.c.b16 %v603, %v596
      %v800 = vpack.c.b16 %v604, %v597
      %v801 = vpack.c.b16 %v605, %v598
      %v802 = vpack.c.b16 %v606, %v599
      %v803 = vpack.c.b16 %v607, %v600
      %v804 = vpack.c.b16 %v608, %v601
      %v805 = vpack.c.b16 %v616, %v609
      %v806 = vpack.c.b16 %v617, %v610
      %v807 = vpack.c.b16 %v618, %v611
      %v808 = vpack.c.b16 %v619, %v612
      %v809 = vpack.c.b16 %v620, %v613
      %v810 = vpack.c.b16 %v621, %v614
      %v811 = vpack.c.b16 %v622, %v615
      %v812 = vpack.c.b16 %v630, %v623
      %v813 = vpack.c.b16 %v631, %v624
      %v814 = vpack.c.b16 %v632, %v625
      %v815 = vpack.c.b16 %v633, %v626
      %v816 = vpack.c.b16 %v634, %v627
      %v817 = vpack.c.b16 %v635, %v628
      %v818 = vpack.c.b16 %v636, %v629
      %v819 = vpack.c.b16 %v644, %v637
      %v820 = vpack.c.b16 %v645, %v638
      %v821 = vpack.c.b16 %v646, %v639
      %v822 = vpack.c.b16 %v647, %v640
      %v823 = vpack.c.b16 %v648, %v641
      %v824 = vpack.c.b16 %v649, %v642
      %v825 = vpack.c.b16 %v650, %v643
      %v826 = vpack.c.b16 %v658, %v651
      %v827 = vpack.c.b16 %v659, %v652
      %v828 = vpack.c.b16 %v660, %v653
      %v829 = vpack.c.b16 %v661, %v654
      %v830 = vpack.c.b16 %v662, %v655
      %v831 = vpack.c.b16 %v663, %v656
      %v832 = vpack.c.b16 %v664, %v657
      %v833 = vpack.c.b16 %v672, %v665
      %v834 = vpack.c.b16 %v673, %v666
      %v835 = vpack.c.b16 %v674, %v667
      %v836 = vpack.c.b16 %v675, %v668
      %v837 = vpack.c.b16 %v676, %v669
      %v838 = vpack.c.b16 %v677, %v670
      %v839 = vpack.c.b16 %v678, %v671
      %v840 = vpack.c.b16 %v686, %v679
      %v841 = vpack.c.b16 %v687, %v680
      %v842 = vpack.c.b16 %v688, %v681
      %v843 = vpack.c.b16 %v689, %v682
      %v844 = vpack.c.b16 %v690, %v683
      %v845 = vpack.c.b16 %v691, %v684
      %v846 = vpack.c.b16 %v692, %v685
      %v847 = vpack.c.b16 %v700, %v693
      %v848 = vpack.c.b16 %v701, %v694
      %v849 = vpack.c.b16 %v702, %v695
      %v850 = vpack.c.b16 %v703, %v696
      %v851 = vpack.c.b16 %v704, %v697
      %v852 = vpack.c.b16 %v705, %v698
      %v853 = vpack.c.b16 %v706, %v699
      %v854 = vpack.c.b16 %v714, %v707
      %v855 = vpack.c.b16 %v715, %v708
      %v856 = vpack.c.b16 %v716, %v709
      %v857 = vpack.c.b16 %v717, %v710
      %v858 = vpack.c.b16 %v718, %v711
      %v859 = vpack.c.b16 %v719, %v712
      %v860 = vpack.c.b16 %v720, %v713
      %v861 = vpack.c.b16 %v728, %v721
      %v862 = vpack.c.b16 %v729, %v722
      %v863 = vpack.c.b16 %v730, %v723
      %v864 = vpack.c.b16 %v731, %v724
      %v865 = vpack.c.b16 %v732, %v725
      %v866 = vpack.c.b16 %v733, %v726
      %v867 = vpack.c.b16 %v734, %v727
      %v868 = vpack.c.b16 %v742, %v735
      %v869 = vpack.c.b16 %v743, %v736
      %v870 = vpack.c.b16 %v744, %v737
      %v871 = vpack.c.b16 %v745, %v738
      %v872 = vpack.c.b16 %v746, %v739
      %v873 = vpack.c.b16 %v747, %v740
      %v874 = vpack.c.b16 %v748, %v741
      %v875 = vpack.c.b16 %v756, %v749
      %v876 = vpack.c.b16 %v757, %v750
      %v877 = vpack.c.b16 %v758, %v751
      %v878 = vpack.c.b16 %v759, %v752
      %v879 = vpack.c.b16 %v760, %v753
      %v880 = vpack.c.b16 %v761, %v754
      %v881 = vpack.c.b16 %v762, %v755
      %v882 = vpack.c.b16 %v770, %v763
      %v883 = vpack.c.b16 %v771, %v764
      %v884 = vpack.c.b16 %v772, %v765
      %v885 = vpack.c.b16 %v773, %v766
      %v886 = vpack.c.b16 %v774, %v767
      %v887 = vpack.c.b16 %v775, %v768
      %v888 = vpack.c.b16 %v776, %v769
      %v1113 = vunpack.c.l.b16 %v306
      %v1114 = vunpack.c.l.b16 %v307
      %v1115 = vunpack.c.l.b16 %v308
      %v1116 = vunpack.c.l.b16 %v309
      %v1117 = vunpack.c.l.b16 %v310
      %v1118 = vunpack.c.l.b16 %v311
      %v1119 = vunpack.c.l.b16 %v312
      %v1120 = vunpack.c.l.b16 %v313
      %v1121 = vunpack.c.l.b16 %v314
      %v1122 = vunpack.c.l.b16 %v315
      %v1123 = vunpack.c.l.b16 %v316
      %v1124 = vunpack.c.l.b16 %v317
      %v1125 = vunpack.c.l.b16 %v318
      %v1126 = vunpack.c.l.b16 %v319
      %v1127 = vunpack.c.l.b16 %v320
      %v1128 = vunpack.c.l.b16 %v321
      %v1129 = vunpack.c.l.b16 %v322
      %v1130 = vunpack.c.l.b16 %v323
      %v1131 = vunpack.c.l.b16 %v324
      %v1132 = vunpack.c.l.b16 %v325
      %v1133 = vunpack.c.l.b16 %v326
      %v1134 = vunpack.c.l.b16 %v327
      %v1135 = vunpack.c.l.b16 %v328
      %v1136 = vunpack.c.l.b16 %v329
      %v1137 = vunpack.c.l.b16 %v330
      %v1138 = vunpack.c.l.b16 %v331
      %v1139 = vunpack.c.l.b16 %v332
      %v1140 = vunpack.c.l.b16 %v333
      %v1141 = vunpack.c.l.b16 %v334
      %v1142 = vunpack.c.l.b16 %v335
      %v1143 = vunpack.c.l.b16 %v336
      %v1144 = vunpack.c.l.b16 %v337
      %v1145 = vunpack.c.l.b16 %v338
      %v1146 = vunpack.c.l.b16 %v339
      %v1147 = vunpack.c.l.b16 %v340
      %v1148 = vunpack.c.l.b16 %v341
      %v1149 = vunpack.c.l.b16 %v342
      %v1150 = vunpack.c.l.b16 %v343
      %v1151 = vunpack.c.l.b16 %v344
      %v1152 = vunpack.c.l.b16 %v345
      %v1153 = vunpack.c.l.b16 %v346
      %v1154 = vunpack.c.l.b16 %v347
      %v1155 = vunpack.c.l.b16 %v348
      %v1156 = vunpack.c.l.b16 %v349
      %v1157 = vunpack.c.l.b16 %v350
      %v1158 = vunpack.c.l.b16 %v351
      %v1159 = vunpack.c.l.b16 %v352
      %v1160 = vunpack.c.l.b16 %v353
      %v1161 = vunpack.c.l.b16 %v354
      %v1162 = vunpack.c.l.b16 %v355
      %v1163 = vunpack.c.l.b16 %v356
      %v1164 = vunpack.c.l.b16 %v357
      %v1165 = vunpack.c.l.b16 %v358
      %v1166 = vunpack.c.l.b16 %v359
      %v1167 = vunpack.c.l.b16 %v360
      %v1168 = vunpack.c.l.b16 %v361
      %v1169 = vunpack.c.l.b16 %v362
      %v1170 = vunpack.c.l.b16 %v363
      %v1171 = vunpack.c.l.b16 %v364
      %v1172 = vunpack.c.l.b16 %v365
      %v1173 = vunpack.c.l.b16 %v366
      %v1174 = vunpack.c.l.b16 %v367
      %v1175 = vunpack.c.l.b16 %v368
      %v1176 = vunpack.c.l.b16 %v369
      %v1177 = vunpack.c.l.b16 %v370
      %v1178 = vunpack.c.l.b16 %v371
      %v1179 = vunpack.c.l.b16 %v372
      %v1180 = vunpack.c.l.b16 %v373
      %v1181 = vunpack.c.l.b16 %v374
      %v1182 = vunpack.c.l.b16 %v375
      %v1183 = vunpack.c.l.b16 %v376
      %v1184 = vunpack.c.l.b16 %v377
      %v1185 = vunpack.c.l.b16 %v378
      %v1186 = vunpack.c.l.b16 %v379
      %v1187 = vunpack.c.l.b16 %v380
      %v1188 = vunpack.c.l.b16 %v381
      %v1189 = vunpack.c.l.b16 %v382
      %v1190 = vunpack.c.l.b16 %v383
      %v1191 = vunpack.c.l.b16 %v384
      %v1192 = vunpack.c.l.b16 %v385
      %v1193 = vunpack.c.l.b16 %v386
      %v1194 = vunpack.c.l.b16 %v387
      %v1195 = vunpack.c.l.b16 %v388
      %v1196 = vunpack.c.l.b16 %v389
      %v1197 = vunpack.c.l.b16 %v390
      %v1198 = vunpack.c.l.b16 %v391
      %v1199 = vunpack.c.l.b16 %v392
      %v1200 = vunpack.c.l.b16 %v393
      %v1201 = vunpack.c.l.b16 %v394
      %v1202 = vunpack.c.l.b16 %v395
      %v1203 = vunpack.c.l.b16 %v396
      %v1204 = vunpack.c.l.b16 %v397
      %v1205 = vunpack.c.l.b16 %v398
      %v1206 = vunpack.c.l.b16 %v399
      %v1207 = vunpack.c.l.b16 %v400
      %v1208 = vunpack.c.l.b16 %v401
      %v1209 = vunpack.c.l.b16 %v402
      %v1210 = vunpack.c.l.b16 %v403
      %v1211 = vunpack.c.l.b16 %v404
      %v1212 = vunpack.c.l.b16 %v405
      %v1213 = vunpack.c.l.b16 %v406
      %v1214 = vunpack.c.l.b16 %v407
      %v1215 = vunpack.c.l.b16 %v408
      %v1216 = vunpack.c.l.b16 %v409
      %v1217 = vunpack.c.l.b16 %v410
      %v1218 = vunpack.c.l.b16 %v411
      %v1219 = vunpack.c.l.b16 %v412
      %v1220 = vunpack.c.l.b16 %v413
      %v1221 = vunpack.c.l.b16 %v414
      %v1222 = vunpack.c.l.b16 %v415
      %v1223 = vunpack.c.l.b16 %v416
      %v1224 = vunpack.c.l.b16 %v417
      %v1225 = vpack.c.b16 %v1114, %v1113
      %v1226 = vpack.c.b16 %v1116, %v1115
      %v1227 = vpack.c.b16 %v1118, %v1117
      %v1228 = vpack.c.b16 %v1120, %v1119
      %v1229 = vpack.c.b16 %v1122, %v1121
      %v1230 = vpack.c.b16 %v1124, %v1123
      %v1231 = vpack.c.b16 %v1126, %v1125
      %v1232 = vpack.c.b16 %v1128, %v1127
      %v1233 = vpack.c.b16 %v1130, %v1129
      %v1234 = vpack.c.b16 %v1132, %v1131
      %v1235 = vpack.c.b16 %v1134, %v1133
      %v1236 = vpack.c.b16 %v1136, %v1135
      %v1237 = vpack.c.b16 %v1138, %v1137
      %v1238 = vpack.c.b16 %v1140, %v1139
      %v1239 = vpack.c.b16 %v1142, %v1141
      %v1240 = vpack.c.b16 %v1144, %v1143
      %v1241 = vpack.c.b16 %v1146, %v1145
      %v1242 = vpack.c.b16 %v1148, %v1147
      %v1243 = vpack.c.b16 %v1150, %v1149
      %v1244 = vpack.c.b16 %v1152, %v1151
      %v1245 = vpack.c.b16 %v1154, %v1153
      %v1246 = vpack.c.b16 %v1156, %v1155
      %v1247 = vpack.c.b16 %v1158, %v1157
      %v1248 = vpack.c.b16 %v1160, %v1159
      %v1249 = vpack.c.b16 %v1162, %v1161
      %v1250 = vpack.c.b16 %v1164, %v1163
      %v1251 = vpack.c.b16 %v1166, %v1165
      %v1252 = vpack.c.b16 %v1168, %v1167
      %v1253 = vpack.c.b16 %v1170, %v1169
      %v1254 = vpack.c.b16 %v1172, %v1171
      %v1255 = vpack.c.b16 %v1174, %v1173
      %v1256 = vpack.c.b16 %v1176, %v1175
      %v1257 = vpack.c.b16 %v1178, %v1177
      %v1258 = vpack.c.b16 %v1180, %v1179
      %v1259 = vpack.c.b16 %v1182, %v1181
      %v1260 = vpack.c.b16 %v1184, %v1183
      %v1261 = vpack.c.b16 %v1186, %v1185
      %v1262 = vpack.c.b16 %v1188, %v1187
      %v1263 = vpack.c.b16 %v1190, %v1189
      %v1264 = vpack.c.b16 %v1192, %v1191
      %v1265 = vpack.c.b16 %v1194, %v1193
      %v1266 = vpack.c.b16 %v1196, %v1195
      %v1267 = vpack.c.b16 %v1198, %v1197
      %v1268 = vpack.c.b16 %v1200, %v1199
      %v1269 = vpack.c.b16 %v1202, %v1201
      %v1270 = vpack.c.b16 %v1204, %v1203
      %v1271 = vpack.c.b16 %v1206, %v1205
      %v1272 = vpack.c.b16 %v1208, %v1207
      %v1273 = vpack.c.b16 %v1210, %v1209
      %v1274 = vpack.c.b16 %v1212, %v1211
      %v1275 = vpack.c.b16 %v1214, %v1213
      %v1276 = vpack.c.b16 %v1216, %v1215
      %v1277 = vpack.c.b16 %v1218, %v1217
      %v1278 = vpack.c.b16 %v1220, %v1219
      %v1279 = vpack.c.b16 %v1222, %v1221
      %v1280 = vpack.c.b16 %v1224, %v1223
      %1337 = vmatprep.subr.bf16.mxu0 0
      %1338 = vmatpush1.bf16.msra.mxu0 %v1232
      %1339 = vmatprep.subr.bf16.mxu0 0
      %1340 = vmatpush1.bf16.msra.mxu0 %v1231
      %1341 = vmatprep.subr.bf16.mxu0 0
      %1342 = vmatpush1.bf16.msra.mxu0 %v1230
      %1343 = vmatprep.subr.bf16.mxu0 0
      %1344 = vmatpush1.bf16.msra.mxu0 %v1229
      %1345 = vmatprep.subr.bf16.mxu0 0
      %1346 = vmatpush1.bf16.msra.mxu0 %v1228
      %1347 = vmatprep.subr.bf16.mxu0 0
      %1348 = vmatpush1.bf16.msra.mxu0 %v1227
      %1349 = vmatprep.subr.bf16.mxu0 0
      %1350 = vmatpush1.bf16.msra.mxu0 %v1226
      %1351 = vmatprep.subr.bf16.mxu0 0
      %1352 = vmatpush1.bf16.msra.mxu0 %v1225
      %1353 = vmatprep.subr.bf16.mxu0 0
      %1354 = vmatpush2.bf16.msra.mxu0 %v1240
      %1355 = vmatprep.subr.bf16.mxu0 0
      %1356 = vmatpush2.bf16.msra.mxu0 %v1239
      %1357 = vmatprep.subr.bf16.mxu0 0
      %1358 = vmatpush2.bf16.msra.mxu0 %v1238
      %1359 = vmatprep.subr.bf16.mxu0 0
      %1360 = vmatpush2.bf16.msra.mxu0 %v1237
      %1361 = vmatprep.subr.bf16.mxu0 0
      %1362 = vmatpush2.bf16.msra.mxu0 %v1236
      %1363 = vmatprep.subr.bf16.mxu0 0
      %1364 = vmatpush2.bf16.msra.mxu0 %v1235
      %1365 = vmatprep.subr.bf16.mxu0 0
      %1366 = vmatpush2.bf16.msra.mxu0 %v1234
      %1367 = vmatprep.subr.bf16.mxu0 0
      %1368 = vmatpush2.bf16.msra.mxu0 %v1233
      %1369 = vmatprep.mubr.bf16.mxu0 %v778
      %1370 = vmatmul.mubr.bf16.gmra.mxu0 %v777
      %v1371 = vpop.f32.mrf.mxu0
      %v1372 = vadd.f32 %v423, %v1371
      %v1373 = vpop.f32.mrf.mxu0
      %v1374 = vpop.f32.mrf.mxu0
      %v1375 = vadd.f32 %v423, %v1374
      %v1376 = vpop.f32.mrf.mxu0
      %1377 = vmatprep.mubr.bf16.mxu0 %v785
      %1378 = vmatmul.mubr.bf16.gmra.mxu0 %v784
      %v1379 = vpop.f32.mrf.mxu0
      %v1380 = vadd.f32 %v423, %v1379
      %v1381 = vpop.f32.mrf.mxu0
      %v1382 = vpop.f32.mrf.mxu0
      %v1383 = vadd.f32 %v423, %v1382
      %v1384 = vpop.f32.mrf.mxu0
      %1385 = vmatprep.mubr.bf16.mxu0 %v792
      %1386 = vmatmul.mubr.bf16.gmra.mxu0 %v791
      %v1387 = vpop.f32.mrf.mxu0
      %v1388 = vadd.f32 %v423, %v1387
      %v1389 = vpop.f32.mrf.mxu0
      %v1390 = vpop.f32.mrf.mxu0
      %v1391 = vadd.f32 %v423, %v1390
      %v1392 = vpop.f32.mrf.mxu0
      %1393 = vmatprep.mubr.bf16.mxu0 %v799
      %1394 = vmatmul.mubr.bf16.gmra.mxu0 %v798
      %v1395 = vpop.f32.mrf.mxu0
      %v1396 = vadd.f32 %v423, %v1395
      %v1397 = vpop.f32.mrf.mxu0
      %v1398 = vpop.f32.mrf.mxu0
      %v1399 = vadd.f32 %v423, %v1398
      %v1400 = vpop.f32.mrf.mxu0
      %1401 = vmatprep.mubr.bf16.mxu0 %v806
      %1402 = vmatmul.mubr.bf16.gmra.mxu0 %v805
      %v1403 = vpop.f32.mrf.mxu0
      %v1404 = vadd.f32 %v423, %v1403
      %v1405 = vpop.f32.mrf.mxu0
      %v1406 = vpop.f32.mrf.mxu0
      %v1407 = vadd.f32 %v423, %v1406
      %v1408 = vpop.f32.mrf.mxu0
      %1409 = vmatprep.mubr.bf16.mxu0 %v813
      %1410 = vmatmul.mubr.bf16.gmra.mxu0 %v812
      %v1411 = vpop.f32.mrf.mxu0
      %v1412 = vadd.f32 %v423, %v1411
      %v1413 = vpop.f32.mrf.mxu0
      %v1414 = vpop.f32.mrf.mxu0
      %v1415 = vadd.f32 %v423, %v1414
      %v1416 = vpop.f32.mrf.mxu0
      %1417 = vmatprep.mubr.bf16.mxu0 %v820
      %1418 = vmatmul.mubr.bf16.gmra.mxu0 %v819
      %v1419 = vpop.f32.mrf.mxu0
      %v1420 = vadd.f32 %v423, %v1419
      %v1421 = vpop.f32.mrf.mxu0
      %v1422 = vpop.f32.mrf.mxu0
      %v1423 = vadd.f32 %v423, %v1422
      %v1424 = vpop.f32.mrf.mxu0
      %1425 = vmatprep.mubr.bf16.mxu0 %v827
      %1426 = vmatmul.mubr.bf16.gmra.mxu0 %v826
      %v1427 = vpop.f32.mrf.mxu0
      %v1428 = vadd.f32 %v423, %v1427
      %v1429 = vpop.f32.mrf.mxu0
      %v1430 = vpop.f32.mrf.mxu0
      %v1431 = vadd.f32 %v423, %v1430
      %v1432 = vpop.f32.mrf.mxu0
      %1433 = vmatprep.mubr.bf16.mxu0 %v834
      %1434 = vmatmul.mubr.bf16.gmra.mxu0 %v833
      %v1435 = vpop.f32.mrf.mxu0
      %v1436 = vadd.f32 %v423, %v1435
      %v1437 = vpop.f32.mrf.mxu0
      %v1438 = vpop.f32.mrf.mxu0
      %v1439 = vadd.f32 %v423, %v1438
      %v1440 = vpop.f32.mrf.mxu0
      %1441 = vmatprep.mubr.bf16.mxu0 %v841
      %1442 = vmatmul.mubr.bf16.gmra.mxu0 %v840
      %v1443 = vpop.f32.mrf.mxu0
      %v1444 = vadd.f32 %v423, %v1443
      %v1445 = vpop.f32.mrf.mxu0
      %v1446 = vpop.f32.mrf.mxu0
      %v1447 = vadd.f32 %v423, %v1446
      %v1448 = vpop.f32.mrf.mxu0
      %1449 = vmatprep.mubr.bf16.mxu0 %v848
      %1450 = vmatmul.mubr.bf16.gmra.mxu0 %v847
      %v1451 = vpop.f32.mrf.mxu0
      %v1452 = vadd.f32 %v423, %v1451
      %v1453 = vpop.f32.mrf.mxu0
      %v1454 = vpop.f32.mrf.mxu0
      %v1455 = vadd.f32 %v423, %v1454
      %v1456 = vpop.f32.mrf.mxu0
      %1457 = vmatprep.mubr.bf16.mxu0 %v855
      %1458 = vmatmul.mubr.bf16.gmra.mxu0 %v854
      %v1459 = vpop.f32.mrf.mxu0
      %v1460 = vadd.f32 %v423, %v1459
      %v1461 = vpop.f32.mrf.mxu0
      %v1462 = vpop.f32.mrf.mxu0
      %v1463 = vadd.f32 %v423, %v1462
      %v1464 = vpop.f32.mrf.mxu0
      %1465 = vmatprep.mubr.bf16.mxu0 %v862
      %1466 = vmatmul.mubr.bf16.gmra.mxu0 %v861
      %v1467 = vpop.f32.mrf.mxu0
      %v1468 = vadd.f32 %v423, %v1467
      %v1469 = vpop.f32.mrf.mxu0
      %v1470 = vpop.f32.mrf.mxu0
      %v1471 = vadd.f32 %v423, %v1470
      %v1472 = vpop.f32.mrf.mxu0
      %1473 = vmatprep.mubr.bf16.mxu0 %v869
      %1474 = vmatmul.mubr.bf16.gmra.mxu0 %v868
      %v1475 = vpop.f32.mrf.mxu0
      %v1476 = vadd.f32 %v423, %v1475
      %v1477 = vpop.f32.mrf.mxu0
      %v1478 = vpop.f32.mrf.mxu0
      %v1479 = vadd.f32 %v423, %v1478
      %v1480 = vpop.f32.mrf.mxu0
      %1481 = vmatprep.mubr.bf16.mxu0 %v876
      %1482 = vmatmul.mubr.bf16.gmra.mxu0 %v875
      %v1483 = vpop.f32.mrf.mxu0
      %v1484 = vadd.f32 %v423, %v1483
      %v1485 = vpop.f32.mrf.mxu0
      %v1486 = vpop.f32.mrf.mxu0
      %v1487 = vadd.f32 %v423, %v1486
      %v1488 = vpop.f32.mrf.mxu0
      %1489 = vmatprep.mubr.bf16.mxu0 %v883
      %1490 = vmatmul.mubr.bf16.gmra.mxu0 %v882
      %v1491 = vpop.f32.mrf.mxu0
      %v1492 = vadd.f32 %v423, %v1491
      %v1493 = vpop.f32.mrf.mxu0
      %v1494 = vpop.f32.mrf.mxu0
      %v1495 = vadd.f32 %v423, %v1494
      %v1496 = vpop.f32.mrf.mxu0
      %1497 = vdwg.mxu0
      %1498 = vmatprep.subr.bf16.mxu0 0
      %1499 = vmatpush1.bf16.msra.mxu0 %v1248
      %1500 = vmatprep.subr.bf16.mxu0 0
      %1501 = vmatpush1.bf16.msra.mxu0 %v1247
      %1502 = vmatprep.subr.bf16.mxu0 0
      %1503 = vmatpush1.bf16.msra.mxu0 %v1246
      %1504 = vmatprep.subr.bf16.mxu0 0
      %1505 = vmatpush1.bf16.msra.mxu0 %v1245
      %1506 = vmatprep.subr.bf16.mxu0 0
      %1507 = vmatpush1.bf16.msra.mxu0 %v1244
      %1508 = vmatprep.subr.bf16.mxu0 0
      %1509 = vmatpush1.bf16.msra.mxu0 %v1243
      %1510 = vmatprep.subr.bf16.mxu0 0
      %1511 = vmatpush1.bf16.msra.mxu0 %v1242
      %1512 = vmatprep.subr.bf16.mxu0 0
      %1513 = vmatpush1.bf16.msra.mxu0 %v1241
      %1514 = vmatprep.subr.bf16.mxu0 0
      %1515 = vmatpush2.bf16.msra.mxu0 %v1256
      %1516 = vmatprep.subr.bf16.mxu0 0
      %1517 = vmatpush2.bf16.msra.mxu0 %v1255
      %1518 = vmatprep.subr.bf16.mxu0 0
      %1519 = vmatpush2.bf16.msra.mxu0 %v1254
      %1520 = vmatprep.subr.bf16.mxu0 0
      %1521 = vmatpush2.bf16.msra.mxu0 %v1253
      %1522 = vmatprep.subr.bf16.mxu0 0
      %1523 = vmatpush2.bf16.msra.mxu0 %v1252
      %1524 = vmatprep.subr.bf16.mxu0 0
      %1525 = vmatpush2.bf16.msra.mxu0 %v1251
      %1526 = vmatprep.subr.bf16.mxu0 0
      %1527 = vmatpush2.bf16.msra.mxu0 %v1250
      %1528 = vmatprep.subr.bf16.mxu0 0
      %1529 = vmatpush2.bf16.msra.mxu0 %v1249
      %1530 = vmatprep.mubr.bf16.mxu0 %v780
      %1531 = vmatmul.mubr.bf16.gmra.mxu0 %v779
      %v1532 = vpop.f32.mrf.mxu0
      %v1533 = vadd.f32 %v1372, %v1532
      %v1534 = vpop.f32.mrf.mxu0
      %v1535 = vpop.f32.mrf.mxu0
      %v1536 = vadd.f32 %v1375, %v1535
      %v1537 = vpop.f32.mrf.mxu0
      %1538 = vmatprep.mubr.bf16.mxu0 %v787
      %1539 = vmatmul.mubr.bf16.gmra.mxu0 %v786
      %v1540 = vpop.f32.mrf.mxu0
      %v1541 = vadd.f32 %v1380, %v1540
      %v1542 = vpop.f32.mrf.mxu0
      %v1543 = vpop.f32.mrf.mxu0
      %v1544 = vadd.f32 %v1383, %v1543
      %v1545 = vpop.f32.mrf.mxu0
      %1546 = vmatprep.mubr.bf16.mxu0 %v794
      %1547 = vmatmul.mubr.bf16.gmra.mxu0 %v793
      %v1548 = vpop.f32.mrf.mxu0
      %v1549 = vadd.f32 %v1388, %v1548
      %v1550 = vpop.f32.mrf.mxu0
      %v1551 = vpop.f32.mrf.mxu0
      %v1552 = vadd.f32 %v1391, %v1551
      %v1553 = vpop.f32.mrf.mxu0
      %1554 = vmatprep.mubr.bf16.mxu0 %v801
      %1555 = vmatmul.mubr.bf16.gmra.mxu0 %v800
      %v1556 = vpop.f32.mrf.mxu0
      %v1557 = vadd.f32 %v1396, %v1556
      %v1558 = vpop.f32.mrf.mxu0
      %v1559 = vpop.f32.mrf.mxu0
      %v1560 = vadd.f32 %v1399, %v1559
      %v1561 = vpop.f32.mrf.mxu0
      %1562 = vmatprep.mubr.bf16.mxu0 %v808
      %1563 = vmatmul.mubr.bf16.gmra.mxu0 %v807
      %v1564 = vpop.f32.mrf.mxu0
      %v1565 = vadd.f32 %v1404, %v1564
      %v1566 = vpop.f32.mrf.mxu0
      %v1567 = vpop.f32.mrf.mxu0
      %v1568 = vadd.f32 %v1407, %v1567
      %v1569 = vpop.f32.mrf.mxu0
      %1570 = vmatprep.mubr.bf16.mxu0 %v815
      %1571 = vmatmul.mubr.bf16.gmra.mxu0 %v814
      %v1572 = vpop.f32.mrf.mxu0
      %v1573 = vadd.f32 %v1412, %v1572
      %v1574 = vpop.f32.mrf.mxu0
      %v1575 = vpop.f32.mrf.mxu0
      %v1576 = vadd.f32 %v1415, %v1575
      %v1577 = vpop.f32.mrf.mxu0
      %1578 = vmatprep.mubr.bf16.mxu0 %v822
      %1579 = vmatmul.mubr.bf16.gmra.mxu0 %v821
      %v1580 = vpop.f32.mrf.mxu0
      %v1581 = vadd.f32 %v1420, %v1580
      %v1582 = vpop.f32.mrf.mxu0
      %v1583 = vpop.f32.mrf.mxu0
      %v1584 = vadd.f32 %v1423, %v1583
      %v1585 = vpop.f32.mrf.mxu0
      %1586 = vmatprep.mubr.bf16.mxu0 %v829
      %1587 = vmatmul.mubr.bf16.gmra.mxu0 %v828
      %v1588 = vpop.f32.mrf.mxu0
      %v1589 = vadd.f32 %v1428, %v1588
      %v1590 = vpop.f32.mrf.mxu0
      %v1591 = vpop.f32.mrf.mxu0
      %v1592 = vadd.f32 %v1431, %v1591
      %v1593 = vpop.f32.mrf.mxu0
      %1594 = vmatprep.mubr.bf16.mxu0 %v836
      %1595 = vmatmul.mubr.bf16.gmra.mxu0 %v835
      %v1596 = vpop.f32.mrf.mxu0
      %v1597 = vadd.f32 %v1436, %v1596
      %v1598 = vpop.f32.mrf.mxu0
      %v1599 = vpop.f32.mrf.mxu0
      %v1600 = vadd.f32 %v1439, %v1599
      %v1601 = vpop.f32.mrf.mxu0
      %1602 = vmatprep.mubr.bf16.mxu0 %v843
      %1603 = vmatmul.mubr.bf16.gmra.mxu0 %v842
      %v1604 = vpop.f32.mrf.mxu0
      %v1605 = vadd.f32 %v1444, %v1604
      %v1606 = vpop.f32.mrf.mxu0
      %v1607 = vpop.f32.mrf.mxu0
      %v1608 = vadd.f32 %v1447, %v1607
      %v1609 = vpop.f32.mrf.mxu0
      %1610 = vmatprep.mubr.bf16.mxu0 %v850
      %1611 = vmatmul.mubr.bf16.gmra.mxu0 %v849
      %v1612 = vpop.f32.mrf.mxu0
      %v1613 = vadd.f32 %v1452, %v1612
      %v1614 = vpop.f32.mrf.mxu0
      %v1615 = vpop.f32.mrf.mxu0
      %v1616 = vadd.f32 %v1455, %v1615
      %v1617 = vpop.f32.mrf.mxu0
      %1618 = vmatprep.mubr.bf16.mxu0 %v857
      %1619 = vmatmul.mubr.bf16.gmra.mxu0 %v856
      %v1620 = vpop.f32.mrf.mxu0
      %v1621 = vadd.f32 %v1460, %v1620
      %v1622 = vpop.f32.mrf.mxu0
      %v1623 = vpop.f32.mrf.mxu0
      %v1624 = vadd.f32 %v1463, %v1623
      %v1625 = vpop.f32.mrf.mxu0
      %1626 = vmatprep.mubr.bf16.mxu0 %v864
      %1627 = vmatmul.mubr.bf16.gmra.mxu0 %v863
      %v1628 = vpop.f32.mrf.mxu0
      %v1629 = vadd.f32 %v1468, %v1628
      %v1630 = vpop.f32.mrf.mxu0
      %v1631 = vpop.f32.mrf.mxu0
      %v1632 = vadd.f32 %v1471, %v1631
      %v1633 = vpop.f32.mrf.mxu0
      %1634 = vmatprep.mubr.bf16.mxu0 %v871
      %1635 = vmatmul.mubr.bf16.gmra.mxu0 %v870
      %v1636 = vpop.f32.mrf.mxu0
      %v1637 = vadd.f32 %v1476, %v1636
      %v1638 = vpop.f32.mrf.mxu0
      %v1639 = vpop.f32.mrf.mxu0
      %v1640 = vadd.f32 %v1479, %v1639
      %v1641 = vpop.f32.mrf.mxu0
      %1642 = vmatprep.mubr.bf16.mxu0 %v878
      %1643 = vmatmul.mubr.bf16.gmra.mxu0 %v877
      %v1644 = vpop.f32.mrf.mxu0
      %v1645 = vadd.f32 %v1484, %v1644
      %v1646 = vpop.f32.mrf.mxu0
      %v1647 = vpop.f32.mrf.mxu0
      %v1648 = vadd.f32 %v1487, %v1647
      %v1649 = vpop.f32.mrf.mxu0
      %1650 = vmatprep.mubr.bf16.mxu0 %v885
      %1651 = vmatmul.mubr.bf16.gmra.mxu0 %v884
      %v1652 = vpop.f32.mrf.mxu0
      %v1653 = vadd.f32 %v1492, %v1652
      %v1654 = vpop.f32.mrf.mxu0
      %v1655 = vpop.f32.mrf.mxu0
      %v1656 = vadd.f32 %v1495, %v1655
      %v1657 = vpop.f32.mrf.mxu0
      %1658 = vdwg.mxu0
      %1659 = vmatprep.subr.bf16.mxu0 0
      %1660 = vmatpush1.bf16.msra.mxu0 %v1264
      %1661 = vmatprep.subr.bf16.mxu0 0
      %1662 = vmatpush1.bf16.msra.mxu0 %v1263
      %1663 = vmatprep.subr.bf16.mxu0 0
      %1664 = vmatpush1.bf16.msra.mxu0 %v1262
      %1665 = vmatprep.subr.bf16.mxu0 0
      %1666 = vmatpush1.bf16.msra.mxu0 %v1261
      %1667 = vmatprep.subr.bf16.mxu0 0
      %1668 = vmatpush1.bf16.msra.mxu0 %v1260
      %1669 = vmatprep.subr.bf16.mxu0 0
      %1670 = vmatpush1.bf16.msra.mxu0 %v1259
      %1671 = vmatprep.subr.bf16.mxu0 0
      %1672 = vmatpush1.bf16.msra.mxu0 %v1258
      %1673 = vmatprep.subr.bf16.mxu0 0
      %1674 = vmatpush1.bf16.msra.mxu0 %v1257
      %1675 = vmatprep.subr.bf16.mxu0 0
      %1676 = vmatpush2.bf16.msra.mxu0 %v1272
      %1677 = vmatprep.subr.bf16.mxu0 0
      %1678 = vmatpush2.bf16.msra.mxu0 %v1271
      %1679 = vmatprep.subr.bf16.mxu0 0
      %1680 = vmatpush2.bf16.msra.mxu0 %v1270
      %1681 = vmatprep.subr.bf16.mxu0 0
      %1682 = vmatpush2.bf16.msra.mxu0 %v1269
      %1683 = vmatprep.subr.bf16.mxu0 0
      %1684 = vmatpush2.bf16.msra.mxu0 %v1268
      %1685 = vmatprep.subr.bf16.mxu0 0
      %1686 = vmatpush2.bf16.msra.mxu0 %v1267
      %1687 = vmatprep.subr.bf16.mxu0 0
      %1688 = vmatpush2.bf16.msra.mxu0 %v1266
      %1689 = vmatprep.subr.bf16.mxu0 0
      %1690 = vmatpush2.bf16.msra.mxu0 %v1265
      %1691 = vmatprep.mubr.bf16.mxu0 %v782
      %1692 = vmatmul.mubr.bf16.gmra.mxu0 %v781
      %v1693 = vpop.f32.mrf.mxu0
      %v1694 = vadd.f32 %v1533, %v1693
      %v1695 = vpop.f32.mrf.mxu0
      %v1696 = vpop.f32.mrf.mxu0
      %v1697 = vadd.f32 %v1536, %v1696
      %v1698 = vpop.f32.mrf.mxu0
      %1699 = vmatprep.mubr.bf16.mxu0 %v789
      %1700 = vmatmul.mubr.bf16.gmra.mxu0 %v788
      %v1701 = vpop.f32.mrf.mxu0
      %v1702 = vadd.f32 %v1541, %v1701
      %v1703 = vpop.f32.mrf.mxu0
      %v1704 = vpop.f32.mrf.mxu0
      %v1705 = vadd.f32 %v1544, %v1704
      %v1706 = vpop.f32.mrf.mxu0
      %1707 = vmatprep.mubr.bf16.mxu0 %v796
      %1708 = vmatmul.mubr.bf16.gmra.mxu0 %v795
      %v1709 = vpop.f32.mrf.mxu0
      %v1710 = vadd.f32 %v1549, %v1709
      %v1711 = vpop.f32.mrf.mxu0
      %v1712 = vpop.f32.mrf.mxu0
      %v1713 = vadd.f32 %v1552, %v1712
      %v1714 = vpop.f32.mrf.mxu0
      %1715 = vmatprep.mubr.bf16.mxu0 %v803
      %1716 = vmatmul.mubr.bf16.gmra.mxu0 %v802
      %v1717 = vpop.f32.mrf.mxu0
      %v1718 = vadd.f32 %v1557, %v1717
      %v1719 = vpop.f32.mrf.mxu0
      %v1720 = vpop.f32.mrf.mxu0
      %v1721 = vadd.f32 %v1560, %v1720
      %v1722 = vpop.f32.mrf.mxu0
      %1723 = vmatprep.mubr.bf16.mxu0 %v810
      %1724 = vmatmul.mubr.bf16.gmra.mxu0 %v809
      %v1725 = vpop.f32.mrf.mxu0
      %v1726 = vadd.f32 %v1565, %v1725
      %v1727 = vpop.f32.mrf.mxu0
      %v1728 = vpop.f32.mrf.mxu0
      %v1729 = vadd.f32 %v1568, %v1728
      %v1730 = vpop.f32.mrf.mxu0
      %1731 = vmatprep.mubr.bf16.mxu0 %v817
      %1732 = vmatmul.mubr.bf16.gmra.mxu0 %v816
      %v1733 = vpop.f32.mrf.mxu0
      %v1734 = vadd.f32 %v1573, %v1733
      %v1735 = vpop.f32.mrf.mxu0
      %v1736 = vpop.f32.mrf.mxu0
      %v1737 = vadd.f32 %v1576, %v1736
      %v1738 = vpop.f32.mrf.mxu0
      %1739 = vmatprep.mubr.bf16.mxu0 %v824
      %1740 = vmatmul.mubr.bf16.gmra.mxu0 %v823
      %v1741 = vpop.f32.mrf.mxu0
      %v1742 = vadd.f32 %v1581, %v1741
      %v1743 = vpop.f32.mrf.mxu0
      %v1744 = vpop.f32.mrf.mxu0
      %v1745 = vadd.f32 %v1584, %v1744
      %v1746 = vpop.f32.mrf.mxu0
      %1747 = vmatprep.mubr.bf16.mxu0 %v831
      %1748 = vmatmul.mubr.bf16.gmra.mxu0 %v830
      %v1749 = vpop.f32.mrf.mxu0
      %v1750 = vadd.f32 %v1589, %v1749
      %v1751 = vpop.f32.mrf.mxu0
      %v1752 = vpop.f32.mrf.mxu0
      %v1753 = vadd.f32 %v1592, %v1752
      %v1754 = vpop.f32.mrf.mxu0
      %1755 = vmatprep.mubr.bf16.mxu0 %v838
      %1756 = vmatmul.mubr.bf16.gmra.mxu0 %v837
      %v1757 = vpop.f32.mrf.mxu0
      %v1758 = vadd.f32 %v1597, %v1757
      %v1759 = vpop.f32.mrf.mxu0
      %v1760 = vpop.f32.mrf.mxu0
      %v1761 = vadd.f32 %v1600, %v1760
      %v1762 = vpop.f32.mrf.mxu0
      %1763 = vmatprep.mubr.bf16.mxu0 %v845
      %1764 = vmatmul.mubr.bf16.gmra.mxu0 %v844
      %v1765 = vpop.f32.mrf.mxu0
      %v1766 = vadd.f32 %v1605, %v1765
      %v1767 = vpop.f32.mrf.mxu0
      %v1768 = vpop.f32.mrf.mxu0
      %v1769 = vadd.f32 %v1608, %v1768
      %v1770 = vpop.f32.mrf.mxu0
      %1771 = vmatprep.mubr.bf16.mxu0 %v852
      %1772 = vmatmul.mubr.bf16.gmra.mxu0 %v851
      %v1773 = vpop.f32.mrf.mxu0
      %v1774 = vadd.f32 %v1613, %v1773
      %v1775 = vpop.f32.mrf.mxu0
      %v1776 = vpop.f32.mrf.mxu0
      %v1777 = vadd.f32 %v1616, %v1776
      %v1778 = vpop.f32.mrf.mxu0
      %1779 = vmatprep.mubr.bf16.mxu0 %v859
      %1780 = vmatmul.mubr.bf16.gmra.mxu0 %v858
      %v1781 = vpop.f32.mrf.mxu0
      %v1782 = vadd.f32 %v1621, %v1781
      %v1783 = vpop.f32.mrf.mxu0
      %v1784 = vpop.f32.mrf.mxu0
      %v1785 = vadd.f32 %v1624, %v1784
      %v1786 = vpop.f32.mrf.mxu0
      %1787 = vmatprep.mubr.bf16.mxu0 %v866
      %1788 = vmatmul.mubr.bf16.gmra.mxu0 %v865
      %v1789 = vpop.f32.mrf.mxu0
      %v1790 = vadd.f32 %v1629, %v1789
      %v1791 = vpop.f32.mrf.mxu0
      %v1792 = vpop.f32.mrf.mxu0
      %v1793 = vadd.f32 %v1632, %v1792
      %v1794 = vpop.f32.mrf.mxu0
      %1795 = vmatprep.mubr.bf16.mxu0 %v873
      %1796 = vmatmul.mubr.bf16.gmra.mxu0 %v872
      %v1797 = vpop.f32.mrf.mxu0
      %v1798 = vadd.f32 %v1637, %v1797
      %v1799 = vpop.f32.mrf.mxu0
      %v1800 = vpop.f32.mrf.mxu0
      %v1801 = vadd.f32 %v1640, %v1800
      %v1802 = vpop.f32.mrf.mxu0
      %1803 = vmatprep.mubr.bf16.mxu0 %v880
      %1804 = vmatmul.mubr.bf16.gmra.mxu0 %v879
      %v1805 = vpop.f32.mrf.mxu0
      %v1806 = vadd.f32 %v1645, %v1805
      %v1807 = vpop.f32.mrf.mxu0
      %v1808 = vpop.f32.mrf.mxu0
      %v1809 = vadd.f32 %v1648, %v1808
      %v1810 = vpop.f32.mrf.mxu0
      %1811 = vmatprep.mubr.bf16.mxu0 %v887
      %1812 = vmatmul.mubr.bf16.gmra.mxu0 %v886
      %v1813 = vpop.f32.mrf.mxu0
      %v1814 = vadd.f32 %v1653, %v1813
      %v1815 = vpop.f32.mrf.mxu0
      %v1816 = vpop.f32.mrf.mxu0
      %v1817 = vadd.f32 %v1656, %v1816
      %v1818 = vpop.f32.mrf.mxu0
      %1819 = vdwg.mxu0
      %1820 = vmatprep.subr.bf16.mxu0 0
      %1821 = vmatpush1.bf16.msra.mxu0 %v1280
      %1822 = vmatprep.subr.bf16.mxu0 0
      %1823 = vmatpush1.bf16.msra.mxu0 %v1279
      %1824 = vmatprep.subr.bf16.mxu0 0
      %1825 = vmatpush1.bf16.msra.mxu0 %v1278
      %1826 = vmatprep.subr.bf16.mxu0 0
      %1827 = vmatpush1.bf16.msra.mxu0 %v1277
      %1828 = vmatprep.subr.bf16.mxu0 0
      %1829 = vmatpush1.bf16.msra.mxu0 %v1276
      %1830 = vmatprep.subr.bf16.mxu0 0
      %1831 = vmatpush1.bf16.msra.mxu0 %v1275
      %1832 = vmatprep.subr.bf16.mxu0 0
      %1833 = vmatpush1.bf16.msra.mxu0 %v1274
      %1834 = vmatprep.subr.bf16.mxu0 0
      %1835 = vmatpush1.bf16.msra.mxu0 %v1273
      %1836 = vmatprep.subr.bf16.mxu0 0
      %1837 = vmatpush2.bf16.msra.mxu0 0
      %1838 = vmatprep.subr.bf16.mxu0 0
      %1839 = vmatpush2.bf16.msra.mxu0 0
      %1840 = vmatprep.subr.bf16.mxu0 0
      %1841 = vmatpush2.bf16.msra.mxu0 0
      %1842 = vmatprep.subr.bf16.mxu0 0
      %1843 = vmatpush2.bf16.msra.mxu0 0
      %1844 = vmatprep.subr.bf16.mxu0 0
      %1845 = vmatpush2.bf16.msra.mxu0 0
      %1846 = vmatprep.subr.bf16.mxu0 0
      %1847 = vmatpush2.bf16.msra.mxu0 0
      %1848 = vmatprep.subr.bf16.mxu0 0
      %1849 = vmatpush2.bf16.msra.mxu0 0
      %1850 = vmatprep.subr.bf16.mxu0 0
      %1851 = vmatpush2.bf16.msra.mxu0 0
      %1852 = vmatprep.mubr.bf16.mxu0 0
      %1853 = vmatmul.mubr.bf16.gmra.mxu0 %v783
      %v1854 = vpop.f32.mrf.mxu0
      %v1855 = vadd.f32 %v1694, %v1854
      %v1856 = vpop.f32.mrf.mxu0
      %v1857 = vpop.f32.mrf.mxu0
      %v1858 = vadd.f32 %v1697, %v1857
      %v1859 = vpop.f32.mrf.mxu0
      %1860 = vmatprep.mubr.bf16.mxu0 0
      %1861 = vmatmul.mubr.bf16.gmra.mxu0 %v790
      %v1862 = vpop.f32.mrf.mxu0
      %v1863 = vadd.f32 %v1702, %v1862
      %v1864 = vpop.f32.mrf.mxu0
      %v1865 = vpop.f32.mrf.mxu0
      %v1866 = vadd.f32 %v1705, %v1865
      %v1867 = vpop.f32.mrf.mxu0
      %1868 = vmatprep.mubr.bf16.mxu0 0
      %1869 = vmatmul.mubr.bf16.gmra.mxu0 %v797
      %v1870 = vpop.f32.mrf.mxu0
      %v1871 = vadd.f32 %v1710, %v1870
      %v1872 = vpop.f32.mrf.mxu0
      %v1873 = vpop.f32.mrf.mxu0
      %v1874 = vadd.f32 %v1713, %v1873
      %v1875 = vpop.f32.mrf.mxu0
      %1876 = vmatprep.mubr.bf16.mxu0 0
      %1877 = vmatmul.mubr.bf16.gmra.mxu0 %v804
      %v1878 = vpop.f32.mrf.mxu0
      %v1879 = vadd.f32 %v1718, %v1878
      %v1880 = vpop.f32.mrf.mxu0
      %v1881 = vpop.f32.mrf.mxu0
      %v1882 = vadd.f32 %v1721, %v1881
      %v1883 = vpop.f32.mrf.mxu0
      %1884 = vmatprep.mubr.bf16.mxu0 0
      %1885 = vmatmul.mubr.bf16.gmra.mxu0 %v811
      %v1886 = vpop.f32.mrf.mxu0
      %v1887 = vadd.f32 %v1726, %v1886
      %v1888 = vpop.f32.mrf.mxu0
      %v1889 = vpop.f32.mrf.mxu0
      %v1890 = vadd.f32 %v1729, %v1889
      %v1891 = vpop.f32.mrf.mxu0
      %1892 = vmatprep.mubr.bf16.mxu0 0
      %1893 = vmatmul.mubr.bf16.gmra.mxu0 %v818
      %v1894 = vpop.f32.mrf.mxu0
      %v1895 = vadd.f32 %v1734, %v1894
      %v1896 = vpop.f32.mrf.mxu0
      %v1897 = vpop.f32.mrf.mxu0
      %v1898 = vadd.f32 %v1737, %v1897
      %v1899 = vpop.f32.mrf.mxu0
      %1900 = vmatprep.mubr.bf16.mxu0 0
      %1901 = vmatmul.mubr.bf16.gmra.mxu0 %v825
      %v1902 = vpop.f32.mrf.mxu0
      %v1903 = vadd.f32 %v1742, %v1902
      %v1904 = vpop.f32.mrf.mxu0
      %v1905 = vpop.f32.mrf.mxu0
      %v1906 = vadd.f32 %v1745, %v1905
      %v1907 = vpop.f32.mrf.mxu0
      %1908 = vmatprep.mubr.bf16.mxu0 0
      %1909 = vmatmul.mubr.bf16.gmra.mxu0 %v832
      %v1910 = vpop.f32.mrf.mxu0
      %v1911 = vadd.f32 %v1750, %v1910
      %v1912 = vpop.f32.mrf.mxu0
      %v1913 = vpop.f32.mrf.mxu0
      %v1914 = vadd.f32 %v1753, %v1913
      %v1915 = vpop.f32.mrf.mxu0
      %1916 = vmatprep.mubr.bf16.mxu0 0
      %1917 = vmatmul.mubr.bf16.gmra.mxu0 %v839
      %v1918 = vpop.f32.mrf.mxu0
      %v1919 = vadd.f32 %v1758, %v1918
      %v1920 = vpop.f32.mrf.mxu0
      %v1921 = vpop.f32.mrf.mxu0
      %v1922 = vadd.f32 %v1761, %v1921
      %v1923 = vpop.f32.mrf.mxu0
      %1924 = vmatprep.mubr.bf16.mxu0 0
      %1925 = vmatmul.mubr.bf16.gmra.mxu0 %v846
      %v1926 = vpop.f32.mrf.mxu0
      %v1927 = vadd.f32 %v1766, %v1926
      %v1928 = vpop.f32.mrf.mxu0
      %v1929 = vpop.f32.mrf.mxu0
      %v1930 = vadd.f32 %v1769, %v1929
      %v1931 = vpop.f32.mrf.mxu0
      %1932 = vmatprep.mubr.bf16.mxu0 0
      %1933 = vmatmul.mubr.bf16.gmra.mxu0 %v853
      %v1934 = vpop.f32.mrf.mxu0
      %v1935 = vadd.f32 %v1774, %v1934
      %v1936 = vpop.f32.mrf.mxu0
      %v1937 = vpop.f32.mrf.mxu0
      %v1938 = vadd.f32 %v1777, %v1937
      %v1939 = vpop.f32.mrf.mxu0
      %1940 = vmatprep.mubr.bf16.mxu0 0
      %1941 = vmatmul.mubr.bf16.gmra.mxu0 %v860
      %v1942 = vpop.f32.mrf.mxu0
      %v1943 = vadd.f32 %v1782, %v1942
      %v1944 = vpop.f32.mrf.mxu0
      %v1945 = vpop.f32.mrf.mxu0
      %v1946 = vadd.f32 %v1785, %v1945
      %v1947 = vpop.f32.mrf.mxu0
      %1948 = vmatprep.mubr.bf16.mxu0 0
      %1949 = vmatmul.mubr.bf16.gmra.mxu0 %v867
      %v1950 = vpop.f32.mrf.mxu0
      %v1951 = vadd.f32 %v1790, %v1950
      %v1952 = vpop.f32.mrf.mxu0
      %v1953 = vpop.f32.mrf.mxu0
      %v1954 = vadd.f32 %v1793, %v1953
      %v1955 = vpop.f32.mrf.mxu0
      %1956 = vmatprep.mubr.bf16.mxu0 0
      %1957 = vmatmul.mubr.bf16.gmra.mxu0 %v874
      %v1958 = vpop.f32.mrf.mxu0
      %v1959 = vadd.f32 %v1798, %v1958
      %v1960 = vpop.f32.mrf.mxu0
      %v1961 = vpop.f32.mrf.mxu0
      %v1962 = vadd.f32 %v1801, %v1961
      %v1963 = vpop.f32.mrf.mxu0
      %1964 = vmatprep.mubr.bf16.mxu0 0
      %1965 = vmatmul.mubr.bf16.gmra.mxu0 %v881
      %v1966 = vpop.f32.mrf.mxu0
      %v1967 = vadd.f32 %v1806, %v1966
      %v1968 = vpop.f32.mrf.mxu0
      %v1969 = vpop.f32.mrf.mxu0
      %v1970 = vadd.f32 %v1809, %v1969
      %v1971 = vpop.f32.mrf.mxu0
      %1972 = vmatprep.mubr.bf16.mxu0 0
      %1973 = vmatmul.mubr.bf16.gmra.mxu0 %v888
      %v1974 = vpop.f32.mrf.mxu0
      %v1975 = vadd.f32 %v1814, %v1974
      %v1976 = vpop.f32.mrf.mxu0
      %v1977 = vpop.f32.mrf.mxu0
      %v1978 = vadd.f32 %v1817, %v1977
      %v1979 = vpop.f32.mrf.mxu0
      %1980 = vdwg.mxu0
      %v1981 = vmax.f32 %v1855, 0.0
      %v1982 = vmax.f32 %v1858, 0.0
      %v1983 = vmax.f32 %v1863, 0.0
      %v1984 = vmax.f32 %v1866, 0.0
      %v1985 = vmax.f32 %v1871, 0.0
      %v1986 = vmax.f32 %v1874, 0.0
      %v1987 = vmax.f32 %v1879, 0.0
      %v1988 = vmax.f32 %v1882, 0.0
      %v1989 = vmax.f32 %v1887, 0.0
      %v1990 = vmax.f32 %v1890, 0.0
      %v1991 = vmax.f32 %v1895, 0.0
      %v1992 = vmax.f32 %v1898, 0.0
      %v1993 = vmax.f32 %v1903, 0.0
      %v1994 = vmax.f32 %v1906, 0.0
      %v1995 = vmax.f32 %v1911, 0.0
      %v1996 = vmax.f32 %v1914, 0.0
      %v1997 = vmax.f32 %v1919, 0.0
      %v1998 = vmax.f32 %v1922, 0.0
      %v1999 = vmax.f32 %v1927, 0.0
      %v2000 = vmax.f32 %v1930, 0.0
      %v2001 = vmax.f32 %v1935, 0.0
      %v2002 = vmax.f32 %v1938, 0.0
      %v2003 = vmax.f32 %v1943, 0.0
      %v2004 = vmax.f32 %v1946, 0.0
      %v2005 = vmax.f32 %v1951, 0.0
      %v2006 = vmax.f32 %v1954, 0.0
      %v2007 = vmax.f32 %v1959, 0.0
      %v2008 = vmax.f32 %v1962, 0.0
      %v2009 = vmax.f32 %v1967, 0.0
      %v2010 = vmax.f32 %v1970, 0.0
      %v2011 = vmax.f32 %v1975, 0.0
      %v2012 = vmax.f32 %v1978, 0.0
      %2013 = vst [vmem:[%s175] sm:$0xff] %v1981
      %2014 = vst [vmem:[%s175 + $0x8] sm:$0xff] %v1982
      %2015 = vst [vmem:[%s175 + $0x10] sm:$0xff] %v1983
      %2016 = vst [vmem:[%s175 + $0x18] sm:$0xff] %v1984
      %2017 = vst [vmem:[%s175 + $0x20] sm:$0xff] %v1985
      %2018 = vst [vmem:[%s175 + $0x28] sm:$0xff] %v1986
      %2019 = vst [vmem:[%s175 + $0x30] sm:$0xff] %v1987
      %2020 = vst [vmem:[%s175 + $0x38] sm:$0xff] %v1988
      %2021 = vst [vmem:[%s175 + $0x40] sm:$0xff] %v1989
      %2022 = vst [vmem:[%s175 + $0x48] sm:$0xff] %v1990
      %2023 = vst [vmem:[%s175 + $0x50] sm:$0xff] %v1991
      %2024 = vst [vmem:[%s175 + $0x58] sm:$0xff] %v1992
      %2025 = vst [vmem:[%s175 + $0x60] sm:$0xff] %v1993
      %2026 = vst [vmem:[%s175 + $0x68] sm:$0xff] %v1994
      %2027 = vst [vmem:[%s175 + $0x70] sm:$0xff] %v1995
      %2028 = vst [vmem:[%s175 + $0x78] sm:$0xff] %v1996
      %2029 = vst [vmem:[%s175 + $0x80] sm:$0xff] %v1997
      %2030 = vst [vmem:[%s175 + $0x88] sm:$0xff] %v1998
      %2031 = vst [vmem:[%s175 + $0x90] sm:$0xff] %v1999
      %2032 = vst [vmem:[%s175 + $0x98] sm:$0xff] %v2000
      %2033 = vst [vmem:[%s175 + $0xa0] sm:$0xff] %v2001
      %2034 = vst [vmem:[%s175 + $0xa8] sm:$0xff] %v2002
      %2035 = vst [vmem:[%s175 + $0xb0] sm:$0xff] %v2003
      %2036 = vst [vmem:[%s175 + $0xb8] sm:$0xff] %v2004
      %2037 = vst [vmem:[%s175 + $0xc0] sm:$0xff] %v2005
      %2038 = vst [vmem:[%s175 + $0xc8] sm:$0xff] %v2006
      %2039 = vst [vmem:[%s175 + $0xd0] sm:$0xff] %v2007
      %2040 = vst [vmem:[%s175 + $0xd8] sm:$0xff] %v2008
      %2041 = vst [vmem:[%s175 + $0xe0] sm:$0xff] %v2009
      %2042 = vst [vmem:[%s175 + $0xe8] sm:$0xff] %v2010
      %2043 = vst [vmem:[%s175 + $0xf0] sm:$0xff] %v2011
      %2044 = vst [vmem:[%s175 + $0xf8] sm:$0xff] %v2012
      %s2045 = smul.u32 32, %s14
      %p2046 = scmp.lt.s32.totalorder %s2045, 63
      %s2047 = scalar_select %p2046, %s2045, 63
      %s2048 = smul.addr %s2047, 8
      %s2049 = scalar_lea.vmem %s3, %s2048
      // Predicated region
      $region33: #{model_forward.5} parent=31 // pred_check
        %p2050 = pneg %p100
      $region34: #{model_forward.5} parent=31 // pred_check_branch
        %2052 = sbr.rel (%p2050) target = $region36
      $region35: #{model_forward.5} parent=31 // pred_region
        %s2053 = smul.u32 32, %s14
      $region36: #{model_forward.5} parent=31 // pred_fallthru
        _
    $region32: #{model_forward.5} parent=5 // pred_fallthru
      _
    %p2054 = scmp.le.s32.totalorder 2, %s9
    // Predicated region
    $region37: #{model_forward.5} parent=5 // pred_check
      %p2055 = pneg %p2054
    $region38: #{model_forward.5} parent=5 // pred_check_branch
      %2057 = sbr.rel (%p2055) target = $region40
    $region39: #{model_forward.5} parent=5 // pred_region
      %s2058 = ssub.s32 %s9, 2
      // Predicated region
      $region41: #{model_forward.5} parent=39 // pred_check
        %p2059 = pneg %p106
      $region42: #{model_forward.5} parent=39 // pred_check_branch
        %2061 = sbr.rel (%p2059) target = $region44
      $region43: #{model_forward.5} parent=39 // pred_region
        %s2062 = smul.u32 32, %s15
        %p2063 = scmp.lt.s32.totalorder %s2062, 63
        %s2064 = scalar_select %p2063, %s2062, 63
        %s2065 = smul.addr %s2064, 8
        %s2066 = scalar_lea.vmem %s3, %s2065
      $region44: #{model_forward.5} parent=39 // pred_fallthru
        _
    $region40: #{model_forward.5} parent=5 // pred_fallthru
      _
  $region6: #{model_forward.5} parent=0 // loop_footer
    %s13 = sadd.s32 1, %s9
  $region7: #{model_forward.5} parent=0 // loop_footer_branch
    %8 = sbr.rel target = $region3
  $region8: #{model_forward.5} parent=0 // loop_exit
    _

// kernel: model_forward.6
$region0: #{model_forward.6}
  #allocation0 [shape = 'u32[]', space=smem, size = 0x4, offset = 0x4, fixed_abs, tag = 'smem constant byte address 0x4 - core index']
  #allocation1 [shape = 'u32[144,128]{1,0:T(1,128)}', space=vmem, size = 0x12000, scoped, tag = 'internal scratch']
  %s0 = inlined_call_operand.vmem [shape: bf16[128,1664], index: 0, kind: input, shape index: {}]
  %s1 = inlined_call_operand.vmem [shape: bf16[1664,128], index: 1, kind: input, shape index: {}]
  %s2 = inlined_call_operand.vmem [shape: f32[1,128], index: 2, kind: input, shape index: {}]
  %s3 = inlined_call_operand.vmem [shape: f32[128,128], index: 3, kind: input, shape index: {}]
  %s4 = inlined_call_operand.vmem [shape: f32[1,128], index: 4, kind: input, shape index: {}]
  %s5 = inlined_call_operand.vmem [shape: f32[8,128], index: 5, kind: output, shape index: {}]
  %s6 = sld [smem:[#allocation0]]
  $region30: #{model_forward.6} parent=0
    _
  %s8 = ssub.s32 1, %s6
  %s9 = scalar_select 0, %s8, %s6
  // Predicated region
  $region2: #{model_forward.6} parent=0 // pred_check
    _
  $region3: #{model_forward.6} parent=0 // pred_check_branch
    %11 = sbr.rel (0) target = $region5
  $region4: #{model_forward.6} parent=0 // pred_region
    _
  $region5: #{model_forward.6} parent=0 // pred_fallthru
    _
  // Predicated region
  $region6: #{model_forward.6} parent=0 // pred_check
    _
  $region7: #{model_forward.6} parent=0 // pred_check_branch
    %13 = sbr.rel (0) target = $region9
  $region8: #{model_forward.6} parent=0 // pred_region
    _
  $region9: #{model_forward.6} parent=0 // pred_fallthru
    _
  // Predicated region
  $region10: #{model_forward.6} parent=0 // pred_check
    _
  $region11: #{model_forward.6} parent=0 // pred_check_branch
    %15 = sbr.rel (0) target = $region13
  $region12: #{model_forward.6} parent=0 // pred_region
    _
  $region13: #{model_forward.6} parent=0 // pred_fallthru
    _
  // Predicated region
  $region14: #{model_forward.6} parent=0 // pred_check
    _
  $region15: #{model_forward.6} parent=0 // pred_check_branch
    %17 = sbr.rel (0) target = $region17
  $region16: #{model_forward.6} parent=0 // pred_region
    _
  $region17: #{model_forward.6} parent=0 // pred_fallthru
    _
  // Predicated region
  $region18: #{model_forward.6} parent=0 // pred_check
    _
  $region19: #{model_forward.6} parent=0 // pred_check_branch
    %19 = sbr.rel (0) target = $region21
  $region20: #{model_forward.6} parent=0 // pred_region
    _
  $region21: #{model_forward.6} parent=0 // pred_fallthru
    _
  %v21 = vld [vmem:[%s0] sm:$0xff]
  %v22 = vld [vmem:[%s0 + $0x8] sm:$0xff]
  %v23 = vld [vmem:[%s0 + $0x10] sm:$0xff]
  %v24 = vld [vmem:[%s0 + $0x18] sm:$0xff]
  %v25 = vld [vmem:[%s0 + $0x20] sm:$0xff]
  %v26 = vld [vmem:[%s0 + $0x28] sm:$0xff]
  %v27 = vld [vmem:[%s0 + $0x30] sm:$0xf]
  %v28 = vld [vmem:[%s0 + $0x34] sm:$0xff]
  %v29 = vld [vmem:[%s0 + $0x3c] sm:$0xff]
  %v30 = vld [vmem:[%s0 + $0x44] sm:$0xff]
  %v31 = vld [vmem:[%s0 + $0x4c] sm:$0xff]
  %v32 = vld [vmem:[%s0 + $0x54] sm:$0xff]
  %v33 = vld [vmem:[%s0 + $0x5c] sm:$0xff]
  %v34 = vld [vmem:[%s0 + $0x64] sm:$0xf]
  %v35 = vld [vmem:[%s0 + $0x68] sm:$0xff]
  %v36 = vld [vmem:[%s0 + $0x70] sm:$0xff]
  %v37 = vld [vmem:[%s0 + $0x78] sm:$0xff]
  %v38 = vld [vmem:[%s0 + $0x80] sm:$0xff]
  %v39 = vld [vmem:[%s0 + $0x88] sm:$0xff]
  %v40 = vld [vmem:[%s0 + $0x90] sm:$0xff]
  %v41 = vld [vmem:[%s0 + $0x98] sm:$0xf]
  %v42 = vld [vmem:[%s0 + $0x9c] sm:$0xff]
  %v43 = vld [vmem:[%s0 + $0xa4] sm:$0xff]
  %v44 = vld [vmem:[%s0 + $0xac] sm:$0xff]
  %v45 = vld [vmem:[%s0 + $0xb4] sm:$0xff]
  %v46 = vld [vmem:[%s0 + $0xbc] sm:$0xff]
  %v47 = vld [vmem:[%s0 + $0xc4] sm:$0xff]
  %v48 = vld [vmem:[%s0 + $0xcc] sm:$0xf]
  %v49 = vld [vmem:[%s0 + $0xd0] sm:$0xff]
  %v50 = vld [vmem:[%s0 + $0xd8] sm:$0xff]
  %v51 = vld [vmem:[%s0 + $0xe0] sm:$0xff]
  %v52 = vld [vmem:[%s0 + $0xe8] sm:$0xff]
  %v53 = vld [vmem:[%s0 + $0xf0] sm:$0xff]
  %v54 = vld [vmem:[%s0 + $0xf8] sm:$0xff]
  %v55 = vld [vmem:[%s0 + $0x100] sm:$0xf]
  %v56 = vld [vmem:[%s0 + $0x104] sm:$0xff]
  %v57 = vld [vmem:[%s0 + $0x10c] sm:$0xff]
  %v58 = vld [vmem:[%s0 + $0x114] sm:$0xff]
  %v59 = vld [vmem:[%s0 + $0x11c] sm:$0xff]
  %v60 = vld [vmem:[%s0 + $0x124] sm:$0xff]
  %v61 = vld [vmem:[%s0 + $0x12c] sm:$0xff]
  %v62 = vld [vmem:[%s0 + $0x134] sm:$0xf]
  %v63 = vld [vmem:[%s0 + $0x138] sm:$0xff]
  %v64 = vld [vmem:[%s0 + $0x140] sm:$0xff]
  %v65 = vld [vmem:[%s0 + $0x148] sm:$0xff]
  %v66 = vld [vmem:[%s0 + $0x150] sm:$0xff]
  %v67 = vld [vmem:[%s0 + $0x158] sm:$0xff]
  %v68 = vld [vmem:[%s0 + $0x160] sm:$0xff]
  %v69 = vld [vmem:[%s0 + $0x168] sm:$0xf]
  %v70 = vld [vmem:[%s0 + $0x16c] sm:$0xff]
  %v71 = vld [vmem:[%s0 + $0x174] sm:$0xff]
  %v72 = vld [vmem:[%s0 + $0x17c] sm:$0xff]
  %v73 = vld [vmem:[%s0 + $0x184] sm:$0xff]
  %v74 = vld [vmem:[%s0 + $0x18c] sm:$0xff]
  %v75 = vld [vmem:[%s0 + $0x194] sm:$0xff]
  %v76 = vld [vmem:[%s0 + $0x19c] sm:$0xf]
  %v77 = vld [vmem:[%s0 + $0x1a0] sm:$0xff]
  %v78 = vld [vmem:[%s0 + $0x1a8] sm:$0xff]
  %v79 = vld [vmem:[%s0 + $0x1b0] sm:$0xff]
  %v80 = vld [vmem:[%s0 + $0x1b8] sm:$0xff]
  %v81 = vld [vmem:[%s0 + $0x1c0] sm:$0xff]
  %v82 = vld [vmem:[%s0 + $0x1c8] sm:$0xff]
  %v83 = vld [vmem:[%s0 + $0x1d0] sm:$0xf]
  %v84 = vld [vmem:[%s0 + $0x1d4] sm:$0xff]
  %v85 = vld [vmem:[%s0 + $0x1dc] sm:$0xff]
  %v86 = vld [vmem:[%s0 + $0x1e4] sm:$0xff]
  %v87 = vld [vmem:[%s0 + $0x1ec] sm:$0xff]
  %v88 = vld [vmem:[%s0 + $0x1f4] sm:$0xff]
  %v89 = vld [vmem:[%s0 + $0x1fc] sm:$0xff]
  %v90 = vld [vmem:[%s0 + $0x204] sm:$0xf]
  %v91 = vld [vmem:[%s0 + $0x208] sm:$0xff]
  %v92 = vld [vmem:[%s0 + $0x210] sm:$0xff]
  %v93 = vld [vmem:[%s0 + $0x218] sm:$0xff]
  %v94 = vld [vmem:[%s0 + $0x220] sm:$0xff]
  %v95 = vld [vmem:[%s0 + $0x228] sm:$0xff]
  %v96 = vld [vmem:[%s0 + $0x230] sm:$0xff]
  %v97 = vld [vmem:[%s0 + $0x238] sm:$0xf]
  %v98 = vld [vmem:[%s0 + $0x23c] sm:$0xff]
  %v99 = vld [vmem:[%s0 + $0x244] sm:$0xff]
  %v100 = vld [vmem:[%s0 + $0x24c] sm:$0xff]
  %v101 = vld [vmem:[%s0 + $0x254] sm:$0xff]
  %v102 = vld [vmem:[%s0 + $0x25c] sm:$0xff]
  %v103 = vld [vmem:[%s0 + $0x264] sm:$0xff]
  %v104 = vld [vmem:[%s0 + $0x26c] sm:$0xf]
  %v105 = vld [vmem:[%s0 + $0x270] sm:$0xff]
  %v106 = vld [vmem:[%s0 + $0x278] sm:$0xff]
  %v107 = vld [vmem:[%s0 + $0x280] sm:$0xff]
  %v108 = vld [vmem:[%s0 + $0x288] sm:$0xff]
  %v109 = vld [vmem:[%s0 + $0x290] sm:$0xff]
  %v110 = vld [vmem:[%s0 + $0x298] sm:$0xff]
  %v111 = vld [vmem:[%s0 + $0x2a0] sm:$0xf]
  %v112 = vld [vmem:[%s0 + $0x2a4] sm:$0xff]
  %v113 = vld [vmem:[%s0 + $0x2ac] sm:$0xff]
  %v114 = vld [vmem:[%s0 + $0x2b4] sm:$0xff]
  %v115 = vld [vmem:[%s0 + $0x2bc] sm:$0xff]
  %v116 = vld [vmem:[%s0 + $0x2c4] sm:$0xff]
  %v117 = vld [vmem:[%s0 + $0x2cc] sm:$0xff]
  %v118 = vld [vmem:[%s0 + $0x2d4] sm:$0xf]
  %v119 = vld [vmem:[%s0 + $0x2d8] sm:$0xff]
  %v120 = vld [vmem:[%s0 + $0x2e0] sm:$0xff]
  %v121 = vld [vmem:[%s0 + $0x2e8] sm:$0xff]
  %v122 = vld [vmem:[%s0 + $0x2f0] sm:$0xff]
  %v123 = vld [vmem:[%s0 + $0x2f8] sm:$0xff]
  %v124 = vld [vmem:[%s0 + $0x300] sm:$0xff]
  %v125 = vld [vmem:[%s0 + $0x308] sm:$0xf]
  %v126 = vld [vmem:[%s0 + $0x30c] sm:$0xff]
  %v127 = vld [vmem:[%s0 + $0x314] sm:$0xff]
  %v128 = vld [vmem:[%s0 + $0x31c] sm:$0xff]
  %v129 = vld [vmem:[%s0 + $0x324] sm:$0xff]
  %v130 = vld [vmem:[%s0 + $0x32c] sm:$0xff]
  %v131 = vld [vmem:[%s0 + $0x334] sm:$0xff]
  %v132 = vld [vmem:[%s0 + $0x33c] sm:$0xf]
  %v133 = vld [vmem:[%s1] sm:$0xf]
  %v134 = vld [vmem:[%s1 + $0x4] sm:$0xf]
  %v135 = vld [vmem:[%s1 + $0x8] sm:$0xf]
  %v136 = vld [vmem:[%s1 + $0xc] sm:$0xf]
  %v137 = vld [vmem:[%s1 + $0x10] sm:$0xf]
  %v138 = vld [vmem:[%s1 + $0x14] sm:$0xf]
  %v139 = vld [vmem:[%s1 + $0x18] sm:$0xf]
  %v140 = vld [vmem:[%s1 + $0x1c] sm:$0xf]
  %v141 = vld [vmem:[%s1 + $0x20] sm:$0xf]
  %v142 = vld [vmem:[%s1 + $0x24] sm:$0xf]
  %v143 = vld [vmem:[%s1 + $0x28] sm:$0xf]
  %v144 = vld [vmem:[%s1 + $0x2c] sm:$0xf]
  %v145 = vld [vmem:[%s1 + $0x30] sm:$0xf]
  %v146 = vld [vmem:[%s1 + $0x34] sm:$0xf]
  %v147 = vld [vmem:[%s1 + $0x38] sm:$0xf]
  %v148 = vld [vmem:[%s1 + $0x3c] sm:$0xf]
  %v149 = vld [vmem:[%s1 + $0x40] sm:$0xf]
  %v150 = vld [vmem:[%s1 + $0x44] sm:$0xf]
  %v151 = vld [vmem:[%s1 + $0x48] sm:$0xf]
  %v152 = vld [vmem:[%s1 + $0x4c] sm:$0xf]
  %v153 = vld [vmem:[%s1 + $0x50] sm:$0xf]
  %v154 = vld [vmem:[%s1 + $0x54] sm:$0xf]
  %v155 = vld [vmem:[%s1 + $0x58] sm:$0xf]
  %v156 = vld [vmem:[%s1 + $0x5c] sm:$0xf]
  %v157 = vld [vmem:[%s1 + $0x60] sm:$0xf]
  %v158 = vld [vmem:[%s1 + $0x64] sm:$0xf]
  %v159 = vld [vmem:[%s1 + $0x68] sm:$0xf]
  %v160 = vld [vmem:[%s1 + $0x6c] sm:$0xf]
  %v161 = vld [vmem:[%s1 + $0x70] sm:$0xf]
  %v162 = vld [vmem:[%s1 + $0x74] sm:$0xf]
  %v163 = vld [vmem:[%s1 + $0x78] sm:$0xf]
  %v164 = vld [vmem:[%s1 + $0x7c] sm:$0xf]
  %v165 = vld [vmem:[%s1 + $0x80] sm:$0xf]
  %v166 = vld [vmem:[%s1 + $0x84] sm:$0xf]
  %v167 = vld [vmem:[%s1 + $0x88] sm:$0xf]
  %v168 = vld [vmem:[%s1 + $0x8c] sm:$0xf]
  %v169 = vld [vmem:[%s1 + $0x90] sm:$0xf]
  %v170 = vld [vmem:[%s1 + $0x94] sm:$0xf]
  %v171 = vld [vmem:[%s1 + $0x98] sm:$0xf]
  %v172 = vld [vmem:[%s1 + $0x9c] sm:$0xf]
  %v173 = vld [vmem:[%s1 + $0xa0] sm:$0xf]
  %v174 = vld [vmem:[%s1 + $0xa4] sm:$0xf]
  %v175 = vld [vmem:[%s1 + $0xa8] sm:$0xf]
  %v176 = vld [vmem:[%s1 + $0xac] sm:$0xf]
  %v177 = vld [vmem:[%s1 + $0xb0] sm:$0xf]
  %v178 = vld [vmem:[%s1 + $0xb4] sm:$0xf]
  %v179 = vld [vmem:[%s1 + $0xb8] sm:$0xf]
  %v180 = vld [vmem:[%s1 + $0xbc] sm:$0xf]
  %v181 = vld [vmem:[%s1 + $0xc0] sm:$0xf]
  %v182 = vld [vmem:[%s1 + $0xc4] sm:$0xf]
  %v183 = vld [vmem:[%s1 + $0xc8] sm:$0xf]
  %v184 = vld [vmem:[%s1 + $0xcc] sm:$0xf]
  %v185 = vld [vmem:[%s1 + $0xd0] sm:$0xf]
  %v186 = vld [vmem:[%s1 + $0xd4] sm:$0xf]
  %v187 = vld [vmem:[%s1 + $0xd8] sm:$0xf]
  %v188 = vld [vmem:[%s1 + $0xdc] sm:$0xf]
  %v189 = vld [vmem:[%s1 + $0xe0] sm:$0xf]
  %v190 = vld [vmem:[%s1 + $0xe4] sm:$0xf]
  %v191 = vld [vmem:[%s1 + $0xe8] sm:$0xf]
  %v192 = vld [vmem:[%s1 + $0xec] sm:$0xf]
  %v193 = vld [vmem:[%s1 + $0xf0] sm:$0xf]
  %v194 = vld [vmem:[%s1 + $0xf4] sm:$0xf]
  %v195 = vld [vmem:[%s1 + $0xf8] sm:$0xf]
  %v196 = vld [vmem:[%s1 + $0xfc] sm:$0xf]
  %v197 = vld [vmem:[%s1 + $0x100] sm:$0xf]
  %v198 = vld [vmem:[%s1 + $0x104] sm:$0xf]
  %v199 = vld [vmem:[%s1 + $0x108] sm:$0xf]
  %v200 = vld [vmem:[%s1 + $0x10c] sm:$0xf]
  %v201 = vld [vmem:[%s1 + $0x110] sm:$0xf]
  %v202 = vld [vmem:[%s1 + $0x114] sm:$0xf]
  %v203 = vld [vmem:[%s1 + $0x118] sm:$0xf]
  %v204 = vld [vmem:[%s1 + $0x11c] sm:$0xf]
  %v205 = vld [vmem:[%s1 + $0x120] sm:$0xf]
  %v206 = vld [vmem:[%s1 + $0x124] sm:$0xf]
  %v207 = vld [vmem:[%s1 + $0x128] sm:$0xf]
  %v208 = vld [vmem:[%s1 + $0x12c] sm:$0xf]
  %v209 = vld [vmem:[%s1 + $0x130] sm:$0xf]
  %v210 = vld [vmem:[%s1 + $0x134] sm:$0xf]
  %v211 = vld [vmem:[%s1 + $0x138] sm:$0xf]
  %v212 = vld [vmem:[%s1 + $0x13c] sm:$0xf]
  %v213 = vld [vmem:[%s1 + $0x140] sm:$0xf]
  %v214 = vld [vmem:[%s1 + $0x144] sm:$0xf]
  %v215 = vld [vmem:[%s1 + $0x148] sm:$0xf]
  %v216 = vld [vmem:[%s1 + $0x14c] sm:$0xf]
  %v217 = vld [vmem:[%s1 + $0x150] sm:$0xf]
  %v218 = vld [vmem:[%s1 + $0x154] sm:$0xf]
  %v219 = vld [vmem:[%s1 + $0x158] sm:$0xf]
  %v220 = vld [vmem:[%s1 + $0x15c] sm:$0xf]
  %v221 = vld [vmem:[%s1 + $0x160] sm:$0xf]
  %v222 = vld [vmem:[%s1 + $0x164] sm:$0xf]
  %v223 = vld [vmem:[%s1 + $0x168] sm:$0xf]
  %v224 = vld [vmem:[%s1 + $0x16c] sm:$0xf]
  %v225 = vld [vmem:[%s1 + $0x170] sm:$0xf]
  %v226 = vld [vmem:[%s1 + $0x174] sm:$0xf]
  %v227 = vld [vmem:[%s1 + $0x178] sm:$0xf]
  %v228 = vld [vmem:[%s1 + $0x17c] sm:$0xf]
  %v229 = vld [vmem:[%s1 + $0x180] sm:$0xf]
  %v230 = vld [vmem:[%s1 + $0x184] sm:$0xf]
  %v231 = vld [vmem:[%s1 + $0x188] sm:$0xf]
  %v232 = vld [vmem:[%s1 + $0x18c] sm:$0xf]
  %v233 = vld [vmem:[%s1 + $0x190] sm:$0xf]
  %v234 = vld [vmem:[%s1 + $0x194] sm:$0xf]
  %v235 = vld [vmem:[%s1 + $0x198] sm:$0xf]
  %v236 = vld [vmem:[%s1 + $0x19c] sm:$0xf]
  %v237 = vld [vmem:[%s1 + $0x1a0] sm:$0xf]
  %v238 = vld [vmem:[%s1 + $0x1a4] sm:$0xf]
  %v239 = vld [vmem:[%s1 + $0x1a8] sm:$0xf]
  %v240 = vld [vmem:[%s1 + $0x1ac] sm:$0xf]
  %v241 = vld [vmem:[%s1 + $0x1b0] sm:$0xf]
  %v242 = vld [vmem:[%s1 + $0x1b4] sm:$0xf]
  %v243 = vld [vmem:[%s1 + $0x1b8] sm:$0xf]
  %v244 = vld [vmem:[%s1 + $0x1bc] sm:$0xf]
  %v245 = vld [vmem:[%s1 + $0x1c0] sm:$0xf]
  %v246 = vld [vmem:[%s1 + $0x1c4] sm:$0xf]
  %v247 = vld [vmem:[%s1 + $0x1c8] sm:$0xf]
  %v248 = vld [vmem:[%s1 + $0x1cc] sm:$0xf]
  %v249 = vld [vmem:[%s1 + $0x1d0] sm:$0xf]
  %v250 = vld [vmem:[%s1 + $0x1d4] sm:$0xf]
  %v251 = vld [vmem:[%s1 + $0x1d8] sm:$0xf]
  %v252 = vld [vmem:[%s1 + $0x1dc] sm:$0xf]
  %v253 = vld [vmem:[%s1 + $0x1e0] sm:$0xf]
  %v254 = vld [vmem:[%s1 + $0x1e4] sm:$0xf]
  %v255 = vld [vmem:[%s1 + $0x1e8] sm:$0xf]
  %v256 = vld [vmem:[%s1 + $0x1ec] sm:$0xf]
  %v257 = vld [vmem:[%s1 + $0x1f0] sm:$0xf]
  %v258 = vld [vmem:[%s1 + $0x1f4] sm:$0xf]
  %v259 = vld [vmem:[%s1 + $0x1f8] sm:$0xf]
  %v260 = vld [vmem:[%s1 + $0x1fc] sm:$0xf]
  %v261 = vld [vmem:[%s1 + $0x200] sm:$0xf]
  %v262 = vld [vmem:[%s1 + $0x204] sm:$0xf]
  %v263 = vld [vmem:[%s1 + $0x208] sm:$0xf]
  %v264 = vld [vmem:[%s1 + $0x20c] sm:$0xf]
  %v265 = vld [vmem:[%s1 + $0x210] sm:$0xf]
  %v266 = vld [vmem:[%s1 + $0x214] sm:$0xf]
  %v267 = vld [vmem:[%s1 + $0x218] sm:$0xf]
  %v268 = vld [vmem:[%s1 + $0x21c] sm:$0xf]
  %v269 = vld [vmem:[%s1 + $0x220] sm:$0xf]
  %v270 = vld [vmem:[%s1 + $0x224] sm:$0xf]
  %v271 = vld [vmem:[%s1 + $0x228] sm:$0xf]
  %v272 = vld [vmem:[%s1 + $0x22c] sm:$0xf]
  %v273 = vld [vmem:[%s1 + $0x230] sm:$0xf]
  %v274 = vld [vmem:[%s1 + $0x234] sm:$0xf]
  %v275 = vld [vmem:[%s1 + $0x238] sm:$0xf]
  %v276 = vld [vmem:[%s1 + $0x23c] sm:$0xf]
  %v277 = vld [vmem:[%s1 + $0x240] sm:$0xf]
  %v278 = vld [vmem:[%s1 + $0x244] sm:$0xf]
  %v279 = vld [vmem:[%s1 + $0x248] sm:$0xf]
  %v280 = vld [vmem:[%s1 + $0x24c] sm:$0xf]
  %v281 = vld [vmem:[%s1 + $0x250] sm:$0xf]
  %v282 = vld [vmem:[%s1 + $0x254] sm:$0xf]
  %v283 = vld [vmem:[%s1 + $0x258] sm:$0xf]
  %v284 = vld [vmem:[%s1 + $0x25c] sm:$0xf]
  %v285 = vld [vmem:[%s1 + $0x260] sm:$0xf]
  %v286 = vld [vmem:[%s1 + $0x264] sm:$0xf]
  %v287 = vld [vmem:[%s1 + $0x268] sm:$0xf]
  %v288 = vld [vmem:[%s1 + $0x26c] sm:$0xf]
  %v289 = vld [vmem:[%s1 + $0x270] sm:$0xf]
  %v290 = vld [vmem:[%s1 + $0x274] sm:$0xf]
  %v291 = vld [vmem:[%s1 + $0x278] sm:$0xf]
  %v292 = vld [vmem:[%s1 + $0x27c] sm:$0xf]
  %v293 = vld [vmem:[%s1 + $0x280] sm:$0xf]
  %v294 = vld [vmem:[%s1 + $0x284] sm:$0xf]
  %v295 = vld [vmem:[%s1 + $0x288] sm:$0xf]
  %v296 = vld [vmem:[%s1 + $0x28c] sm:$0xf]
  %v297 = vld [vmem:[%s1 + $0x290] sm:$0xf]
  %v298 = vld [vmem:[%s1 + $0x294] sm:$0xf]
  %v299 = vld [vmem:[%s1 + $0x298] sm:$0xf]
  %v300 = vld [vmem:[%s1 + $0x29c] sm:$0xf]
  %v301 = vld [vmem:[%s1 + $0x2a0] sm:$0xf]
  %v302 = vld [vmem:[%s1 + $0x2a4] sm:$0xf]
  %v303 = vld [vmem:[%s1 + $0x2a8] sm:$0xf]
  %v304 = vld [vmem:[%s1 + $0x2ac] sm:$0xf]
  %v305 = vld [vmem:[%s1 + $0x2b0] sm:$0xf]
  %v306 = vld [vmem:[%s1 + $0x2b4] sm:$0xf]
  %v307 = vld [vmem:[%s1 + $0x2b8] sm:$0xf]
  %v308 = vld [vmem:[%s1 + $0x2bc] sm:$0xf]
  %v309 = vld [vmem:[%s1 + $0x2c0] sm:$0xf]
  %v310 = vld [vmem:[%s1 + $0x2c4] sm:$0xf]
  %v311 = vld [vmem:[%s1 + $0x2c8] sm:$0xf]
  %v312 = vld [vmem:[%s1 + $0x2cc] sm:$0xf]
  %v313 = vld [vmem:[%s1 + $0x2d0] sm:$0xf]
  %v314 = vld [vmem:[%s1 + $0x2d4] sm:$0xf]
  %v315 = vld [vmem:[%s1 + $0x2d8] sm:$0xf]
  %v316 = vld [vmem:[%s1 + $0x2dc] sm:$0xf]
  %v317 = vld [vmem:[%s1 + $0x2e0] sm:$0xf]
  %v318 = vld [vmem:[%s1 + $0x2e4] sm:$0xf]
  %v319 = vld [vmem:[%s1 + $0x2e8] sm:$0xf]
  %v320 = vld [vmem:[%s1 + $0x2ec] sm:$0xf]
  %v321 = vld [vmem:[%s1 + $0x2f0] sm:$0xf]
  %v322 = vld [vmem:[%s1 + $0x2f4] sm:$0xf]
  %v323 = vld [vmem:[%s1 + $0x2f8] sm:$0xf]
  %v324 = vld [vmem:[%s1 + $0x2fc] sm:$0xf]
  %v325 = vld [vmem:[%s1 + $0x300] sm:$0xf]
  %v326 = vld [vmem:[%s1 + $0x304] sm:$0xf]
  %v327 = vld [vmem:[%s1 + $0x308] sm:$0xf]
  %v328 = vld [vmem:[%s1 + $0x30c] sm:$0xf]
  %v329 = vld [vmem:[%s1 + $0x310] sm:$0xf]
  %v330 = vld [vmem:[%s1 + $0x314] sm:$0xf]
  %v331 = vld [vmem:[%s1 + $0x318] sm:$0xf]
  %v332 = vld [vmem:[%s1 + $0x31c] sm:$0xf]
  %v333 = vld [vmem:[%s1 + $0x320] sm:$0xf]
  %v334 = vld [vmem:[%s1 + $0x324] sm:$0xf]
  %v335 = vld [vmem:[%s1 + $0x328] sm:$0xf]
  %v336 = vld [vmem:[%s1 + $0x32c] sm:$0xf]
  %v337 = vld [vmem:[%s1 + $0x330] sm:$0xf]
  %v338 = vld [vmem:[%s1 + $0x334] sm:$0xf]
  %v339 = vld [vmem:[%s1 + $0x338] sm:$0xf]
  %v340 = vld [vmem:[%s1 + $0x33c] sm:$0xf]
  %v341 = vld [vmem:[%s2] sm:$0x1]
  %v343 = vlaneseq
  %v344 = vshrl.u32 %v343, 7
  %v345 = vsub.s32 0, %v344
  %v346 = vrot.slane %v341, %v345
  %v460 = vunpack.c.l.b16 %v21
  %v461 = vunpack.c.h.b16 %v21
  %v462 = vunpack.c.l.b16 %v22
  %v463 = vunpack.c.h.b16 %v22
  %v464 = vunpack.c.l.b16 %v23
  %v465 = vunpack.c.h.b16 %v23
  %v466 = vunpack.c.l.b16 %v24
  %v467 = vunpack.c.h.b16 %v24
  %v468 = vunpack.c.l.b16 %v25
  %v469 = vunpack.c.h.b16 %v25
  %v470 = vunpack.c.l.b16 %v26
  %v471 = vunpack.c.h.b16 %v26
  %v472 = vunpack.c.l.b16 %v27
  %v473 = vunpack.c.l.b16 %v28
  %v474 = vunpack.c.h.b16 %v28
  %v475 = vunpack.c.l.b16 %v29
  %v476 = vunpack.c.h.b16 %v29
  %v477 = vunpack.c.l.b16 %v30
  %v478 = vunpack.c.h.b16 %v30
  %v479 = vunpack.c.l.b16 %v31
  %v480 = vunpack.c.h.b16 %v31
  %v481 = vunpack.c.l.b16 %v32
  %v482 = vunpack.c.h.b16 %v32
  %v483 = vunpack.c.l.b16 %v33
  %v484 = vunpack.c.h.b16 %v33
  %v485 = vunpack.c.l.b16 %v34
  %v486 = vunpack.c.l.b16 %v35
  %v487 = vunpack.c.h.b16 %v35
  %v488 = vunpack.c.l.b16 %v36
  %v489 = vunpack.c.h.b16 %v36
  %v490 = vunpack.c.l.b16 %v37
  %v491 = vunpack.c.h.b16 %v37
  %v492 = vunpack.c.l.b16 %v38
  %v493 = vunpack.c.h.b16 %v38
  %v494 = vunpack.c.l.b16 %v39
  %v495 = vunpack.c.h.b16 %v39
  %v496 = vunpack.c.l.b16 %v40
  %v497 = vunpack.c.h.b16 %v40
  %v498 = vunpack.c.l.b16 %v41
  %v499 = vunpack.c.l.b16 %v42
  %v500 = vunpack.c.h.b16 %v42
  %v501 = vunpack.c.l.b16 %v43
  %v502 = vunpack.c.h.b16 %v43
  %v503 = vunpack.c.l.b16 %v44
  %v504 = vunpack.c.h.b16 %v44
  %v505 = vunpack.c.l.b16 %v45
  %v506 = vunpack.c.h.b16 %v45
  %v507 = vunpack.c.l.b16 %v46
  %v508 = vunpack.c.h.b16 %v46
  %v509 = vunpack.c.l.b16 %v47
  %v510 = vunpack.c.h.b16 %v47
  %v511 = vunpack.c.l.b16 %v48
  %v512 = vunpack.c.l.b16 %v49
  %v513 = vunpack.c.h.b16 %v49
  %v514 = vunpack.c.l.b16 %v50
  %v515 = vunpack.c.h.b16 %v50
  %v516 = vunpack.c.l.b16 %v51
  %v517 = vunpack.c.h.b16 %v51
  %v518 = vunpack.c.l.b16 %v52
  %v519 = vunpack.c.h.b16 %v52
  %v520 = vunpack.c.l.b16 %v53
  %v521 = vunpack.c.h.b16 %v53
  %v522 = vunpack.c.l.b16 %v54
  %v523 = vunpack.c.h.b16 %v54
  %v524 = vunpack.c.l.b16 %v55
  %v525 = vunpack.c.l.b16 %v56
  %v526 = vunpack.c.h.b16 %v56
  %v527 = vunpack.c.l.b16 %v57
  %v528 = vunpack.c.h.b16 %v57
  %v529 = vunpack.c.l.b16 %v58
  %v530 = vunpack.c.h.b16 %v58
  %v531 = vunpack.c.l.b16 %v59
  %v532 = vunpack.c.h.b16 %v59
  %v533 = vunpack.c.l.b16 %v60
  %v534 = vunpack.c.h.b16 %v60
  %v535 = vunpack.c.l.b16 %v61
  %v536 = vunpack.c.h.b16 %v61
  %v537 = vunpack.c.l.b16 %v62
  %v538 = vunpack.c.l.b16 %v63
  %v539 = vunpack.c.h.b16 %v63
  %v540 = vunpack.c.l.b16 %v64
  %v541 = vunpack.c.h.b16 %v64
  %v542 = vunpack.c.l.b16 %v65
  %v543 = vunpack.c.h.b16 %v65
  %v544 = vunpack.c.l.b16 %v66
  %v545 = vunpack.c.h.b16 %v66
  %v546 = vunpack.c.l.b16 %v67
  %v547 = vunpack.c.h.b16 %v67
  %v548 = vunpack.c.l.b16 %v68
  %v549 = vunpack.c.h.b16 %v68
  %v550 = vunpack.c.l.b16 %v69
  %v551 = vunpack.c.l.b16 %v70
  %v552 = vunpack.c.h.b16 %v70
  %v553 = vunpack.c.l.b16 %v71
  %v554 = vunpack.c.h.b16 %v71
  %v555 = vunpack.c.l.b16 %v72
  %v556 = vunpack.c.h.b16 %v72
  %v557 = vunpack.c.l.b16 %v73
  %v558 = vunpack.c.h.b16 %v73
  %v559 = vunpack.c.l.b16 %v74
  %v560 = vunpack.c.h.b16 %v74
  %v561 = vunpack.c.l.b16 %v75
  %v562 = vunpack.c.h.b16 %v75
  %v563 = vunpack.c.l.b16 %v76
  %v564 = vunpack.c.l.b16 %v77
  %v565 = vunpack.c.h.b16 %v77
  %v566 = vunpack.c.l.b16 %v78
  %v567 = vunpack.c.h.b16 %v78
  %v568 = vunpack.c.l.b16 %v79
  %v569 = vunpack.c.h.b16 %v79
  %v570 = vunpack.c.l.b16 %v80
  %v571 = vunpack.c.h.b16 %v80
  %v572 = vunpack.c.l.b16 %v81
  %v573 = vunpack.c.h.b16 %v81
  %v574 = vunpack.c.l.b16 %v82
  %v575 = vunpack.c.h.b16 %v82
  %v576 = vunpack.c.l.b16 %v83
  %v577 = vunpack.c.l.b16 %v84
  %v578 = vunpack.c.h.b16 %v84
  %v579 = vunpack.c.l.b16 %v85
  %v580 = vunpack.c.h.b16 %v85
  %v581 = vunpack.c.l.b16 %v86
  %v582 = vunpack.c.h.b16 %v86
  %v583 = vunpack.c.l.b16 %v87
  %v584 = vunpack.c.h.b16 %v87
  %v585 = vunpack.c.l.b16 %v88
  %v586 = vunpack.c.h.b16 %v88
  %v587 = vunpack.c.l.b16 %v89
  %v588 = vunpack.c.h.b16 %v89
  %v589 = vunpack.c.l.b16 %v90
  %v590 = vunpack.c.l.b16 %v91
  %v591 = vunpack.c.h.b16 %v91
  %v592 = vunpack.c.l.b16 %v92
  %v593 = vunpack.c.h.b16 %v92
  %v594 = vunpack.c.l.b16 %v93
  %v595 = vunpack.c.h.b16 %v93
  %v596 = vunpack.c.l.b16 %v94
  %v597 = vunpack.c.h.b16 %v94
  %v598 = vunpack.c.l.b16 %v95
  %v599 = vunpack.c.h.b16 %v95
  %v600 = vunpack.c.l.b16 %v96
  %v601 = vunpack.c.h.b16 %v96
  %v602 = vunpack.c.l.b16 %v97
  %v603 = vunpack.c.l.b16 %v98
  %v604 = vunpack.c.h.b16 %v98
  %v605 = vunpack.c.l.b16 %v99
  %v606 = vunpack.c.h.b16 %v99
  %v607 = vunpack.c.l.b16 %v100
  %v608 = vunpack.c.h.b16 %v100
  %v609 = vunpack.c.l.b16 %v101
  %v610 = vunpack.c.h.b16 %v101
  %v611 = vunpack.c.l.b16 %v102
  %v612 = vunpack.c.h.b16 %v102
  %v613 = vunpack.c.l.b16 %v103
  %v614 = vunpack.c.h.b16 %v103
  %v615 = vunpack.c.l.b16 %v104
  %v616 = vunpack.c.l.b16 %v105
  %v617 = vunpack.c.h.b16 %v105
  %v618 = vunpack.c.l.b16 %v106
  %v619 = vunpack.c.h.b16 %v106
  %v620 = vunpack.c.l.b16 %v107
  %v621 = vunpack.c.h.b16 %v107
  %v622 = vunpack.c.l.b16 %v108
  %v623 = vunpack.c.h.b16 %v108
  %v624 = vunpack.c.l.b16 %v109
  %v625 = vunpack.c.h.b16 %v109
  %v626 = vunpack.c.l.b16 %v110
  %v627 = vunpack.c.h.b16 %v110
  %v628 = vunpack.c.l.b16 %v111
  %v629 = vunpack.c.l.b16 %v112
  %v630 = vunpack.c.h.b16 %v112
  %v631 = vunpack.c.l.b16 %v113
  %v632 = vunpack.c.h.b16 %v113
  %v633 = vunpack.c.l.b16 %v114
  %v634 = vunpack.c.h.b16 %v114
  %v635 = vunpack.c.l.b16 %v115
  %v636 = vunpack.c.h.b16 %v115
  %v637 = vunpack.c.l.b16 %v116
  %v638 = vunpack.c.h.b16 %v116
  %v639 = vunpack.c.l.b16 %v117
  %v640 = vunpack.c.h.b16 %v117
  %v641 = vunpack.c.l.b16 %v118
  %v642 = vunpack.c.l.b16 %v119
  %v643 = vunpack.c.h.b16 %v119
  %v644 = vunpack.c.l.b16 %v120
  %v645 = vunpack.c.h.b16 %v120
  %v646 = vunpack.c.l.b16 %v121
  %v647 = vunpack.c.h.b16 %v121
  %v648 = vunpack.c.l.b16 %v122
  %v649 = vunpack.c.h.b16 %v122
  %v650 = vunpack.c.l.b16 %v123
  %v651 = vunpack.c.h.b16 %v123
  %v652 = vunpack.c.l.b16 %v124
  %v653 = vunpack.c.h.b16 %v124
  %v654 = vunpack.c.l.b16 %v125
  %v655 = vunpack.c.l.b16 %v126
  %v656 = vunpack.c.h.b16 %v126
  %v657 = vunpack.c.l.b16 %v127
  %v658 = vunpack.c.h.b16 %v127
  %v659 = vunpack.c.l.b16 %v128
  %v660 = vunpack.c.h.b16 %v128
  %v661 = vunpack.c.l.b16 %v129
  %v662 = vunpack.c.h.b16 %v129
  %v663 = vunpack.c.l.b16 %v130
  %v664 = vunpack.c.h.b16 %v130
  %v665 = vunpack.c.l.b16 %v131
  %v666 = vunpack.c.h.b16 %v131
  %v667 = vunpack.c.l.b16 %v132
  %v668 = vpack.c.b16 %v473, %v460
  %v669 = vpack.c.b16 %v474, %v461
  %v670 = vpack.c.b16 %v475, %v462
  %v671 = vpack.c.b16 %v476, %v463
  %v672 = vpack.c.b16 %v477, %v464
  %v673 = vpack.c.b16 %v478, %v465
  %v674 = vpack.c.b16 %v479, %v466
  %v675 = vpack.c.b16 %v480, %v467
  %v676 = vpack.c.b16 %v481, %v468
  %v677 = vpack.c.b16 %v482, %v469
  %v678 = vpack.c.b16 %v483, %v470
  %v679 = vpack.c.b16 %v484, %v471
  %v680 = vpack.c.b16 %v485, %v472
  %v681 = vpack.c.b16 %v499, %v486
  %v682 = vpack.c.b16 %v500, %v487
  %v683 = vpack.c.b16 %v501, %v488
  %v684 = vpack.c.b16 %v502, %v489
  %v685 = vpack.c.b16 %v503, %v490
  %v686 = vpack.c.b16 %v504, %v491
  %v687 = vpack.c.b16 %v505, %v492
  %v688 = vpack.c.b16 %v506, %v493
  %v689 = vpack.c.b16 %v507, %v494
  %v690 = vpack.c.b16 %v508, %v495
  %v691 = vpack.c.b16 %v509, %v496
  %v692 = vpack.c.b16 %v510, %v497
  %v693 = vpack.c.b16 %v511, %v498
  %v694 = vpack.c.b16 %v525, %v512
  %v695 = vpack.c.b16 %v526, %v513
  %v696 = vpack.c.b16 %v527, %v514
  %v697 = vpack.c.b16 %v528, %v515
  %v698 = vpack.c.b16 %v529, %v516
  %v699 = vpack.c.b16 %v530, %v517
  %v700 = vpack.c.b16 %v531, %v518
  %v701 = vpack.c.b16 %v532, %v519
  %v702 = vpack.c.b16 %v533, %v520
  %v703 = vpack.c.b16 %v534, %v521
  %v704 = vpack.c.b16 %v535, %v522
  %v705 = vpack.c.b16 %v536, %v523
  %v706 = vpack.c.b16 %v537, %v524
  %v707 = vpack.c.b16 %v551, %v538
  %v708 = vpack.c.b16 %v552, %v539
  %v709 = vpack.c.b16 %v553, %v540
  %v710 = vpack.c.b16 %v554, %v541
  %v711 = vpack.c.b16 %v555, %v542
  %v712 = vpack.c.b16 %v556, %v543
  %v713 = vpack.c.b16 %v557, %v544
  %v714 = vpack.c.b16 %v558, %v545
  %v715 = vpack.c.b16 %v559, %v546
  %v716 = vpack.c.b16 %v560, %v547
  %v717 = vpack.c.b16 %v561, %v548
  %v718 = vpack.c.b16 %v562, %v549
  %v719 = vpack.c.b16 %v563, %v550
  %v720 = vpack.c.b16 %v577, %v564
  %v721 = vpack.c.b16 %v578, %v565
  %v722 = vpack.c.b16 %v579, %v566
  %v723 = vpack.c.b16 %v580, %v567
  %v724 = vpack.c.b16 %v581, %v568
  %v725 = vpack.c.b16 %v582, %v569
  %v726 = vpack.c.b16 %v583, %v570
  %v727 = vpack.c.b16 %v584, %v571
  %v728 = vpack.c.b16 %v585, %v572
  %v729 = vpack.c.b16 %v586, %v573
  %v730 = vpack.c.b16 %v587, %v574
  %v731 = vpack.c.b16 %v588, %v575
  %v732 = vpack.c.b16 %v589, %v576
  %v733 = vpack.c.b16 %v603, %v590
  %v734 = vpack.c.b16 %v604, %v591
  %v735 = vpack.c.b16 %v605, %v592
  %v736 = vpack.c.b16 %v606, %v593
  %v737 = vpack.c.b16 %v607, %v594
  %v738 = vpack.c.b16 %v608, %v595
  %v739 = vpack.c.b16 %v609, %v596
  %v740 = vpack.c.b16 %v610, %v597
  %v741 = vpack.c.b16 %v611, %v598
  %v742 = vpack.c.b16 %v612, %v599
  %v743 = vpack.c.b16 %v613, %v600
  %v744 = vpack.c.b16 %v614, %v601
  %v745 = vpack.c.b16 %v615, %v602
  %v746 = vpack.c.b16 %v629, %v616
  %v747 = vpack.c.b16 %v630, %v617
  %v748 = vpack.c.b16 %v631, %v618
  %v749 = vpack.c.b16 %v632, %v619
  %v750 = vpack.c.b16 %v633, %v620
  %v751 = vpack.c.b16 %v634, %v621
  %v752 = vpack.c.b16 %v635, %v622
  %v753 = vpack.c.b16 %v636, %v623
  %v754 = vpack.c.b16 %v637, %v624
  %v755 = vpack.c.b16 %v638, %v625
  %v756 = vpack.c.b16 %v639, %v626
  %v757 = vpack.c.b16 %v640, %v627
  %v758 = vpack.c.b16 %v641, %v628
  %v759 = vpack.c.b16 %v655, %v642
  %v760 = vpack.c.b16 %v656, %v643
  %v761 = vpack.c.b16 %v657, %v644
  %v762 = vpack.c.b16 %v658, %v645
  %v763 = vpack.c.b16 %v659, %v646
  %v764 = vpack.c.b16 %v660, %v647
  %v765 = vpack.c.b16 %v661, %v648
  %v766 = vpack.c.b16 %v662, %v649
  %v767 = vpack.c.b16 %v663, %v650
  %v768 = vpack.c.b16 %v664, %v651
  %v769 = vpack.c.b16 %v665, %v652
  %v770 = vpack.c.b16 %v666, %v653
  %v771 = vpack.c.b16 %v667, %v654
  %v1084 = vunpack.c.l.b16 %v133
  %v1085 = vunpack.c.l.b16 %v134
  %v1086 = vunpack.c.l.b16 %v135
  %v1087 = vunpack.c.l.b16 %v136
  %v1088 = vunpack.c.l.b16 %v137
  %v1089 = vunpack.c.l.b16 %v138
  %v1090 = vunpack.c.l.b16 %v139
  %v1091 = vunpack.c.l.b16 %v140
  %v1092 = vunpack.c.l.b16 %v141
  %v1093 = vunpack.c.l.b16 %v142
  %v1094 = vunpack.c.l.b16 %v143
  %v1095 = vunpack.c.l.b16 %v144
  %v1096 = vunpack.c.l.b16 %v145
  %v1097 = vunpack.c.l.b16 %v146
  %v1098 = vunpack.c.l.b16 %v147
  %v1099 = vunpack.c.l.b16 %v148
  %v1100 = vunpack.c.l.b16 %v149
  %v1101 = vunpack.c.l.b16 %v150
  %v1102 = vunpack.c.l.b16 %v151
  %v1103 = vunpack.c.l.b16 %v152
  %v1104 = vunpack.c.l.b16 %v153
  %v1105 = vunpack.c.l.b16 %v154
  %v1106 = vunpack.c.l.b16 %v155
  %v1107 = vunpack.c.l.b16 %v156
  %v1108 = vunpack.c.l.b16 %v157
  %v1109 = vunpack.c.l.b16 %v158
  %v1110 = vunpack.c.l.b16 %v159
  %v1111 = vunpack.c.l.b16 %v160
  %v1112 = vunpack.c.l.b16 %v161
  %v1113 = vunpack.c.l.b16 %v162
  %v1114 = vunpack.c.l.b16 %v163
  %v1115 = vunpack.c.l.b16 %v164
  %v1116 = vunpack.c.l.b16 %v165
  %v1117 = vunpack.c.l.b16 %v166
  %v1118 = vunpack.c.l.b16 %v167
  %v1119 = vunpack.c.l.b16 %v168
  %v1120 = vunpack.c.l.b16 %v169
  %v1121 = vunpack.c.l.b16 %v170
  %v1122 = vunpack.c.l.b16 %v171
  %v1123 = vunpack.c.l.b16 %v172
  %v1124 = vunpack.c.l.b16 %v173
  %v1125 = vunpack.c.l.b16 %v174
  %v1126 = vunpack.c.l.b16 %v175
  %v1127 = vunpack.c.l.b16 %v176
  %v1128 = vunpack.c.l.b16 %v177
  %v1129 = vunpack.c.l.b16 %v178
  %v1130 = vunpack.c.l.b16 %v179
  %v1131 = vunpack.c.l.b16 %v180
  %v1132 = vunpack.c.l.b16 %v181
  %v1133 = vunpack.c.l.b16 %v182
  %v1134 = vunpack.c.l.b16 %v183
  %v1135 = vunpack.c.l.b16 %v184
  %v1136 = vunpack.c.l.b16 %v185
  %v1137 = vunpack.c.l.b16 %v186
  %v1138 = vunpack.c.l.b16 %v187
  %v1139 = vunpack.c.l.b16 %v188
  %v1140 = vunpack.c.l.b16 %v189
  %v1141 = vunpack.c.l.b16 %v190
  %v1142 = vunpack.c.l.b16 %v191
  %v1143 = vunpack.c.l.b16 %v192
  %v1144 = vunpack.c.l.b16 %v193
  %v1145 = vunpack.c.l.b16 %v194
  %v1146 = vunpack.c.l.b16 %v195
  %v1147 = vunpack.c.l.b16 %v196
  %v1148 = vunpack.c.l.b16 %v197
  %v1149 = vunpack.c.l.b16 %v198
  %v1150 = vunpack.c.l.b16 %v199
  %v1151 = vunpack.c.l.b16 %v200
  %v1152 = vunpack.c.l.b16 %v201
  %v1153 = vunpack.c.l.b16 %v202
  %v1154 = vunpack.c.l.b16 %v203
  %v1155 = vunpack.c.l.b16 %v204
  %v1156 = vunpack.c.l.b16 %v205
  %v1157 = vunpack.c.l.b16 %v206
  %v1158 = vunpack.c.l.b16 %v207
  %v1159 = vunpack.c.l.b16 %v208
  %v1160 = vunpack.c.l.b16 %v209
  %v1161 = vunpack.c.l.b16 %v210
  %v1162 = vunpack.c.l.b16 %v211
  %v1163 = vunpack.c.l.b16 %v212
  %v1164 = vunpack.c.l.b16 %v213
  %v1165 = vunpack.c.l.b16 %v214
  %v1166 = vunpack.c.l.b16 %v215
  %v1167 = vunpack.c.l.b16 %v216
  %v1168 = vunpack.c.l.b16 %v217
  %v1169 = vunpack.c.l.b16 %v218
  %v1170 = vunpack.c.l.b16 %v219
  %v1171 = vunpack.c.l.b16 %v220
  %v1172 = vunpack.c.l.b16 %v221
  %v1173 = vunpack.c.l.b16 %v222
  %v1174 = vunpack.c.l.b16 %v223
  %v1175 = vunpack.c.l.b16 %v224
  %v1176 = vunpack.c.l.b16 %v225
  %v1177 = vunpack.c.l.b16 %v226
  %v1178 = vunpack.c.l.b16 %v227
  %v1179 = vunpack.c.l.b16 %v228
  %v1180 = vunpack.c.l.b16 %v229
  %v1181 = vunpack.c.l.b16 %v230
  %v1182 = vunpack.c.l.b16 %v231
  %v1183 = vunpack.c.l.b16 %v232
  %v1184 = vunpack.c.l.b16 %v233
  %v1185 = vunpack.c.l.b16 %v234
  %v1186 = vunpack.c.l.b16 %v235
  %v1187 = vunpack.c.l.b16 %v236
  %v1188 = vunpack.c.l.b16 %v237
  %v1189 = vunpack.c.l.b16 %v238
  %v1190 = vunpack.c.l.b16 %v239
  %v1191 = vunpack.c.l.b16 %v240
  %v1192 = vunpack.c.l.b16 %v241
  %v1193 = vunpack.c.l.b16 %v242
  %v1194 = vunpack.c.l.b16 %v243
  %v1195 = vunpack.c.l.b16 %v244
  %v1196 = vunpack.c.l.b16 %v245
  %v1197 = vunpack.c.l.b16 %v246
  %v1198 = vunpack.c.l.b16 %v247
  %v1199 = vunpack.c.l.b16 %v248
  %v1200 = vunpack.c.l.b16 %v249
  %v1201 = vunpack.c.l.b16 %v250
  %v1202 = vunpack.c.l.b16 %v251
  %v1203 = vunpack.c.l.b16 %v252
  %v1204 = vunpack.c.l.b16 %v253
  %v1205 = vunpack.c.l.b16 %v254
  %v1206 = vunpack.c.l.b16 %v255
  %v1207 = vunpack.c.l.b16 %v256
  %v1208 = vunpack.c.l.b16 %v257
  %v1209 = vunpack.c.l.b16 %v258
  %v1210 = vunpack.c.l.b16 %v259
  %v1211 = vunpack.c.l.b16 %v260
  %v1212 = vunpack.c.l.b16 %v261
  %v1213 = vunpack.c.l.b16 %v262
  %v1214 = vunpack.c.l.b16 %v263
  %v1215 = vunpack.c.l.b16 %v264
  %v1216 = vunpack.c.l.b16 %v265
  %v1217 = vunpack.c.l.b16 %v266
  %v1218 = vunpack.c.l.b16 %v267
  %v1219 = vunpack.c.l.b16 %v268
  %v1220 = vunpack.c.l.b16 %v269
  %v1221 = vunpack.c.l.b16 %v270
  %v1222 = vunpack.c.l.b16 %v271
  %v1223 = vunpack.c.l.b16 %v272
  %v1224 = vunpack.c.l.b16 %v273
  %v1225 = vunpack.c.l.b16 %v274
  %v1226 = vunpack.c.l.b16 %v275
  %v1227 = vunpack.c.l.b16 %v276
  %v1228 = vunpack.c.l.b16 %v277
  %v1229 = vunpack.c.l.b16 %v278
  %v1230 = vunpack.c.l.b16 %v279
  %v1231 = vunpack.c.l.b16 %v280
  %v1232 = vunpack.c.l.b16 %v281
  %v1233 = vunpack.c.l.b16 %v282
  %v1234 = vunpack.c.l.b16 %v283
  %v1235 = vunpack.c.l.b16 %v284
  %v1236 = vunpack.c.l.b16 %v285
  %v1237 = vunpack.c.l.b16 %v286
  %v1238 = vunpack.c.l.b16 %v287
  %v1239 = vunpack.c.l.b16 %v288
  %v1240 = vunpack.c.l.b16 %v289
  %v1241 = vunpack.c.l.b16 %v290
  %v1242 = vunpack.c.l.b16 %v291
  %v1243 = vunpack.c.l.b16 %v292
  %v1244 = vunpack.c.l.b16 %v293
  %v1245 = vunpack.c.l.b16 %v294
  %v1246 = vunpack.c.l.b16 %v295
  %v1247 = vunpack.c.l.b16 %v296
  %v1248 = vunpack.c.l.b16 %v297
  %v1249 = vunpack.c.l.b16 %v298
  %v1250 = vunpack.c.l.b16 %v299
  %v1251 = vunpack.c.l.b16 %v300
  %v1252 = vunpack.c.l.b16 %v301
  %v1253 = vunpack.c.l.b16 %v302
  %v1254 = vunpack.c.l.b16 %v303
  %v1255 = vunpack.c.l.b16 %v304
  %v1256 = vunpack.c.l.b16 %v305
  %v1257 = vunpack.c.l.b16 %v306
  %v1258 = vunpack.c.l.b16 %v307
  %v1259 = vunpack.c.l.b16 %v308
  %v1260 = vunpack.c.l.b16 %v309
  %v1261 = vunpack.c.l.b16 %v310
  %v1262 = vunpack.c.l.b16 %v311
  %v1263 = vunpack.c.l.b16 %v312
  %v1264 = vunpack.c.l.b16 %v313
  %v1265 = vunpack.c.l.b16 %v314
  %v1266 = vunpack.c.l.b16 %v315
  %v1267 = vunpack.c.l.b16 %v316
  %v1268 = vunpack.c.l.b16 %v317
  %v1269 = vunpack.c.l.b16 %v318
  %v1270 = vunpack.c.l.b16 %v319
  %v1271 = vunpack.c.l.b16 %v320
  %v1272 = vunpack.c.l.b16 %v321
  %v1273 = vunpack.c.l.b16 %v322
  %v1274 = vunpack.c.l.b16 %v323
  %v1275 = vunpack.c.l.b16 %v324
  %v1276 = vunpack.c.l.b16 %v325
  %v1277 = vunpack.c.l.b16 %v326
  %v1278 = vunpack.c.l.b16 %v327
  %v1279 = vunpack.c.l.b16 %v328
  %v1280 = vunpack.c.l.b16 %v329
  %v1281 = vunpack.c.l.b16 %v330
  %v1282 = vunpack.c.l.b16 %v331
  %v1283 = vunpack.c.l.b16 %v332
  %v1284 = vunpack.c.l.b16 %v333
  %v1285 = vunpack.c.l.b16 %v334
  %v1286 = vunpack.c.l.b16 %v335
  %v1287 = vunpack.c.l.b16 %v336
  %v1288 = vunpack.c.l.b16 %v337
  %v1289 = vunpack.c.l.b16 %v338
  %v1290 = vunpack.c.l.b16 %v339
  %v1291 = vunpack.c.l.b16 %v340
  %v1292 = vpack.c.b16 %v1085, %v1084
  %v1293 = vpack.c.b16 %v1087, %v1086
  %v1294 = vpack.c.b16 %v1089, %v1088
  %v1295 = vpack.c.b16 %v1091, %v1090
  %v1296 = vpack.c.b16 %v1093, %v1092
  %v1297 = vpack.c.b16 %v1095, %v1094
  %v1298 = vpack.c.b16 %v1097, %v1096
  %v1299 = vpack.c.b16 %v1099, %v1098
  %v1300 = vpack.c.b16 %v1101, %v1100
  %v1301 = vpack.c.b16 %v1103, %v1102
  %v1302 = vpack.c.b16 %v1105, %v1104
  %v1303 = vpack.c.b16 %v1107, %v1106
  %v1304 = vpack.c.b16 %v1109, %v1108
  %v1305 = vpack.c.b16 %v1111, %v1110
  %v1306 = vpack.c.b16 %v1113, %v1112
  %v1307 = vpack.c.b16 %v1115, %v1114
  %v1308 = vpack.c.b16 %v1117, %v1116
  %v1309 = vpack.c.b16 %v1119, %v1118
  %v1310 = vpack.c.b16 %v1121, %v1120
  %v1311 = vpack.c.b16 %v1123, %v1122
  %v1312 = vpack.c.b16 %v1125, %v1124
  %v1313 = vpack.c.b16 %v1127, %v1126
  %v1314 = vpack.c.b16 %v1129, %v1128
  %v1315 = vpack.c.b16 %v1131, %v1130
  %v1316 = vpack.c.b16 %v1133, %v1132
  %v1317 = vpack.c.b16 %v1135, %v1134
  %v1318 = vpack.c.b16 %v1137, %v1136
  %v1319 = vpack.c.b16 %v1139, %v1138
  %v1320 = vpack.c.b16 %v1141, %v1140
  %v1321 = vpack.c.b16 %v1143, %v1142
  %v1322 = vpack.c.b16 %v1145, %v1144
  %v1323 = vpack.c.b16 %v1147, %v1146
  %v1324 = vpack.c.b16 %v1149, %v1148
  %v1325 = vpack.c.b16 %v1151, %v1150
  %v1326 = vpack.c.b16 %v1153, %v1152
  %v1327 = vpack.c.b16 %v1155, %v1154
  %v1328 = vpack.c.b16 %v1157, %v1156
  %v1329 = vpack.c.b16 %v1159, %v1158
  %v1330 = vpack.c.b16 %v1161, %v1160
  %v1331 = vpack.c.b16 %v1163, %v1162
  %v1332 = vpack.c.b16 %v1165, %v1164
  %v1333 = vpack.c.b16 %v1167, %v1166
  %v1334 = vpack.c.b16 %v1169, %v1168
  %v1335 = vpack.c.b16 %v1171, %v1170
  %v1336 = vpack.c.b16 %v1173, %v1172
  %v1337 = vpack.c.b16 %v1175, %v1174
  %v1338 = vpack.c.b16 %v1177, %v1176
  %v1339 = vpack.c.b16 %v1179, %v1178
  %v1340 = vpack.c.b16 %v1181, %v1180
  %v1341 = vpack.c.b16 %v1183, %v1182
  %v1342 = vpack.c.b16 %v1185, %v1184
  %v1343 = vpack.c.b16 %v1187, %v1186
  %v1344 = vpack.c.b16 %v1189, %v1188
  %v1345 = vpack.c.b16 %v1191, %v1190
  %v1346 = vpack.c.b16 %v1193, %v1192
  %v1347 = vpack.c.b16 %v1195, %v1194
  %v1348 = vpack.c.b16 %v1197, %v1196
  %v1349 = vpack.c.b16 %v1199, %v1198
  %v1350 = vpack.c.b16 %v1201, %v1200
  %v1351 = vpack.c.b16 %v1203, %v1202
  %v1352 = vpack.c.b16 %v1205, %v1204
  %v1353 = vpack.c.b16 %v1207, %v1206
  %v1354 = vpack.c.b16 %v1209, %v1208
  %v1355 = vpack.c.b16 %v1211, %v1210
  %v1356 = vpack.c.b16 %v1213, %v1212
  %v1357 = vpack.c.b16 %v1215, %v1214
  %v1358 = vpack.c.b16 %v1217, %v1216
  %v1359 = vpack.c.b16 %v1219, %v1218
  %v1360 = vpack.c.b16 %v1221, %v1220
  %v1361 = vpack.c.b16 %v1223, %v1222
  %v1362 = vpack.c.b16 %v1225, %v1224
  %v1363 = vpack.c.b16 %v1227, %v1226
  %v1364 = vpack.c.b16 %v1229, %v1228
  %v1365 = vpack.c.b16 %v1231, %v1230
  %v1366 = vpack.c.b16 %v1233, %v1232
  %v1367 = vpack.c.b16 %v1235, %v1234
  %v1368 = vpack.c.b16 %v1237, %v1236
  %v1369 = vpack.c.b16 %v1239, %v1238
  %v1370 = vpack.c.b16 %v1241, %v1240
  %v1371 = vpack.c.b16 %v1243, %v1242
  %v1372 = vpack.c.b16 %v1245, %v1244
  %v1373 = vpack.c.b16 %v1247, %v1246
  %v1374 = vpack.c.b16 %v1249, %v1248
  %v1375 = vpack.c.b16 %v1251, %v1250
  %v1376 = vpack.c.b16 %v1253, %v1252
  %v1377 = vpack.c.b16 %v1255, %v1254
  %v1378 = vpack.c.b16 %v1257, %v1256
  %v1379 = vpack.c.b16 %v1259, %v1258
  %v1380 = vpack.c.b16 %v1261, %v1260
  %v1381 = vpack.c.b16 %v1263, %v1262
  %v1382 = vpack.c.b16 %v1265, %v1264
  %v1383 = vpack.c.b16 %v1267, %v1266
  %v1384 = vpack.c.b16 %v1269, %v1268
  %v1385 = vpack.c.b16 %v1271, %v1270
  %v1386 = vpack.c.b16 %v1273, %v1272
  %v1387 = vpack.c.b16 %v1275, %v1274
  %v1388 = vpack.c.b16 %v1277, %v1276
  %v1389 = vpack.c.b16 %v1279, %v1278
  %v1390 = vpack.c.b16 %v1281, %v1280
  %v1391 = vpack.c.b16 %v1283, %v1282
  %v1392 = vpack.c.b16 %v1285, %v1284
  %v1393 = vpack.c.b16 %v1287, %v1286
  %v1394 = vpack.c.b16 %v1289, %v1288
  %v1395 = vpack.c.b16 %v1291, %v1290
  %1500 = vmatprep.subr.bf16.mxu0 0
  %1501 = vmatpush1.bf16.msra.mxu0 %v1299
  %1502 = vmatprep.subr.bf16.mxu0 0
  %1503 = vmatpush1.bf16.msra.mxu0 %v1298
  %1504 = vmatprep.subr.bf16.mxu0 0
  %1505 = vmatpush1.bf16.msra.mxu0 %v1297
  %1506 = vmatprep.subr.bf16.mxu0 0
  %1507 = vmatpush1.bf16.msra.mxu0 %v1296
  %1508 = vmatprep.subr.bf16.mxu0 0
  %1509 = vmatpush1.bf16.msra.mxu0 %v1295
  %1510 = vmatprep.subr.bf16.mxu0 0
  %1511 = vmatpush1.bf16.msra.mxu0 %v1294
  %1512 = vmatprep.subr.bf16.mxu0 0
  %1513 = vmatpush1.bf16.msra.mxu0 %v1293
  %1514 = vmatprep.subr.bf16.mxu0 0
  %1515 = vmatpush1.bf16.msra.mxu0 %v1292
  %1516 = vmatprep.subr.bf16.mxu0 0
  %1517 = vmatpush2.bf16.msra.mxu0 %v1307
  %1518 = vmatprep.subr.bf16.mxu0 0
  %1519 = vmatpush2.bf16.msra.mxu0 %v1306
  %1520 = vmatprep.subr.bf16.mxu0 0
  %1521 = vmatpush2.bf16.msra.mxu0 %v1305
  %1522 = vmatprep.subr.bf16.mxu0 0
  %1523 = vmatpush2.bf16.msra.mxu0 %v1304
  %1524 = vmatprep.subr.bf16.mxu0 0
  %1525 = vmatpush2.bf16.msra.mxu0 %v1303
  %1526 = vmatprep.subr.bf16.mxu0 0
  %1527 = vmatpush2.bf16.msra.mxu0 %v1302
  %1528 = vmatprep.subr.bf16.mxu0 0
  %1529 = vmatpush2.bf16.msra.mxu0 %v1301
  %1530 = vmatprep.subr.bf16.mxu0 0
  %1531 = vmatpush2.bf16.msra.mxu0 %v1300
  %1532 = vmatprep.mubr.bf16.mxu0 %v669
  %1533 = vmatmul.mubr.bf16.gmra.mxu0 %v668
  %v1534 = vpop.f32.mrf.mxu0
  %v1535 = vadd.f32 %v346, %v1534
  %v1536 = vpop.f32.mrf.mxu0
  %v1537 = vpop.f32.mrf.mxu0
  %v1538 = vadd.f32 %v346, %v1537
  %v1539 = vpop.f32.mrf.mxu0
  %1540 = vmatprep.mubr.bf16.mxu0 %v682
  %1541 = vmatmul.mubr.bf16.gmra.mxu0 %v681
  %v1542 = vpop.f32.mrf.mxu0
  %v1543 = vadd.f32 %v346, %v1542
  %v1544 = vpop.f32.mrf.mxu0
  %v1545 = vpop.f32.mrf.mxu0
  %v1546 = vadd.f32 %v346, %v1545
  %v1547 = vpop.f32.mrf.mxu0
  %1548 = vmatprep.mubr.bf16.mxu0 %v695
  %1549 = vmatmul.mubr.bf16.gmra.mxu0 %v694
  %v1550 = vpop.f32.mrf.mxu0
  %v1551 = vadd.f32 %v346, %v1550
  %v1552 = vpop.f32.mrf.mxu0
  %v1553 = vpop.f32.mrf.mxu0
  %v1554 = vadd.f32 %v346, %v1553
  %v1555 = vpop.f32.mrf.mxu0
  %1556 = vmatprep.mubr.bf16.mxu0 %v708
  %1557 = vmatmul.mubr.bf16.gmra.mxu0 %v707
  %v1558 = vpop.f32.mrf.mxu0
  %v1559 = vadd.f32 %v346, %v1558
  %v1560 = vpop.f32.mrf.mxu0
  %v1561 = vpop.f32.mrf.mxu0
  %v1562 = vadd.f32 %v346, %v1561
  %v1563 = vpop.f32.mrf.mxu0
  %1564 = vmatprep.mubr.bf16.mxu0 %v721
  %1565 = vmatmul.mubr.bf16.gmra.mxu0 %v720
  %v1566 = vpop.f32.mrf.mxu0
  %v1567 = vadd.f32 %v346, %v1566
  %v1568 = vpop.f32.mrf.mxu0
  %v1569 = vpop.f32.mrf.mxu0
  %v1570 = vadd.f32 %v346, %v1569
  %v1571 = vpop.f32.mrf.mxu0
  %1572 = vmatprep.mubr.bf16.mxu0 %v734
  %1573 = vmatmul.mubr.bf16.gmra.mxu0 %v733
  %v1574 = vpop.f32.mrf.mxu0
  %v1575 = vadd.f32 %v346, %v1574
  %v1576 = vpop.f32.mrf.mxu0
  %v1577 = vpop.f32.mrf.mxu0
  %v1578 = vadd.f32 %v346, %v1577
  %v1579 = vpop.f32.mrf.mxu0
  %1580 = vmatprep.mubr.bf16.mxu0 %v747
  %1581 = vmatmul.mubr.bf16.gmra.mxu0 %v746
  %v1582 = vpop.f32.mrf.mxu0
  %v1583 = vadd.f32 %v346, %v1582
  %v1584 = vpop.f32.mrf.mxu0
  %v1585 = vpop.f32.mrf.mxu0
  %v1586 = vadd.f32 %v346, %v1585
  %v1587 = vpop.f32.mrf.mxu0
  %1588 = vmatprep.mubr.bf16.mxu0 %v760
  %1589 = vmatmul.mubr.bf16.gmra.mxu0 %v759
  %v1590 = vpop.f32.mrf.mxu0
  %v1591 = vadd.f32 %v346, %v1590
  %v1592 = vpop.f32.mrf.mxu0
  %v1593 = vpop.f32.mrf.mxu0
  %v1594 = vadd.f32 %v346, %v1593
  %v1595 = vpop.f32.mrf.mxu0
  %1596 = vdwg.mxu0
  %1597 = vmatprep.subr.bf16.mxu0 0
  %1598 = vmatpush1.bf16.msra.mxu0 %v1315
  %1599 = vmatprep.subr.bf16.mxu0 0
  %1600 = vmatpush1.bf16.msra.mxu0 %v1314
  %1601 = vmatprep.subr.bf16.mxu0 0
  %1602 = vmatpush1.bf16.msra.mxu0 %v1313
  %1603 = vmatprep.subr.bf16.mxu0 0
  %1604 = vmatpush1.bf16.msra.mxu0 %v1312
  %1605 = vmatprep.subr.bf16.mxu0 0
  %1606 = vmatpush1.bf16.msra.mxu0 %v1311
  %1607 = vmatprep.subr.bf16.mxu0 0
  %1608 = vmatpush1.bf16.msra.mxu0 %v1310
  %1609 = vmatprep.subr.bf16.mxu0 0
  %1610 = vmatpush1.bf16.msra.mxu0 %v1309
  %1611 = vmatprep.subr.bf16.mxu0 0
  %1612 = vmatpush1.bf16.msra.mxu0 %v1308
  %1613 = vmatprep.subr.bf16.mxu0 0
  %1614 = vmatpush2.bf16.msra.mxu0 %v1323
  %1615 = vmatprep.subr.bf16.mxu0 0
  %1616 = vmatpush2.bf16.msra.mxu0 %v1322
  %1617 = vmatprep.subr.bf16.mxu0 0
  %1618 = vmatpush2.bf16.msra.mxu0 %v1321
  %1619 = vmatprep.subr.bf16.mxu0 0
  %1620 = vmatpush2.bf16.msra.mxu0 %v1320
  %1621 = vmatprep.subr.bf16.mxu0 0
  %1622 = vmatpush2.bf16.msra.mxu0 %v1319
  %1623 = vmatprep.subr.bf16.mxu0 0
  %1624 = vmatpush2.bf16.msra.mxu0 %v1318
  %1625 = vmatprep.subr.bf16.mxu0 0
  %1626 = vmatpush2.bf16.msra.mxu0 %v1317
  %1627 = vmatprep.subr.bf16.mxu0 0
  %1628 = vmatpush2.bf16.msra.mxu0 %v1316
  %1629 = vmatprep.mubr.bf16.mxu0 %v671
  %1630 = vmatmul.mubr.bf16.gmra.mxu0 %v670
  %v1631 = vpop.f32.mrf.mxu0
  %v1632 = vadd.f32 %v1535, %v1631
  %v1633 = vpop.f32.mrf.mxu0
  %v1634 = vpop.f32.mrf.mxu0
  %v1635 = vadd.f32 %v1538, %v1634
  %v1636 = vpop.f32.mrf.mxu0
  %1637 = vmatprep.mubr.bf16.mxu0 %v684
  %1638 = vmatmul.mubr.bf16.gmra.mxu0 %v683
  %v1639 = vpop.f32.mrf.mxu0
  %v1640 = vadd.f32 %v1543, %v1639
  %v1641 = vpop.f32.mrf.mxu0
  %v1642 = vpop.f32.mrf.mxu0
  %v1643 = vadd.f32 %v1546, %v1642
  %v1644 = vpop.f32.mrf.mxu0
  %1645 = vmatprep.mubr.bf16.mxu0 %v697
  %1646 = vmatmul.mubr.bf16.gmra.mxu0 %v696
  %v1647 = vpop.f32.mrf.mxu0
  %v1648 = vadd.f32 %v1551, %v1647
  %v1649 = vpop.f32.mrf.mxu0
  %v1650 = vpop.f32.mrf.mxu0
  %v1651 = vadd.f32 %v1554, %v1650
  %v1652 = vpop.f32.mrf.mxu0
  %1653 = vmatprep.mubr.bf16.mxu0 %v710
  %1654 = vmatmul.mubr.bf16.gmra.mxu0 %v709
  %v1655 = vpop.f32.mrf.mxu0
  %v1656 = vadd.f32 %v1559, %v1655
  %v1657 = vpop.f32.mrf.mxu0
  %v1658 = vpop.f32.mrf.mxu0
  %v1659 = vadd.f32 %v1562, %v1658
  %v1660 = vpop.f32.mrf.mxu0
  %1661 = vmatprep.mubr.bf16.mxu0 %v723
  %1662 = vmatmul.mubr.bf16.gmra.mxu0 %v722
  %v1663 = vpop.f32.mrf.mxu0
  %v1664 = vadd.f32 %v1567, %v1663
  %v1665 = vpop.f32.mrf.mxu0
  %v1666 = vpop.f32.mrf.mxu0
  %v1667 = vadd.f32 %v1570, %v1666
  %v1668 = vpop.f32.mrf.mxu0
  %1669 = vmatprep.mubr.bf16.mxu0 %v736
  %1670 = vmatmul.mubr.bf16.gmra.mxu0 %v735
  %v1671 = vpop.f32.mrf.mxu0
  %v1672 = vadd.f32 %v1575, %v1671
  %v1673 = vpop.f32.mrf.mxu0
  %v1674 = vpop.f32.mrf.mxu0
  %v1675 = vadd.f32 %v1578, %v1674
  %v1676 = vpop.f32.mrf.mxu0
  %1677 = vmatprep.mubr.bf16.mxu0 %v749
  %1678 = vmatmul.mubr.bf16.gmra.mxu0 %v748
  %v1679 = vpop.f32.mrf.mxu0
  %v1680 = vadd.f32 %v1583, %v1679
  %v1681 = vpop.f32.mrf.mxu0
  %v1682 = vpop.f32.mrf.mxu0
  %v1683 = vadd.f32 %v1586, %v1682
  %v1684 = vpop.f32.mrf.mxu0
  %1685 = vmatprep.mubr.bf16.mxu0 %v762
  %1686 = vmatmul.mubr.bf16.gmra.mxu0 %v761
  %v1687 = vpop.f32.mrf.mxu0
  %v1688 = vadd.f32 %v1591, %v1687
  %v1689 = vpop.f32.mrf.mxu0
  %v1690 = vpop.f32.mrf.mxu0
  %v1691 = vadd.f32 %v1594, %v1690
  %v1692 = vpop.f32.mrf.mxu0
  %1693 = vdwg.mxu0
  %1694 = vmatprep.subr.bf16.mxu0 0
  %1695 = vmatpush1.bf16.msra.mxu0 %v1331
  %1696 = vmatprep.subr.bf16.mxu0 0
  %1697 = vmatpush1.bf16.msra.mxu0 %v1330
  %1698 = vmatprep.subr.bf16.mxu0 0
  %1699 = vmatpush1.bf16.msra.mxu0 %v1329
  %1700 = vmatprep.subr.bf16.mxu0 0
  %1701 = vmatpush1.bf16.msra.mxu0 %v1328
  %1702 = vmatprep.subr.bf16.mxu0 0
  %1703 = vmatpush1.bf16.msra.mxu0 %v1327
  %1704 = vmatprep.subr.bf16.mxu0 0
  %1705 = vmatpush1.bf16.msra.mxu0 %v1326
  %1706 = vmatprep.subr.bf16.mxu0 0
  %1707 = vmatpush1.bf16.msra.mxu0 %v1325
  %1708 = vmatprep.subr.bf16.mxu0 0
  %1709 = vmatpush1.bf16.msra.mxu0 %v1324
  %1710 = vmatprep.subr.bf16.mxu0 0
  %1711 = vmatpush2.bf16.msra.mxu0 %v1339
  %1712 = vmatprep.subr.bf16.mxu0 0
  %1713 = vmatpush2.bf16.msra.mxu0 %v1338
  %1714 = vmatprep.subr.bf16.mxu0 0
  %1715 = vmatpush2.bf16.msra.mxu0 %v1337
  %1716 = vmatprep.subr.bf16.mxu0 0
  %1717 = vmatpush2.bf16.msra.mxu0 %v1336
  %1718 = vmatprep.subr.bf16.mxu0 0
  %1719 = vmatpush2.bf16.msra.mxu0 %v1335
  %1720 = vmatprep.subr.bf16.mxu0 0
  %1721 = vmatpush2.bf16.msra.mxu0 %v1334
  %1722 = vmatprep.subr.bf16.mxu0 0
  %1723 = vmatpush2.bf16.msra.mxu0 %v1333
  %1724 = vmatprep.subr.bf16.mxu0 0
  %1725 = vmatpush2.bf16.msra.mxu0 %v1332
  %1726 = vmatprep.mubr.bf16.mxu0 %v673
  %1727 = vmatmul.mubr.bf16.gmra.mxu0 %v672
  %v1728 = vpop.f32.mrf.mxu0
  %v1729 = vadd.f32 %v1632, %v1728
  %v1730 = vpop.f32.mrf.mxu0
  %v1731 = vpop.f32.mrf.mxu0
  %v1732 = vadd.f32 %v1635, %v1731
  %v1733 = vpop.f32.mrf.mxu0
  %1734 = vmatprep.mubr.bf16.mxu0 %v686
  %1735 = vmatmul.mubr.bf16.gmra.mxu0 %v685
  %v1736 = vpop.f32.mrf.mxu0
  %v1737 = vadd.f32 %v1640, %v1736
  %v1738 = vpop.f32.mrf.mxu0
  %v1739 = vpop.f32.mrf.mxu0
  %v1740 = vadd.f32 %v1643, %v1739
  %v1741 = vpop.f32.mrf.mxu0
  %1742 = vmatprep.mubr.bf16.mxu0 %v699
  %1743 = vmatmul.mubr.bf16.gmra.mxu0 %v698
  %v1744 = vpop.f32.mrf.mxu0
  %v1745 = vadd.f32 %v1648, %v1744
  %v1746 = vpop.f32.mrf.mxu0
  %v1747 = vpop.f32.mrf.mxu0
  %v1748 = vadd.f32 %v1651, %v1747
  %v1749 = vpop.f32.mrf.mxu0
  %1750 = vmatprep.mubr.bf16.mxu0 %v712
  %1751 = vmatmul.mubr.bf16.gmra.mxu0 %v711
  %v1752 = vpop.f32.mrf.mxu0
  %v1753 = vadd.f32 %v1656, %v1752
  %v1754 = vpop.f32.mrf.mxu0
  %v1755 = vpop.f32.mrf.mxu0
  %v1756 = vadd.f32 %v1659, %v1755
  %v1757 = vpop.f32.mrf.mxu0
  %1758 = vmatprep.mubr.bf16.mxu0 %v725
  %1759 = vmatmul.mubr.bf16.gmra.mxu0 %v724
  %v1760 = vpop.f32.mrf.mxu0
  %v1761 = vadd.f32 %v1664, %v1760
  %v1762 = vpop.f32.mrf.mxu0
  %v1763 = vpop.f32.mrf.mxu0
  %v1764 = vadd.f32 %v1667, %v1763
  %v1765 = vpop.f32.mrf.mxu0
  %1766 = vmatprep.mubr.bf16.mxu0 %v738
  %1767 = vmatmul.mubr.bf16.gmra.mxu0 %v737
  %v1768 = vpop.f32.mrf.mxu0
  %v1769 = vadd.f32 %v1672, %v1768
  %v1770 = vpop.f32.mrf.mxu0
  %v1771 = vpop.f32.mrf.mxu0
  %v1772 = vadd.f32 %v1675, %v1771
  %v1773 = vpop.f32.mrf.mxu0
  %1774 = vmatprep.mubr.bf16.mxu0 %v751
  %1775 = vmatmul.mubr.bf16.gmra.mxu0 %v750
  %v1776 = vpop.f32.mrf.mxu0
  %v1777 = vadd.f32 %v1680, %v1776
  %v1778 = vpop.f32.mrf.mxu0
  %v1779 = vpop.f32.mrf.mxu0
  %v1780 = vadd.f32 %v1683, %v1779
  %v1781 = vpop.f32.mrf.mxu0
  %1782 = vmatprep.mubr.bf16.mxu0 %v764
  %1783 = vmatmul.mubr.bf16.gmra.mxu0 %v763
  %v1784 = vpop.f32.mrf.mxu0
  %v1785 = vadd.f32 %v1688, %v1784
  %v1786 = vpop.f32.mrf.mxu0
  %v1787 = vpop.f32.mrf.mxu0
  %v1788 = vadd.f32 %v1691, %v1787
  %v1789 = vpop.f32.mrf.mxu0
  %1790 = vdwg.mxu0
  %1791 = vmatprep.subr.bf16.mxu0 0
  %1792 = vmatpush1.bf16.msra.mxu0 %v1347
  %1793 = vmatprep.subr.bf16.mxu0 0
  %1794 = vmatpush1.bf16.msra.mxu0 %v1346
  %1795 = vmatprep.subr.bf16.mxu0 0
  %1796 = vmatpush1.bf16.msra.mxu0 %v1345
  %1797 = vmatprep.subr.bf16.mxu0 0
  %1798 = vmatpush1.bf16.msra.mxu0 %v1344
  %1799 = vmatprep.subr.bf16.mxu0 0
  %1800 = vmatpush1.bf16.msra.mxu0 %v1343
  %1801 = vmatprep.subr.bf16.mxu0 0
  %1802 = vmatpush1.bf16.msra.mxu0 %v1342
  %1803 = vmatprep.subr.bf16.mxu0 0
  %1804 = vmatpush1.bf16.msra.mxu0 %v1341
  %1805 = vmatprep.subr.bf16.mxu0 0
  %1806 = vmatpush1.bf16.msra.mxu0 %v1340
  %1807 = vmatprep.subr.bf16.mxu0 0
  %1808 = vmatpush2.bf16.msra.mxu0 %v1355
  %1809 = vmatprep.subr.bf16.mxu0 0
  %1810 = vmatpush2.bf16.msra.mxu0 %v1354
  %1811 = vmatprep.subr.bf16.mxu0 0
  %1812 = vmatpush2.bf16.msra.mxu0 %v1353
  %1813 = vmatprep.subr.bf16.mxu0 0
  %1814 = vmatpush2.bf16.msra.mxu0 %v1352
  %1815 = vmatprep.subr.bf16.mxu0 0
  %1816 = vmatpush2.bf16.msra.mxu0 %v1351
  %1817 = vmatprep.subr.bf16.mxu0 0
  %1818 = vmatpush2.bf16.msra.mxu0 %v1350
  %1819 = vmatprep.subr.bf16.mxu0 0
  %1820 = vmatpush2.bf16.msra.mxu0 %v1349
  %1821 = vmatprep.subr.bf16.mxu0 0
  %1822 = vmatpush2.bf16.msra.mxu0 %v1348
  %1823 = vmatprep.mubr.bf16.mxu0 %v675
  %1824 = vmatmul.mubr.bf16.gmra.mxu0 %v674
  %v1825 = vpop.f32.mrf.mxu0
  %v1826 = vadd.f32 %v1729, %v1825
  %v1827 = vpop.f32.mrf.mxu0
  %v1828 = vpop.f32.mrf.mxu0
  %v1829 = vadd.f32 %v1732, %v1828
  %v1830 = vpop.f32.mrf.mxu0
  %1831 = vmatprep.mubr.bf16.mxu0 %v688
  %1832 = vmatmul.mubr.bf16.gmra.mxu0 %v687
  %v1833 = vpop.f32.mrf.mxu0
  %v1834 = vadd.f32 %v1737, %v1833
  %v1835 = vpop.f32.mrf.mxu0
  %v1836 = vpop.f32.mrf.mxu0
  %v1837 = vadd.f32 %v1740, %v1836
  %v1838 = vpop.f32.mrf.mxu0
  %1839 = vmatprep.mubr.bf16.mxu0 %v701
  %1840 = vmatmul.mubr.bf16.gmra.mxu0 %v700
  %v1841 = vpop.f32.mrf.mxu0
  %v1842 = vadd.f32 %v1745, %v1841
  %v1843 = vpop.f32.mrf.mxu0
  %v1844 = vpop.f32.mrf.mxu0
  %v1845 = vadd.f32 %v1748, %v1844
  %v1846 = vpop.f32.mrf.mxu0
  %1847 = vmatprep.mubr.bf16.mxu0 %v714
  %1848 = vmatmul.mubr.bf16.gmra.mxu0 %v713
  %v1849 = vpop.f32.mrf.mxu0
  %v1850 = vadd.f32 %v1753, %v1849
  %v1851 = vpop.f32.mrf.mxu0
  %v1852 = vpop.f32.mrf.mxu0
  %v1853 = vadd.f32 %v1756, %v1852
  %v1854 = vpop.f32.mrf.mxu0
  %1855 = vmatprep.mubr.bf16.mxu0 %v727
  %1856 = vmatmul.mubr.bf16.gmra.mxu0 %v726
  %v1857 = vpop.f32.mrf.mxu0
  %v1858 = vadd.f32 %v1761, %v1857
  %v1859 = vpop.f32.mrf.mxu0
  %v1860 = vpop.f32.mrf.mxu0
  %v1861 = vadd.f32 %v1764, %v1860
  %v1862 = vpop.f32.mrf.mxu0
  %1863 = vmatprep.mubr.bf16.mxu0 %v740
  %1864 = vmatmul.mubr.bf16.gmra.mxu0 %v739
  %v1865 = vpop.f32.mrf.mxu0
  %v1866 = vadd.f32 %v1769, %v1865
  %v1867 = vpop.f32.mrf.mxu0
  %v1868 = vpop.f32.mrf.mxu0
  %v1869 = vadd.f32 %v1772, %v1868
  %v1870 = vpop.f32.mrf.mxu0
  %1871 = vmatprep.mubr.bf16.mxu0 %v753
  %1872 = vmatmul.mubr.bf16.gmra.mxu0 %v752
  %v1873 = vpop.f32.mrf.mxu0
  %v1874 = vadd.f32 %v1777, %v1873
  %v1875 = vpop.f32.mrf.mxu0
  %v1876 = vpop.f32.mrf.mxu0
  %v1877 = vadd.f32 %v1780, %v1876
  %v1878 = vpop.f32.mrf.mxu0
  %1879 = vmatprep.mubr.bf16.mxu0 %v766
  %1880 = vmatmul.mubr.bf16.gmra.mxu0 %v765
  %v1881 = vpop.f32.mrf.mxu0
  %v1882 = vadd.f32 %v1785, %v1881
  %v1883 = vpop.f32.mrf.mxu0
  %v1884 = vpop.f32.mrf.mxu0
  %v1885 = vadd.f32 %v1788, %v1884
  %v1886 = vpop.f32.mrf.mxu0
  %1887 = vdwg.mxu0
  %1888 = vmatprep.subr.bf16.mxu0 0
  %1889 = vmatpush1.bf16.msra.mxu0 %v1363
  %1890 = vmatprep.subr.bf16.mxu0 0
  %1891 = vmatpush1.bf16.msra.mxu0 %v1362
  %1892 = vmatprep.subr.bf16.mxu0 0
  %1893 = vmatpush1.bf16.msra.mxu0 %v1361
  %1894 = vmatprep.subr.bf16.mxu0 0
  %1895 = vmatpush1.bf16.msra.mxu0 %v1360
  %1896 = vmatprep.subr.bf16.mxu0 0
  %1897 = vmatpush1.bf16.msra.mxu0 %v1359
  %1898 = vmatprep.subr.bf16.mxu0 0
  %1899 = vmatpush1.bf16.msra.mxu0 %v1358
  %1900 = vmatprep.subr.bf16.mxu0 0
  %1901 = vmatpush1.bf16.msra.mxu0 %v1357
  %1902 = vmatprep.subr.bf16.mxu0 0
  %1903 = vmatpush1.bf16.msra.mxu0 %v1356
  %1904 = vmatprep.subr.bf16.mxu0 0
  %1905 = vmatpush2.bf16.msra.mxu0 %v1371
  %1906 = vmatprep.subr.bf16.mxu0 0
  %1907 = vmatpush2.bf16.msra.mxu0 %v1370
  %1908 = vmatprep.subr.bf16.mxu0 0
  %1909 = vmatpush2.bf16.msra.mxu0 %v1369
  %1910 = vmatprep.subr.bf16.mxu0 0
  %1911 = vmatpush2.bf16.msra.mxu0 %v1368
  %1912 = vmatprep.subr.bf16.mxu0 0
  %1913 = vmatpush2.bf16.msra.mxu0 %v1367
  %1914 = vmatprep.subr.bf16.mxu0 0
  %1915 = vmatpush2.bf16.msra.mxu0 %v1366
  %1916 = vmatprep.subr.bf16.mxu0 0
  %1917 = vmatpush2.bf16.msra.mxu0 %v1365
  %1918 = vmatprep.subr.bf16.mxu0 0
  %1919 = vmatpush2.bf16.msra.mxu0 %v1364
  %1920 = vmatprep.mubr.bf16.mxu0 %v677
  %1921 = vmatmul.mubr.bf16.gmra.mxu0 %v676
  %v1922 = vpop.f32.mrf.mxu0
  %v1923 = vadd.f32 %v1826, %v1922
  %v1924 = vpop.f32.mrf.mxu0
  %v1925 = vpop.f32.mrf.mxu0
  %v1926 = vadd.f32 %v1829, %v1925
  %v1927 = vpop.f32.mrf.mxu0
  %1928 = vmatprep.mubr.bf16.mxu0 %v690
  %1929 = vmatmul.mubr.bf16.gmra.mxu0 %v689
  %v1930 = vpop.f32.mrf.mxu0
  %v1931 = vadd.f32 %v1834, %v1930
  %v1932 = vpop.f32.mrf.mxu0
  %v1933 = vpop.f32.mrf.mxu0
  %v1934 = vadd.f32 %v1837, %v1933
  %v1935 = vpop.f32.mrf.mxu0
  %1936 = vmatprep.mubr.bf16.mxu0 %v703
  %1937 = vmatmul.mubr.bf16.gmra.mxu0 %v702
  %v1938 = vpop.f32.mrf.mxu0
  %v1939 = vadd.f32 %v1842, %v1938
  %v1940 = vpop.f32.mrf.mxu0
  %v1941 = vpop.f32.mrf.mxu0
  %v1942 = vadd.f32 %v1845, %v1941
  %v1943 = vpop.f32.mrf.mxu0
  %1944 = vmatprep.mubr.bf16.mxu0 %v716
  %1945 = vmatmul.mubr.bf16.gmra.mxu0 %v715
  %v1946 = vpop.f32.mrf.mxu0
  %v1947 = vadd.f32 %v1850, %v1946
  %v1948 = vpop.f32.mrf.mxu0
  %v1949 = vpop.f32.mrf.mxu0
  %v1950 = vadd.f32 %v1853, %v1949
  %v1951 = vpop.f32.mrf.mxu0
  %1952 = vmatprep.mubr.bf16.mxu0 %v729
  %1953 = vmatmul.mubr.bf16.gmra.mxu0 %v728
  %v1954 = vpop.f32.mrf.mxu0
  %v1955 = vadd.f32 %v1858, %v1954
  %v1956 = vpop.f32.mrf.mxu0
  %v1957 = vpop.f32.mrf.mxu0
  %v1958 = vadd.f32 %v1861, %v1957
  %v1959 = vpop.f32.mrf.mxu0
  %1960 = vmatprep.mubr.bf16.mxu0 %v742
  %1961 = vmatmul.mubr.bf16.gmra.mxu0 %v741
  %v1962 = vpop.f32.mrf.mxu0
  %v1963 = vadd.f32 %v1866, %v1962
  %v1964 = vpop.f32.mrf.mxu0
  %v1965 = vpop.f32.mrf.mxu0
  %v1966 = vadd.f32 %v1869, %v1965
  %v1967 = vpop.f32.mrf.mxu0
  %1968 = vmatprep.mubr.bf16.mxu0 %v755
  %1969 = vmatmul.mubr.bf16.gmra.mxu0 %v754
  %v1970 = vpop.f32.mrf.mxu0
  %v1971 = vadd.f32 %v1874, %v1970
  %v1972 = vpop.f32.mrf.mxu0
  %v1973 = vpop.f32.mrf.mxu0
  %v1974 = vadd.f32 %v1877, %v1973
  %v1975 = vpop.f32.mrf.mxu0
  %1976 = vmatprep.mubr.bf16.mxu0 %v768
  %1977 = vmatmul.mubr.bf16.gmra.mxu0 %v767
  %v1978 = vpop.f32.mrf.mxu0
  %v1979 = vadd.f32 %v1882, %v1978
  %v1980 = vpop.f32.mrf.mxu0
  %v1981 = vpop.f32.mrf.mxu0
  %v1982 = vadd.f32 %v1885, %v1981
  %v1983 = vpop.f32.mrf.mxu0
  %1984 = vdwg.mxu0
  %1985 = vmatprep.subr.bf16.mxu0 0
  %1986 = vmatpush1.bf16.msra.mxu0 %v1379
  %1987 = vmatprep.subr.bf16.mxu0 0
  %1988 = vmatpush1.bf16.msra.mxu0 %v1378
  %1989 = vmatprep.subr.bf16.mxu0 0
  %1990 = vmatpush1.bf16.msra.mxu0 %v1377
  %1991 = vmatprep.subr.bf16.mxu0 0
  %1992 = vmatpush1.bf16.msra.mxu0 %v1376
  %1993 = vmatprep.subr.bf16.mxu0 0
  %1994 = vmatpush1.bf16.msra.mxu0 %v1375
  %1995 = vmatprep.subr.bf16.mxu0 0
  %1996 = vmatpush1.bf16.msra.mxu0 %v1374
  %1997 = vmatprep.subr.bf16.mxu0 0
  %1998 = vmatpush1.bf16.msra.mxu0 %v1373
  %1999 = vmatprep.subr.bf16.mxu0 0
  %2000 = vmatpush1.bf16.msra.mxu0 %v1372
  %2001 = vmatprep.subr.bf16.mxu0 0
  %2002 = vmatpush2.bf16.msra.mxu0 %v1387
  %2003 = vmatprep.subr.bf16.mxu0 0
  %2004 = vmatpush2.bf16.msra.mxu0 %v1386
  %2005 = vmatprep.subr.bf16.mxu0 0
  %2006 = vmatpush2.bf16.msra.mxu0 %v1385
  %2007 = vmatprep.subr.bf16.mxu0 0
  %2008 = vmatpush2.bf16.msra.mxu0 %v1384
  %2009 = vmatprep.subr.bf16.mxu0 0
  %2010 = vmatpush2.bf16.msra.mxu0 %v1383
  %2011 = vmatprep.subr.bf16.mxu0 0
  %2012 = vmatpush2.bf16.msra.mxu0 %v1382
  %2013 = vmatprep.subr.bf16.mxu0 0
  %2014 = vmatpush2.bf16.msra.mxu0 %v1381
  %2015 = vmatprep.subr.bf16.mxu0 0
  %2016 = vmatpush2.bf16.msra.mxu0 %v1380
  %2017 = vmatprep.mubr.bf16.mxu0 %v679
  %2018 = vmatmul.mubr.bf16.gmra.mxu0 %v678
  %v2019 = vpop.f32.mrf.mxu0
  %v2020 = vadd.f32 %v1923, %v2019
  %v2021 = vpop.f32.mrf.mxu0
  %v2022 = vpop.f32.mrf.mxu0
  %v2023 = vadd.f32 %v1926, %v2022
  %v2024 = vpop.f32.mrf.mxu0
  %2025 = vmatprep.mubr.bf16.mxu0 %v692
  %2026 = vmatmul.mubr.bf16.gmra.mxu0 %v691
  %v2027 = vpop.f32.mrf.mxu0
  %v2028 = vadd.f32 %v1931, %v2027
  %v2029 = vpop.f32.mrf.mxu0
  %v2030 = vpop.f32.mrf.mxu0
  %v2031 = vadd.f32 %v1934, %v2030
  %v2032 = vpop.f32.mrf.mxu0
  %2033 = vmatprep.mubr.bf16.mxu0 %v705
  %2034 = vmatmul.mubr.bf16.gmra.mxu0 %v704
  %v2035 = vpop.f32.mrf.mxu0
  %v2036 = vadd.f32 %v1939, %v2035
  %v2037 = vpop.f32.mrf.mxu0
  %v2038 = vpop.f32.mrf.mxu0
  %v2039 = vadd.f32 %v1942, %v2038
  %v2040 = vpop.f32.mrf.mxu0
  %2041 = vmatprep.mubr.bf16.mxu0 %v718
  %2042 = vmatmul.mubr.bf16.gmra.mxu0 %v717
  %v2043 = vpop.f32.mrf.mxu0
  %v2044 = vadd.f32 %v1947, %v2043
  %v2045 = vpop.f32.mrf.mxu0
  %v2046 = vpop.f32.mrf.mxu0
  %v2047 = vadd.f32 %v1950, %v2046
  %v2048 = vpop.f32.mrf.mxu0
  %2049 = vmatprep.mubr.bf16.mxu0 %v731
  %2050 = vmatmul.mubr.bf16.gmra.mxu0 %v730
  %v2051 = vpop.f32.mrf.mxu0
  %v2052 = vadd.f32 %v1955, %v2051
  %v2053 = vpop.f32.mrf.mxu0
  %v2054 = vpop.f32.mrf.mxu0
  %v2055 = vadd.f32 %v1958, %v2054
  %v2056 = vpop.f32.mrf.mxu0
  %2057 = vmatprep.mubr.bf16.mxu0 %v744
  %2058 = vmatmul.mubr.bf16.gmra.mxu0 %v743
  %v2059 = vpop.f32.mrf.mxu0
  %v2060 = vadd.f32 %v1963, %v2059
  %v2061 = vpop.f32.mrf.mxu0
  %v2062 = vpop.f32.mrf.mxu0
  %v2063 = vadd.f32 %v1966, %v2062
  %v2064 = vpop.f32.mrf.mxu0
  %2065 = vmatprep.mubr.bf16.mxu0 %v757
  %2066 = vmatmul.mubr.bf16.gmra.mxu0 %v756
  %v2067 = vpop.f32.mrf.mxu0
  %v2068 = vadd.f32 %v1971, %v2067
  %v2069 = vpop.f32.mrf.mxu0
  %v2070 = vpop.f32.mrf.mxu0
  %v2071 = vadd.f32 %v1974, %v2070
  %v2072 = vpop.f32.mrf.mxu0
  %2073 = vmatprep.mubr.bf16.mxu0 %v770
  %2074 = vmatmul.mubr.bf16.gmra.mxu0 %v769
  %v2075 = vpop.f32.mrf.mxu0
  %v2076 = vadd.f32 %v1979, %v2075
  %v2077 = vpop.f32.mrf.mxu0
  %v2078 = vpop.f32.mrf.mxu0
  %v2079 = vadd.f32 %v1982, %v2078
  %v2080 = vpop.f32.mrf.mxu0
  %2081 = vdwg.mxu0
  %2082 = vmatprep.subr.bf16.mxu0 0
  %2083 = vmatpush1.bf16.msra.mxu0 %v1395
  %2084 = vmatprep.subr.bf16.mxu0 0
  %2085 = vmatpush1.bf16.msra.mxu0 %v1394
  %2086 = vmatprep.subr.bf16.mxu0 0
  %2087 = vmatpush1.bf16.msra.mxu0 %v1393
  %2088 = vmatprep.subr.bf16.mxu0 0
  %2089 = vmatpush1.bf16.msra.mxu0 %v1392
  %2090 = vmatprep.subr.bf16.mxu0 0
  %2091 = vmatpush1.bf16.msra.mxu0 %v1391
  %2092 = vmatprep.subr.bf16.mxu0 0
  %2093 = vmatpush1.bf16.msra.mxu0 %v1390
  %2094 = vmatprep.subr.bf16.mxu0 0
  %2095 = vmatpush1.bf16.msra.mxu0 %v1389
  %2096 = vmatprep.subr.bf16.mxu0 0
  %2097 = vmatpush1.bf16.msra.mxu0 %v1388
  %2098 = vmatprep.subr.bf16.mxu0 0
  %2099 = vmatpush2.bf16.msra.mxu0 0
  %2100 = vmatprep.subr.bf16.mxu0 0
  %2101 = vmatpush2.bf16.msra.mxu0 0
  %2102 = vmatprep.subr.bf16.mxu0 0
  %2103 = vmatpush2.bf16.msra.mxu0 0
  %2104 = vmatprep.subr.bf16.mxu0 0
  %2105 = vmatpush2.bf16.msra.mxu0 0
  %2106 = vmatprep.subr.bf16.mxu0 0
  %2107 = vmatpush2.bf16.msra.mxu0 0
  %2108 = vmatprep.subr.bf16.mxu0 0
  %2109 = vmatpush2.bf16.msra.mxu0 0
  %2110 = vmatprep.subr.bf16.mxu0 0
  %2111 = vmatpush2.bf16.msra.mxu0 0
  %2112 = vmatprep.subr.bf16.mxu0 0
  %2113 = vmatpush2.bf16.msra.mxu0 0
  %2114 = vmatprep.mubr.bf16.mxu0 0
  %2115 = vmatmul.mubr.bf16.gmra.mxu0 %v680
  %v2116 = vpop.f32.mrf.mxu0
  %v2117 = vadd.f32 %v2020, %v2116
  %v2118 = vpop.f32.mrf.mxu0
  %v2119 = vpop.f32.mrf.mxu0
  %v2120 = vadd.f32 %v2023, %v2119
  %v2121 = vpop.f32.mrf.mxu0
  %2122 = vmatprep.mubr.bf16.mxu0 0
  %2123 = vmatmul.mubr.bf16.gmra.mxu0 %v693
  %v2124 = vpop.f32.mrf.mxu0
  %v2125 = vadd.f32 %v2028, %v2124
  %v2126 = vpop.f32.mrf.mxu0
  %v2127 = vpop.f32.mrf.mxu0
  %v2128 = vadd.f32 %v2031, %v2127
  %v2129 = vpop.f32.mrf.mxu0
  %2130 = vmatprep.mubr.bf16.mxu0 0
  %2131 = vmatmul.mubr.bf16.gmra.mxu0 %v706
  %v2132 = vpop.f32.mrf.mxu0
  %v2133 = vadd.f32 %v2036, %v2132
  %v2134 = vpop.f32.mrf.mxu0
  %v2135 = vpop.f32.mrf.mxu0
  %v2136 = vadd.f32 %v2039, %v2135
  %v2137 = vpop.f32.mrf.mxu0
  %2138 = vmatprep.mubr.bf16.mxu0 0
  %2139 = vmatmul.mubr.bf16.gmra.mxu0 %v719
  %v2140 = vpop.f32.mrf.mxu0
  %v2141 = vadd.f32 %v2044, %v2140
  %v2142 = vpop.f32.mrf.mxu0
  %v2143 = vpop.f32.mrf.mxu0
  %v2144 = vadd.f32 %v2047, %v2143
  %v2145 = vpop.f32.mrf.mxu0
  %2146 = vmatprep.mubr.bf16.mxu0 0
  %2147 = vmatmul.mubr.bf16.gmra.mxu0 %v732
  %v2148 = vpop.f32.mrf.mxu0
  %v2149 = vadd.f32 %v2052, %v2148
  %v2150 = vpop.f32.mrf.mxu0
  %v2151 = vpop.f32.mrf.mxu0
  %v2152 = vadd.f32 %v2055, %v2151
  %v2153 = vpop.f32.mrf.mxu0
  %2154 = vmatprep.mubr.bf16.mxu0 0
  %2155 = vmatmul.mubr.bf16.gmra.mxu0 %v745
  %v2156 = vpop.f32.mrf.mxu0
  %v2157 = vadd.f32 %v2060, %v2156
  %v2158 = vpop.f32.mrf.mxu0
  %v2159 = vpop.f32.mrf.mxu0
  %v2160 = vadd.f32 %v2063, %v2159
  %v2161 = vpop.f32.mrf.mxu0
  %2162 = vmatprep.mubr.bf16.mxu0 0
  %2163 = vmatmul.mubr.bf16.gmra.mxu0 %v758
  %v2164 = vpop.f32.mrf.mxu0
  %v2165 = vadd.f32 %v2068, %v2164
  %v2166 = vpop.f32.mrf.mxu0
  %v2167 = vpop.f32.mrf.mxu0
  %v2168 = vadd.f32 %v2071, %v2167
  %v2169 = vpop.f32.mrf.mxu0
  %2170 = vmatprep.mubr.bf16.mxu0 0
  %2171 = vmatmul.mubr.bf16.gmra.mxu0 %v771
  %v2172 = vpop.f32.mrf.mxu0
  %v2173 = vadd.f32 %v2076, %v2172
  %v2174 = vpop.f32.mrf.mxu0
  %v2175 = vpop.f32.mrf.mxu0
  %v2176 = vadd.f32 %v2079, %v2175
  %v2177 = vpop.f32.mrf.mxu0
  %2178 = vdwg.mxu0
  %v2179 = vmax.f32 %v2117, 0.0
  %v2180 = vmax.f32 %v2120, 0.0
  %v2181 = vmax.f32 %v2125, 0.0
  %v2182 = vmax.f32 %v2128, 0.0
  %v2183 = vmax.f32 %v2133, 0.0
  %v2184 = vmax.f32 %v2136, 0.0
  %v2185 = vmax.f32 %v2141, 0.0
  %v2186 = vmax.f32 %v2144, 0.0
  %v2187 = vmax.f32 %v2149, 0.0
  %v2188 = vmax.f32 %v2152, 0.0
  %v2189 = vmax.f32 %v2157, 0.0
  %v2190 = vmax.f32 %v2160, 0.0
  %v2191 = vmax.f32 %v2165, 0.0
  %v2192 = vmax.f32 %v2168, 0.0
  %v2193 = vmax.f32 %v2173, 0.0
  %v2194 = vmax.f32 %v2176, 0.0
  %v2195 = vadd.f32 %v2179, %v2180
  %v2196 = vrot.slane %v2195, 4
  %v2197 = vadd.f32 %v2195, %v2196
  %v2198 = vrot.slane %v2197, 2
  %v2199 = vadd.f32 %v2197, %v2198
  %v2200 = vrot.slane %v2199, 1
  %v2201 = vadd.f32 %v2199, %v2200
  %v2202 = vadd.f32 %v2181, %v2182
  %v2203 = vrot.slane %v2202, 4
  %v2204 = vadd.f32 %v2202, %v2203
  %v2205 = vrot.slane %v2204, 2
  %v2206 = vadd.f32 %v2204, %v2205
  %v2207 = vrot.slane %v2206, 1
  %v2208 = vadd.f32 %v2206, %v2207
  %v2209 = vadd.f32 %v2183, %v2184
  %v2210 = vrot.slane %v2209, 4
  %v2211 = vadd.f32 %v2209, %v2210
  %v2212 = vrot.slane %v2211, 2
  %v2213 = vadd.f32 %v2211, %v2212
  %v2214 = vrot.slane %v2213, 1
  %v2215 = vadd.f32 %v2213, %v2214
  %v2216 = vadd.f32 %v2185, %v2186
  %v2217 = vrot.slane %v2216, 4
  %v2218 = vadd.f32 %v2216, %v2217
  %v2219 = vrot.slane %v2218, 2
  %v2220 = vadd.f32 %v2218, %v2219
  %v2221 = vrot.slane %v2220, 1
  %v2222 = vadd.f32 %v2220, %v2221
  %v2223 = vadd.f32 %v2187, %v2188
  %v2224 = vrot.slane %v2223, 4
  %v2225 = vadd.f32 %v2223, %v2224
  %v2226 = vrot.slane %v2225, 2
  %v2227 = vadd.f32 %v2225, %v2226
  %v2228 = vrot.slane %v2227, 1
  %v2229 = vadd.f32 %v2227, %v2228
  %v2230 = vadd.f32 %v2189, %v2190
  %v2231 = vrot.slane %v2230, 4
  %v2232 = vadd.f32 %v2230, %v2231
  %v2233 = vrot.slane %v2232, 2
  %v2234 = vadd.f32 %v2232, %v2233
  %v2235 = vrot.slane %v2234, 1
  %v2236 = vadd.f32 %v2234, %v2235
  %v2237 = vadd.f32 %v2191, %v2192
  %v2238 = vrot.slane %v2237, 4
  %v2239 = vadd.f32 %v2237, %v2238
  %v2240 = vrot.slane %v2239, 2
  %v2241 = vadd.f32 %v2239, %v2240
  %v2242 = vrot.slane %v2241, 1
  %v2243 = vadd.f32 %v2241, %v2242
  %v2244 = vadd.f32 %v2193, %v2194
  %v2245 = vrot.slane %v2244, 4
  %v2246 = vadd.f32 %v2244, %v2245
  %v2247 = vrot.slane %v2246, 2
  %v2248 = vadd.f32 %v2246, %v2247
  %v2249 = vrot.slane %v2248, 1
  %v2250 = vadd.f32 %v2248, %v2249
  %v2251 = vrcp.pop 16.0
  %v2252 = vmul.f32 %v2201, %v2251
  %v2253 = vmul.f32 %v2208, %v2251
  %v2254 = vmul.f32 %v2215, %v2251
  %v2255 = vmul.f32 %v2222, %v2251
  %v2256 = vmul.f32 %v2229, %v2251
  %v2257 = vmul.f32 %v2236, %v2251
  %v2258 = vmul.f32 %v2243, %v2251
  %v2259 = vmul.f32 %v2250, %v2251
  %v2260 = vld [vmem:[%s3] sm:$0xff]
  %v2261 = vld [vmem:[%s3 + $0x8] sm:$0xff]
  %v2262 = vld [vmem:[%s3 + $0x10] sm:$0xff]
  %v2263 = vld [vmem:[%s3 + $0x18] sm:$0xff]
  %v2264 = vld [vmem:[%s3 + $0x20] sm:$0xff]
  %v2265 = vld [vmem:[%s3 + $0x28] sm:$0xff]
  %v2266 = vld [vmem:[%s3 + $0x30] sm:$0xff]
  %v2267 = vld [vmem:[%s3 + $0x38] sm:$0xff]
  %v2268 = vld [vmem:[%s3 + $0x40] sm:$0xff]
  %v2269 = vld [vmem:[%s3 + $0x48] sm:$0xff]
  %v2270 = vld [vmem:[%s3 + $0x50] sm:$0xff]
  %v2271 = vld [vmem:[%s3 + $0x58] sm:$0xff]
  %v2272 = vld [vmem:[%s3 + $0x60] sm:$0xff]
  %v2273 = vld [vmem:[%s3 + $0x68] sm:$0xff]
  %v2274 = vld [vmem:[%s3 + $0x70] sm:$0xff]
  %v2275 = vld [vmem:[%s3 + $0x78] sm:$0xff]
  %v2276 = vld [vmem:[%s4] sm:$0x1]
  %v2278 = vlaneseq
  %v2279 = vshrl.u32 %v2278, 7
  %v2280 = vsub.s32 0, %v2279
  %v2281 = vrot.slane %v2276, %v2280
  %vm2291 = vcmask 1041409
  %v2292 = vsel %vm2291, %v2253, %v2252
  %vm2293 = vcmask 1042434
  %v2294 = vsel %vm2293, %v2254, %v2292
  %vm2295 = vcmask 1043459
  %v2296 = vsel %vm2295, %v2255, %v2294
  %vm2297 = vcmask 1044484
  %v2298 = vsel %vm2297, %v2256, %v2296
  %vm2299 = vcmask 1045509
  %v2300 = vsel %vm2299, %v2257, %v2298
  %vm2301 = vcmask 1046534
  %v2302 = vsel %vm2301, %v2258, %v2300
  %vm2303 = vcmask 1047559
  %v2304 = vsel %vm2303, %v2259, %v2302
  %2306 = vmatprep.subr.mxu0 0.0
  %2307 = vmatpush1.msra.mxu0 %v2275
  %2308 = vmatprep.subr.mxu0 0.0
  %2309 = vmatpush1.msra.mxu0 %v2274
  %2310 = vmatprep.subr.mxu0 0.0
  %2311 = vmatpush1.msra.mxu0 %v2273
  %2312 = vmatprep.subr.mxu0 0.0
  %2313 = vmatpush1.msra.mxu0 %v2272
  %2314 = vmatprep.subr.mxu0 0.0
  %2315 = vmatpush1.msra.mxu0 %v2271
  %2316 = vmatprep.subr.mxu0 0.0
  %2317 = vmatpush1.msra.mxu0 %v2270
  %2318 = vmatprep.subr.mxu0 0.0
  %2319 = vmatpush1.msra.mxu0 %v2269
  %2320 = vmatprep.subr.mxu0 0.0
  %2321 = vmatpush1.msra.mxu0 %v2268
  %2322 = vmatprep.subr.mxu0 0.0
  %2323 = vmatpush1.msra.mxu0 %v2267
  %2324 = vmatprep.subr.mxu0 0.0
  %2325 = vmatpush1.msra.mxu0 %v2266
  %2326 = vmatprep.subr.mxu0 0.0
  %2327 = vmatpush1.msra.mxu0 %v2265
  %2328 = vmatprep.subr.mxu0 0.0
  %2329 = vmatpush1.msra.mxu0 %v2264
  %2330 = vmatprep.subr.mxu0 0.0
  %2331 = vmatpush1.msra.mxu0 %v2263
  %2332 = vmatprep.subr.mxu0 0.0
  %2333 = vmatpush1.msra.mxu0 %v2262
  %2334 = vmatprep.subr.mxu0 0.0
  %2335 = vmatpush1.msra.mxu0 %v2261
  %2336 = vmatprep.subr.mxu0 0.0
  %2337 = vmatpush1.msra.mxu0 %v2260
  %2338 = vmatprep.subr.mxu0 0.0
  %2339 = vmatpush2.msra.mxu0 0.0
  %2340 = vmatprep.subr.mxu0 0.0
  %2341 = vmatpush2.msra.mxu0 0.0
  %2342 = vmatprep.subr.mxu0 0.0
  %2343 = vmatpush2.msra.mxu0 0.0
  %2344 = vmatprep.subr.mxu0 0.0
  %2345 = vmatpush2.msra.mxu0 0.0
  %2346 = vmatprep.subr.mxu0 0.0
  %2347 = vmatpush2.msra.mxu0 0.0
  %2348 = vmatprep.subr.mxu0 0.0
  %2349 = vmatpush2.msra.mxu0 0.0
  %2350 = vmatprep.subr.mxu0 0.0
  %2351 = vmatpush2.msra.mxu0 0.0
  %2352 = vmatprep.subr.mxu0 0.0
  %2353 = vmatpush2.msra.mxu0 0.0
  %2354 = vmatprep.subr.mxu0 0.0
  %2355 = vmatpush2.msra.mxu0 0.0
  %2356 = vmatprep.subr.mxu0 0.0
  %2357 = vmatpush2.msra.mxu0 0.0
  %2358 = vmatprep.subr.mxu0 0.0
  %2359 = vmatpush2.msra.mxu0 0.0
  %2360 = vmatprep.subr.mxu0 0.0
  %2361 = vmatpush2.msra.mxu0 0.0
  %2362 = vmatprep.subr.mxu0 0.0
  %2363 = vmatpush2.msra.mxu0 0.0
  %2364 = vmatprep.subr.mxu0 0.0
  %2365 = vmatpush2.msra.mxu0 0.0
  %2366 = vmatprep.subr.mxu0 0.0
  %2367 = vmatpush2.msra.mxu0 0.0
  %2368 = vmatprep.subr.mxu0 0.0
  %2369 = vmatpush2.msra.mxu0 0.0
  %2370 = vmatprep.mubr.f32.mxu0 0.0
  %2371 = vmatmul.mubr.f32.gmra.mxu0 %v2304
  %v2372 = vpop.f32.mrf.mxu0
  %v2373 = vadd.f32 %v2281, %v2372
  %v2374 = vpop.f32.mrf.mxu0
  %2375 = vdwg.mxu0
  %2376 = vst [vmem:[%s5] sm:$0xff] %v2373
  // Predicated region
  $region22: #{model_forward.6} parent=0 // pred_check
    _
  $region23: #{model_forward.6} parent=0 // pred_check_branch
    %2378 = sbr.rel (0) target = $region25
  $region24: #{model_forward.6} parent=0 // pred_region
    _
  $region25: #{model_forward.6} parent=0 // pred_fallthru
    _
  // Predicated region
  $region26: #{model_forward.6} parent=0 // pred_check
    _
  $region27: #{model_forward.6} parent=0 // pred_check_branch
    %2380 = sbr.rel (0) target = $region29
  $region28: #{model_forward.6} parent=0 // pred_region
    _
  $region29: #{model_forward.6} parent=0 // pred_fallthru
    _

// kernel: model_forward.7
$region0: #{model_forward.7}
  #allocation0 [shape = 'u32[]', space=smem, size = 0x4, offset = 0x4, fixed_abs, tag = 'smem constant byte address 0x4 - core index']
  #allocation1 [shape = 'u32[144,128]{1,0:T(1,128)}', space=vmem, size = 0x12000, scoped, tag = 'internal scratch']
  #allocation2 [shape = 'f32[4,8,128]{2,1,0:T(8,128)}', space=vmem, size = 0x4000, scoped, tag = 'scratch operand']
  %s0 = inlined_call_operand.vmem [shape: f32[4,8,128], index: 0, kind: input, shape index: {}]
  %s1 = inlined_call_operand.vmem [shape: f32[8,128], index: 1, kind: input, shape index: {}]
  %s2 = inlined_call_operand.vmem [shape: f32[128,128], index: 2, kind: input, shape index: {}]
  %s3 = inlined_call_operand.vmem [shape: f32[128,128], index: 3, kind: input, shape index: {}]
  %s4 = inlined_call_operand.vmem [shape: f32[1,128], index: 4, kind: input, shape index: {}]
  %s5 = inlined_call_operand.vmem [shape: f32[4,8,128], index: 5, kind: output, shape index: {0}]
  %s6 = inlined_call_operand.vmem [shape: f32[8,128], index: 6, kind: output, shape index: {1}]
  %7 = xla_tuple %s5, %s6
  %s8 = sld [smem:[#allocation0]]
  $region38: #{model_forward.7} parent=0
    _
  %s10 = ssub.s32 1, %s8
  %s11 = scalar_select 0, %s10, %s8
  // Predicated region
  $region2: #{model_forward.7} parent=0 // pred_check
    _
  $region3: #{model_forward.7} parent=0 // pred_check_branch
    %13 = sbr.rel (0) target = $region5
  $region4: #{model_forward.7} parent=0 // pred_region
    _
  $region5: #{model_forward.7} parent=0 // pred_fallthru
    _
  // Predicated region
  $region6: #{model_forward.7} parent=0 // pred_check
    _
  $region7: #{model_forward.7} parent=0 // pred_check_branch
    %15 = sbr.rel (0) target = $region9
  $region8: #{model_forward.7} parent=0 // pred_region
    _
  $region9: #{model_forward.7} parent=0 // pred_fallthru
    _
  // Predicated region
  $region10: #{model_forward.7} parent=0 // pred_check
    _
  $region11: #{model_forward.7} parent=0 // pred_check_branch
    %17 = sbr.rel (0) target = $region13
  $region12: #{model_forward.7} parent=0 // pred_region
    _
  $region13: #{model_forward.7} parent=0 // pred_fallthru
    _
  // Predicated region
  $region14: #{model_forward.7} parent=0 // pred_check
    _
  $region15: #{model_forward.7} parent=0 // pred_check_branch
    %19 = sbr.rel (0) target = $region17
  $region16: #{model_forward.7} parent=0 // pred_region
    _
  $region17: #{model_forward.7} parent=0 // pred_fallthru
    _
  // Predicated region
  $region18: #{model_forward.7} parent=0 // pred_check
    _
  $region19: #{model_forward.7} parent=0 // pred_check_branch
    %21 = sbr.rel (0) target = $region21
  $region20: #{model_forward.7} parent=0 // pred_region
    _
  $region21: #{model_forward.7} parent=0 // pred_fallthru
    _
  %v22 = vld [vmem:[%s2] sm:$0xff]
  %v23 = vld [vmem:[%s2 + $0x8] sm:$0xff]
  %v24 = vld [vmem:[%s2 + $0x10] sm:$0xff]
  %v25 = vld [vmem:[%s2 + $0x18] sm:$0xff]
  %v26 = vld [vmem:[%s2 + $0x20] sm:$0xff]
  %v27 = vld [vmem:[%s2 + $0x28] sm:$0xff]
  %v28 = vld [vmem:[%s2 + $0x30] sm:$0xff]
  %v29 = vld [vmem:[%s2 + $0x38] sm:$0xff]
  %v30 = vld [vmem:[%s2 + $0x40] sm:$0xff]
  %v31 = vld [vmem:[%s2 + $0x48] sm:$0xff]
  %v32 = vld [vmem:[%s2 + $0x50] sm:$0xff]
  %v33 = vld [vmem:[%s2 + $0x58] sm:$0xff]
  %v34 = vld [vmem:[%s2 + $0x60] sm:$0xff]
  %v35 = vld [vmem:[%s2 + $0x68] sm:$0xff]
  %v36 = vld [vmem:[%s2 + $0x70] sm:$0xff]
  %v37 = vld [vmem:[%s2 + $0x78] sm:$0xff]
  %v38 = vld [vmem:[%s1] sm:$0xff]
  %v39 = vld [vmem:[%s0] sm:$0xff]
  %40 = vmatprep.subr.mxu0 0.0
  %41 = vmatpush1.msra.mxu0 %v37
  %42 = vmatprep.subr.mxu0 0.0
  %43 = vmatpush1.msra.mxu0 %v36
  %44 = vmatprep.subr.mxu0 0.0
  %45 = vmatpush1.msra.mxu0 %v35
  %46 = vmatprep.subr.mxu0 0.0
  %47 = vmatpush1.msra.mxu0 %v34
  %48 = vmatprep.subr.mxu0 0.0
  %49 = vmatpush1.msra.mxu0 %v33
  %50 = vmatprep.subr.mxu0 0.0
  %51 = vmatpush1.msra.mxu0 %v32
  %52 = vmatprep.subr.mxu0 0.0
  %53 = vmatpush1.msra.mxu0 %v31
  %54 = vmatprep.subr.mxu0 0.0
  %55 = vmatpush1.msra.mxu0 %v30
  %56 = vmatprep.subr.mxu0 0.0
  %57 = vmatpush1.msra.mxu0 %v29
  %58 = vmatprep.subr.mxu0 0.0
  %59 = vmatpush1.msra.mxu0 %v28
  %60 = vmatprep.subr.mxu0 0.0
  %61 = vmatpush1.msra.mxu0 %v27
  %62 = vmatprep.subr.mxu0 0.0
  %63 = vmatpush1.msra.mxu0 %v26
  %64 = vmatprep.subr.mxu0 0.0
  %65 = vmatpush1.msra.mxu0 %v25
  %66 = vmatprep.subr.mxu0 0.0
  %67 = vmatpush1.msra.mxu0 %v24
  %68 = vmatprep.subr.mxu0 0.0
  %69 = vmatpush1.msra.mxu0 %v23
  %70 = vmatprep.subr.mxu0 0.0
  %71 = vmatpush1.msra.mxu0 %v22
  %72 = vmatprep.subr.mxu0 0.0
  %73 = vmatpush2.msra.mxu0 0.0
  %74 = vmatprep.subr.mxu0 0.0
  %75 = vmatpush2.msra.mxu0 0.0
  %76 = vmatprep.subr.mxu0 0.0
  %77 = vmatpush2.msra.mxu0 0.0
  %78 = vmatprep.subr.mxu0 0.0
  %79 = vmatpush2.msra.mxu0 0.0
  %80 = vmatprep.subr.mxu0 0.0
  %81 = vmatpush2.msra.mxu0 0.0
  %82 = vmatprep.subr.mxu0 0.0
  %83 = vmatpush2.msra.mxu0 0.0
  %84 = vmatprep.subr.mxu0 0.0
  %85 = vmatpush2.msra.mxu0 0.0
  %86 = vmatprep.subr.mxu0 0.0
  %87 = vmatpush2.msra.mxu0 0.0
  %88 = vmatprep.subr.mxu0 0.0
  %89 = vmatpush2.msra.mxu0 0.0
  %90 = vmatprep.subr.mxu0 0.0
  %91 = vmatpush2.msra.mxu0 0.0
  %92 = vmatprep.subr.mxu0 0.0
  %93 = vmatpush2.msra.mxu0 0.0
  %94 = vmatprep.subr.mxu0 0.0
  %95 = vmatpush2.msra.mxu0 0.0
  %96 = vmatprep.subr.mxu0 0.0
  %97 = vmatpush2.msra.mxu0 0.0
  %98 = vmatprep.subr.mxu0 0.0
  %99 = vmatpush2.msra.mxu0 0.0
  %100 = vmatprep.subr.mxu0 0.0
  %101 = vmatpush2.msra.mxu0 0.0
  %102 = vmatprep.subr.mxu0 0.0
  %103 = vmatpush2.msra.mxu0 0.0
  %104 = vmatprep.mubr.f32.mxu0 0.0
  %105 = vmatmul.mubr.f32.gmra.mxu0 %v38
  %v106 = vpop.f32.mrf.mxu0
  %v107 = vadd.f32 0.0, %v106
  %v108 = vpop.f32.mrf.mxu0
  %109 = vdwg.mxu0
  %v110 = vsub.f32 0.0, %v38
  %v111 = vadd.f32 %v39, %v107
  %v112 = vtanh.pop %v111
  %v113 = vadd.f32 %v110, %v112
  %v114 = vmul.f32 %v113, 0.05
  %v115 = vadd.f32 %v38, %v114
  %116 = vmatprep.subr.mxu0 0.0
  %117 = vmatpush1.msra.mxu0 %v37
  %118 = vmatprep.subr.mxu0 0.0
  %119 = vmatpush1.msra.mxu0 %v36
  %120 = vmatprep.subr.mxu0 0.0
  %121 = vmatpush1.msra.mxu0 %v35
  %122 = vmatprep.subr.mxu0 0.0
  %123 = vmatpush1.msra.mxu0 %v34
  %124 = vmatprep.subr.mxu0 0.0
  %125 = vmatpush1.msra.mxu0 %v33
  %126 = vmatprep.subr.mxu0 0.0
  %127 = vmatpush1.msra.mxu0 %v32
  %128 = vmatprep.subr.mxu0 0.0
  %129 = vmatpush1.msra.mxu0 %v31
  %130 = vmatprep.subr.mxu0 0.0
  %131 = vmatpush1.msra.mxu0 %v30
  %132 = vmatprep.subr.mxu0 0.0
  %133 = vmatpush1.msra.mxu0 %v29
  %134 = vmatprep.subr.mxu0 0.0
  %135 = vmatpush1.msra.mxu0 %v28
  %136 = vmatprep.subr.mxu0 0.0
  %137 = vmatpush1.msra.mxu0 %v27
  %138 = vmatprep.subr.mxu0 0.0
  %139 = vmatpush1.msra.mxu0 %v26
  %140 = vmatprep.subr.mxu0 0.0
  %141 = vmatpush1.msra.mxu0 %v25
  %142 = vmatprep.subr.mxu0 0.0
  %143 = vmatpush1.msra.mxu0 %v24
  %144 = vmatprep.subr.mxu0 0.0
  %145 = vmatpush1.msra.mxu0 %v23
  %146 = vmatprep.subr.mxu0 0.0
  %147 = vmatpush1.msra.mxu0 %v22
  %148 = vmatprep.subr.mxu0 0.0
  %149 = vmatpush2.msra.mxu0 0.0
  %150 = vmatprep.subr.mxu0 0.0
  %151 = vmatpush2.msra.mxu0 0.0
  %152 = vmatprep.subr.mxu0 0.0
  %153 = vmatpush2.msra.mxu0 0.0
  %154 = vmatprep.subr.mxu0 0.0
  %155 = vmatpush2.msra.mxu0 0.0
  %156 = vmatprep.subr.mxu0 0.0
  %157 = vmatpush2.msra.mxu0 0.0
  %158 = vmatprep.subr.mxu0 0.0
  %159 = vmatpush2.msra.mxu0 0.0
  %160 = vmatprep.subr.mxu0 0.0
  %161 = vmatpush2.msra.mxu0 0.0
  %162 = vmatprep.subr.mxu0 0.0
  %163 = vmatpush2.msra.mxu0 0.0
  %164 = vmatprep.subr.mxu0 0.0
  %165 = vmatpush2.msra.mxu0 0.0
  %166 = vmatprep.subr.mxu0 0.0
  %167 = vmatpush2.msra.mxu0 0.0
  %168 = vmatprep.subr.mxu0 0.0
  %169 = vmatpush2.msra.mxu0 0.0
  %170 = vmatprep.subr.mxu0 0.0
  %171 = vmatpush2.msra.mxu0 0.0
  %172 = vmatprep.subr.mxu0 0.0
  %173 = vmatpush2.msra.mxu0 0.0
  %174 = vmatprep.subr.mxu0 0.0
  %175 = vmatpush2.msra.mxu0 0.0
  %176 = vmatprep.subr.mxu0 0.0
  %177 = vmatpush2.msra.mxu0 0.0
  %178 = vmatprep.subr.mxu0 0.0
  %179 = vmatpush2.msra.mxu0 0.0
  %180 = vmatprep.mubr.f32.mxu0 0.0
  %181 = vmatmul.mubr.f32.gmra.mxu0 %v115
  %v182 = vpop.f32.mrf.mxu0
  %v183 = vadd.f32 0.0, %v182
  %v184 = vpop.f32.mrf.mxu0
  %185 = vdwg.mxu0
  %v186 = vsub.f32 0.0, %v115
  %v187 = vadd.f32 %v39, %v183
  %v188 = vtanh.pop %v187
  %v189 = vadd.f32 %v186, %v188
  %v190 = vmul.f32 %v189, 0.05
  %v191 = vadd.f32 %v38, %v190
  %192 = vmatprep.subr.mxu0 0.0
  %193 = vmatpush1.msra.mxu0 %v37
  %194 = vmatprep.subr.mxu0 0.0
  %195 = vmatpush1.msra.mxu0 %v36
  %196 = vmatprep.subr.mxu0 0.0
  %197 = vmatpush1.msra.mxu0 %v35
  %198 = vmatprep.subr.mxu0 0.0
  %199 = vmatpush1.msra.mxu0 %v34
  %200 = vmatprep.subr.mxu0 0.0
  %201 = vmatpush1.msra.mxu0 %v33
  %202 = vmatprep.subr.mxu0 0.0
  %203 = vmatpush1.msra.mxu0 %v32
  %204 = vmatprep.subr.mxu0 0.0
  %205 = vmatpush1.msra.mxu0 %v31
  %206 = vmatprep.subr.mxu0 0.0
  %207 = vmatpush1.msra.mxu0 %v30
  %208 = vmatprep.subr.mxu0 0.0
  %209 = vmatpush1.msra.mxu0 %v29
  %210 = vmatprep.subr.mxu0 0.0
  %211 = vmatpush1.msra.mxu0 %v28
  %212 = vmatprep.subr.mxu0 0.0
  %213 = vmatpush1.msra.mxu0 %v27
  %214 = vmatprep.subr.mxu0 0.0
  %215 = vmatpush1.msra.mxu0 %v26
  %216 = vmatprep.subr.mxu0 0.0
  %217 = vmatpush1.msra.mxu0 %v25
  %218 = vmatprep.subr.mxu0 0.0
  %219 = vmatpush1.msra.mxu0 %v24
  %220 = vmatprep.subr.mxu0 0.0
  %221 = vmatpush1.msra.mxu0 %v23
  %222 = vmatprep.subr.mxu0 0.0
  %223 = vmatpush1.msra.mxu0 %v22
  %224 = vmatprep.subr.mxu0 0.0
  %225 = vmatpush2.msra.mxu0 0.0
  %226 = vmatprep.subr.mxu0 0.0
  %227 = vmatpush2.msra.mxu0 0.0
  %228 = vmatprep.subr.mxu0 0.0
  %229 = vmatpush2.msra.mxu0 0.0
  %230 = vmatprep.subr.mxu0 0.0
  %231 = vmatpush2.msra.mxu0 0.0
  %232 = vmatprep.subr.mxu0 0.0
  %233 = vmatpush2.msra.mxu0 0.0
  %234 = vmatprep.subr.mxu0 0.0
  %235 = vmatpush2.msra.mxu0 0.0
  %236 = vmatprep.subr.mxu0 0.0
  %237 = vmatpush2.msra.mxu0 0.0
  %238 = vmatprep.subr.mxu0 0.0
  %239 = vmatpush2.msra.mxu0 0.0
  %240 = vmatprep.subr.mxu0 0.0
  %241 = vmatpush2.msra.mxu0 0.0
  %242 = vmatprep.subr.mxu0 0.0
  %243 = vmatpush2.msra.mxu0 0.0
  %244 = vmatprep.subr.mxu0 0.0
  %245 = vmatpush2.msra.mxu0 0.0
  %246 = vmatprep.subr.mxu0 0.0
  %247 = vmatpush2.msra.mxu0 0.0
  %248 = vmatprep.subr.mxu0 0.0
  %249 = vmatpush2.msra.mxu0 0.0
  %250 = vmatprep.subr.mxu0 0.0
  %251 = vmatpush2.msra.mxu0 0.0
  %252 = vmatprep.subr.mxu0 0.0
  %253 = vmatpush2.msra.mxu0 0.0
  %254 = vmatprep.subr.mxu0 0.0
  %255 = vmatpush2.msra.mxu0 0.0
  %256 = vmatprep.mubr.f32.mxu0 0.0
  %257 = vmatmul.mubr.f32.gmra.mxu0 %v191
  %v258 = vpop.f32.mrf.mxu0
  %v259 = vadd.f32 0.0, %v258
  %v260 = vpop.f32.mrf.mxu0
  %261 = vdwg.mxu0
  %v262 = vsub.f32 0.0, %v191
  %v263 = vadd.f32 %v39, %v259
  %v264 = vtanh.pop %v263
  %v265 = vadd.f32 %v262, %v264
  %v266 = vmul.f32 %v265, 0.1
  %v267 = vadd.f32 %v38, %v266
  %268 = vmatprep.subr.mxu0 0.0
  %269 = vmatpush1.msra.mxu0 %v37
  %270 = vmatprep.subr.mxu0 0.0
  %271 = vmatpush1.msra.mxu0 %v36
  %272 = vmatprep.subr.mxu0 0.0
  %273 = vmatpush1.msra.mxu0 %v35
  %274 = vmatprep.subr.mxu0 0.0
  %275 = vmatpush1.msra.mxu0 %v34
  %276 = vmatprep.subr.mxu0 0.0
  %277 = vmatpush1.msra.mxu0 %v33
  %278 = vmatprep.subr.mxu0 0.0
  %279 = vmatpush1.msra.mxu0 %v32
  %280 = vmatprep.subr.mxu0 0.0
  %281 = vmatpush1.msra.mxu0 %v31
  %282 = vmatprep.subr.mxu0 0.0
  %283 = vmatpush1.msra.mxu0 %v30
  %284 = vmatprep.subr.mxu0 0.0
  %285 = vmatpush1.msra.mxu0 %v29
  %286 = vmatprep.subr.mxu0 0.0
  %287 = vmatpush1.msra.mxu0 %v28
  %288 = vmatprep.subr.mxu0 0.0
  %289 = vmatpush1.msra.mxu0 %v27
  %290 = vmatprep.subr.mxu0 0.0
  %291 = vmatpush1.msra.mxu0 %v26
  %292 = vmatprep.subr.mxu0 0.0
  %293 = vmatpush1.msra.mxu0 %v25
  %294 = vmatprep.subr.mxu0 0.0
  %295 = vmatpush1.msra.mxu0 %v24
  %296 = vmatprep.subr.mxu0 0.0
  %297 = vmatpush1.msra.mxu0 %v23
  %298 = vmatprep.subr.mxu0 0.0
  %299 = vmatpush1.msra.mxu0 %v22
  %300 = vmatprep.subr.mxu0 0.0
  %301 = vmatpush2.msra.mxu0 0.0
  %302 = vmatprep.subr.mxu0 0.0
  %303 = vmatpush2.msra.mxu0 0.0
  %304 = vmatprep.subr.mxu0 0.0
  %305 = vmatpush2.msra.mxu0 0.0
  %306 = vmatprep.subr.mxu0 0.0
  %307 = vmatpush2.msra.mxu0 0.0
  %308 = vmatprep.subr.mxu0 0.0
  %309 = vmatpush2.msra.mxu0 0.0
  %310 = vmatprep.subr.mxu0 0.0
  %311 = vmatpush2.msra.mxu0 0.0
  %312 = vmatprep.subr.mxu0 0.0
  %313 = vmatpush2.msra.mxu0 0.0
  %314 = vmatprep.subr.mxu0 0.0
  %315 = vmatpush2.msra.mxu0 0.0
  %316 = vmatprep.subr.mxu0 0.0
  %317 = vmatpush2.msra.mxu0 0.0
  %318 = vmatprep.subr.mxu0 0.0
  %319 = vmatpush2.msra.mxu0 0.0
  %320 = vmatprep.subr.mxu0 0.0
  %321 = vmatpush2.msra.mxu0 0.0
  %322 = vmatprep.subr.mxu0 0.0
  %323 = vmatpush2.msra.mxu0 0.0
  %324 = vmatprep.subr.mxu0 0.0
  %325 = vmatpush2.msra.mxu0 0.0
  %326 = vmatprep.subr.mxu0 0.0
  %327 = vmatpush2.msra.mxu0 0.0
  %328 = vmatprep.subr.mxu0 0.0
  %329 = vmatpush2.msra.mxu0 0.0
  %330 = vmatprep.subr.mxu0 0.0
  %331 = vmatpush2.msra.mxu0 0.0
  %332 = vmatprep.mubr.f32.mxu0 0.0
  %333 = vmatmul.mubr.f32.gmra.mxu0 %v267
  %v334 = vpop.f32.mrf.mxu0
  %v335 = vadd.f32 0.0, %v334
  %v336 = vpop.f32.mrf.mxu0
  %337 = vdwg.mxu0
  %v338 = vsub.f32 0.0, %v267
  %v339 = vadd.f32 %v39, %v335
  %v340 = vtanh.pop %v339
  %v341 = vadd.f32 %v338, %v340
  %v342 = vmul.f32 %v189, 2.0
  %v343 = vadd.f32 %v113, %v342
  %v344 = vmul.f32 %v265, 2.0
  %v345 = vadd.f32 %v343, %v344
  %v346 = vadd.f32 %v345, %v341
  %v347 = vmul.f32 %v346, 0.016666668
  %v348 = vadd.f32 %v38, %v347
  %349 = vst [vmem:[#allocation2] sm:$0xff] %v348
  %s350 = scalar_lea.vmem %s0, 8
  %v351 = vld [vmem:[%s350] sm:$0xff]
  %352 = vmatprep.subr.mxu0 0.0
  %353 = vmatpush1.msra.mxu0 %v37
  %354 = vmatprep.subr.mxu0 0.0
  %355 = vmatpush1.msra.mxu0 %v36
  %356 = vmatprep.subr.mxu0 0.0
  %357 = vmatpush1.msra.mxu0 %v35
  %358 = vmatprep.subr.mxu0 0.0
  %359 = vmatpush1.msra.mxu0 %v34
  %360 = vmatprep.subr.mxu0 0.0
  %361 = vmatpush1.msra.mxu0 %v33
  %362 = vmatprep.subr.mxu0 0.0
  %363 = vmatpush1.msra.mxu0 %v32
  %364 = vmatprep.subr.mxu0 0.0
  %365 = vmatpush1.msra.mxu0 %v31
  %366 = vmatprep.subr.mxu0 0.0
  %367 = vmatpush1.msra.mxu0 %v30
  %368 = vmatprep.subr.mxu0 0.0
  %369 = vmatpush1.msra.mxu0 %v29
  %370 = vmatprep.subr.mxu0 0.0
  %371 = vmatpush1.msra.mxu0 %v28
  %372 = vmatprep.subr.mxu0 0.0
  %373 = vmatpush1.msra.mxu0 %v27
  %374 = vmatprep.subr.mxu0 0.0
  %375 = vmatpush1.msra.mxu0 %v26
  %376 = vmatprep.subr.mxu0 0.0
  %377 = vmatpush1.msra.mxu0 %v25
  %378 = vmatprep.subr.mxu0 0.0
  %379 = vmatpush1.msra.mxu0 %v24
  %380 = vmatprep.subr.mxu0 0.0
  %381 = vmatpush1.msra.mxu0 %v23
  %382 = vmatprep.subr.mxu0 0.0
  %383 = vmatpush1.msra.mxu0 %v22
  %384 = vmatprep.subr.mxu0 0.0
  %385 = vmatpush2.msra.mxu0 0.0
  %386 = vmatprep.subr.mxu0 0.0
  %387 = vmatpush2.msra.mxu0 0.0
  %388 = vmatprep.subr.mxu0 0.0
  %389 = vmatpush2.msra.mxu0 0.0
  %390 = vmatprep.subr.mxu0 0.0
  %391 = vmatpush2.msra.mxu0 0.0
  %392 = vmatprep.subr.mxu0 0.0
  %393 = vmatpush2.msra.mxu0 0.0
  %394 = vmatprep.subr.mxu0 0.0
  %395 = vmatpush2.msra.mxu0 0.0
  %396 = vmatprep.subr.mxu0 0.0
  %397 = vmatpush2.msra.mxu0 0.0
  %398 = vmatprep.subr.mxu0 0.0
  %399 = vmatpush2.msra.mxu0 0.0
  %400 = vmatprep.subr.mxu0 0.0
  %401 = vmatpush2.msra.mxu0 0.0
  %402 = vmatprep.subr.mxu0 0.0
  %403 = vmatpush2.msra.mxu0 0.0
  %404 = vmatprep.subr.mxu0 0.0
  %405 = vmatpush2.msra.mxu0 0.0
  %406 = vmatprep.subr.mxu0 0.0
  %407 = vmatpush2.msra.mxu0 0.0
  %408 = vmatprep.subr.mxu0 0.0
  %409 = vmatpush2.msra.mxu0 0.0
  %410 = vmatprep.subr.mxu0 0.0
  %411 = vmatpush2.msra.mxu0 0.0
  %412 = vmatprep.subr.mxu0 0.0
  %413 = vmatpush2.msra.mxu0 0.0
  %414 = vmatprep.subr.mxu0 0.0
  %415 = vmatpush2.msra.mxu0 0.0
  %416 = vmatprep.mubr.f32.mxu0 0.0
  %417 = vmatmul.mubr.f32.gmra.mxu0 %v348
  %v418 = vpop.f32.mrf.mxu0
  %v419 = vadd.f32 0.0, %v418
  %v420 = vpop.f32.mrf.mxu0
  %421 = vdwg.mxu0
  %v422 = vsub.f32 0.0, %v348
  %v423 = vadd.f32 %v351, %v419
  %v424 = vtanh.pop %v423
  %v425 = vadd.f32 %v422, %v424
  %v426 = vmul.f32 %v425, 0.05
  %v427 = vadd.f32 %v348, %v426
  %428 = vmatprep.subr.mxu0 0.0
  %429 = vmatpush1.msra.mxu0 %v37
  %430 = vmatprep.subr.mxu0 0.0
  %431 = vmatpush1.msra.mxu0 %v36
  %432 = vmatprep.subr.mxu0 0.0
  %433 = vmatpush1.msra.mxu0 %v35
  %434 = vmatprep.subr.mxu0 0.0
  %435 = vmatpush1.msra.mxu0 %v34
  %436 = vmatprep.subr.mxu0 0.0
  %437 = vmatpush1.msra.mxu0 %v33
  %438 = vmatprep.subr.mxu0 0.0
  %439 = vmatpush1.msra.mxu0 %v32
  %440 = vmatprep.subr.mxu0 0.0
  %441 = vmatpush1.msra.mxu0 %v31
  %442 = vmatprep.subr.mxu0 0.0
  %443 = vmatpush1.msra.mxu0 %v30
  %444 = vmatprep.subr.mxu0 0.0
  %445 = vmatpush1.msra.mxu0 %v29
  %446 = vmatprep.subr.mxu0 0.0
  %447 = vmatpush1.msra.mxu0 %v28
  %448 = vmatprep.subr.mxu0 0.0
  %449 = vmatpush1.msra.mxu0 %v27
  %450 = vmatprep.subr.mxu0 0.0
  %451 = vmatpush1.msra.mxu0 %v26
  %452 = vmatprep.subr.mxu0 0.0
  %453 = vmatpush1.msra.mxu0 %v25
  %454 = vmatprep.subr.mxu0 0.0
  %455 = vmatpush1.msra.mxu0 %v24
  %456 = vmatprep.subr.mxu0 0.0
  %457 = vmatpush1.msra.mxu0 %v23
  %458 = vmatprep.subr.mxu0 0.0
  %459 = vmatpush1.msra.mxu0 %v22
  %460 = vmatprep.subr.mxu0 0.0
  %461 = vmatpush2.msra.mxu0 0.0
  %462 = vmatprep.subr.mxu0 0.0
  %463 = vmatpush2.msra.mxu0 0.0
  %464 = vmatprep.subr.mxu0 0.0
  %465 = vmatpush2.msra.mxu0 0.0
  %466 = vmatprep.subr.mxu0 0.0
  %467 = vmatpush2.msra.mxu0 0.0
  %468 = vmatprep.subr.mxu0 0.0
  %469 = vmatpush2.msra.mxu0 0.0
  %470 = vmatprep.subr.mxu0 0.0
  %471 = vmatpush2.msra.mxu0 0.0
  %472 = vmatprep.subr.mxu0 0.0
  %473 = vmatpush2.msra.mxu0 0.0
  %474 = vmatprep.subr.mxu0 0.0
  %475 = vmatpush2.msra.mxu0 0.0
  %476 = vmatprep.subr.mxu0 0.0
  %477 = vmatpush2.msra.mxu0 0.0
  %478 = vmatprep.subr.mxu0 0.0
  %479 = vmatpush2.msra.mxu0 0.0
  %480 = vmatprep.subr.mxu0 0.0
  %481 = vmatpush2.msra.mxu0 0.0
  %482 = vmatprep.subr.mxu0 0.0
  %483 = vmatpush2.msra.mxu0 0.0
  %484 = vmatprep.subr.mxu0 0.0
  %485 = vmatpush2.msra.mxu0 0.0
  %486 = vmatprep.subr.mxu0 0.0
  %487 = vmatpush2.msra.mxu0 0.0
  %488 = vmatprep.subr.mxu0 0.0
  %489 = vmatpush2.msra.mxu0 0.0
  %490 = vmatprep.subr.mxu0 0.0
  %491 = vmatpush2.msra.mxu0 0.0
  %492 = vmatprep.mubr.f32.mxu0 0.0
  %493 = vmatmul.mubr.f32.gmra.mxu0 %v427
  %v494 = vpop.f32.mrf.mxu0
  %v495 = vadd.f32 0.0, %v494
  %v496 = vpop.f32.mrf.mxu0
  %497 = vdwg.mxu0
  %v498 = vsub.f32 0.0, %v427
  %v499 = vadd.f32 %v351, %v495
  %v500 = vtanh.pop %v499
  %v501 = vadd.f32 %v498, %v500
  %v502 = vmul.f32 %v501, 0.05
  %v503 = vadd.f32 %v348, %v502
  %504 = vmatprep.subr.mxu0 0.0
  %505 = vmatpush1.msra.mxu0 %v37
  %506 = vmatprep.subr.mxu0 0.0
  %507 = vmatpush1.msra.mxu0 %v36
  %508 = vmatprep.subr.mxu0 0.0
  %509 = vmatpush1.msra.mxu0 %v35
  %510 = vmatprep.subr.mxu0 0.0
  %511 = vmatpush1.msra.mxu0 %v34
  %512 = vmatprep.subr.mxu0 0.0
  %513 = vmatpush1.msra.mxu0 %v33
  %514 = vmatprep.subr.mxu0 0.0
  %515 = vmatpush1.msra.mxu0 %v32
  %516 = vmatprep.subr.mxu0 0.0
  %517 = vmatpush1.msra.mxu0 %v31
  %518 = vmatprep.subr.mxu0 0.0
  %519 = vmatpush1.msra.mxu0 %v30
  %520 = vmatprep.subr.mxu0 0.0
  %521 = vmatpush1.msra.mxu0 %v29
  %522 = vmatprep.subr.mxu0 0.0
  %523 = vmatpush1.msra.mxu0 %v28
  %524 = vmatprep.subr.mxu0 0.0
  %525 = vmatpush1.msra.mxu0 %v27
  %526 = vmatprep.subr.mxu0 0.0
  %527 = vmatpush1.msra.mxu0 %v26
  %528 = vmatprep.subr.mxu0 0.0
  %529 = vmatpush1.msra.mxu0 %v25
  %530 = vmatprep.subr.mxu0 0.0
  %531 = vmatpush1.msra.mxu0 %v24
  %532 = vmatprep.subr.mxu0 0.0
  %533 = vmatpush1.msra.mxu0 %v23
  %534 = vmatprep.subr.mxu0 0.0
  %535 = vmatpush1.msra.mxu0 %v22
  %536 = vmatprep.subr.mxu0 0.0
  %537 = vmatpush2.msra.mxu0 0.0
  %538 = vmatprep.subr.mxu0 0.0
  %539 = vmatpush2.msra.mxu0 0.0
  %540 = vmatprep.subr.mxu0 0.0
  %541 = vmatpush2.msra.mxu0 0.0
  %542 = vmatprep.subr.mxu0 0.0
  %543 = vmatpush2.msra.mxu0 0.0
  %544 = vmatprep.subr.mxu0 0.0
  %545 = vmatpush2.msra.mxu0 0.0
  %546 = vmatprep.subr.mxu0 0.0
  %547 = vmatpush2.msra.mxu0 0.0
  %548 = vmatprep.subr.mxu0 0.0
  %549 = vmatpush2.msra.mxu0 0.0
  %550 = vmatprep.subr.mxu0 0.0
  %551 = vmatpush2.msra.mxu0 0.0
  %552 = vmatprep.subr.mxu0 0.0
  %553 = vmatpush2.msra.mxu0 0.0
  %554 = vmatprep.subr.mxu0 0.0
  %555 = vmatpush2.msra.mxu0 0.0
  %556 = vmatprep.subr.mxu0 0.0
  %557 = vmatpush2.msra.mxu0 0.0
  %558 = vmatprep.subr.mxu0 0.0
  %559 = vmatpush2.msra.mxu0 0.0
  %560 = vmatprep.subr.mxu0 0.0
  %561 = vmatpush2.msra.mxu0 0.0
  %562 = vmatprep.subr.mxu0 0.0
  %563 = vmatpush2.msra.mxu0 0.0
  %564 = vmatprep.subr.mxu0 0.0
  %565 = vmatpush2.msra.mxu0 0.0
  %566 = vmatprep.subr.mxu0 0.0
  %567 = vmatpush2.msra.mxu0 0.0
  %568 = vmatprep.mubr.f32.mxu0 0.0
  %569 = vmatmul.mubr.f32.gmra.mxu0 %v503
  %v570 = vpop.f32.mrf.mxu0
  %v571 = vadd.f32 0.0, %v570
  %v572 = vpop.f32.mrf.mxu0
  %573 = vdwg.mxu0
  %v574 = vsub.f32 0.0, %v503
  %v575 = vadd.f32 %v351, %v571
  %v576 = vtanh.pop %v575
  %v577 = vadd.f32 %v574, %v576
  %v578 = vmul.f32 %v577, 0.1
  %v579 = vadd.f32 %v348, %v578
  %580 = vmatprep.subr.mxu0 0.0
  %581 = vmatpush1.msra.mxu0 %v37
  %582 = vmatprep.subr.mxu0 0.0
  %583 = vmatpush1.msra.mxu0 %v36
  %584 = vmatprep.subr.mxu0 0.0
  %585 = vmatpush1.msra.mxu0 %v35
  %586 = vmatprep.subr.mxu0 0.0
  %587 = vmatpush1.msra.mxu0 %v34
  %588 = vmatprep.subr.mxu0 0.0
  %589 = vmatpush1.msra.mxu0 %v33
  %590 = vmatprep.subr.mxu0 0.0
  %591 = vmatpush1.msra.mxu0 %v32
  %592 = vmatprep.subr.mxu0 0.0
  %593 = vmatpush1.msra.mxu0 %v31
  %594 = vmatprep.subr.mxu0 0.0
  %595 = vmatpush1.msra.mxu0 %v30
  %596 = vmatprep.subr.mxu0 0.0
  %597 = vmatpush1.msra.mxu0 %v29
  %598 = vmatprep.subr.mxu0 0.0
  %599 = vmatpush1.msra.mxu0 %v28
  %600 = vmatprep.subr.mxu0 0.0
  %601 = vmatpush1.msra.mxu0 %v27
  %602 = vmatprep.subr.mxu0 0.0
  %603 = vmatpush1.msra.mxu0 %v26
  %604 = vmatprep.subr.mxu0 0.0
  %605 = vmatpush1.msra.mxu0 %v25
  %606 = vmatprep.subr.mxu0 0.0
  %607 = vmatpush1.msra.mxu0 %v24
  %608 = vmatprep.subr.mxu0 0.0
  %609 = vmatpush1.msra.mxu0 %v23
  %610 = vmatprep.subr.mxu0 0.0
  %611 = vmatpush1.msra.mxu0 %v22
  %612 = vmatprep.subr.mxu0 0.0
  %613 = vmatpush2.msra.mxu0 0.0
  %614 = vmatprep.subr.mxu0 0.0
  %615 = vmatpush2.msra.mxu0 0.0
  %616 = vmatprep.subr.mxu0 0.0
  %617 = vmatpush2.msra.mxu0 0.0
  %618 = vmatprep.subr.mxu0 0.0
  %619 = vmatpush2.msra.mxu0 0.0
  %620 = vmatprep.subr.mxu0 0.0
  %621 = vmatpush2.msra.mxu0 0.0
  %622 = vmatprep.subr.mxu0 0.0
  %623 = vmatpush2.msra.mxu0 0.0
  %624 = vmatprep.subr.mxu0 0.0
  %625 = vmatpush2.msra.mxu0 0.0
  %626 = vmatprep.subr.mxu0 0.0
  %627 = vmatpush2.msra.mxu0 0.0
  %628 = vmatprep.subr.mxu0 0.0
  %629 = vmatpush2.msra.mxu0 0.0
  %630 = vmatprep.subr.mxu0 0.0
  %631 = vmatpush2.msra.mxu0 0.0
  %632 = vmatprep.subr.mxu0 0.0
  %633 = vmatpush2.msra.mxu0 0.0
  %634 = vmatprep.subr.mxu0 0.0
  %635 = vmatpush2.msra.mxu0 0.0
  %636 = vmatprep.subr.mxu0 0.0
  %637 = vmatpush2.msra.mxu0 0.0
  %638 = vmatprep.subr.mxu0 0.0
  %639 = vmatpush2.msra.mxu0 0.0
  %640 = vmatprep.subr.mxu0 0.0
  %641 = vmatpush2.msra.mxu0 0.0
  %642 = vmatprep.subr.mxu0 0.0
  %643 = vmatpush2.msra.mxu0 0.0
  %644 = vmatprep.mubr.f32.mxu0 0.0
  %645 = vmatmul.mubr.f32.gmra.mxu0 %v579
  %v646 = vpop.f32.mrf.mxu0
  %v647 = vadd.f32 0.0, %v646
  %v648 = vpop.f32.mrf.mxu0
  %649 = vdwg.mxu0
  %v650 = vsub.f32 0.0, %v579
  %v651 = vadd.f32 %v351, %v647
  %v652 = vtanh.pop %v651
  %v653 = vadd.f32 %v650, %v652
  %v654 = vmul.f32 %v501, 2.0
  %v655 = vadd.f32 %v425, %v654
  %v656 = vmul.f32 %v577, 2.0
  %v657 = vadd.f32 %v655, %v656
  %v658 = vadd.f32 %v657, %v653
  %v659 = vmul.f32 %v658, 0.016666668
  %v660 = vadd.f32 %v348, %v659
  %s661 = scalar_lea.vmem [#allocation2], 8
  %662 = vst [vmem:[%s661] sm:$0xff] %v660
  %s663 = scalar_lea.vmem %s0, 16
  %v664 = vld [vmem:[%s663] sm:$0xff]
  %665 = vmatprep.subr.mxu0 0.0
  %666 = vmatpush1.msra.mxu0 %v37
  %667 = vmatprep.subr.mxu0 0.0
  %668 = vmatpush1.msra.mxu0 %v36
  %669 = vmatprep.subr.mxu0 0.0
  %670 = vmatpush1.msra.mxu0 %v35
  %671 = vmatprep.subr.mxu0 0.0
  %672 = vmatpush1.msra.mxu0 %v34
  %673 = vmatprep.subr.mxu0 0.0
  %674 = vmatpush1.msra.mxu0 %v33
  %675 = vmatprep.subr.mxu0 0.0
  %676 = vmatpush1.msra.mxu0 %v32
  %677 = vmatprep.subr.mxu0 0.0
  %678 = vmatpush1.msra.mxu0 %v31
  %679 = vmatprep.subr.mxu0 0.0
  %680 = vmatpush1.msra.mxu0 %v30
  %681 = vmatprep.subr.mxu0 0.0
  %682 = vmatpush1.msra.mxu0 %v29
  %683 = vmatprep.subr.mxu0 0.0
  %684 = vmatpush1.msra.mxu0 %v28
  %685 = vmatprep.subr.mxu0 0.0
  %686 = vmatpush1.msra.mxu0 %v27
  %687 = vmatprep.subr.mxu0 0.0
  %688 = vmatpush1.msra.mxu0 %v26
  %689 = vmatprep.subr.mxu0 0.0
  %690 = vmatpush1.msra.mxu0 %v25
  %691 = vmatprep.subr.mxu0 0.0
  %692 = vmatpush1.msra.mxu0 %v24
  %693 = vmatprep.subr.mxu0 0.0
  %694 = vmatpush1.msra.mxu0 %v23
  %695 = vmatprep.subr.mxu0 0.0
  %696 = vmatpush1.msra.mxu0 %v22
  %697 = vmatprep.subr.mxu0 0.0
  %698 = vmatpush2.msra.mxu0 0.0
  %699 = vmatprep.subr.mxu0 0.0
  %700 = vmatpush2.msra.mxu0 0.0
  %701 = vmatprep.subr.mxu0 0.0
  %702 = vmatpush2.msra.mxu0 0.0
  %703 = vmatprep.subr.mxu0 0.0
  %704 = vmatpush2.msra.mxu0 0.0
  %705 = vmatprep.subr.mxu0 0.0
  %706 = vmatpush2.msra.mxu0 0.0
  %707 = vmatprep.subr.mxu0 0.0
  %708 = vmatpush2.msra.mxu0 0.0
  %709 = vmatprep.subr.mxu0 0.0
  %710 = vmatpush2.msra.mxu0 0.0
  %711 = vmatprep.subr.mxu0 0.0
  %712 = vmatpush2.msra.mxu0 0.0
  %713 = vmatprep.subr.mxu0 0.0
  %714 = vmatpush2.msra.mxu0 0.0
  %715 = vmatprep.subr.mxu0 0.0
  %716 = vmatpush2.msra.mxu0 0.0
  %717 = vmatprep.subr.mxu0 0.0
  %718 = vmatpush2.msra.mxu0 0.0
  %719 = vmatprep.subr.mxu0 0.0
  %720 = vmatpush2.msra.mxu0 0.0
  %721 = vmatprep.subr.mxu0 0.0
  %722 = vmatpush2.msra.mxu0 0.0
  %723 = vmatprep.subr.mxu0 0.0
  %724 = vmatpush2.msra.mxu0 0.0
  %725 = vmatprep.subr.mxu0 0.0
  %726 = vmatpush2.msra.mxu0 0.0
  %727 = vmatprep.subr.mxu0 0.0
  %728 = vmatpush2.msra.mxu0 0.0
  %729 = vmatprep.mubr.f32.mxu0 0.0
  %730 = vmatmul.mubr.f32.gmra.mxu0 %v660
  %v731 = vpop.f32.mrf.mxu0
  %v732 = vadd.f32 0.0, %v731
  %v733 = vpop.f32.mrf.mxu0
  %734 = vdwg.mxu0
  %v735 = vsub.f32 0.0, %v660
  %v736 = vadd.f32 %v664, %v732
  %v737 = vtanh.pop %v736
  %v738 = vadd.f32 %v735, %v737
  %v739 = vmul.f32 %v738, 0.05
  %v740 = vadd.f32 %v660, %v739
  %741 = vmatprep.subr.mxu0 0.0
  %742 = vmatpush1.msra.mxu0 %v37
  %743 = vmatprep.subr.mxu0 0.0
  %744 = vmatpush1.msra.mxu0 %v36
  %745 = vmatprep.subr.mxu0 0.0
  %746 = vmatpush1.msra.mxu0 %v35
  %747 = vmatprep.subr.mxu0 0.0
  %748 = vmatpush1.msra.mxu0 %v34
  %749 = vmatprep.subr.mxu0 0.0
  %750 = vmatpush1.msra.mxu0 %v33
  %751 = vmatprep.subr.mxu0 0.0
  %752 = vmatpush1.msra.mxu0 %v32
  %753 = vmatprep.subr.mxu0 0.0
  %754 = vmatpush1.msra.mxu0 %v31
  %755 = vmatprep.subr.mxu0 0.0
  %756 = vmatpush1.msra.mxu0 %v30
  %757 = vmatprep.subr.mxu0 0.0
  %758 = vmatpush1.msra.mxu0 %v29
  %759 = vmatprep.subr.mxu0 0.0
  %760 = vmatpush1.msra.mxu0 %v28
  %761 = vmatprep.subr.mxu0 0.0
  %762 = vmatpush1.msra.mxu0 %v27
  %763 = vmatprep.subr.mxu0 0.0
  %764 = vmatpush1.msra.mxu0 %v26
  %765 = vmatprep.subr.mxu0 0.0
  %766 = vmatpush1.msra.mxu0 %v25
  %767 = vmatprep.subr.mxu0 0.0
  %768 = vmatpush1.msra.mxu0 %v24
  %769 = vmatprep.subr.mxu0 0.0
  %770 = vmatpush1.msra.mxu0 %v23
  %771 = vmatprep.subr.mxu0 0.0
  %772 = vmatpush1.msra.mxu0 %v22
  %773 = vmatprep.subr.mxu0 0.0
  %774 = vmatpush2.msra.mxu0 0.0
  %775 = vmatprep.subr.mxu0 0.0
  %776 = vmatpush2.msra.mxu0 0.0
  %777 = vmatprep.subr.mxu0 0.0
  %778 = vmatpush2.msra.mxu0 0.0
  %779 = vmatprep.subr.mxu0 0.0
  %780 = vmatpush2.msra.mxu0 0.0
  %781 = vmatprep.subr.mxu0 0.0
  %782 = vmatpush2.msra.mxu0 0.0
  %783 = vmatprep.subr.mxu0 0.0
  %784 = vmatpush2.msra.mxu0 0.0
  %785 = vmatprep.subr.mxu0 0.0
  %786 = vmatpush2.msra.mxu0 0.0
  %787 = vmatprep.subr.mxu0 0.0
  %788 = vmatpush2.msra.mxu0 0.0
  %789 = vmatprep.subr.mxu0 0.0
  %790 = vmatpush2.msra.mxu0 0.0
  %791 = vmatprep.subr.mxu0 0.0
  %792 = vmatpush2.msra.mxu0 0.0
  %793 = vmatprep.subr.mxu0 0.0
  %794 = vmatpush2.msra.mxu0 0.0
  %795 = vmatprep.subr.mxu0 0.0
  %796 = vmatpush2.msra.mxu0 0.0
  %797 = vmatprep.subr.mxu0 0.0
  %798 = vmatpush2.msra.mxu0 0.0
  %799 = vmatprep.subr.mxu0 0.0
  %800 = vmatpush2.msra.mxu0 0.0
  %801 = vmatprep.subr.mxu0 0.0
  %802 = vmatpush2.msra.mxu0 0.0
  %803 = vmatprep.subr.mxu0 0.0
  %804 = vmatpush2.msra.mxu0 0.0
  %805 = vmatprep.mubr.f32.mxu0 0.0
  %806 = vmatmul.mubr.f32.gmra.mxu0 %v740
  %v807 = vpop.f32.mrf.mxu0
  %v808 = vadd.f32 0.0, %v807
  %v809 = vpop.f32.mrf.mxu0
  %810 = vdwg.mxu0
  %v811 = vsub.f32 0.0, %v740
  %v812 = vadd.f32 %v664, %v808
  %v813 = vtanh.pop %v812
  %v814 = vadd.f32 %v811, %v813
  %v815 = vmul.f32 %v814, 0.05
  %v816 = vadd.f32 %v660, %v815
  %817 = vmatprep.subr.mxu0 0.0
  %818 = vmatpush1.msra.mxu0 %v37
  %819 = vmatprep.subr.mxu0 0.0
  %820 = vmatpush1.msra.mxu0 %v36
  %821 = vmatprep.subr.mxu0 0.0
  %822 = vmatpush1.msra.mxu0 %v35
  %823 = vmatprep.subr.mxu0 0.0
  %824 = vmatpush1.msra.mxu0 %v34
  %825 = vmatprep.subr.mxu0 0.0
  %826 = vmatpush1.msra.mxu0 %v33
  %827 = vmatprep.subr.mxu0 0.0
  %828 = vmatpush1.msra.mxu0 %v32
  %829 = vmatprep.subr.mxu0 0.0
  %830 = vmatpush1.msra.mxu0 %v31
  %831 = vmatprep.subr.mxu0 0.0
  %832 = vmatpush1.msra.mxu0 %v30
  %833 = vmatprep.subr.mxu0 0.0
  %834 = vmatpush1.msra.mxu0 %v29
  %835 = vmatprep.subr.mxu0 0.0
  %836 = vmatpush1.msra.mxu0 %v28
  %837 = vmatprep.subr.mxu0 0.0
  %838 = vmatpush1.msra.mxu0 %v27
  %839 = vmatprep.subr.mxu0 0.0
  %840 = vmatpush1.msra.mxu0 %v26
  %841 = vmatprep.subr.mxu0 0.0
  %842 = vmatpush1.msra.mxu0 %v25
  %843 = vmatprep.subr.mxu0 0.0
  %844 = vmatpush1.msra.mxu0 %v24
  %845 = vmatprep.subr.mxu0 0.0
  %846 = vmatpush1.msra.mxu0 %v23
  %847 = vmatprep.subr.mxu0 0.0
  %848 = vmatpush1.msra.mxu0 %v22
  %849 = vmatprep.subr.mxu0 0.0
  %850 = vmatpush2.msra.mxu0 0.0
  %851 = vmatprep.subr.mxu0 0.0
  %852 = vmatpush2.msra.mxu0 0.0
  %853 = vmatprep.subr.mxu0 0.0
  %854 = vmatpush2.msra.mxu0 0.0
  %855 = vmatprep.subr.mxu0 0.0
  %856 = vmatpush2.msra.mxu0 0.0
  %857 = vmatprep.subr.mxu0 0.0
  %858 = vmatpush2.msra.mxu0 0.0
  %859 = vmatprep.subr.mxu0 0.0
  %860 = vmatpush2.msra.mxu0 0.0
  %861 = vmatprep.subr.mxu0 0.0
  %862 = vmatpush2.msra.mxu0 0.0
  %863 = vmatprep.subr.mxu0 0.0
  %864 = vmatpush2.msra.mxu0 0.0
  %865 = vmatprep.subr.mxu0 0.0
  %866 = vmatpush2.msra.mxu0 0.0
  %867 = vmatprep.subr.mxu0 0.0
  %868 = vmatpush2.msra.mxu0 0.0
  %869 = vmatprep.subr.mxu0 0.0
  %870 = vmatpush2.msra.mxu0 0.0
  %871 = vmatprep.subr.mxu0 0.0
  %872 = vmatpush2.msra.mxu0 0.0
  %873 = vmatprep.subr.mxu0 0.0
  %874 = vmatpush2.msra.mxu0 0.0
  %875 = vmatprep.subr.mxu0 0.0
  %876 = vmatpush2.msra.mxu0 0.0
  %877 = vmatprep.subr.mxu0 0.0
  %878 = vmatpush2.msra.mxu0 0.0
  %879 = vmatprep.subr.mxu0 0.0
  %880 = vmatpush2.msra.mxu0 0.0
  %881 = vmatprep.mubr.f32.mxu0 0.0
  %882 = vmatmul.mubr.f32.gmra.mxu0 %v816
  %v883 = vpop.f32.mrf.mxu0
  %v884 = vadd.f32 0.0, %v883
  %v885 = vpop.f32.mrf.mxu0
  %886 = vdwg.mxu0
  %v887 = vsub.f32 0.0, %v816
  %v888 = vadd.f32 %v664, %v884
  %v889 = vtanh.pop %v888
  %v890 = vadd.f32 %v887, %v889
  %v891 = vmul.f32 %v890, 0.1
  %v892 = vadd.f32 %v660, %v891
  %893 = vmatprep.subr.mxu0 0.0
  %894 = vmatpush1.msra.mxu0 %v37
  %895 = vmatprep.subr.mxu0 0.0
  %896 = vmatpush1.msra.mxu0 %v36
  %897 = vmatprep.subr.mxu0 0.0
  %898 = vmatpush1.msra.mxu0 %v35
  %899 = vmatprep.subr.mxu0 0.0
  %900 = vmatpush1.msra.mxu0 %v34
  %901 = vmatprep.subr.mxu0 0.0
  %902 = vmatpush1.msra.mxu0 %v33
  %903 = vmatprep.subr.mxu0 0.0
  %904 = vmatpush1.msra.mxu0 %v32
  %905 = vmatprep.subr.mxu0 0.0
  %906 = vmatpush1.msra.mxu0 %v31
  %907 = vmatprep.subr.mxu0 0.0
  %908 = vmatpush1.msra.mxu0 %v30
  %909 = vmatprep.subr.mxu0 0.0
  %910 = vmatpush1.msra.mxu0 %v29
  %911 = vmatprep.subr.mxu0 0.0
  %912 = vmatpush1.msra.mxu0 %v28
  %913 = vmatprep.subr.mxu0 0.0
  %914 = vmatpush1.msra.mxu0 %v27
  %915 = vmatprep.subr.mxu0 0.0
  %916 = vmatpush1.msra.mxu0 %v26
  %917 = vmatprep.subr.mxu0 0.0
  %918 = vmatpush1.msra.mxu0 %v25
  %919 = vmatprep.subr.mxu0 0.0
  %920 = vmatpush1.msra.mxu0 %v24
  %921 = vmatprep.subr.mxu0 0.0
  %922 = vmatpush1.msra.mxu0 %v23
  %923 = vmatprep.subr.mxu0 0.0
  %924 = vmatpush1.msra.mxu0 %v22
  %925 = vmatprep.subr.mxu0 0.0
  %926 = vmatpush2.msra.mxu0 0.0
  %927 = vmatprep.subr.mxu0 0.0
  %928 = vmatpush2.msra.mxu0 0.0
  %929 = vmatprep.subr.mxu0 0.0
  %930 = vmatpush2.msra.mxu0 0.0
  %931 = vmatprep.subr.mxu0 0.0
  %932 = vmatpush2.msra.mxu0 0.0
  %933 = vmatprep.subr.mxu0 0.0
  %934 = vmatpush2.msra.mxu0 0.0
  %935 = vmatprep.subr.mxu0 0.0
  %936 = vmatpush2.msra.mxu0 0.0
  %937 = vmatprep.subr.mxu0 0.0
  %938 = vmatpush2.msra.mxu0 0.0
  %939 = vmatprep.subr.mxu0 0.0
  %940 = vmatpush2.msra.mxu0 0.0
  %941 = vmatprep.subr.mxu0 0.0
  %942 = vmatpush2.msra.mxu0 0.0
  %943 = vmatprep.subr.mxu0 0.0
  %944 = vmatpush2.msra.mxu0 0.0
  %945 = vmatprep.subr.mxu0 0.0
  %946 = vmatpush2.msra.mxu0 0.0
  %947 = vmatprep.subr.mxu0 0.0
  %948 = vmatpush2.msra.mxu0 0.0
  %949 = vmatprep.subr.mxu0 0.0
  %950 = vmatpush2.msra.mxu0 0.0
  %951 = vmatprep.subr.mxu0 0.0
  %952 = vmatpush2.msra.mxu0 0.0
  %953 = vmatprep.subr.mxu0 0.0
  %954 = vmatpush2.msra.mxu0 0.0
  %955 = vmatprep.subr.mxu0 0.0
  %956 = vmatpush2.msra.mxu0 0.0
  %957 = vmatprep.mubr.f32.mxu0 0.0
  %958 = vmatmul.mubr.f32.gmra.mxu0 %v892
  %v959 = vpop.f32.mrf.mxu0
  %v960 = vadd.f32 0.0, %v959
  %v961 = vpop.f32.mrf.mxu0
  %962 = vdwg.mxu0
  %v963 = vsub.f32 0.0, %v892
  %v964 = vadd.f32 %v664, %v960
  %v965 = vtanh.pop %v964
  %v966 = vadd.f32 %v963, %v965
  %v967 = vmul.f32 %v814, 2.0
  %v968 = vadd.f32 %v738, %v967
  %v969 = vmul.f32 %v890, 2.0
  %v970 = vadd.f32 %v968, %v969
  %v971 = vadd.f32 %v970, %v966
  %v972 = vmul.f32 %v971, 0.016666668
  %v973 = vadd.f32 %v660, %v972
  %s974 = scalar_lea.vmem [#allocation2], 16
  %975 = vst [vmem:[%s974] sm:$0xff] %v973
  %s976 = scalar_lea.vmem %s0, 24
  %v977 = vld [vmem:[%s976] sm:$0xff]
  %978 = vmatprep.subr.mxu0 0.0
  %979 = vmatpush1.msra.mxu0 %v37
  %980 = vmatprep.subr.mxu0 0.0
  %981 = vmatpush1.msra.mxu0 %v36
  %982 = vmatprep.subr.mxu0 0.0
  %983 = vmatpush1.msra.mxu0 %v35
  %984 = vmatprep.subr.mxu0 0.0
  %985 = vmatpush1.msra.mxu0 %v34
  %986 = vmatprep.subr.mxu0 0.0
  %987 = vmatpush1.msra.mxu0 %v33
  %988 = vmatprep.subr.mxu0 0.0
  %989 = vmatpush1.msra.mxu0 %v32
  %990 = vmatprep.subr.mxu0 0.0
  %991 = vmatpush1.msra.mxu0 %v31
  %992 = vmatprep.subr.mxu0 0.0
  %993 = vmatpush1.msra.mxu0 %v30
  %994 = vmatprep.subr.mxu0 0.0
  %995 = vmatpush1.msra.mxu0 %v29
  %996 = vmatprep.subr.mxu0 0.0
  %997 = vmatpush1.msra.mxu0 %v28
  %998 = vmatprep.subr.mxu0 0.0
  %999 = vmatpush1.msra.mxu0 %v27
  %1000 = vmatprep.subr.mxu0 0.0
  %1001 = vmatpush1.msra.mxu0 %v26
  %1002 = vmatprep.subr.mxu0 0.0
  %1003 = vmatpush1.msra.mxu0 %v25
  %1004 = vmatprep.subr.mxu0 0.0
  %1005 = vmatpush1.msra.mxu0 %v24
  %1006 = vmatprep.subr.mxu0 0.0
  %1007 = vmatpush1.msra.mxu0 %v23
  %1008 = vmatprep.subr.mxu0 0.0
  %1009 = vmatpush1.msra.mxu0 %v22
  %1010 = vmatprep.subr.mxu0 0.0
  %1011 = vmatpush2.msra.mxu0 0.0
  %1012 = vmatprep.subr.mxu0 0.0
  %1013 = vmatpush2.msra.mxu0 0.0
  %1014 = vmatprep.subr.mxu0 0.0
  %1015 = vmatpush2.msra.mxu0 0.0
  %1016 = vmatprep.subr.mxu0 0.0
  %1017 = vmatpush2.msra.mxu0 0.0
  %1018 = vmatprep.subr.mxu0 0.0
  %1019 = vmatpush2.msra.mxu0 0.0
  %1020 = vmatprep.subr.mxu0 0.0
  %1021 = vmatpush2.msra.mxu0 0.0
  %1022 = vmatprep.subr.mxu0 0.0
  %1023 = vmatpush2.msra.mxu0 0.0
  %1024 = vmatprep.subr.mxu0 0.0
  %1025 = vmatpush2.msra.mxu0 0.0
  %1026 = vmatprep.subr.mxu0 0.0
  %1027 = vmatpush2.msra.mxu0 0.0
  %1028 = vmatprep.subr.mxu0 0.0
  %1029 = vmatpush2.msra.mxu0 0.0
  %1030 = vmatprep.subr.mxu0 0.0
  %1031 = vmatpush2.msra.mxu0 0.0
  %1032 = vmatprep.subr.mxu0 0.0
  %1033 = vmatpush2.msra.mxu0 0.0
  %1034 = vmatprep.subr.mxu0 0.0
  %1035 = vmatpush2.msra.mxu0 0.0
  %1036 = vmatprep.subr.mxu0 0.0
  %1037 = vmatpush2.msra.mxu0 0.0
  %1038 = vmatprep.subr.mxu0 0.0
  %1039 = vmatpush2.msra.mxu0 0.0
  %1040 = vmatprep.subr.mxu0 0.0
  %1041 = vmatpush2.msra.mxu0 0.0
  %1042 = vmatprep.mubr.f32.mxu0 0.0
  %1043 = vmatmul.mubr.f32.gmra.mxu0 %v973
  %v1044 = vpop.f32.mrf.mxu0
  %v1045 = vadd.f32 0.0, %v1044
  %v1046 = vpop.f32.mrf.mxu0
  %1047 = vdwg.mxu0
  %v1048 = vsub.f32 0.0, %v973
  %v1049 = vadd.f32 %v977, %v1045
  %v1050 = vtanh.pop %v1049
  %v1051 = vadd.f32 %v1048, %v1050
  %v1052 = vmul.f32 %v1051, 0.05
  %v1053 = vadd.f32 %v973, %v1052
  %1054 = vmatprep.subr.mxu0 0.0
  %1055 = vmatpush1.msra.mxu0 %v37
  %1056 = vmatprep.subr.mxu0 0.0
  %1057 = vmatpush1.msra.mxu0 %v36
  %1058 = vmatprep.subr.mxu0 0.0
  %1059 = vmatpush1.msra.mxu0 %v35
  %1060 = vmatprep.subr.mxu0 0.0
  %1061 = vmatpush1.msra.mxu0 %v34
  %1062 = vmatprep.subr.mxu0 0.0
  %1063 = vmatpush1.msra.mxu0 %v33
  %1064 = vmatprep.subr.mxu0 0.0
  %1065 = vmatpush1.msra.mxu0 %v32
  %1066 = vmatprep.subr.mxu0 0.0
  %1067 = vmatpush1.msra.mxu0 %v31
  %1068 = vmatprep.subr.mxu0 0.0
  %1069 = vmatpush1.msra.mxu0 %v30
  %1070 = vmatprep.subr.mxu0 0.0
  %1071 = vmatpush1.msra.mxu0 %v29
  %1072 = vmatprep.subr.mxu0 0.0
  %1073 = vmatpush1.msra.mxu0 %v28
  %1074 = vmatprep.subr.mxu0 0.0
  %1075 = vmatpush1.msra.mxu0 %v27
  %1076 = vmatprep.subr.mxu0 0.0
  %1077 = vmatpush1.msra.mxu0 %v26
  %1078 = vmatprep.subr.mxu0 0.0
  %1079 = vmatpush1.msra.mxu0 %v25
  %1080 = vmatprep.subr.mxu0 0.0
  %1081 = vmatpush1.msra.mxu0 %v24
  %1082 = vmatprep.subr.mxu0 0.0
  %1083 = vmatpush1.msra.mxu0 %v23
  %1084 = vmatprep.subr.mxu0 0.0
  %1085 = vmatpush1.msra.mxu0 %v22
  %1086 = vmatprep.subr.mxu0 0.0
  %1087 = vmatpush2.msra.mxu0 0.0
  %1088 = vmatprep.subr.mxu0 0.0
  %1089 = vmatpush2.msra.mxu0 0.0
  %1090 = vmatprep.subr.mxu0 0.0
  %1091 = vmatpush2.msra.mxu0 0.0
  %1092 = vmatprep.subr.mxu0 0.0
  %1093 = vmatpush2.msra.mxu0 0.0
  %1094 = vmatprep.subr.mxu0 0.0
  %1095 = vmatpush2.msra.mxu0 0.0
  %1096 = vmatprep.subr.mxu0 0.0
  %1097 = vmatpush2.msra.mxu0 0.0
  %1098 = vmatprep.subr.mxu0 0.0
  %1099 = vmatpush2.msra.mxu0 0.0
  %1100 = vmatprep.subr.mxu0 0.0
  %1101 = vmatpush2.msra.mxu0 0.0
  %1102 = vmatprep.subr.mxu0 0.0
  %1103 = vmatpush2.msra.mxu0 0.0
  %1104 = vmatprep.subr.mxu0 0.0
  %1105 = vmatpush2.msra.mxu0 0.0
  %1106 = vmatprep.subr.mxu0 0.0
  %1107 = vmatpush2.msra.mxu0 0.0
  %1108 = vmatprep.subr.mxu0 0.0
  %1109 = vmatpush2.msra.mxu0 0.0
  %1110 = vmatprep.subr.mxu0 0.0
  %1111 = vmatpush2.msra.mxu0 0.0
  %1112 = vmatprep.subr.mxu0 0.0
  %1113 = vmatpush2.msra.mxu0 0.0
  %1114 = vmatprep.subr.mxu0 0.0
  %1115 = vmatpush2.msra.mxu0 0.0
  %1116 = vmatprep.subr.mxu0 0.0
  %1117 = vmatpush2.msra.mxu0 0.0
  %1118 = vmatprep.mubr.f32.mxu0 0.0
  %1119 = vmatmul.mubr.f32.gmra.mxu0 %v1053
  %v1120 = vpop.f32.mrf.mxu0
  %v1121 = vadd.f32 0.0, %v1120
  %v1122 = vpop.f32.mrf.mxu0
  %1123 = vdwg.mxu0
  %v1124 = vsub.f32 0.0, %v1053
  %v1125 = vadd.f32 %v977, %v1121
  %v1126 = vtanh.pop %v1125
  %v1127 = vadd.f32 %v1124, %v1126
  %v1128 = vmul.f32 %v1127, 0.05
  %v1129 = vadd.f32 %v973, %v1128
  %1130 = vmatprep.subr.mxu0 0.0
  %1131 = vmatpush1.msra.mxu0 %v37
  %1132 = vmatprep.subr.mxu0 0.0
  %1133 = vmatpush1.msra.mxu0 %v36
  %1134 = vmatprep.subr.mxu0 0.0
  %1135 = vmatpush1.msra.mxu0 %v35
  %1136 = vmatprep.subr.mxu0 0.0
  %1137 = vmatpush1.msra.mxu0 %v34
  %1138 = vmatprep.subr.mxu0 0.0
  %1139 = vmatpush1.msra.mxu0 %v33
  %1140 = vmatprep.subr.mxu0 0.0
  %1141 = vmatpush1.msra.mxu0 %v32
  %1142 = vmatprep.subr.mxu0 0.0
  %1143 = vmatpush1.msra.mxu0 %v31
  %1144 = vmatprep.subr.mxu0 0.0
  %1145 = vmatpush1.msra.mxu0 %v30
  %1146 = vmatprep.subr.mxu0 0.0
  %1147 = vmatpush1.msra.mxu0 %v29
  %1148 = vmatprep.subr.mxu0 0.0
  %1149 = vmatpush1.msra.mxu0 %v28
  %1150 = vmatprep.subr.mxu0 0.0
  %1151 = vmatpush1.msra.mxu0 %v27
  %1152 = vmatprep.subr.mxu0 0.0
  %1153 = vmatpush1.msra.mxu0 %v26
  %1154 = vmatprep.subr.mxu0 0.0
  %1155 = vmatpush1.msra.mxu0 %v25
  %1156 = vmatprep.subr.mxu0 0.0
  %1157 = vmatpush1.msra.mxu0 %v24
  %1158 = vmatprep.subr.mxu0 0.0
  %1159 = vmatpush1.msra.mxu0 %v23
  %1160 = vmatprep.subr.mxu0 0.0
  %1161 = vmatpush1.msra.mxu0 %v22
  %1162 = vmatprep.subr.mxu0 0.0
  %1163 = vmatpush2.msra.mxu0 0.0
  %1164 = vmatprep.subr.mxu0 0.0
  %1165 = vmatpush2.msra.mxu0 0.0
  %1166 = vmatprep.subr.mxu0 0.0
  %1167 = vmatpush2.msra.mxu0 0.0
  %1168 = vmatprep.subr.mxu0 0.0
  %1169 = vmatpush2.msra.mxu0 0.0
  %1170 = vmatprep.subr.mxu0 0.0
  %1171 = vmatpush2.msra.mxu0 0.0
  %1172 = vmatprep.subr.mxu0 0.0
  %1173 = vmatpush2.msra.mxu0 0.0
  %1174 = vmatprep.subr.mxu0 0.0
  %1175 = vmatpush2.msra.mxu0 0.0
  %1176 = vmatprep.subr.mxu0 0.0
  %1177 = vmatpush2.msra.mxu0 0.0
  %1178 = vmatprep.subr.mxu0 0.0
  %1179 = vmatpush2.msra.mxu0 0.0
  %1180 = vmatprep.subr.mxu0 0.0
  %1181 = vmatpush2.msra.mxu0 0.0
  %1182 = vmatprep.subr.mxu0 0.0
  %1183 = vmatpush2.msra.mxu0 0.0
  %1184 = vmatprep.subr.mxu0 0.0
  %1185 = vmatpush2.msra.mxu0 0.0
  %1186 = vmatprep.subr.mxu0 0.0
  %1187 = vmatpush2.msra.mxu0 0.0
  %1188 = vmatprep.subr.mxu0 0.0
  %1189 = vmatpush2.msra.mxu0 0.0
  %1190 = vmatprep.subr.mxu0 0.0
  %1191 = vmatpush2.msra.mxu0 0.0
  %1192 = vmatprep.subr.mxu0 0.0
  %1193 = vmatpush2.msra.mxu0 0.0
  %1194 = vmatprep.mubr.f32.mxu0 0.0
  %1195 = vmatmul.mubr.f32.gmra.mxu0 %v1129
  %v1196 = vpop.f32.mrf.mxu0
  %v1197 = vadd.f32 0.0, %v1196
  %v1198 = vpop.f32.mrf.mxu0
  %1199 = vdwg.mxu0
  %v1200 = vsub.f32 0.0, %v1129
  %v1201 = vadd.f32 %v977, %v1197
  %v1202 = vtanh.pop %v1201
  %v1203 = vadd.f32 %v1200, %v1202
  %v1204 = vmul.f32 %v1203, 0.1
  %v1205 = vadd.f32 %v973, %v1204
  %1206 = vmatprep.subr.mxu0 0.0
  %1207 = vmatpush1.msra.mxu0 %v37
  %1208 = vmatprep.subr.mxu0 0.0
  %1209 = vmatpush1.msra.mxu0 %v36
  %1210 = vmatprep.subr.mxu0 0.0
  %1211 = vmatpush1.msra.mxu0 %v35
  %1212 = vmatprep.subr.mxu0 0.0
  %1213 = vmatpush1.msra.mxu0 %v34
  %1214 = vmatprep.subr.mxu0 0.0
  %1215 = vmatpush1.msra.mxu0 %v33
  %1216 = vmatprep.subr.mxu0 0.0
  %1217 = vmatpush1.msra.mxu0 %v32
  %1218 = vmatprep.subr.mxu0 0.0
  %1219 = vmatpush1.msra.mxu0 %v31
  %1220 = vmatprep.subr.mxu0 0.0
  %1221 = vmatpush1.msra.mxu0 %v30
  %1222 = vmatprep.subr.mxu0 0.0
  %1223 = vmatpush1.msra.mxu0 %v29
  %1224 = vmatprep.subr.mxu0 0.0
  %1225 = vmatpush1.msra.mxu0 %v28
  %1226 = vmatprep.subr.mxu0 0.0
  %1227 = vmatpush1.msra.mxu0 %v27
  %1228 = vmatprep.subr.mxu0 0.0
  %1229 = vmatpush1.msra.mxu0 %v26
  %1230 = vmatprep.subr.mxu0 0.0
  %1231 = vmatpush1.msra.mxu0 %v25
  %1232 = vmatprep.subr.mxu0 0.0
  %1233 = vmatpush1.msra.mxu0 %v24
  %1234 = vmatprep.subr.mxu0 0.0
  %1235 = vmatpush1.msra.mxu0 %v23
  %1236 = vmatprep.subr.mxu0 0.0
  %1237 = vmatpush1.msra.mxu0 %v22
  %1238 = vmatprep.subr.mxu0 0.0
  %1239 = vmatpush2.msra.mxu0 0.0
  %1240 = vmatprep.subr.mxu0 0.0
  %1241 = vmatpush2.msra.mxu0 0.0
  %1242 = vmatprep.subr.mxu0 0.0
  %1243 = vmatpush2.msra.mxu0 0.0
  %1244 = vmatprep.subr.mxu0 0.0
  %1245 = vmatpush2.msra.mxu0 0.0
  %1246 = vmatprep.subr.mxu0 0.0
  %1247 = vmatpush2.msra.mxu0 0.0
  %1248 = vmatprep.subr.mxu0 0.0
  %1249 = vmatpush2.msra.mxu0 0.0
  %1250 = vmatprep.subr.mxu0 0.0
  %1251 = vmatpush2.msra.mxu0 0.0
  %1252 = vmatprep.subr.mxu0 0.0
  %1253 = vmatpush2.msra.mxu0 0.0
  %1254 = vmatprep.subr.mxu0 0.0
  %1255 = vmatpush2.msra.mxu0 0.0
  %1256 = vmatprep.subr.mxu0 0.0
  %1257 = vmatpush2.msra.mxu0 0.0
  %1258 = vmatprep.subr.mxu0 0.0
  %1259 = vmatpush2.msra.mxu0 0.0
  %1260 = vmatprep.subr.mxu0 0.0
  %1261 = vmatpush2.msra.mxu0 0.0
  %1262 = vmatprep.subr.mxu0 0.0
  %1263 = vmatpush2.msra.mxu0 0.0
  %1264 = vmatprep.subr.mxu0 0.0
  %1265 = vmatpush2.msra.mxu0 0.0
  %1266 = vmatprep.subr.mxu0 0.0
  %1267 = vmatpush2.msra.mxu0 0.0
  %1268 = vmatprep.subr.mxu0 0.0
  %1269 = vmatpush2.msra.mxu0 0.0
  %1270 = vmatprep.mubr.f32.mxu0 0.0
  %1271 = vmatmul.mubr.f32.gmra.mxu0 %v1205
  %v1272 = vpop.f32.mrf.mxu0
  %v1273 = vadd.f32 0.0, %v1272
  %v1274 = vpop.f32.mrf.mxu0
  %1275 = vdwg.mxu0
  %v1276 = vsub.f32 0.0, %v1205
  %v1277 = vadd.f32 %v977, %v1273
  %v1278 = vtanh.pop %v1277
  %v1279 = vadd.f32 %v1276, %v1278
  %v1280 = vmul.f32 %v1127, 2.0
  %v1281 = vadd.f32 %v1051, %v1280
  %v1282 = vmul.f32 %v1203, 2.0
  %v1283 = vadd.f32 %v1281, %v1282
  %v1284 = vadd.f32 %v1283, %v1279
  %v1285 = vmul.f32 %v1284, 0.016666668
  %v1286 = vadd.f32 %v973, %v1285
  %s1287 = scalar_lea.vmem [#allocation2], 24
  %1288 = vst [vmem:[%s1287] sm:$0xff] %v1286
  %1289 = vst [vmem:[%s6] sm:$0xff] %v1286
  %v1290 = vld [vmem:[#allocation2] sm:$0xff]
  %v1291 = vld [vmem:[#allocation2 + $0x8] sm:$0xff]
  %v1292 = vld [vmem:[#allocation2 + $0x10] sm:$0xff]
  %v1293 = vld [vmem:[#allocation2 + $0x18] sm:$0xff]
  %v1294 = vld [vmem:[%s3] sm:$0xff]
  %v1295 = vld [vmem:[%s3 + $0x8] sm:$0xff]
  %v1296 = vld [vmem:[%s3 + $0x10] sm:$0xff]
  %v1297 = vld [vmem:[%s3 + $0x18] sm:$0xff]
  %v1298 = vld [vmem:[%s3 + $0x20] sm:$0xff]
  %v1299 = vld [vmem:[%s3 + $0x28] sm:$0xff]
  %v1300 = vld [vmem:[%s3 + $0x30] sm:$0xff]
  %v1301 = vld [vmem:[%s3 + $0x38] sm:$0xff]
  %v1302 = vld [vmem:[%s3 + $0x40] sm:$0xff]
  %v1303 = vld [vmem:[%s3 + $0x48] sm:$0xff]
  %v1304 = vld [vmem:[%s3 + $0x50] sm:$0xff]
  %v1305 = vld [vmem:[%s3 + $0x58] sm:$0xff]
  %v1306 = vld [vmem:[%s3 + $0x60] sm:$0xff]
  %v1307 = vld [vmem:[%s3 + $0x68] sm:$0xff]
  %v1308 = vld [vmem:[%s3 + $0x70] sm:$0xff]
  %v1309 = vld [vmem:[%s3 + $0x78] sm:$0xff]
  %v1310 = vld [vmem:[%s4] sm:$0x1]
  %v1312 = vlaneseq
  %v1313 = vshrl.u32 %v1312, 7
  %v1314 = vsub.s32 0, %v1313
  %v1315 = vrot.slane %v1310, %v1314
  %1317 = vmatprep.subr.mxu0 0.0
  %1318 = vmatpush1.msra.mxu0 %v1309
  %1319 = vmatprep.subr.mxu0 0.0
  %1320 = vmatpush1.msra.mxu0 %v1308
  %1321 = vmatprep.subr.mxu0 0.0
  %1322 = vmatpush1.msra.mxu0 %v1307
  %1323 = vmatprep.subr.mxu0 0.0
  %1324 = vmatpush1.msra.mxu0 %v1306
  %1325 = vmatprep.subr.mxu0 0.0
  %1326 = vmatpush1.msra.mxu0 %v1305
  %1327 = vmatprep.subr.mxu0 0.0
  %1328 = vmatpush1.msra.mxu0 %v1304
  %1329 = vmatprep.subr.mxu0 0.0
  %1330 = vmatpush1.msra.mxu0 %v1303
  %1331 = vmatprep.subr.mxu0 0.0
  %1332 = vmatpush1.msra.mxu0 %v1302
  %1333 = vmatprep.subr.mxu0 0.0
  %1334 = vmatpush1.msra.mxu0 %v1301
  %1335 = vmatprep.subr.mxu0 0.0
  %1336 = vmatpush1.msra.mxu0 %v1300
  %1337 = vmatprep.subr.mxu0 0.0
  %1338 = vmatpush1.msra.mxu0 %v1299
  %1339 = vmatprep.subr.mxu0 0.0
  %1340 = vmatpush1.msra.mxu0 %v1298
  %1341 = vmatprep.subr.mxu0 0.0
  %1342 = vmatpush1.msra.mxu0 %v1297
  %1343 = vmatprep.subr.mxu0 0.0
  %1344 = vmatpush1.msra.mxu0 %v1296
  %1345 = vmatprep.subr.mxu0 0.0
  %1346 = vmatpush1.msra.mxu0 %v1295
  %1347 = vmatprep.subr.mxu0 0.0
  %1348 = vmatpush1.msra.mxu0 %v1294
  %1349 = vmatprep.subr.mxu0 0.0
  %1350 = vmatpush2.msra.mxu0 0.0
  %1351 = vmatprep.subr.mxu0 0.0
  %1352 = vmatpush2.msra.mxu0 0.0
  %1353 = vmatprep.subr.mxu0 0.0
  %1354 = vmatpush2.msra.mxu0 0.0
  %1355 = vmatprep.subr.mxu0 0.0
  %1356 = vmatpush2.msra.mxu0 0.0
  %1357 = vmatprep.subr.mxu0 0.0
  %1358 = vmatpush2.msra.mxu0 0.0
  %1359 = vmatprep.subr.mxu0 0.0
  %1360 = vmatpush2.msra.mxu0 0.0
  %1361 = vmatprep.subr.mxu0 0.0
  %1362 = vmatpush2.msra.mxu0 0.0
  %1363 = vmatprep.subr.mxu0 0.0
  %1364 = vmatpush2.msra.mxu0 0.0
  %1365 = vmatprep.subr.mxu0 0.0
  %1366 = vmatpush2.msra.mxu0 0.0
  %1367 = vmatprep.subr.mxu0 0.0
  %1368 = vmatpush2.msra.mxu0 0.0
  %1369 = vmatprep.subr.mxu0 0.0
  %1370 = vmatpush2.msra.mxu0 0.0
  %1371 = vmatprep.subr.mxu0 0.0
  %1372 = vmatpush2.msra.mxu0 0.0
  %1373 = vmatprep.subr.mxu0 0.0
  %1374 = vmatpush2.msra.mxu0 0.0
  %1375 = vmatprep.subr.mxu0 0.0
  %1376 = vmatpush2.msra.mxu0 0.0
  %1377 = vmatprep.subr.mxu0 0.0
  %1378 = vmatpush2.msra.mxu0 0.0
  %1379 = vmatprep.subr.mxu0 0.0
  %1380 = vmatpush2.msra.mxu0 0.0
  %1381 = vmatprep.mubr.f32.mxu0 0.0
  %1382 = vmatmul.mubr.f32.gmra.mxu0 %v1290
  %v1383 = vpop.f32.mrf.mxu0
  %v1384 = vadd.f32 %v1315, %v1383
  %v1385 = vpop.f32.mrf.mxu0
  %1386 = vmatprep.mubr.f32.mxu0 0.0
  %1387 = vmatmul.mubr.f32.gmra.mxu0 %v1291
  %v1388 = vpop.f32.mrf.mxu0
  %v1389 = vadd.f32 %v1315, %v1388
  %v1390 = vpop.f32.mrf.mxu0
  %1391 = vmatprep.mubr.f32.mxu0 0.0
  %1392 = vmatmul.mubr.f32.gmra.mxu0 %v1292
  %v1393 = vpop.f32.mrf.mxu0
  %v1394 = vadd.f32 %v1315, %v1393
  %v1395 = vpop.f32.mrf.mxu0
  %1396 = vmatprep.mubr.f32.mxu0 0.0
  %1397 = vmatmul.mubr.f32.gmra.mxu0 %v1293
  %v1398 = vpop.f32.mrf.mxu0
  %v1399 = vadd.f32 %v1315, %v1398
  %v1400 = vpop.f32.mrf.mxu0
  %1401 = vdwg.mxu0
  %1402 = vst [vmem:[%s5] sm:$0xff] %v1384
  %1403 = vst [vmem:[%s5 + $0x8] sm:$0xff] %v1389
  %1404 = vst [vmem:[%s5 + $0x10] sm:$0xff] %v1394
  %1405 = vst [vmem:[%s5 + $0x18] sm:$0xff] %v1399
  // Predicated region
  $region22: #{model_forward.7} parent=0 // pred_check
    _
  $region23: #{model_forward.7} parent=0 // pred_check_branch
    %1407 = sbr.rel (0) target = $region25
  $region24: #{model_forward.7} parent=0 // pred_region
    _
  $region25: #{model_forward.7} parent=0 // pred_fallthru
    _
  // Predicated region
  $region26: #{model_forward.7} parent=0 // pred_check
    _
  $region27: #{model_forward.7} parent=0 // pred_check_branch
    %1409 = sbr.rel (0) target = $region29
  $region28: #{model_forward.7} parent=0 // pred_region
    _
  $region29: #{model_forward.7} parent=0 // pred_fallthru
    _
  // Predicated region
  $region30: #{model_forward.7} parent=0 // pred_check
    _
  $region31: #{model_forward.7} parent=0 // pred_check_branch
    %1411 = sbr.rel (0) target = $region33
  $region32: #{model_forward.7} parent=0 // pred_region
    _
  $region33: #{model_forward.7} parent=0 // pred_fallthru
    _
  // Predicated region
  $region34: #{model_forward.7} parent=0 // pred_check
    _
  $region35: #{model_forward.7} parent=0 // pred_check_branch
    %1413 = sbr.rel (0) target = $region37
  $region36: #{model_forward.7} parent=0 // pred_region
    _
  $region37: #{model_forward.7} parent=0 // pred_fallthru
    _

</llo_original>
